<compile_context>
chip_gen: v5e
topology: v5e:2x2
jax: 0.10.0
libtpu: 0.0.40
codegen_flags: <defaults>
</compile_context>

<pallas_src>
import functools

import jax
import jax.numpy as jnp
from jax.experimental import pallas as pl
from jax.experimental.pallas import tpu as pltpu


def _encoder_block_kernel(x_ref, w1_ref, w2_ref, g1_ref, b1_ref, g2_ref, b2_ref,
                          out_ref, save_ref,
                          xpad_ref, ypad_ref, hpool_ref,
                          *, N, H, W, Cin, Cpad, eps, mxu_dtype):
    """Whole (small) batch processed in one invocation so train-mode BN can
    reduce over (N, H, W)."""
    HW = H * W
    M = N * HW
    Ho, Wo = H // 2, W // 2
    f32 = jnp.float32

    def pad_into(dst_ref, interior, c):
        # Zero only the 1-pixel border, then write the interior data once
        # (instead of zeroing the whole buffer and overwriting it).
        zrow = jnp.zeros((N, 1, W + 2, c), f32)
        zcol = jnp.zeros((N, H + 2, 1, c), f32)
        dst_ref[:, 0:1, :, :] = zrow
        dst_ref[:, H + 1:H + 2, :, :] = zrow
        dst_ref[:, :, 0:1, :] = zcol
        dst_ref[:, :, W + 1:W + 2, :] = zcol
        dst_ref[:, 1:H + 1, 1:W + 1, :] = interior

    def conv3x3(src_ref, w_ref, cin):
        # src_ref: (N, H+2, W+2, cin) zero-padded input.  Gather the 9 shifted
        # taps, fold (tap, cin) into the GEMM contraction dim and (n, h, w)
        # into the M dim -> a single (M, 9*cin) x (9*cin, Cpad) MXU GEMM.
        taps = []
        for dy in range(3):
            for dx in range(3):
                taps.append(src_ref[:, dy:dy + H, dx:dx + W, :].reshape(M, cin))
        patch = jnp.concatenate(taps, axis=-1).astype(mxu_dtype)
        return jnp.dot(patch, w_ref[...].astype(mxu_dtype),
                       preferred_element_type=jnp.float32)        # (M, Cpad) f32

    def bn_relu(y, g_ref, b_ref):
        # Training-mode BatchNorm2d over (N, H, W), biased variance.
        # Single pass over the register value: var = E[y^2] - E[y]^2.
        mean = jnp.mean(y, axis=0, keepdims=True)                 # (1, Cpad)
        var = jnp.maximum(jnp.mean(y * y, axis=0, keepdims=True) - mean * mean, 0.0)
        yhat = (y - mean) * jax.lax.rsqrt(var + eps)
        return jnp.maximum(yhat * g_ref[...] + b_ref[...], 0.0)

    # conv1 -> bn1 -> relu   (pad x in-kernel; no wrapper-side jnp.pad pass)
    pad_into(xpad_ref, x_ref[...], Cin)
    y1 = bn_relu(conv3x3(xpad_ref, w1_ref, Cin), g1_ref, b1_ref)

    # conv2 -> bn2 -> relu   (this is `out_save`)
    pad_into(ypad_ref, y1.reshape(N, H, W, Cpad), Cpad)
    y2 = bn_relu(conv3x3(ypad_ref, w2_ref, Cpad), g2_ref, b2_ref)
    save_ref[...] = y2.reshape(N, H, W, Cpad)

    # MaxPool2d(2, 2).  H-pooling from the register value (splitting a
    # non-minor dim is a layout-trivial reshape); W-pooling via one
    # sublane-strided read of the small H-pooled scratch.  Never reads back
    # from an output ref.
    h2 = y2.reshape(N, Ho, 2, W, Cpad)
    hpool_ref[...] = jnp.maximum(h2[:, :, 0], h2[:, :, 1])        # (N, Ho, W, Cpad)
    out_ref[...] = jnp.maximum(hpool_ref[:, :, pl.ds(0, Wo, 2), :],
                               hpool_ref[:, :, pl.ds(1, Wo, 2), :])


def encoder_block_sc(x_nchw, params, *, eps=1e-5, mxu_dtype=jnp.float32):
    """Wrapper: NCHW in, (out, out_save) NCHW out, matching the PyTorch module.

    `mxu_dtype=jnp.bfloat16` feeds the MXU bf16 operands (f32 accumulation,
    all BN/ReLU/pool math stays f32) for v6e/v7x; default keeps full f32.
    """
    N, Cin, H, W = x_nchw.shape
    assert H % 2 == 0 and W % 2 == 0, "MaxPool2d(2,2) path expects even H and W"

    w1 = params["conv1_w"]                                # (3, 3, Cin, Cout) HWIO
    w2 = params["conv2_w"]                                # (3, 3, Cout, Cout)
    g1, b1 = params["bn1_gamma"], params["bn1_beta"]
    g2, b2 = params["bn2_gamma"], params["bn2_beta"]
    Cout = w1.shape[-1]
    Cpad = ((Cout + 127) // 128) * 128                    # lane-dense channel width
    Ho, Wo = H // 2, W // 2

    def pad_axis(a, axis, to):
        pads = [(0, 0)] * a.ndim
        pads[axis] = (0, to - a.shape[axis])
        return jnp.pad(a, pads)

    # Fold the 9 taps into the contraction dim: (3,3,ci,co) -> (9*ci, Cpad).
    w1f = pad_axis(w1.astype(jnp.float32), 3, Cpad).reshape(9 * Cin, Cpad)
    w2f = pad_axis(pad_axis(w2.astype(jnp.float32), 3, Cpad), 2, Cpad
                   ).reshape(9 * Cpad, Cpad)
    # Padded channels get gamma = beta = 0 so they remain exactly zero.
    g1p = pad_axis(g1.reshape(1, Cout).astype(jnp.float32), 1, Cpad)
    b1p = pad_axis(b1.reshape(1, Cout).astype(jnp.float32), 1, Cpad)
    g2p = pad_axis(g2.reshape(1, Cout).astype(jnp.float32), 1, Cpad)
    b2p = pad_axis(b2.reshape(1, Cout).astype(jnp.float32), 1, Cpad)

    x_nhwc = jnp.transpose(x_nchw, (0, 2, 3, 1)).astype(jnp.float32)

    kernel = functools.partial(_encoder_block_kernel, N=N, H=H, W=W, Cin=Cin,
                               Cpad=Cpad, eps=eps, mxu_dtype=mxu_dtype)

    zero4 = lambda i: (0, 0, 0, 0)
    zero2 = lambda i: (0, 0)

    out_nhwc, save_nhwc = pl.pallas_call(
        kernel,
        out_shape=(jax.ShapeDtypeStruct((N, Ho, Wo, Cpad), jnp.float32),
                   jax.ShapeDtypeStruct((N, H, W, Cpad), jnp.float32)),
        grid=(1,),
        in_specs=[
            pl.BlockSpec((N, H, W, Cin), zero4),          # x (unpadded; padded in-kernel)
            pl.BlockSpec((9 * Cin, Cpad), zero2),         # conv1 weights (K, Cpad)
            pl.BlockSpec((9 * Cpad, Cpad), zero2),        # conv2 weights (K, Cpad)
            pl.BlockSpec((1, Cpad), zero2),               # bn1 gamma
            pl.BlockSpec((1, Cpad), zero2),               # bn1 beta
            pl.BlockSpec((1, Cpad), zero2),               # bn2 gamma
            pl.BlockSpec((1, Cpad), zero2),               # bn2 beta
        ],
        out_specs=(pl.BlockSpec((N, Ho, Wo, Cpad), zero4),
                   pl.BlockSpec((N, H, W, Cpad), zero4)),
        scratch_shapes=[
            pltpu.VMEM((N, H + 2, W + 2, Cin), jnp.float32),   # padded x
            pltpu.VMEM((N, H + 2, W + 2, Cpad), jnp.float32),  # padded y1
            pltpu.VMEM((N, Ho, W, Cpad), jnp.float32),         # H-pooled stage
        ],
        compiler_params=pltpu.CompilerParams(
            dimension_semantics=("arbitrary",),
            vmem_limit_bytes=32 * 1024 * 1024),
    )(x_nhwc, w1f, w2f, g1p, b1p, g2p, b2p)

    out = jnp.transpose(out_nhwc[..., :Cout], (0, 3, 1, 2))
    out_save = jnp.transpose(save_nhwc[..., :Cout], (0, 3, 1, 2))
    return out, out_save


def _reference(x_nchw, params, eps=1e-5):
    """Pure-JAX reference for validation."""
    w1, w2 = params["conv1_w"], params["conv2_w"]
    g1, b1 = params["bn1_gamma"], params["bn1_beta"]
    g2, b2 = params["bn2_gamma"], params["bn2_beta"]

    def conv(x, w):
        return jax.lax.conv_general_dilated(
            x, w, window_strides=(1, 1), padding=((1, 1), (1, 1)),
            dimension_numbers=("NHWC", "HWIO", "NHWC"))

    def bn_relu(y, g, b):
        mean = jnp.mean(y, axis=(0, 1, 2), keepdims=True)
        var = jnp.mean((y - mean) ** 2, axis=(0, 1, 2), keepdims=True)
        yhat = (y - mean) * jax.lax.rsqrt(var + eps)
        return jnp.maximum(yhat * g.reshape(1, 1, 1, -1) + b.reshape(1, 1, 1, -1), 0.0)

    x = jnp.transpose(x_nchw, (0, 2, 3, 1)).astype(jnp.float32)
    y1 = bn_relu(conv(x, w1), g1, b1)
    y2 = bn_relu(conv(y1, w2), g2, b2)
    pooled = jax.lax.reduce_window(y2, -jnp.inf, jax.lax.max,
                                   (1, 2, 2, 1), (1, 2, 2, 1), "VALID")
    return (jnp.transpose(pooled, (0, 3, 1, 2)),
            jnp.transpose(y2, (0, 3, 1, 2)))


if __name__ == "__main__":
    N, Cin, Cout, H, W = 2, 4, 8, 16, 16
    k = jax.random.split(jax.random.PRNGKey(0), 7)
    x = jax.random.normal(k[0], (N, Cin, H, W), jnp.float32)
    params = {
        "conv1_w": 0.2 * jax.random.normal(k[1], (3, 3, Cin, Cout), jnp.float32),
        "conv2_w": 0.2 * jax.random.normal(k[2], (3, 3, Cout, Cout), jnp.float32),
        "bn1_gamma": 1.0 + 0.1 * jax.random.normal(k[3], (1, Cout), jnp.float32),
        "bn1_beta": 0.1 * jax.random.normal(k[4], (1, Cout), jnp.float32),
        "bn2_gamma": 1.0 + 0.1 * jax.random.normal(k[5], (1, Cout), jnp.float32),
        "bn2_beta": 0.1 * jax.random.normal(k[6], (1, Cout), jnp.float32),
    }

    out, out_save = encoder_block_sc(x, params)
    out, out_save = jax.block_until_ready((out, out_save))

    assert out.shape == (N, Cout, H // 2, W // 2)
    assert out_save.shape == (N, Cout, H, W)

    ref_out, ref_save = _reference(x, params)
    assert jnp.allclose(out, ref_out, atol=1e-2, rtol=1e-2)
    assert jnp.allclose(out_save, ref_save, atol=1e-2, rtol=1e-2)

    print("KERNEL_OK")
</pallas_src>

<mosaic_0001>
module attributes {stable_mosaic.version = 11 : i64} {
  func.func @_encoder_block_kernel(%arg0: i32, %arg1: memref<2x16x16x4xf32, #tpu.memory_space<vmem>>, %arg2: memref<36x128xf32, #tpu.memory_space<vmem>>, %arg3: memref<1152x128xf32, #tpu.memory_space<vmem>>, %arg4: memref<1x128xf32, #tpu.memory_space<vmem>>, %arg5: memref<1x128xf32, #tpu.memory_space<vmem>>, %arg6: memref<1x128xf32, #tpu.memory_space<vmem>>, %arg7: memref<1x128xf32, #tpu.memory_space<vmem>>, %arg8: memref<2x8x8x128xf32, #tpu.memory_space<vmem>>, %arg9: memref<2x16x16x128xf32, #tpu.memory_space<vmem>>, %arg10: memref<2x18x18x4xf32, #tpu.memory_space<vmem>>, %arg11: memref<2x18x18x128xf32, #tpu.memory_space<vmem>>, %arg12: memref<2x8x16x128xf32, #tpu.memory_space<vmem>>) attributes {dimension_semantics = [#tpu.dimension_semantics<arbitrary>], iteration_bounds = array<i64: 1>, scalar_prefetch = 0 : i64, scratch_operands = 3 : i64, tpu.core_type = #tpu.core_type<tc>, window_params = [{pipeline_mode = #tpu.pipeline_mode<synchronous>, transform_indices = @transform_0, window_bounds = array<i64: 2, 16, 16, 4>}, {pipeline_mode = #tpu.pipeline_mode<synchronous>, transform_indices = @transform_1, window_bounds = array<i64: 36, 128>}, {pipeline_mode = #tpu.pipeline_mode<synchronous>, transform_indices = @transform_2, window_bounds = array<i64: 1152, 128>}, {pipeline_mode = #tpu.pipeline_mode<synchronous>, transform_indices = @transform_3, window_bounds = array<i64: 1, 128>}, {pipeline_mode = #tpu.pipeline_mode<synchronous>, transform_indices = @transform_4, window_bounds = array<i64: 1, 128>}, {pipeline_mode = #tpu.pipeline_mode<synchronous>, transform_indices = @transform_5, window_bounds = array<i64: 1, 128>}, {pipeline_mode = #tpu.pipeline_mode<synchronous>, transform_indices = @transform_6, window_bounds = array<i64: 1, 128>}, {pipeline_mode = #tpu.pipeline_mode<synchronous>, transform_indices = @transform_7, window_bounds = array<i64: 2, 8, 8, 128>}, {pipeline_mode = #tpu.pipeline_mode<synchronous>, transform_indices = @transform_8, window_bounds = array<i64: 2, 16, 16, 128>}]} {
    %c0 = arith.constant 0 : index
    %c0_0 = arith.constant 0 : index
    %c0_1 = arith.constant 0 : index
    %c0_2 = arith.constant 0 : index
    %0 = vector.load %arg1[%c0, %c0_0, %c0_1, %c0_2] : memref<2x16x16x4xf32, #tpu.memory_space<vmem>>, vector<2x16x16x4xf32>
    %cst = arith.constant 0.000000e+00 : f32
    %1 = vector.broadcast %cst : f32 to vector<2x1x18x4xf32>
    %cst_3 = arith.constant 0.000000e+00 : f32
    %2 = vector.broadcast %cst_3 : f32 to vector<2x18x1x4xf32>
    %c0_4 = arith.constant 0 : index
    %c0_5 = arith.constant 0 : index
    %c0_6 = arith.constant 0 : index
    %c0_7 = arith.constant 0 : index
    %3 = vector.load %arg10[%c0_4, %c0_5, %c0_6, %c0_7] : memref<2x18x18x4xf32, #tpu.memory_space<vmem>>, vector<2x1x18x4xf32>
    tpu.vector_store %arg10[%c0_4, %c0_5, %c0_6, %c0_7], %1 {strides = array<i32>} : memref<2x18x18x4xf32, #tpu.memory_space<vmem>>, vector<2x1x18x4xf32>,
    %c0_8 = arith.constant 0 : index
    %c17 = arith.constant 17 : index
    %c0_9 = arith.constant 0 : index
    %c0_10 = arith.constant 0 : index
    %4 = vector.load %arg10[%c0_8, %c17, %c0_9, %c0_10] : memref<2x18x18x4xf32, #tpu.memory_space<vmem>>, vector<2x1x18x4xf32>
    tpu.vector_store %arg10[%c0_8, %c17, %c0_9, %c0_10], %1 {strides = array<i32>} : memref<2x18x18x4xf32, #tpu.memory_space<vmem>>, vector<2x1x18x4xf32>,
    %c0_11 = arith.constant 0 : index
    %c0_12 = arith.constant 0 : index
    %c0_13 = arith.constant 0 : index
    %c0_14 = arith.constant 0 : index
    %5 = vector.load %arg10[%c0_11, %c0_12, %c0_13, %c0_14] : memref<2x18x18x4xf32, #tpu.memory_space<vmem>>, vector<2x18x1x4xf32>
    tpu.vector_store %arg10[%c0_11, %c0_12, %c0_13, %c0_14], %2 {strides = array<i32>} : memref<2x18x18x4xf32, #tpu.memory_space<vmem>>, vector<2x18x1x4xf32>,
    %c0_15 = arith.constant 0 : index
    %c0_16 = arith.constant 0 : index
    %c17_17 = arith.constant 17 : index
    %c0_18 = arith.constant 0 : index
    %6 = vector.load %arg10[%c0_15, %c0_16, %c17_17, %c0_18] : memref<2x18x18x4xf32, #tpu.memory_space<vmem>>, vector<2x18x1x4xf32>
    tpu.vector_store %arg10[%c0_15, %c0_16, %c17_17, %c0_18], %2 {strides = array<i32>} : memref<2x18x18x4xf32, #tpu.memory_space<vmem>>, vector<2x18x1x4xf32>,
    %c0_19 = arith.constant 0 : index
    %c1 = arith.constant 1 : index
    %c1_20 = arith.constant 1 : index
    %c0_21 = arith.constant 0 : index
    %7 = vector.load %arg10[%c0_19, %c1, %c1_20, %c0_21] : memref<2x18x18x4xf32, #tpu.memory_space<vmem>>, vector<2x16x16x4xf32>
    tpu.vector_store %arg10[%c0_19, %c1, %c1_20, %c0_21], %0 {strides = array<i32>} : memref<2x18x18x4xf32, #tpu.memory_space<vmem>>, vector<2x16x16x4xf32>,
    %c0_22 = arith.constant 0 : index
    %c0_23 = arith.constant 0 : index
    %c0_24 = arith.constant 0 : index
    %c0_25 = arith.constant 0 : index
    %8 = vector.load %arg10[%c0_22, %c0_23, %c0_24, %c0_25] : memref<2x18x18x4xf32, #tpu.memory_space<vmem>>, vector<2x16x16x4xf32>
    %9 = vector.shape_cast %8 : vector<2x16x16x4xf32> to vector<512x4xf32>
    %c0_26 = arith.constant 0 : index
    %c0_27 = arith.constant 0 : index
    %c1_28 = arith.constant 1 : index
    %c0_29 = arith.constant 0 : index
    %10 = vector.load %arg10[%c0_26, %c0_27, %c1_28, %c0_29] : memref<2x18x18x4xf32, #tpu.memory_space<vmem>>, vector<2x16x16x4xf32>
    %11 = vector.shape_cast %10 : vector<2x16x16x4xf32> to vector<512x4xf32>
    %c0_30 = arith.constant 0 : index
    %c0_31 = arith.constant 0 : index
    %c2 = arith.constant 2 : index
    %c0_32 = arith.constant 0 : index
    %12 = vector.load %arg10[%c0_30, %c0_31, %c2, %c0_32] : memref<2x18x18x4xf32, #tpu.memory_space<vmem>>, vector<2x16x16x4xf32>
    %13 = vector.shape_cast %12 : vector<2x16x16x4xf32> to vector<512x4xf32>
    %c0_33 = arith.constant 0 : index
    %c1_34 = arith.constant 1 : index
    %c0_35 = arith.constant 0 : index
    %c0_36 = arith.constant 0 : index
    %14 = vector.load %arg10[%c0_33, %c1_34, %c0_35, %c0_36] : memref<2x18x18x4xf32, #tpu.memory_space<vmem>>, vector<2x16x16x4xf32>
    %15 = vector.shape_cast %14 : vector<2x16x16x4xf32> to vector<512x4xf32>
    %c0_37 = arith.constant 0 : index
    %c1_38 = arith.constant 1 : index
    %c1_39 = arith.constant 1 : index
    %c0_40 = arith.constant 0 : index
    %16 = vector.load %arg10[%c0_37, %c1_38, %c1_39, %c0_40] : memref<2x18x18x4xf32, #tpu.memory_space<vmem>>, vector<2x16x16x4xf32>
    %17 = vector.shape_cast %16 : vector<2x16x16x4xf32> to vector<512x4xf32>
    %c0_41 = arith.constant 0 : index
    %c1_42 = arith.constant 1 : index
    %c2_43 = arith.constant 2 : index
    %c0_44 = arith.constant 0 : index
    %18 = vector.load %arg10[%c0_41, %c1_42, %c2_43, %c0_44] : memref<2x18x18x4xf32, #tpu.memory_space<vmem>>, vector<2x16x16x4xf32>
    %19 = vector.shape_cast %18 : vector<2x16x16x4xf32> to vector<512x4xf32>
    %c0_45 = arith.constant 0 : index
    %c2_46 = arith.constant 2 : index
    %c0_47 = arith.constant 0 : index
    %c0_48 = arith.constant 0 : index
    %20 = vector.load %arg10[%c0_45, %c2_46, %c0_47, %c0_48] : memref<2x18x18x4xf32, #tpu.memory_space<vmem>>, vector<2x16x16x4xf32>
    %21 = vector.shape_cast %20 : vector<2x16x16x4xf32> to vector<512x4xf32>
    %c0_49 = arith.constant 0 : index
    %c2_50 = arith.constant 2 : index
    %c1_51 = arith.constant 1 : index
    %c0_52 = arith.constant 0 : index
    %22 = vector.load %arg10[%c0_49, %c2_50, %c1_51, %c0_52] : memref<2x18x18x4xf32, #tpu.memory_space<vmem>>, vector<2x16x16x4xf32>
    %23 = vector.shape_cast %22 : vector<2x16x16x4xf32> to vector<512x4xf32>
    %c0_53 = arith.constant 0 : index
    %c2_54 = arith.constant 2 : index
    %c2_55 = arith.constant 2 : index
    %c0_56 = arith.constant 0 : index
    %24 = vector.load %arg10[%c0_53, %c2_54, %c2_55, %c0_56] : memref<2x18x18x4xf32, #tpu.memory_space<vmem>>, vector<2x16x16x4xf32>
    %25 = vector.shape_cast %24 : vector<2x16x16x4xf32> to vector<512x4xf32>
    %26 = tpu.concatenate %9, %11, %13, %15, %17, %19, %21, %23, %25 in 1 : vector<512x4xf32>, vector<512x4xf32>, vector<512x4xf32>, vector<512x4xf32>, vector<512x4xf32>, vector<512x4xf32>, vector<512x4xf32>, vector<512x4xf32>, vector<512x4xf32> -> vector<512x36xf32>
    %c0_57 = arith.constant 0 : index
    %c0_58 = arith.constant 0 : index
    %27 = vector.load %arg2[%c0_57, %c0_58] : memref<36x128xf32, #tpu.memory_space<vmem>>, vector<36x128xf32>
    %cst_59 = arith.constant dense<0.000000e+00> : vector<512x128xf32>
    %28 = tpu.matmul %26, %27, %cst_59 {dimension_numbers = #tpu.dot_dimension_numbers<[1], [0], [0], [1], [0, 0, 1, 1], [], []>} : vector<512x36xf32>, vector<36x128xf32>, vector<512x128xf32> -> vector<512x128xf32>
    %cst_60 = arith.constant dense<0.000000e+00> : vector<128xf32>
    %29 = vector.multi_reduction <add>, %28, %cst_60 [0] : vector<512x128xf32> to vector<128xf32>
    %30 = vector.shape_cast %29 : vector<128xf32> to vector<1x128xf32>
    %cst_61 = arith.constant 5.120000e+02 : f32
    %31 = vector.broadcast %cst_61 : f32 to vector<1x128xf32>
    %32 = arith.divf %30, %31 : vector<1x128xf32>
    %33 = arith.mulf %28, %28 : vector<512x128xf32>
    %cst_62 = arith.constant dense<0.000000e+00> : vector<128xf32>
    %34 = vector.multi_reduction <add>, %33, %cst_62 [0] : vector<512x128xf32> to vector<128xf32>
    %35 = vector.shape_cast %34 : vector<128xf32> to vector<1x128xf32>
    %cst_63 = arith.constant 5.120000e+02 : f32
    %36 = vector.broadcast %cst_63 : f32 to vector<1x128xf32>
    %37 = arith.divf %35, %36 : vector<1x128xf32>
    %38 = arith.mulf %32, %32 : vector<1x128xf32>
    %39 = arith.subf %37, %38 : vector<1x128xf32>
    %cst_64 = arith.constant 0.000000e+00 : f32
    %40 = vector.broadcast %cst_64 : f32 to vector<1x128xf32>
    %41 = arith.maximumf %39, %40 : vector<1x128xf32>
    %42 = vector.broadcast %32 : vector<1x128xf32> to vector<512x128xf32>
    %43 = arith.subf %28, %42 : vector<512x128xf32>
    %cst_65 = arith.constant 9.99999974E-6 : f32
    %44 = vector.broadcast %cst_65 : f32 to vector<1x128xf32>
    %45 = arith.addf %41, %44 : vector<1x128xf32>
    %46 = math.rsqrt %45 : vector<1x128xf32>
    %47 = vector.broadcast %46 : vector<1x128xf32> to vector<512x128xf32>
    %48 = arith.mulf %43, %47 : vector<512x128xf32>
    %c0_66 = arith.constant 0 : index
    %c0_67 = arith.constant 0 : index
    %49 = vector.load %arg4[%c0_66, %c0_67] : memref<1x128xf32, #tpu.memory_space<vmem>>, vector<1x128xf32>
    %50 = vector.broadcast %49 : vector<1x128xf32> to vector<512x128xf32>
    %51 = arith.mulf %48, %50 : vector<512x128xf32>
    %c0_68 = arith.constant 0 : index
    %c0_69 = arith.constant 0 : index
    %52 = vector.load %arg5[%c0_68, %c0_69] : memref<1x128xf32, #tpu.memory_space<vmem>>, vector<1x128xf32>
    %53 = vector.broadcast %52 : vector<1x128xf32> to vector<512x128xf32>
    %54 = arith.addf %51, %53 : vector<512x128xf32>
    %cst_70 = arith.constant 0.000000e+00 : f32
    %55 = vector.broadcast %cst_70 : f32 to vector<512x128xf32>
    %56 = arith.maximumf %54, %55 : vector<512x128xf32>
    %57 = vector.shape_cast %56 : vector<512x128xf32> to vector<2x16x16x128xf32>
    %cst_71 = arith.constant 0.000000e+00 : f32
    %58 = vector.broadcast %cst_71 : f32 to vector<2x1x18x128xf32>
    %cst_72 = arith.constant 0.000000e+00 : f32
    %59 = vector.broadcast %cst_72 : f32 to vector<2x18x1x128xf32>
    %c0_73 = arith.constant 0 : index
    %c0_74 = arith.constant 0 : index
    %c0_75 = arith.constant 0 : index
    %c0_76 = arith.constant 0 : index
    %60 = vector.load %arg11[%c0_73, %c0_74, %c0_75, %c0_76] : memref<2x18x18x128xf32, #tpu.memory_space<vmem>>, vector<2x1x18x128xf32>
    tpu.vector_store %arg11[%c0_73, %c0_74, %c0_75, %c0_76], %58 {strides = array<i32>} : memref<2x18x18x128xf32, #tpu.memory_space<vmem>>, vector<2x1x18x128xf32>,
    %c0_77 = arith.constant 0 : index
    %c17_78 = arith.constant 17 : index
    %c0_79 = arith.constant 0 : index
    %c0_80 = arith.constant 0 : index
    %61 = vector.load %arg11[%c0_77, %c17_78, %c0_79, %c0_80] : memref<2x18x18x128xf32, #tpu.memory_space<vmem>>, vector<2x1x18x128xf32>
    tpu.vector_store %arg11[%c0_77, %c17_78, %c0_79, %c0_80], %58 {strides = array<i32>} : memref<2x18x18x128xf32, #tpu.memory_space<vmem>>, vector<2x1x18x128xf32>,
    %c0_81 = arith.constant 0 : index
    %c0_82 = arith.constant 0 : index
    %c0_83 = arith.constant 0 : index
    %c0_84 = arith.constant 0 : index
    %62 = vector.load %arg11[%c0_81, %c0_82, %c0_83, %c0_84] : memref<2x18x18x128xf32, #tpu.memory_space<vmem>>, vector<2x18x1x128xf32>
    tpu.vector_store %arg11[%c0_81, %c0_82, %c0_83, %c0_84], %59 {strides = array<i32>} : memref<2x18x18x128xf32, #tpu.memory_space<vmem>>, vector<2x18x1x128xf32>,
    %c0_85 = arith.constant 0 : index
    %c0_86 = arith.constant 0 : index
    %c17_87 = arith.constant 17 : index
    %c0_88 = arith.constant 0 : index
    %63 = vector.load %arg11[%c0_85, %c0_86, %c17_87, %c0_88] : memref<2x18x18x128xf32, #tpu.memory_space<vmem>>, vector<2x18x1x128xf32>
    tpu.vector_store %arg11[%c0_85, %c0_86, %c17_87, %c0_88], %59 {strides = array<i32>} : memref<2x18x18x128xf32, #tpu.memory_space<vmem>>, vector<2x18x1x128xf32>,
    %c0_89 = arith.constant 0 : index
    %c1_90 = arith.constant 1 : index
    %c1_91 = arith.constant 1 : index
    %c0_92 = arith.constant 0 : index
    %64 = vector.load %arg11[%c0_89, %c1_90, %c1_91, %c0_92] : memref<2x18x18x128xf32, #tpu.memory_space<vmem>>, vector<2x16x16x128xf32>
    tpu.vector_store %arg11[%c0_89, %c1_90, %c1_91, %c0_92], %57 {strides = array<i32>} : memref<2x18x18x128xf32, #tpu.memory_space<vmem>>, vector<2x16x16x128xf32>,
    %c0_93 = arith.constant 0 : index
    %c0_94 = arith.constant 0 : index
    %c0_95 = arith.constant 0 : index
    %c0_96 = arith.constant 0 : index
    %65 = vector.load %arg11[%c0_93, %c0_94, %c0_95, %c0_96] : memref<2x18x18x128xf32, #tpu.memory_space<vmem>>, vector<2x16x16x128xf32>
    %66 = vector.shape_cast %65 : vector<2x16x16x128xf32> to vector<512x128xf32>
    %c0_97 = arith.constant 0 : index
    %c0_98 = arith.constant 0 : index
    %c1_99 = arith.constant 1 : index
    %c0_100 = arith.constant 0 : index
    %67 = vector.load %arg11[%c0_97, %c0_98, %c1_99, %c0_100] : memref<2x18x18x128xf32, #tpu.memory_space<vmem>>, vector<2x16x16x128xf32>
    %68 = vector.shape_cast %67 : vector<2x16x16x128xf32> to vector<512x128xf32>
    %c0_101 = arith.constant 0 : index
    %c0_102 = arith.constant 0 : index
    %c2_103 = arith.constant 2 : index
    %c0_104 = arith.constant 0 : index
    %69 = vector.load %arg11[%c0_101, %c0_102, %c2_103, %c0_104] : memref<2x18x18x128xf32, #tpu.memory_space<vmem>>, vector<2x16x16x128xf32>
    %70 = vector.shape_cast %69 : vector<2x16x16x128xf32> to vector<512x128xf32>
    %c0_105 = arith.constant 0 : index
    %c1_106 = arith.constant 1 : index
    %c0_107 = arith.constant 0 : index
    %c0_108 = arith.constant 0 : index
    %71 = vector.load %arg11[%c0_105, %c1_106, %c0_107, %c0_108] : memref<2x18x18x128xf32, #tpu.memory_space<vmem>>, vector<2x16x16x128xf32>
    %72 = vector.shape_cast %71 : vector<2x16x16x128xf32> to vector<512x128xf32>
    %c0_109 = arith.constant 0 : index
    %c1_110 = arith.constant 1 : index
    %c1_111 = arith.constant 1 : index
    %c0_112 = arith.constant 0 : index
    %73 = vector.load %arg11[%c0_109, %c1_110, %c1_111, %c0_112] : memref<2x18x18x128xf32, #tpu.memory_space<vmem>>, vector<2x16x16x128xf32>
    %74 = vector.shape_cast %73 : vector<2x16x16x128xf32> to vector<512x128xf32>
    %c0_113 = arith.constant 0 : index
    %c1_114 = arith.constant 1 : index
    %c2_115 = arith.constant 2 : index
    %c0_116 = arith.constant 0 : index
    %75 = vector.load %arg11[%c0_113, %c1_114, %c2_115, %c0_116] : memref<2x18x18x128xf32, #tpu.memory_space<vmem>>, vector<2x16x16x128xf32>
    %76 = vector.shape_cast %75 : vector<2x16x16x128xf32> to vector<512x128xf32>
    %c0_117 = arith.constant 0 : index
    %c2_118 = arith.constant 2 : index
    %c0_119 = arith.constant 0 : index
    %c0_120 = arith.constant 0 : index
    %77 = vector.load %arg11[%c0_117, %c2_118, %c0_119, %c0_120] : memref<2x18x18x128xf32, #tpu.memory_space<vmem>>, vector<2x16x16x128xf32>
    %78 = vector.shape_cast %77 : vector<2x16x16x128xf32> to vector<512x128xf32>
    %c0_121 = arith.constant 0 : index
    %c2_122 = arith.constant 2 : index
    %c1_123 = arith.constant 1 : index
    %c0_124 = arith.constant 0 : index
    %79 = vector.load %arg11[%c0_121, %c2_122, %c1_123, %c0_124] : memref<2x18x18x128xf32, #tpu.memory_space<vmem>>, vector<2x16x16x128xf32>
    %80 = vector.shape_cast %79 : vector<2x16x16x128xf32> to vector<512x128xf32>
    %c0_125 = arith.constant 0 : index
    %c2_126 = arith.constant 2 : index
    %c2_127 = arith.constant 2 : index
    %c0_128 = arith.constant 0 : index
    %81 = vector.load %arg11[%c0_125, %c2_126, %c2_127, %c0_128] : memref<2x18x18x128xf32, #tpu.memory_space<vmem>>, vector<2x16x16x128xf32>
    %82 = vector.shape_cast %81 : vector<2x16x16x128xf32> to vector<512x128xf32>
    %83 = tpu.concatenate %66, %68, %70, %72, %74, %76, %78, %80, %82 in 1 : vector<512x128xf32>, vector<512x128xf32>, vector<512x128xf32>, vector<512x128xf32>, vector<512x128xf32>, vector<512x128xf32>, vector<512x128xf32>, vector<512x128xf32>, vector<512x128xf32> -> vector<512x1152xf32>
    %c0_129 = arith.constant 0 : index
    %c0_130 = arith.constant 0 : index
    %84 = vector.load %arg3[%c0_129, %c0_130] : memref<1152x128xf32, #tpu.memory_space<vmem>>, vector<1152x128xf32>
    %cst_131 = arith.constant dense<0.000000e+00> : vector<512x128xf32>
    %85 = tpu.matmul %83, %84, %cst_131 {dimension_numbers = #tpu.dot_dimension_numbers<[1], [0], [0], [1], [0, 0, 1, 1], [], []>} : vector<512x1152xf32>, vector<1152x128xf32>, vector<512x128xf32> -> vector<512x128xf32>
    %cst_132 = arith.constant dense<0.000000e+00> : vector<128xf32>
    %86 = vector.multi_reduction <add>, %85, %cst_132 [0] : vector<512x128xf32> to vector<128xf32>
    %87 = vector.shape_cast %86 : vector<128xf32> to vector<1x128xf32>
    %cst_133 = arith.constant 5.120000e+02 : f32
    %88 = vector.broadcast %cst_133 : f32 to vector<1x128xf32>
    %89 = arith.divf %87, %88 : vector<1x128xf32>
    %90 = arith.mulf %85, %85 : vector<512x128xf32>
    %cst_134 = arith.constant dense<0.000000e+00> : vector<128xf32>
    %91 = vector.multi_reduction <add>, %90, %cst_134 [0] : vector<512x128xf32> to vector<128xf32>
    %92 = vector.shape_cast %91 : vector<128xf32> to vector<1x128xf32>
    %cst_135 = arith.constant 5.120000e+02 : f32
    %93 = vector.broadcast %cst_135 : f32 to vector<1x128xf32>
    %94 = arith.divf %92, %93 : vector<1x128xf32>
    %95 = arith.mulf %89, %89 : vector<1x128xf32>
    %96 = arith.subf %94, %95 : vector<1x128xf32>
    %cst_136 = arith.constant 0.000000e+00 : f32
    %97 = vector.broadcast %cst_136 : f32 to vector<1x128xf32>
    %98 = arith.maximumf %96, %97 : vector<1x128xf32>
    %99 = vector.broadcast %89 : vector<1x128xf32> to vector<512x128xf32>
    %100 = arith.subf %85, %99 : vector<512x128xf32>
    %cst_137 = arith.constant 9.99999974E-6 : f32
    %101 = vector.broadcast %cst_137 : f32 to vector<1x128xf32>
    %102 = arith.addf %98, %101 : vector<1x128xf32>
    %103 = math.rsqrt %102 : vector<1x128xf32>
    %104 = vector.broadcast %103 : vector<1x128xf32> to vector<512x128xf32>
    %105 = arith.mulf %100, %104 : vector<512x128xf32>
    %c0_138 = arith.constant 0 : index
    %c0_139 = arith.constant 0 : index
    %106 = vector.load %arg6[%c0_138, %c0_139] : memref<1x128xf32, #tpu.memory_space<vmem>>, vector<1x128xf32>
    %107 = vector.broadcast %106 : vector<1x128xf32> to vector<512x128xf32>
    %108 = arith.mulf %105, %107 : vector<512x128xf32>
    %c0_140 = arith.constant 0 : index
    %c0_141 = arith.constant 0 : index
    %109 = vector.load %arg7[%c0_140, %c0_141] : memref<1x128xf32, #tpu.memory_space<vmem>>, vector<1x128xf32>
    %110 = vector.broadcast %109 : vector<1x128xf32> to vector<512x128xf32>
    %111 = arith.addf %108, %110 : vector<512x128xf32>
    %cst_142 = arith.constant 0.000000e+00 : f32
    %112 = vector.broadcast %cst_142 : f32 to vector<512x128xf32>
    %113 = arith.maximumf %111, %112 : vector<512x128xf32>
    %114 = vector.shape_cast %113 : vector<512x128xf32> to vector<2x16x16x128xf32>
    %c0_143 = arith.constant 0 : index
    %c0_144 = arith.constant 0 : index
    %c0_145 = arith.constant 0 : index
    %c0_146 = arith.constant 0 : index
    %115 = vector.load %arg9[%c0_143, %c0_144, %c0_145, %c0_146] : memref<2x16x16x128xf32, #tpu.memory_space<vmem>>, vector<2x16x16x128xf32>
    tpu.vector_store %arg9[%c0_143, %c0_144, %c0_145, %c0_146], %114 {strides = array<i32>} : memref<2x16x16x128xf32, #tpu.memory_space<vmem>>, vector<2x16x16x128xf32>,
    %116 = vector.shape_cast %113 : vector<512x128xf32> to vector<2x8x2x16x128xf32>
    %117 = vector.extract_strided_slice %116 {offsets = [0, 0, 0, 0, 0], sizes = [2, 8, 1, 16, 128], strides = [1, 1, 1, 1, 1]} : vector<2x8x2x16x128xf32> to vector<2x8x1x16x128xf32>
    %118 = vector.shape_cast %117 : vector<2x8x1x16x128xf32> to vector<2x8x16x128xf32>
    %119 = vector.extract_strided_slice %116 {offsets = [0, 0, 1, 0, 0], sizes = [2, 8, 1, 16, 128], strides = [1, 1, 1, 1, 1]} : vector<2x8x2x16x128xf32> to vector<2x8x1x16x128xf32>
    %120 = vector.shape_cast %119 : vector<2x8x1x16x128xf32> to vector<2x8x16x128xf32>
    %121 = arith.maximumf %118, %120 : vector<2x8x16x128xf32>
    %c0_147 = arith.constant 0 : index
    %c0_148 = arith.constant 0 : index
    %c0_149 = arith.constant 0 : index
    %c0_150 = arith.constant 0 : index
    %122 = vector.load %arg12[%c0_147, %c0_148, %c0_149, %c0_150] : memref<2x8x16x128xf32, #tpu.memory_space<vmem>>, vector<2x8x16x128xf32>
    tpu.vector_store %arg12[%c0_147, %c0_148, %c0_149, %c0_150], %121 {strides = array<i32>} : memref<2x8x16x128xf32, #tpu.memory_space<vmem>>, vector<2x8x16x128xf32>,
    %c0_151 = arith.constant 0 : index
    %c0_152 = arith.constant 0 : index
    %c0_153 = arith.constant 0 : index
    %c0_154 = arith.constant 0 : index
    %123 = tpu.strided_load %arg12[%c0_151, %c0_152, %c0_153, %c0_154] {strides = array<i32: 1, 1, 2, 1>} : memref<2x8x16x128xf32, #tpu.memory_space<vmem>>, vector<2x8x8x128xf32>
    %c0_155 = arith.constant 0 : index
    %c0_156 = arith.constant 0 : index
    %c1_157 = arith.constant 1 : index
    %c0_158 = arith.constant 0 : index
    %124 = tpu.strided_load %arg12[%c0_155, %c0_156, %c1_157, %c0_158] {strides = array<i32: 1, 1, 2, 1>} : memref<2x8x16x128xf32, #tpu.memory_space<vmem>>, vector<2x8x8x128xf32>
    %125 = arith.maximumf %123, %124 : vector<2x8x8x128xf32>
    %c0_159 = arith.constant 0 : index
    %c0_160 = arith.constant 0 : index
    %c0_161 = arith.constant 0 : index
    %c0_162 = arith.constant 0 : index
    %126 = vector.load %arg8[%c0_159, %c0_160, %c0_161, %c0_162] : memref<2x8x8x128xf32, #tpu.memory_space<vmem>>, vector<2x8x8x128xf32>
    tpu.vector_store %arg8[%c0_159, %c0_160, %c0_161, %c0_162], %125 {strides = array<i32>} : memref<2x8x8x128xf32, #tpu.memory_space<vmem>>, vector<2x8x8x128xf32>,
    return
  }
  func.func @transform_0(%arg0: i32) -> (i32, i32, i32, i32) {
    %c0_i32 = arith.constant 0 : i32
    %c0_i32_0 = arith.constant 0 : i32
    %c0_i32_1 = arith.constant 0 : i32
    %c0_i32_2 = arith.constant 0 : i32
    %c0_i32_3 = arith.constant 0 : i32
    return %c0_i32, %c0_i32_0, %c0_i32_1, %c0_i32_2 : i32, i32, i32, i32
  }
  func.func @transform_1(%arg0: i32) -> (i32, i32) {
    %c0_i32 = arith.constant 0 : i32
    %c0_i32_0 = arith.constant 0 : i32
    %c0_i32_1 = arith.constant 0 : i32
    return %c0_i32, %c0_i32_0 : i32, i32
  }
  func.func @transform_2(%arg0: i32) -> (i32, i32) {
    %c0_i32 = arith.constant 0 : i32
    %c0_i32_0 = arith.constant 0 : i32
    %c0_i32_1 = arith.constant 0 : i32
    return %c0_i32, %c0_i32_0 : i32, i32
  }
  func.func @transform_3(%arg0: i32) -> (i32, i32) {
    %c0_i32 = arith.constant 0 : i32
    %c0_i32_0 = arith.constant 0 : i32
    %c0_i32_1 = arith.constant 0 : i32
    return %c0_i32, %c0_i32_0 : i32, i32
  }
  func.func @transform_4(%arg0: i32) -> (i32, i32) {
    %c0_i32 = arith.constant 0 : i32
    %c0_i32_0 = arith.constant 0 : i32
    %c0_i32_1 = arith.constant 0 : i32
    return %c0_i32, %c0_i32_0 : i32, i32
  }
  func.func @transform_5(%arg0: i32) -> (i32, i32) {
    %c0_i32 = arith.constant 0 : i32
    %c0_i32_0 = arith.constant 0 : i32
    %c0_i32_1 = arith.constant 0 : i32
    return %c0_i32, %c0_i32_0 : i32, i32
  }
  func.func @transform_6(%arg0: i32) -> (i32, i32) {
    %c0_i32 = arith.constant 0 : i32
    %c0_i32_0 = arith.constant 0 : i32
    %c0_i32_1 = arith.constant 0 : i32
    return %c0_i32, %c0_i32_0 : i32, i32
  }
  func.func @transform_7(%arg0: i32) -> (i32, i32, i32, i32) {
    %c0_i32 = arith.constant 0 : i32
    %c0_i32_0 = arith.constant 0 : i32
    %c0_i32_1 = arith.constant 0 : i32
    %c0_i32_2 = arith.constant 0 : i32
    %c0_i32_3 = arith.constant 0 : i32
    return %c0_i32, %c0_i32_0, %c0_i32_1, %c0_i32_2 : i32, i32, i32, i32
  }
  func.func @transform_8(%arg0: i32) -> (i32, i32, i32, i32) {
    %c0_i32 = arith.constant 0 : i32
    %c0_i32_0 = arith.constant 0 : i32
    %c0_i32_1 = arith.constant 0 : i32
    %c0_i32_2 = arith.constant 0 : i32
    %c0_i32_3 = arith.constant 0 : i32
    return %c0_i32, %c0_i32_0, %c0_i32_1, %c0_i32_2 : i32, i32, i32, i32
  }
}

</mosaic_0001>

<llo_original>
// kernel: tpu_custom_call.1
$region0: #{tpu_custom_call.1}
  #allocation0 [shape = 'u32[]', space=smem, size = 0x4, offset = 0x4, fixed_abs, tag = 'smem constant byte address 0x4 - core index']
  #allocation1 [shape = 'u32[72,128]{1,0:T(1,128)}', space=vmem, size = 0x9000, scoped, tag = 'internal scratch']
  #allocation2 [shape = 'f32[2,18,18,4]{3,2,1,0:T(8,128)}', space=vmem, size = 0x6c000, scoped, tag = 'scratch operand']
  #allocation3 [shape = 'f32[2,18,18,128]{3,2,1,0:T(8,128)}', space=vmem, size = 0x6c000, scoped, tag = 'scratch operand']
  #allocation4 [shape = 'f32[2,8,16,128]{3,2,1,0:T(8,128)}', space=vmem, size = 0x20000, scoped, tag = 'scratch operand']
  %s0 = inlined_call_operand.vmem [shape: f32[2,16,16,4], index: 0, kind: input, shape index: {}]
  %s1 = inlined_call_operand.vmem [shape: f32[36,128], index: 1, kind: input, shape index: {}]
  %s2 = inlined_call_operand.hbm [shape: f32[1152,128], index: 2, kind: input, shape index: {}]
  %s3 = inlined_call_operand.vmem [shape: f32[1,128], index: 3, kind: input, shape index: {}]
  %s4 = inlined_call_operand.vmem [shape: f32[1,128], index: 4, kind: input, shape index: {}]
  %s5 = inlined_call_operand.vmem [shape: f32[1,128], index: 5, kind: input, shape index: {}]
  %s6 = inlined_call_operand.vmem [shape: f32[1,128], index: 6, kind: input, shape index: {}]
  %s7 = inlined_call_operand.hbm [shape: f32[2,8,8,128], index: 7, kind: output, shape index: {0}]
  %s8 = inlined_call_operand.hbm [shape: f32[2,16,16,128], index: 8, kind: output, shape index: {1}]
  %9 = xla_tuple %s7, %s8
  %s10 = sld [smem:[#allocation0]]
  $region50: #{tpu_custom_call.1} parent=0
    _
  %s12 = ssub.s32 1, %s10
  %s13 = scalar_select 0, %s12, %s10
  $region1: #{tpu_custom_call.1} parent=0
    #allocation5 [shape = 'u8[589824]{0}', space=vmem, size = 0x90000, scoped, tag = 'input window, operand 2, single buffered']
    #allocation6 [shape = 's32[1]{0}', space=sflag, size = 0x4, scoped, tag = 'scoped memory for tpu_custom_call.1']
    #allocation7 [shape = 's32[1]{0}', space=sflag, size = 0x4, scoped, tag = 'scoped memory for tpu_custom_call.1']
    #allocation8 [shape = 'u8[65536]{0}', space=vmem, size = 0x10000, scoped, tag = 'output window, operand 0, single buffered']
    #allocation9 [shape = 'u8[262144]{0}', space=vmem, size = 0x40000, scoped, tag = 'output window, operand 1, single buffered']
    #allocation10 [shape = 's32[1]{0}', space=sflag, size = 0x4, scoped, tag = 'scoped memory for tpu_custom_call.1']
    %14 = vsyncpa [#allocation6], 0
    %15 = vsyncpa [#allocation7], 0
    %16 = vsyncpa [#allocation10], 0
    // Predicated region
    $region2: #{tpu_custom_call.1} parent=1 // pred_check
      _
    $region3: #{tpu_custom_call.1} parent=1 // pred_check_branch
      %18 = sbr.rel (0) target = $region5
    $region4: #{tpu_custom_call.1} parent=1 // pred_region
      _
    $region5: #{tpu_custom_call.1} parent=1 // pred_fallthru
      _
    // Predicated region
    $region6: #{tpu_custom_call.1} parent=1 // pred_check
      _
    $region7: #{tpu_custom_call.1} parent=1 // pred_check_branch
      %20 = sbr.rel (0) target = $region9
    $region8: #{tpu_custom_call.1} parent=1 // pred_region
      _
    $region9: #{tpu_custom_call.1} parent=1 // pred_fallthru
      _
    // Predicated region
    $region10: #{tpu_custom_call.1} parent=1 // pred_check
      _
    $region11: #{tpu_custom_call.1} parent=1 // pred_check_branch
      %22 = sbr.rel (0) target = $region13
    $region12: #{tpu_custom_call.1} parent=1 // pred_region
      %24 = vsyncadd [#allocation6], 0
      %s25 = sshll.u32 %s2, 4
      %s26 = int_to_ptr.hbm [resolvable:$true] %s25
      %s27 = sshll.u32 [#allocation5], 4
      %s28 = int_to_ptr.vmem [resolvable:$true] %s27
      %33 = dma.hbm_to_vmem [thread:$0]  %s26, 18432, %s28, [#allocation6], 128, 128, 8
    $region13: #{tpu_custom_call.1} parent=1 // pred_fallthru
      _
    // Predicated region
    $region14: #{tpu_custom_call.1} parent=1 // pred_check
      _
    $region15: #{tpu_custom_call.1} parent=1 // pred_check_branch
      %35 = sbr.rel (0) target = $region17
    $region16: #{tpu_custom_call.1} parent=1 // pred_region
      _
    $region17: #{tpu_custom_call.1} parent=1 // pred_fallthru
      _
    // Predicated region
    $region18: #{tpu_custom_call.1} parent=1 // pred_check
      _
    $region19: #{tpu_custom_call.1} parent=1 // pred_check_branch
      %37 = sbr.rel (0) target = $region21
    $region20: #{tpu_custom_call.1} parent=1 // pred_region
      _
    $region21: #{tpu_custom_call.1} parent=1 // pred_fallthru
      _
    // Predicated region
    $region22: #{tpu_custom_call.1} parent=1 // pred_check
      _
    $region23: #{tpu_custom_call.1} parent=1 // pred_check_branch
      %39 = sbr.rel (0) target = $region25
    $region24: #{tpu_custom_call.1} parent=1 // pred_region
      _
    $region25: #{tpu_custom_call.1} parent=1 // pred_fallthru
      _
    // Predicated region
    $region26: #{tpu_custom_call.1} parent=1 // pred_check
      _
    $region27: #{tpu_custom_call.1} parent=1 // pred_check_branch
      %41 = sbr.rel (0) target = $region29
    $region28: #{tpu_custom_call.1} parent=1 // pred_region
      _
    $region29: #{tpu_custom_call.1} parent=1 // pred_fallthru
      _
    // Predicated region
    $region30: #{tpu_custom_call.1} parent=1 // pred_check
      _
    $region31: #{tpu_custom_call.1} parent=1 // pred_check_branch
      %43 = sbr.rel (0) target = $region33
    $region32: #{tpu_custom_call.1} parent=1 // pred_region
      %45 = dma.done [#allocation6], 18432
    $region33: #{tpu_custom_call.1} parent=1 // pred_fallthru
      _
    %v46 = vld [vmem:[%s0] sm:$0xff]
    %v47 = vld [vmem:[%s0 + $0x8] sm:$0xff]
    %v48 = vld [vmem:[%s0 + $0x10] sm:$0xff]
    %v49 = vld [vmem:[%s0 + $0x18] sm:$0xff]
    %v50 = vld [vmem:[%s0 + $0x20] sm:$0xff]
    %v51 = vld [vmem:[%s0 + $0x28] sm:$0xff]
    %v52 = vld [vmem:[%s0 + $0x30] sm:$0xff]
    %v53 = vld [vmem:[%s0 + $0x38] sm:$0xff]
    %v54 = vld [vmem:[%s0 + $0x40] sm:$0xff]
    %v55 = vld [vmem:[%s0 + $0x48] sm:$0xff]
    %v56 = vld [vmem:[%s0 + $0x50] sm:$0xff]
    %v57 = vld [vmem:[%s0 + $0x58] sm:$0xff]
    %v58 = vld [vmem:[%s0 + $0x60] sm:$0xff]
    %v59 = vld [vmem:[%s0 + $0x68] sm:$0xff]
    %v60 = vld [vmem:[%s0 + $0x70] sm:$0xff]
    %v61 = vld [vmem:[%s0 + $0x78] sm:$0xff]
    %v62 = vld [vmem:[%s0 + $0x80] sm:$0xff]
    %v63 = vld [vmem:[%s0 + $0x88] sm:$0xff]
    %v64 = vld [vmem:[%s0 + $0x90] sm:$0xff]
    %v65 = vld [vmem:[%s0 + $0x98] sm:$0xff]
    %v66 = vld [vmem:[%s0 + $0xa0] sm:$0xff]
    %v67 = vld [vmem:[%s0 + $0xa8] sm:$0xff]
    %v68 = vld [vmem:[%s0 + $0xb0] sm:$0xff]
    %v69 = vld [vmem:[%s0 + $0xb8] sm:$0xff]
    %v70 = vld [vmem:[%s0 + $0xc0] sm:$0xff]
    %v71 = vld [vmem:[%s0 + $0xc8] sm:$0xff]
    %v72 = vld [vmem:[%s0 + $0xd0] sm:$0xff]
    %v73 = vld [vmem:[%s0 + $0xd8] sm:$0xff]
    %v74 = vld [vmem:[%s0 + $0xe0] sm:$0xff]
    %v75 = vld [vmem:[%s0 + $0xe8] sm:$0xff]
    %v76 = vld [vmem:[%s0 + $0xf0] sm:$0xff]
    %v77 = vld [vmem:[%s0 + $0xf8] sm:$0xff]
    %v78 = vld [vmem:[%s0 + $0x100] sm:$0xff]
    %v79 = vld [vmem:[%s0 + $0x108] sm:$0xff]
    %v80 = vld [vmem:[%s0 + $0x110] sm:$0xff]
    %v81 = vld [vmem:[%s0 + $0x118] sm:$0xff]
    %v82 = vld [vmem:[%s0 + $0x120] sm:$0xff]
    %v83 = vld [vmem:[%s0 + $0x128] sm:$0xff]
    %v84 = vld [vmem:[%s0 + $0x130] sm:$0xff]
    %v85 = vld [vmem:[%s0 + $0x138] sm:$0xff]
    %v86 = vld [vmem:[%s0 + $0x140] sm:$0xff]
    %v87 = vld [vmem:[%s0 + $0x148] sm:$0xff]
    %v88 = vld [vmem:[%s0 + $0x150] sm:$0xff]
    %v89 = vld [vmem:[%s0 + $0x158] sm:$0xff]
    %v90 = vld [vmem:[%s0 + $0x160] sm:$0xff]
    %v91 = vld [vmem:[%s0 + $0x168] sm:$0xff]
    %v92 = vld [vmem:[%s0 + $0x170] sm:$0xff]
    %v93 = vld [vmem:[%s0 + $0x178] sm:$0xff]
    %v94 = vld [vmem:[%s0 + $0x180] sm:$0xff]
    %v95 = vld [vmem:[%s0 + $0x188] sm:$0xff]
    %v96 = vld [vmem:[%s0 + $0x190] sm:$0xff]
    %v97 = vld [vmem:[%s0 + $0x198] sm:$0xff]
    %v98 = vld [vmem:[%s0 + $0x1a0] sm:$0xff]
    %v99 = vld [vmem:[%s0 + $0x1a8] sm:$0xff]
    %v100 = vld [vmem:[%s0 + $0x1b0] sm:$0xff]
    %v101 = vld [vmem:[%s0 + $0x1b8] sm:$0xff]
    %v102 = vld [vmem:[%s0 + $0x1c0] sm:$0xff]
    %v103 = vld [vmem:[%s0 + $0x1c8] sm:$0xff]
    %v104 = vld [vmem:[%s0 + $0x1d0] sm:$0xff]
    %v105 = vld [vmem:[%s0 + $0x1d8] sm:$0xff]
    %v106 = vld [vmem:[%s0 + $0x1e0] sm:$0xff]
    %v107 = vld [vmem:[%s0 + $0x1e8] sm:$0xff]
    %v108 = vld [vmem:[%s0 + $0x1f0] sm:$0xff]
    %v109 = vld [vmem:[%s0 + $0x1f8] sm:$0xff]
    %vm110 = vcmask 31744
    %111 = vst.msk [vmem:[#allocation2] sm:$0xff] %vm110, 0.0
    %112 = vst.msk [vmem:[#allocation2 + $0x8] sm:$0xff] %vm110, 0.0
    %vm113 = vcmask 25600
    %114 = vst.msk [vmem:[#allocation2 + $0x10] sm:$0x3] %vm113, 0.0
    %115 = vst.msk [vmem:[#allocation2 + $0x1b0] sm:$0xff] %vm110, 0.0
    %116 = vst.msk [vmem:[#allocation2 + $0x1b8] sm:$0xff] %vm110, 0.0
    %117 = vst.msk [vmem:[#allocation2 + $0x1c0] sm:$0x3] %vm113, 0.0
    %s118 = scalar_lea.vmem [#allocation2], 408
    %119 = vst.msk [vmem:[%s118] sm:$0xff] %vm110, 0.0
    %120 = vst.msk [vmem:[%s118 + $0x8] sm:$0xff] %vm110, 0.0
    %121 = vst.msk [vmem:[%s118 + $0x10] sm:$0x3] %vm113, 0.0
    %122 = vst.msk [vmem:[%s118 + $0x1b0] sm:$0xff] %vm110, 0.0
    %123 = vst.msk [vmem:[%s118 + $0x1b8] sm:$0xff] %vm110, 0.0
    %124 = vst.msk [vmem:[%s118 + $0x1c0] sm:$0x3] %vm113, 0.0
    %vm125 = vcmask 24576
    %126 = vst.msk [vmem:[#allocation2] sm:$0x1] %vm125, 0.0
    %127 = vst.msk [vmem:[#allocation2 + $0x18] sm:$0x1] %vm125, 0.0
    %128 = vst.msk [vmem:[#allocation2 + $0x30] sm:$0x1] %vm125, 0.0
    %129 = vst.msk [vmem:[#allocation2 + $0x48] sm:$0x1] %vm125, 0.0
    %130 = vst.msk [vmem:[#allocation2 + $0x60] sm:$0x1] %vm125, 0.0
    %131 = vst.msk [vmem:[#allocation2 + $0x78] sm:$0x1] %vm125, 0.0
    %132 = vst.msk [vmem:[#allocation2 + $0x90] sm:$0x1] %vm125, 0.0
    %133 = vst.msk [vmem:[#allocation2 + $0xa8] sm:$0x1] %vm125, 0.0
    %134 = vst.msk [vmem:[#allocation2 + $0xc0] sm:$0x1] %vm125, 0.0
    %135 = vst.msk [vmem:[#allocation2 + $0xd8] sm:$0x1] %vm125, 0.0
    %136 = vst.msk [vmem:[#allocation2 + $0xf0] sm:$0x1] %vm125, 0.0
    %137 = vst.msk [vmem:[#allocation2 + $0x108] sm:$0x1] %vm125, 0.0
    %138 = vst.msk [vmem:[#allocation2 + $0x120] sm:$0x1] %vm125, 0.0
    %139 = vst.msk [vmem:[#allocation2 + $0x138] sm:$0x1] %vm125, 0.0
    %140 = vst.msk [vmem:[#allocation2 + $0x150] sm:$0x1] %vm125, 0.0
    %141 = vst.msk [vmem:[#allocation2 + $0x168] sm:$0x1] %vm125, 0.0
    %142 = vst.msk [vmem:[#allocation2 + $0x180] sm:$0x1] %vm125, 0.0
    %143 = vst.msk [vmem:[#allocation2 + $0x198] sm:$0x1] %vm125, 0.0
    %144 = vst.msk [vmem:[#allocation2 + $0x1b0] sm:$0x1] %vm125, 0.0
    %145 = vst.msk [vmem:[#allocation2 + $0x1c8] sm:$0x1] %vm125, 0.0
    %146 = vst.msk [vmem:[#allocation2 + $0x1e0] sm:$0x1] %vm125, 0.0
    %147 = vst.msk [vmem:[#allocation2 + $0x1f8] sm:$0x1] %vm125, 0.0
    %148 = vst.msk [vmem:[#allocation2 + $0x210] sm:$0x1] %vm125, 0.0
    %149 = vst.msk [vmem:[#allocation2 + $0x228] sm:$0x1] %vm125, 0.0
    %150 = vst.msk [vmem:[#allocation2 + $0x240] sm:$0x1] %vm125, 0.0
    %151 = vst.msk [vmem:[#allocation2 + $0x258] sm:$0x1] %vm125, 0.0
    %152 = vst.msk [vmem:[#allocation2 + $0x270] sm:$0x1] %vm125, 0.0
    %153 = vst.msk [vmem:[#allocation2 + $0x288] sm:$0x1] %vm125, 0.0
    %154 = vst.msk [vmem:[#allocation2 + $0x2a0] sm:$0x1] %vm125, 0.0
    %155 = vst.msk [vmem:[#allocation2 + $0x2b8] sm:$0x1] %vm125, 0.0
    %156 = vst.msk [vmem:[#allocation2 + $0x2d0] sm:$0x1] %vm125, 0.0
    %157 = vst.msk [vmem:[#allocation2 + $0x2e8] sm:$0x1] %vm125, 0.0
    %158 = vst.msk [vmem:[#allocation2 + $0x300] sm:$0x1] %vm125, 0.0
    %159 = vst.msk [vmem:[#allocation2 + $0x318] sm:$0x1] %vm125, 0.0
    %160 = vst.msk [vmem:[#allocation2 + $0x330] sm:$0x1] %vm125, 0.0
    %161 = vst.msk [vmem:[#allocation2 + $0x348] sm:$0x1] %vm125, 0.0
    %162 = vst.msk [vmem:[#allocation2 + $0x11] sm:$0x1] %vm125, 0.0
    %163 = vst.msk [vmem:[#allocation2 + $0x29] sm:$0x1] %vm125, 0.0
    %164 = vst.msk [vmem:[#allocation2 + $0x41] sm:$0x1] %vm125, 0.0
    %165 = vst.msk [vmem:[#allocation2 + $0x59] sm:$0x1] %vm125, 0.0
    %166 = vst.msk [vmem:[#allocation2 + $0x71] sm:$0x1] %vm125, 0.0
    %167 = vst.msk [vmem:[#allocation2 + $0x89] sm:$0x1] %vm125, 0.0
    %168 = vst.msk [vmem:[#allocation2 + $0xa1] sm:$0x1] %vm125, 0.0
    %169 = vst.msk [vmem:[#allocation2 + $0xb9] sm:$0x1] %vm125, 0.0
    %170 = vst.msk [vmem:[#allocation2 + $0xd1] sm:$0x1] %vm125, 0.0
    %171 = vst.msk [vmem:[#allocation2 + $0xe9] sm:$0x1] %vm125, 0.0
    %172 = vst.msk [vmem:[#allocation2 + $0x101] sm:$0x1] %vm125, 0.0
    %173 = vst.msk [vmem:[#allocation2 + $0x119] sm:$0x1] %vm125, 0.0
    %174 = vst.msk [vmem:[#allocation2 + $0x131] sm:$0x1] %vm125, 0.0
    %175 = vst.msk [vmem:[#allocation2 + $0x149] sm:$0x1] %vm125, 0.0
    %176 = vst.msk [vmem:[#allocation2 + $0x161] sm:$0x1] %vm125, 0.0
    %177 = vst.msk [vmem:[#allocation2 + $0x179] sm:$0x1] %vm125, 0.0
    %178 = vst.msk [vmem:[#allocation2 + $0x191] sm:$0x1] %vm125, 0.0
    %179 = vst.msk [vmem:[#allocation2 + $0x1a9] sm:$0x1] %vm125, 0.0
    %180 = vst.msk [vmem:[#allocation2 + $0x1c1] sm:$0x1] %vm125, 0.0
    %181 = vst.msk [vmem:[#allocation2 + $0x1d9] sm:$0x1] %vm125, 0.0
    %182 = vst.msk [vmem:[#allocation2 + $0x1f1] sm:$0x1] %vm125, 0.0
    %183 = vst.msk [vmem:[#allocation2 + $0x209] sm:$0x1] %vm125, 0.0
    %184 = vst.msk [vmem:[#allocation2 + $0x221] sm:$0x1] %vm125, 0.0
    %185 = vst.msk [vmem:[#allocation2 + $0x239] sm:$0x1] %vm125, 0.0
    %186 = vst.msk [vmem:[#allocation2 + $0x251] sm:$0x1] %vm125, 0.0
    %187 = vst.msk [vmem:[#allocation2 + $0x269] sm:$0x1] %vm125, 0.0
    %188 = vst.msk [vmem:[#allocation2 + $0x281] sm:$0x1] %vm125, 0.0
    %189 = vst.msk [vmem:[#allocation2 + $0x299] sm:$0x1] %vm125, 0.0
    %190 = vst.msk [vmem:[#allocation2 + $0x2b1] sm:$0x1] %vm125, 0.0
    %191 = vst.msk [vmem:[#allocation2 + $0x2c9] sm:$0x1] %vm125, 0.0
    %192 = vst.msk [vmem:[#allocation2 + $0x2e1] sm:$0x1] %vm125, 0.0
    %193 = vst.msk [vmem:[#allocation2 + $0x2f9] sm:$0x1] %vm125, 0.0
    %194 = vst.msk [vmem:[#allocation2 + $0x311] sm:$0x1] %vm125, 0.0
    %195 = vst.msk [vmem:[#allocation2 + $0x329] sm:$0x1] %vm125, 0.0
    %196 = vst.msk [vmem:[#allocation2 + $0x341] sm:$0x1] %vm125, 0.0
    %197 = vst.msk [vmem:[#allocation2 + $0x359] sm:$0x1] %vm125, 0.0
    %s198 = scalar_lea.vmem [#allocation2], 24
    %199 = vst.msk [vmem:[%s198 + $0x1] sm:$0xff] %vm110, %v46
    %200 = vst.msk [vmem:[%s198 + $0x9] sm:$0xff] %vm110, %v47
    %201 = vst.msk [vmem:[%s198 + $0x19] sm:$0xff] %vm110, %v48
    %202 = vst.msk [vmem:[%s198 + $0x21] sm:$0xff] %vm110, %v49
    %203 = vst.msk [vmem:[%s198 + $0x31] sm:$0xff] %vm110, %v50
    %204 = vst.msk [vmem:[%s198 + $0x39] sm:$0xff] %vm110, %v51
    %205 = vst.msk [vmem:[%s198 + $0x49] sm:$0xff] %vm110, %v52
    %206 = vst.msk [vmem:[%s198 + $0x51] sm:$0xff] %vm110, %v53
    %207 = vst.msk [vmem:[%s198 + $0x61] sm:$0xff] %vm110, %v54
    %208 = vst.msk [vmem:[%s198 + $0x69] sm:$0xff] %vm110, %v55
    %209 = vst.msk [vmem:[%s198 + $0x79] sm:$0xff] %vm110, %v56
    %210 = vst.msk [vmem:[%s198 + $0x81] sm:$0xff] %vm110, %v57
    %211 = vst.msk [vmem:[%s198 + $0x91] sm:$0xff] %vm110, %v58
    %212 = vst.msk [vmem:[%s198 + $0x99] sm:$0xff] %vm110, %v59
    %213 = vst.msk [vmem:[%s198 + $0xa9] sm:$0xff] %vm110, %v60
    %214 = vst.msk [vmem:[%s198 + $0xb1] sm:$0xff] %vm110, %v61
    %215 = vst.msk [vmem:[%s198 + $0xc1] sm:$0xff] %vm110, %v62
    %216 = vst.msk [vmem:[%s198 + $0xc9] sm:$0xff] %vm110, %v63
    %217 = vst.msk [vmem:[%s198 + $0xd9] sm:$0xff] %vm110, %v64
    %218 = vst.msk [vmem:[%s198 + $0xe1] sm:$0xff] %vm110, %v65
    %219 = vst.msk [vmem:[%s198 + $0xf1] sm:$0xff] %vm110, %v66
    %220 = vst.msk [vmem:[%s198 + $0xf9] sm:$0xff] %vm110, %v67
    %221 = vst.msk [vmem:[%s198 + $0x109] sm:$0xff] %vm110, %v68
    %222 = vst.msk [vmem:[%s198 + $0x111] sm:$0xff] %vm110, %v69
    %223 = vst.msk [vmem:[%s198 + $0x121] sm:$0xff] %vm110, %v70
    %224 = vst.msk [vmem:[%s198 + $0x129] sm:$0xff] %vm110, %v71
    %225 = vst.msk [vmem:[%s198 + $0x139] sm:$0xff] %vm110, %v72
    %226 = vst.msk [vmem:[%s198 + $0x141] sm:$0xff] %vm110, %v73
    %227 = vst.msk [vmem:[%s198 + $0x151] sm:$0xff] %vm110, %v74
    %228 = vst.msk [vmem:[%s198 + $0x159] sm:$0xff] %vm110, %v75
    %229 = vst.msk [vmem:[%s198 + $0x169] sm:$0xff] %vm110, %v76
    %230 = vst.msk [vmem:[%s198 + $0x171] sm:$0xff] %vm110, %v77
    %231 = vst.msk [vmem:[%s198 + $0x1b1] sm:$0xff] %vm110, %v78
    %232 = vst.msk [vmem:[%s198 + $0x1b9] sm:$0xff] %vm110, %v79
    %233 = vst.msk [vmem:[%s198 + $0x1c9] sm:$0xff] %vm110, %v80
    %234 = vst.msk [vmem:[%s198 + $0x1d1] sm:$0xff] %vm110, %v81
    %235 = vst.msk [vmem:[%s198 + $0x1e1] sm:$0xff] %vm110, %v82
    %236 = vst.msk [vmem:[%s198 + $0x1e9] sm:$0xff] %vm110, %v83
    %237 = vst.msk [vmem:[%s198 + $0x1f9] sm:$0xff] %vm110, %v84
    %238 = vst.msk [vmem:[%s198 + $0x201] sm:$0xff] %vm110, %v85
    %239 = vst.msk [vmem:[%s198 + $0x211] sm:$0xff] %vm110, %v86
    %240 = vst.msk [vmem:[%s198 + $0x219] sm:$0xff] %vm110, %v87
    %241 = vst.msk [vmem:[%s198 + $0x229] sm:$0xff] %vm110, %v88
    %242 = vst.msk [vmem:[%s198 + $0x231] sm:$0xff] %vm110, %v89
    %243 = vst.msk [vmem:[%s198 + $0x241] sm:$0xff] %vm110, %v90
    %244 = vst.msk [vmem:[%s198 + $0x249] sm:$0xff] %vm110, %v91
    %245 = vst.msk [vmem:[%s198 + $0x259] sm:$0xff] %vm110, %v92
    %246 = vst.msk [vmem:[%s198 + $0x261] sm:$0xff] %vm110, %v93
    %247 = vst.msk [vmem:[%s198 + $0x271] sm:$0xff] %vm110, %v94
    %248 = vst.msk [vmem:[%s198 + $0x279] sm:$0xff] %vm110, %v95
    %249 = vst.msk [vmem:[%s198 + $0x289] sm:$0xff] %vm110, %v96
    %250 = vst.msk [vmem:[%s198 + $0x291] sm:$0xff] %vm110, %v97
    %251 = vst.msk [vmem:[%s198 + $0x2a1] sm:$0xff] %vm110, %v98
    %252 = vst.msk [vmem:[%s198 + $0x2a9] sm:$0xff] %vm110, %v99
    %253 = vst.msk [vmem:[%s198 + $0x2b9] sm:$0xff] %vm110, %v100
    %254 = vst.msk [vmem:[%s198 + $0x2c1] sm:$0xff] %vm110, %v101
    %255 = vst.msk [vmem:[%s198 + $0x2d1] sm:$0xff] %vm110, %v102
    %256 = vst.msk [vmem:[%s198 + $0x2d9] sm:$0xff] %vm110, %v103
    %257 = vst.msk [vmem:[%s198 + $0x2e9] sm:$0xff] %vm110, %v104
    %258 = vst.msk [vmem:[%s198 + $0x2f1] sm:$0xff] %vm110, %v105
    %259 = vst.msk [vmem:[%s198 + $0x301] sm:$0xff] %vm110, %v106
    %260 = vst.msk [vmem:[%s198 + $0x309] sm:$0xff] %vm110, %v107
    %261 = vst.msk [vmem:[%s198 + $0x319] sm:$0xff] %vm110, %v108
    %262 = vst.msk [vmem:[%s198 + $0x321] sm:$0xff] %vm110, %v109
    %v263 = vld [vmem:[#allocation2] sm:$0xff]
    %v264 = vld [vmem:[#allocation2 + $0x8] sm:$0xff]
    %v265 = vld [vmem:[#allocation2 + $0x18] sm:$0xff]
    %v266 = vld [vmem:[#allocation2 + $0x20] sm:$0xff]
    %v267 = vld [vmem:[#allocation2 + $0x30] sm:$0xff]
    %v268 = vld [vmem:[#allocation2 + $0x38] sm:$0xff]
    %v269 = vld [vmem:[#allocation2 + $0x48] sm:$0xff]
    %v270 = vld [vmem:[#allocation2 + $0x50] sm:$0xff]
    %v271 = vld [vmem:[#allocation2 + $0x60] sm:$0xff]
    %v272 = vld [vmem:[#allocation2 + $0x68] sm:$0xff]
    %v273 = vld [vmem:[#allocation2 + $0x78] sm:$0xff]
    %v274 = vld [vmem:[#allocation2 + $0x80] sm:$0xff]
    %v275 = vld [vmem:[#allocation2 + $0x90] sm:$0xff]
    %v276 = vld [vmem:[#allocation2 + $0x98] sm:$0xff]
    %v277 = vld [vmem:[#allocation2 + $0xa8] sm:$0xff]
    %v278 = vld [vmem:[#allocation2 + $0xb0] sm:$0xff]
    %v279 = vld [vmem:[#allocation2 + $0xc0] sm:$0xff]
    %v280 = vld [vmem:[#allocation2 + $0xc8] sm:$0xff]
    %v281 = vld [vmem:[#allocation2 + $0xd8] sm:$0xff]
    %v282 = vld [vmem:[#allocation2 + $0xe0] sm:$0xff]
    %v283 = vld [vmem:[#allocation2 + $0xf0] sm:$0xff]
    %v284 = vld [vmem:[#allocation2 + $0xf8] sm:$0xff]
    %v285 = vld [vmem:[#allocation2 + $0x108] sm:$0xff]
    %v286 = vld [vmem:[#allocation2 + $0x110] sm:$0xff]
    %v287 = vld [vmem:[#allocation2 + $0x120] sm:$0xff]
    %v288 = vld [vmem:[#allocation2 + $0x128] sm:$0xff]
    %v289 = vld [vmem:[#allocation2 + $0x138] sm:$0xff]
    %v290 = vld [vmem:[#allocation2 + $0x140] sm:$0xff]
    %v291 = vld [vmem:[#allocation2 + $0x150] sm:$0xff]
    %v292 = vld [vmem:[#allocation2 + $0x158] sm:$0xff]
    %v293 = vld [vmem:[#allocation2 + $0x168] sm:$0xff]
    %v294 = vld [vmem:[#allocation2 + $0x170] sm:$0xff]
    %v295 = vld [vmem:[#allocation2 + $0x1b0] sm:$0xff]
    %v296 = vld [vmem:[#allocation2 + $0x1b8] sm:$0xff]
    %v297 = vld [vmem:[#allocation2 + $0x1c8] sm:$0xff]
    %v298 = vld [vmem:[#allocation2 + $0x1d0] sm:$0xff]
    %v299 = vld [vmem:[#allocation2 + $0x1e0] sm:$0xff]
    %v300 = vld [vmem:[#allocation2 + $0x1e8] sm:$0xff]
    %v301 = vld [vmem:[#allocation2 + $0x1f8] sm:$0xff]
    %v302 = vld [vmem:[#allocation2 + $0x200] sm:$0xff]
    %v303 = vld [vmem:[#allocation2 + $0x210] sm:$0xff]
    %v304 = vld [vmem:[#allocation2 + $0x218] sm:$0xff]
    %v305 = vld [vmem:[#allocation2 + $0x228] sm:$0xff]
    %v306 = vld [vmem:[#allocation2 + $0x230] sm:$0xff]
    %v307 = vld [vmem:[#allocation2 + $0x240] sm:$0xff]
    %v308 = vld [vmem:[#allocation2 + $0x248] sm:$0xff]
    %v309 = vld [vmem:[#allocation2 + $0x258] sm:$0xff]
    %v310 = vld [vmem:[#allocation2 + $0x260] sm:$0xff]
    %v311 = vld [vmem:[#allocation2 + $0x270] sm:$0xff]
    %v312 = vld [vmem:[#allocation2 + $0x278] sm:$0xff]
    %v313 = vld [vmem:[#allocation2 + $0x288] sm:$0xff]
    %v314 = vld [vmem:[#allocation2 + $0x290] sm:$0xff]
    %v315 = vld [vmem:[#allocation2 + $0x2a0] sm:$0xff]
    %v316 = vld [vmem:[#allocation2 + $0x2a8] sm:$0xff]
    %v317 = vld [vmem:[#allocation2 + $0x2b8] sm:$0xff]
    %v318 = vld [vmem:[#allocation2 + $0x2c0] sm:$0xff]
    %v319 = vld [vmem:[#allocation2 + $0x2d0] sm:$0xff]
    %v320 = vld [vmem:[#allocation2 + $0x2d8] sm:$0xff]
    %v321 = vld [vmem:[#allocation2 + $0x2e8] sm:$0xff]
    %v322 = vld [vmem:[#allocation2 + $0x2f0] sm:$0xff]
    %v323 = vld [vmem:[#allocation2 + $0x300] sm:$0xff]
    %v324 = vld [vmem:[#allocation2 + $0x308] sm:$0xff]
    %v325 = vld [vmem:[#allocation2 + $0x318] sm:$0xff]
    %v326 = vld [vmem:[#allocation2 + $0x320] sm:$0xff]
    %v327 = vld [vmem:[#allocation2 + $0x1] sm:$0xff]
    %v328 = vld [vmem:[#allocation2 + $0x9] sm:$0xff]
    %v329 = vld [vmem:[#allocation2 + $0x19] sm:$0xff]
    %v330 = vld [vmem:[#allocation2 + $0x21] sm:$0xff]
    %v331 = vld [vmem:[#allocation2 + $0x31] sm:$0xff]
    %v332 = vld [vmem:[#allocation2 + $0x39] sm:$0xff]
    %v333 = vld [vmem:[#allocation2 + $0x49] sm:$0xff]
    %v334 = vld [vmem:[#allocation2 + $0x51] sm:$0xff]
    %v335 = vld [vmem:[#allocation2 + $0x61] sm:$0xff]
    %v336 = vld [vmem:[#allocation2 + $0x69] sm:$0xff]
    %v337 = vld [vmem:[#allocation2 + $0x79] sm:$0xff]
    %v338 = vld [vmem:[#allocation2 + $0x81] sm:$0xff]
    %v339 = vld [vmem:[#allocation2 + $0x91] sm:$0xff]
    %v340 = vld [vmem:[#allocation2 + $0x99] sm:$0xff]
    %v341 = vld [vmem:[#allocation2 + $0xa9] sm:$0xff]
    %v342 = vld [vmem:[#allocation2 + $0xb1] sm:$0xff]
    %v343 = vld [vmem:[#allocation2 + $0xc1] sm:$0xff]
    %v344 = vld [vmem:[#allocation2 + $0xc9] sm:$0xff]
    %v345 = vld [vmem:[#allocation2 + $0xd9] sm:$0xff]
    %v346 = vld [vmem:[#allocation2 + $0xe1] sm:$0xff]
    %v347 = vld [vmem:[#allocation2 + $0xf1] sm:$0xff]
    %v348 = vld [vmem:[#allocation2 + $0xf9] sm:$0xff]
    %v349 = vld [vmem:[#allocation2 + $0x109] sm:$0xff]
    %v350 = vld [vmem:[#allocation2 + $0x111] sm:$0xff]
    %v351 = vld [vmem:[#allocation2 + $0x121] sm:$0xff]
    %v352 = vld [vmem:[#allocation2 + $0x129] sm:$0xff]
    %v353 = vld [vmem:[#allocation2 + $0x139] sm:$0xff]
    %v354 = vld [vmem:[#allocation2 + $0x141] sm:$0xff]
    %v355 = vld [vmem:[#allocation2 + $0x151] sm:$0xff]
    %v356 = vld [vmem:[#allocation2 + $0x159] sm:$0xff]
    %v357 = vld [vmem:[#allocation2 + $0x169] sm:$0xff]
    %v358 = vld [vmem:[#allocation2 + $0x171] sm:$0xff]
    %v359 = vld [vmem:[#allocation2 + $0x1b1] sm:$0xff]
    %v360 = vld [vmem:[#allocation2 + $0x1b9] sm:$0xff]
    %v361 = vld [vmem:[#allocation2 + $0x1c9] sm:$0xff]
    %v362 = vld [vmem:[#allocation2 + $0x1d1] sm:$0xff]
    %v363 = vld [vmem:[#allocation2 + $0x1e1] sm:$0xff]
    %v364 = vld [vmem:[#allocation2 + $0x1e9] sm:$0xff]
    %v365 = vld [vmem:[#allocation2 + $0x1f9] sm:$0xff]
    %v366 = vld [vmem:[#allocation2 + $0x201] sm:$0xff]
    %v367 = vld [vmem:[#allocation2 + $0x211] sm:$0xff]
    %v368 = vld [vmem:[#allocation2 + $0x219] sm:$0xff]
    %v369 = vld [vmem:[#allocation2 + $0x229] sm:$0xff]
    %v370 = vld [vmem:[#allocation2 + $0x231] sm:$0xff]
    %v371 = vld [vmem:[#allocation2 + $0x241] sm:$0xff]
    %v372 = vld [vmem:[#allocation2 + $0x249] sm:$0xff]
    %v373 = vld [vmem:[#allocation2 + $0x259] sm:$0xff]
    %v374 = vld [vmem:[#allocation2 + $0x261] sm:$0xff]
    %v375 = vld [vmem:[#allocation2 + $0x271] sm:$0xff]
    %v376 = vld [vmem:[#allocation2 + $0x279] sm:$0xff]
    %v377 = vld [vmem:[#allocation2 + $0x289] sm:$0xff]
    %v378 = vld [vmem:[#allocation2 + $0x291] sm:$0xff]
    %v379 = vld [vmem:[#allocation2 + $0x2a1] sm:$0xff]
    %v380 = vld [vmem:[#allocation2 + $0x2a9] sm:$0xff]
    %v381 = vld [vmem:[#allocation2 + $0x2b9] sm:$0xff]
    %v382 = vld [vmem:[#allocation2 + $0x2c1] sm:$0xff]
    %v383 = vld [vmem:[#allocation2 + $0x2d1] sm:$0xff]
    %v384 = vld [vmem:[#allocation2 + $0x2d9] sm:$0xff]
    %v385 = vld [vmem:[#allocation2 + $0x2e9] sm:$0xff]
    %v386 = vld [vmem:[#allocation2 + $0x2f1] sm:$0xff]
    %v387 = vld [vmem:[#allocation2 + $0x301] sm:$0xff]
    %v388 = vld [vmem:[#allocation2 + $0x309] sm:$0xff]
    %v389 = vld [vmem:[#allocation2 + $0x319] sm:$0xff]
    %v390 = vld [vmem:[#allocation2 + $0x321] sm:$0xff]
    %v391 = vld [vmem:[#allocation2 + $0x2] sm:$0xff]
    %v392 = vld [vmem:[#allocation2 + $0xa] sm:$0xff]
    %v393 = vld [vmem:[#allocation2 + $0x1a] sm:$0xff]
    %v394 = vld [vmem:[#allocation2 + $0x22] sm:$0xff]
    %v395 = vld [vmem:[#allocation2 + $0x32] sm:$0xff]
    %v396 = vld [vmem:[#allocation2 + $0x3a] sm:$0xff]
    %v397 = vld [vmem:[#allocation2 + $0x4a] sm:$0xff]
    %v398 = vld [vmem:[#allocation2 + $0x52] sm:$0xff]
    %v399 = vld [vmem:[#allocation2 + $0x62] sm:$0xff]
    %v400 = vld [vmem:[#allocation2 + $0x6a] sm:$0xff]
    %v401 = vld [vmem:[#allocation2 + $0x7a] sm:$0xff]
    %v402 = vld [vmem:[#allocation2 + $0x82] sm:$0xff]
    %v403 = vld [vmem:[#allocation2 + $0x92] sm:$0xff]
    %v404 = vld [vmem:[#allocation2 + $0x9a] sm:$0xff]
    %v405 = vld [vmem:[#allocation2 + $0xaa] sm:$0xff]
    %v406 = vld [vmem:[#allocation2 + $0xb2] sm:$0xff]
    %v407 = vld [vmem:[#allocation2 + $0xc2] sm:$0xff]
    %v408 = vld [vmem:[#allocation2 + $0xca] sm:$0xff]
    %v409 = vld [vmem:[#allocation2 + $0xda] sm:$0xff]
    %v410 = vld [vmem:[#allocation2 + $0xe2] sm:$0xff]
    %v411 = vld [vmem:[#allocation2 + $0xf2] sm:$0xff]
    %v412 = vld [vmem:[#allocation2 + $0xfa] sm:$0xff]
    %v413 = vld [vmem:[#allocation2 + $0x10a] sm:$0xff]
    %v414 = vld [vmem:[#allocation2 + $0x112] sm:$0xff]
    %v415 = vld [vmem:[#allocation2 + $0x122] sm:$0xff]
    %v416 = vld [vmem:[#allocation2 + $0x12a] sm:$0xff]
    %v417 = vld [vmem:[#allocation2 + $0x13a] sm:$0xff]
    %v418 = vld [vmem:[#allocation2 + $0x142] sm:$0xff]
    %v419 = vld [vmem:[#allocation2 + $0x152] sm:$0xff]
    %v420 = vld [vmem:[#allocation2 + $0x15a] sm:$0xff]
    %v421 = vld [vmem:[#allocation2 + $0x16a] sm:$0xff]
    %v422 = vld [vmem:[#allocation2 + $0x172] sm:$0xff]
    %v423 = vld [vmem:[#allocation2 + $0x1b2] sm:$0xff]
    %v424 = vld [vmem:[#allocation2 + $0x1ba] sm:$0xff]
    %v425 = vld [vmem:[#allocation2 + $0x1ca] sm:$0xff]
    %v426 = vld [vmem:[#allocation2 + $0x1d2] sm:$0xff]
    %v427 = vld [vmem:[#allocation2 + $0x1e2] sm:$0xff]
    %v428 = vld [vmem:[#allocation2 + $0x1ea] sm:$0xff]
    %v429 = vld [vmem:[#allocation2 + $0x1fa] sm:$0xff]
    %v430 = vld [vmem:[#allocation2 + $0x202] sm:$0xff]
    %v431 = vld [vmem:[#allocation2 + $0x212] sm:$0xff]
    %v432 = vld [vmem:[#allocation2 + $0x21a] sm:$0xff]
    %v433 = vld [vmem:[#allocation2 + $0x22a] sm:$0xff]
    %v434 = vld [vmem:[#allocation2 + $0x232] sm:$0xff]
    %v435 = vld [vmem:[#allocation2 + $0x242] sm:$0xff]
    %v436 = vld [vmem:[#allocation2 + $0x24a] sm:$0xff]
    %v437 = vld [vmem:[#allocation2 + $0x25a] sm:$0xff]
    %v438 = vld [vmem:[#allocation2 + $0x262] sm:$0xff]
    %v439 = vld [vmem:[#allocation2 + $0x272] sm:$0xff]
    %v440 = vld [vmem:[#allocation2 + $0x27a] sm:$0xff]
    %v441 = vld [vmem:[#allocation2 + $0x28a] sm:$0xff]
    %v442 = vld [vmem:[#allocation2 + $0x292] sm:$0xff]
    %v443 = vld [vmem:[#allocation2 + $0x2a2] sm:$0xff]
    %v444 = vld [vmem:[#allocation2 + $0x2aa] sm:$0xff]
    %v445 = vld [vmem:[#allocation2 + $0x2ba] sm:$0xff]
    %v446 = vld [vmem:[#allocation2 + $0x2c2] sm:$0xff]
    %v447 = vld [vmem:[#allocation2 + $0x2d2] sm:$0xff]
    %v448 = vld [vmem:[#allocation2 + $0x2da] sm:$0xff]
    %v449 = vld [vmem:[#allocation2 + $0x2ea] sm:$0xff]
    %v450 = vld [vmem:[#allocation2 + $0x2f2] sm:$0xff]
    %v451 = vld [vmem:[#allocation2 + $0x302] sm:$0xff]
    %v452 = vld [vmem:[#allocation2 + $0x30a] sm:$0xff]
    %v453 = vld [vmem:[#allocation2 + $0x31a] sm:$0xff]
    %v454 = vld [vmem:[#allocation2 + $0x322] sm:$0xff]
    %v455 = vld [vmem:[%s198] sm:$0xff]
    %v456 = vld [vmem:[%s198 + $0x8] sm:$0xff]
    %v457 = vld [vmem:[%s198 + $0x18] sm:$0xff]
    %v458 = vld [vmem:[%s198 + $0x20] sm:$0xff]
    %v459 = vld [vmem:[%s198 + $0x30] sm:$0xff]
    %v460 = vld [vmem:[%s198 + $0x38] sm:$0xff]
    %v461 = vld [vmem:[%s198 + $0x48] sm:$0xff]
    %v462 = vld [vmem:[%s198 + $0x50] sm:$0xff]
    %v463 = vld [vmem:[%s198 + $0x60] sm:$0xff]
    %v464 = vld [vmem:[%s198 + $0x68] sm:$0xff]
    %v465 = vld [vmem:[%s198 + $0x78] sm:$0xff]
    %v466 = vld [vmem:[%s198 + $0x80] sm:$0xff]
    %v467 = vld [vmem:[%s198 + $0x90] sm:$0xff]
    %v468 = vld [vmem:[%s198 + $0x98] sm:$0xff]
    %v469 = vld [vmem:[%s198 + $0xa8] sm:$0xff]
    %v470 = vld [vmem:[%s198 + $0xb0] sm:$0xff]
    %v471 = vld [vmem:[%s198 + $0xc0] sm:$0xff]
    %v472 = vld [vmem:[%s198 + $0xc8] sm:$0xff]
    %v473 = vld [vmem:[%s198 + $0xd8] sm:$0xff]
    %v474 = vld [vmem:[%s198 + $0xe0] sm:$0xff]
    %v475 = vld [vmem:[%s198 + $0xf0] sm:$0xff]
    %v476 = vld [vmem:[%s198 + $0xf8] sm:$0xff]
    %v477 = vld [vmem:[%s198 + $0x108] sm:$0xff]
    %v478 = vld [vmem:[%s198 + $0x110] sm:$0xff]
    %v479 = vld [vmem:[%s198 + $0x120] sm:$0xff]
    %v480 = vld [vmem:[%s198 + $0x128] sm:$0xff]
    %v481 = vld [vmem:[%s198 + $0x138] sm:$0xff]
    %v482 = vld [vmem:[%s198 + $0x140] sm:$0xff]
    %v483 = vld [vmem:[%s198 + $0x150] sm:$0xff]
    %v484 = vld [vmem:[%s198 + $0x158] sm:$0xff]
    %v485 = vld [vmem:[%s198 + $0x168] sm:$0xff]
    %v486 = vld [vmem:[%s198 + $0x170] sm:$0xff]
    %v487 = vld [vmem:[%s198 + $0x1b0] sm:$0xff]
    %v488 = vld [vmem:[%s198 + $0x1b8] sm:$0xff]
    %v489 = vld [vmem:[%s198 + $0x1c8] sm:$0xff]
    %v490 = vld [vmem:[%s198 + $0x1d0] sm:$0xff]
    %v491 = vld [vmem:[%s198 + $0x1e0] sm:$0xff]
    %v492 = vld [vmem:[%s198 + $0x1e8] sm:$0xff]
    %v493 = vld [vmem:[%s198 + $0x1f8] sm:$0xff]
    %v494 = vld [vmem:[%s198 + $0x200] sm:$0xff]
    %v495 = vld [vmem:[%s198 + $0x210] sm:$0xff]
    %v496 = vld [vmem:[%s198 + $0x218] sm:$0xff]
    %v497 = vld [vmem:[%s198 + $0x228] sm:$0xff]
    %v498 = vld [vmem:[%s198 + $0x230] sm:$0xff]
    %v499 = vld [vmem:[%s198 + $0x240] sm:$0xff]
    %v500 = vld [vmem:[%s198 + $0x248] sm:$0xff]
    %v501 = vld [vmem:[%s198 + $0x258] sm:$0xff]
    %v502 = vld [vmem:[%s198 + $0x260] sm:$0xff]
    %v503 = vld [vmem:[%s198 + $0x270] sm:$0xff]
    %v504 = vld [vmem:[%s198 + $0x278] sm:$0xff]
    %v505 = vld [vmem:[%s198 + $0x288] sm:$0xff]
    %v506 = vld [vmem:[%s198 + $0x290] sm:$0xff]
    %v507 = vld [vmem:[%s198 + $0x2a0] sm:$0xff]
    %v508 = vld [vmem:[%s198 + $0x2a8] sm:$0xff]
    %v509 = vld [vmem:[%s198 + $0x2b8] sm:$0xff]
    %v510 = vld [vmem:[%s198 + $0x2c0] sm:$0xff]
    %v511 = vld [vmem:[%s198 + $0x2d0] sm:$0xff]
    %v512 = vld [vmem:[%s198 + $0x2d8] sm:$0xff]
    %v513 = vld [vmem:[%s198 + $0x2e8] sm:$0xff]
    %v514 = vld [vmem:[%s198 + $0x2f0] sm:$0xff]
    %v515 = vld [vmem:[%s198 + $0x300] sm:$0xff]
    %v516 = vld [vmem:[%s198 + $0x308] sm:$0xff]
    %v517 = vld [vmem:[%s198 + $0x318] sm:$0xff]
    %v518 = vld [vmem:[%s198 + $0x320] sm:$0xff]
    %v519 = vld [vmem:[%s198 + $0x1] sm:$0xff]
    %v520 = vld [vmem:[%s198 + $0x9] sm:$0xff]
    %v521 = vld [vmem:[%s198 + $0x19] sm:$0xff]
    %v522 = vld [vmem:[%s198 + $0x21] sm:$0xff]
    %v523 = vld [vmem:[%s198 + $0x31] sm:$0xff]
    %v524 = vld [vmem:[%s198 + $0x39] sm:$0xff]
    %v525 = vld [vmem:[%s198 + $0x49] sm:$0xff]
    %v526 = vld [vmem:[%s198 + $0x51] sm:$0xff]
    %v527 = vld [vmem:[%s198 + $0x61] sm:$0xff]
    %v528 = vld [vmem:[%s198 + $0x69] sm:$0xff]
    %v529 = vld [vmem:[%s198 + $0x79] sm:$0xff]
    %v530 = vld [vmem:[%s198 + $0x81] sm:$0xff]
    %v531 = vld [vmem:[%s198 + $0x91] sm:$0xff]
    %v532 = vld [vmem:[%s198 + $0x99] sm:$0xff]
    %v533 = vld [vmem:[%s198 + $0xa9] sm:$0xff]
    %v534 = vld [vmem:[%s198 + $0xb1] sm:$0xff]
    %v535 = vld [vmem:[%s198 + $0xc1] sm:$0xff]
    %v536 = vld [vmem:[%s198 + $0xc9] sm:$0xff]
    %v537 = vld [vmem:[%s198 + $0xd9] sm:$0xff]
    %v538 = vld [vmem:[%s198 + $0xe1] sm:$0xff]
    %v539 = vld [vmem:[%s198 + $0xf1] sm:$0xff]
    %v540 = vld [vmem:[%s198 + $0xf9] sm:$0xff]
    %v541 = vld [vmem:[%s198 + $0x109] sm:$0xff]
    %v542 = vld [vmem:[%s198 + $0x111] sm:$0xff]
    %v543 = vld [vmem:[%s198 + $0x121] sm:$0xff]
    %v544 = vld [vmem:[%s198 + $0x129] sm:$0xff]
    %v545 = vld [vmem:[%s198 + $0x139] sm:$0xff]
    %v546 = vld [vmem:[%s198 + $0x141] sm:$0xff]
    %v547 = vld [vmem:[%s198 + $0x151] sm:$0xff]
    %v548 = vld [vmem:[%s198 + $0x159] sm:$0xff]
    %v549 = vld [vmem:[%s198 + $0x169] sm:$0xff]
    %v550 = vld [vmem:[%s198 + $0x171] sm:$0xff]
    %v551 = vld [vmem:[%s198 + $0x1b1] sm:$0xff]
    %v552 = vld [vmem:[%s198 + $0x1b9] sm:$0xff]
    %v553 = vld [vmem:[%s198 + $0x1c9] sm:$0xff]
    %v554 = vld [vmem:[%s198 + $0x1d1] sm:$0xff]
    %v555 = vld [vmem:[%s198 + $0x1e1] sm:$0xff]
    %v556 = vld [vmem:[%s198 + $0x1e9] sm:$0xff]
    %v557 = vld [vmem:[%s198 + $0x1f9] sm:$0xff]
    %v558 = vld [vmem:[%s198 + $0x201] sm:$0xff]
    %v559 = vld [vmem:[%s198 + $0x211] sm:$0xff]
    %v560 = vld [vmem:[%s198 + $0x219] sm:$0xff]
    %v561 = vld [vmem:[%s198 + $0x229] sm:$0xff]
    %v562 = vld [vmem:[%s198 + $0x231] sm:$0xff]
    %v563 = vld [vmem:[%s198 + $0x241] sm:$0xff]
    %v564 = vld [vmem:[%s198 + $0x249] sm:$0xff]
    %v565 = vld [vmem:[%s198 + $0x259] sm:$0xff]
    %v566 = vld [vmem:[%s198 + $0x261] sm:$0xff]
    %v567 = vld [vmem:[%s198 + $0x271] sm:$0xff]
    %v568 = vld [vmem:[%s198 + $0x279] sm:$0xff]
    %v569 = vld [vmem:[%s198 + $0x289] sm:$0xff]
    %v570 = vld [vmem:[%s198 + $0x291] sm:$0xff]
    %v571 = vld [vmem:[%s198 + $0x2a1] sm:$0xff]
    %v572 = vld [vmem:[%s198 + $0x2a9] sm:$0xff]
    %v573 = vld [vmem:[%s198 + $0x2b9] sm:$0xff]
    %v574 = vld [vmem:[%s198 + $0x2c1] sm:$0xff]
    %v575 = vld [vmem:[%s198 + $0x2d1] sm:$0xff]
    %v576 = vld [vmem:[%s198 + $0x2d9] sm:$0xff]
    %v577 = vld [vmem:[%s198 + $0x2e9] sm:$0xff]
    %v578 = vld [vmem:[%s198 + $0x2f1] sm:$0xff]
    %v579 = vld [vmem:[%s198 + $0x301] sm:$0xff]
    %v580 = vld [vmem:[%s198 + $0x309] sm:$0xff]
    %v581 = vld [vmem:[%s198 + $0x319] sm:$0xff]
    %v582 = vld [vmem:[%s198 + $0x321] sm:$0xff]
    %v583 = vld [vmem:[%s198 + $0x2] sm:$0xff]
    %v584 = vld [vmem:[%s198 + $0xa] sm:$0xff]
    %v585 = vld [vmem:[%s198 + $0x1a] sm:$0xff]
    %v586 = vld [vmem:[%s198 + $0x22] sm:$0xff]
    %v587 = vld [vmem:[%s198 + $0x32] sm:$0xff]
    %v588 = vld [vmem:[%s198 + $0x3a] sm:$0xff]
    %v589 = vld [vmem:[%s198 + $0x4a] sm:$0xff]
    %v590 = vld [vmem:[%s198 + $0x52] sm:$0xff]
    %v591 = vld [vmem:[%s198 + $0x62] sm:$0xff]
    %v592 = vld [vmem:[%s198 + $0x6a] sm:$0xff]
    %v593 = vld [vmem:[%s198 + $0x7a] sm:$0xff]
    %v594 = vld [vmem:[%s198 + $0x82] sm:$0xff]
    %v595 = vld [vmem:[%s198 + $0x92] sm:$0xff]
    %v596 = vld [vmem:[%s198 + $0x9a] sm:$0xff]
    %v597 = vld [vmem:[%s198 + $0xaa] sm:$0xff]
    %v598 = vld [vmem:[%s198 + $0xb2] sm:$0xff]
    %v599 = vld [vmem:[%s198 + $0xc2] sm:$0xff]
    %v600 = vld [vmem:[%s198 + $0xca] sm:$0xff]
    %v601 = vld [vmem:[%s198 + $0xda] sm:$0xff]
    %v602 = vld [vmem:[%s198 + $0xe2] sm:$0xff]
    %v603 = vld [vmem:[%s198 + $0xf2] sm:$0xff]
    %v604 = vld [vmem:[%s198 + $0xfa] sm:$0xff]
    %v605 = vld [vmem:[%s198 + $0x10a] sm:$0xff]
    %v606 = vld [vmem:[%s198 + $0x112] sm:$0xff]
    %v607 = vld [vmem:[%s198 + $0x122] sm:$0xff]
    %v608 = vld [vmem:[%s198 + $0x12a] sm:$0xff]
    %v609 = vld [vmem:[%s198 + $0x13a] sm:$0xff]
    %v610 = vld [vmem:[%s198 + $0x142] sm:$0xff]
    %v611 = vld [vmem:[%s198 + $0x152] sm:$0xff]
    %v612 = vld [vmem:[%s198 + $0x15a] sm:$0xff]
    %v613 = vld [vmem:[%s198 + $0x16a] sm:$0xff]
    %v614 = vld [vmem:[%s198 + $0x172] sm:$0xff]
    %v615 = vld [vmem:[%s198 + $0x1b2] sm:$0xff]
    %v616 = vld [vmem:[%s198 + $0x1ba] sm:$0xff]
    %v617 = vld [vmem:[%s198 + $0x1ca] sm:$0xff]
    %v618 = vld [vmem:[%s198 + $0x1d2] sm:$0xff]
    %v619 = vld [vmem:[%s198 + $0x1e2] sm:$0xff]
    %v620 = vld [vmem:[%s198 + $0x1ea] sm:$0xff]
    %v621 = vld [vmem:[%s198 + $0x1fa] sm:$0xff]
    %v622 = vld [vmem:[%s198 + $0x202] sm:$0xff]
    %v623 = vld [vmem:[%s198 + $0x212] sm:$0xff]
    %v624 = vld [vmem:[%s198 + $0x21a] sm:$0xff]
    %v625 = vld [vmem:[%s198 + $0x22a] sm:$0xff]
    %v626 = vld [vmem:[%s198 + $0x232] sm:$0xff]
    %v627 = vld [vmem:[%s198 + $0x242] sm:$0xff]
    %v628 = vld [vmem:[%s198 + $0x24a] sm:$0xff]
    %v629 = vld [vmem:[%s198 + $0x25a] sm:$0xff]
    %v630 = vld [vmem:[%s198 + $0x262] sm:$0xff]
    %v631 = vld [vmem:[%s198 + $0x272] sm:$0xff]
    %v632 = vld [vmem:[%s198 + $0x27a] sm:$0xff]
    %v633 = vld [vmem:[%s198 + $0x28a] sm:$0xff]
    %v634 = vld [vmem:[%s198 + $0x292] sm:$0xff]
    %v635 = vld [vmem:[%s198 + $0x2a2] sm:$0xff]
    %v636 = vld [vmem:[%s198 + $0x2aa] sm:$0xff]
    %v637 = vld [vmem:[%s198 + $0x2ba] sm:$0xff]
    %v638 = vld [vmem:[%s198 + $0x2c2] sm:$0xff]
    %v639 = vld [vmem:[%s198 + $0x2d2] sm:$0xff]
    %v640 = vld [vmem:[%s198 + $0x2da] sm:$0xff]
    %v641 = vld [vmem:[%s198 + $0x2ea] sm:$0xff]
    %v642 = vld [vmem:[%s198 + $0x2f2] sm:$0xff]
    %v643 = vld [vmem:[%s198 + $0x302] sm:$0xff]
    %v644 = vld [vmem:[%s198 + $0x30a] sm:$0xff]
    %v645 = vld [vmem:[%s198 + $0x31a] sm:$0xff]
    %v646 = vld [vmem:[%s198 + $0x322] sm:$0xff]
    %s647 = scalar_lea.vmem [#allocation2], 48
    %v648 = vld [vmem:[%s647] sm:$0xff]
    %v649 = vld [vmem:[%s647 + $0x8] sm:$0xff]
    %v650 = vld [vmem:[%s647 + $0x18] sm:$0xff]
    %v651 = vld [vmem:[%s647 + $0x20] sm:$0xff]
    %v652 = vld [vmem:[%s647 + $0x30] sm:$0xff]
    %v653 = vld [vmem:[%s647 + $0x38] sm:$0xff]
    %v654 = vld [vmem:[%s647 + $0x48] sm:$0xff]
    %v655 = vld [vmem:[%s647 + $0x50] sm:$0xff]
    %v656 = vld [vmem:[%s647 + $0x60] sm:$0xff]
    %v657 = vld [vmem:[%s647 + $0x68] sm:$0xff]
    %v658 = vld [vmem:[%s647 + $0x78] sm:$0xff]
    %v659 = vld [vmem:[%s647 + $0x80] sm:$0xff]
    %v660 = vld [vmem:[%s647 + $0x90] sm:$0xff]
    %v661 = vld [vmem:[%s647 + $0x98] sm:$0xff]
    %v662 = vld [vmem:[%s647 + $0xa8] sm:$0xff]
    %v663 = vld [vmem:[%s647 + $0xb0] sm:$0xff]
    %v664 = vld [vmem:[%s647 + $0xc0] sm:$0xff]
    %v665 = vld [vmem:[%s647 + $0xc8] sm:$0xff]
    %v666 = vld [vmem:[%s647 + $0xd8] sm:$0xff]
    %v667 = vld [vmem:[%s647 + $0xe0] sm:$0xff]
    %v668 = vld [vmem:[%s647 + $0xf0] sm:$0xff]
    %v669 = vld [vmem:[%s647 + $0xf8] sm:$0xff]
    %v670 = vld [vmem:[%s647 + $0x108] sm:$0xff]
    %v671 = vld [vmem:[%s647 + $0x110] sm:$0xff]
    %v672 = vld [vmem:[%s647 + $0x120] sm:$0xff]
    %v673 = vld [vmem:[%s647 + $0x128] sm:$0xff]
    %v674 = vld [vmem:[%s647 + $0x138] sm:$0xff]
    %v675 = vld [vmem:[%s647 + $0x140] sm:$0xff]
    %v676 = vld [vmem:[%s647 + $0x150] sm:$0xff]
    %v677 = vld [vmem:[%s647 + $0x158] sm:$0xff]
    %v678 = vld [vmem:[%s647 + $0x168] sm:$0xff]
    %v679 = vld [vmem:[%s647 + $0x170] sm:$0xff]
    %v680 = vld [vmem:[%s647 + $0x1b0] sm:$0xff]
    %v681 = vld [vmem:[%s647 + $0x1b8] sm:$0xff]
    %v682 = vld [vmem:[%s647 + $0x1c8] sm:$0xff]
    %v683 = vld [vmem:[%s647 + $0x1d0] sm:$0xff]
    %v684 = vld [vmem:[%s647 + $0x1e0] sm:$0xff]
    %v685 = vld [vmem:[%s647 + $0x1e8] sm:$0xff]
    %v686 = vld [vmem:[%s647 + $0x1f8] sm:$0xff]
    %v687 = vld [vmem:[%s647 + $0x200] sm:$0xff]
    %v688 = vld [vmem:[%s647 + $0x210] sm:$0xff]
    %v689 = vld [vmem:[%s647 + $0x218] sm:$0xff]
    %v690 = vld [vmem:[%s647 + $0x228] sm:$0xff]
    %v691 = vld [vmem:[%s647 + $0x230] sm:$0xff]
    %v692 = vld [vmem:[%s647 + $0x240] sm:$0xff]
    %v693 = vld [vmem:[%s647 + $0x248] sm:$0xff]
    %v694 = vld [vmem:[%s647 + $0x258] sm:$0xff]
    %v695 = vld [vmem:[%s647 + $0x260] sm:$0xff]
    %v696 = vld [vmem:[%s647 + $0x270] sm:$0xff]
    %v697 = vld [vmem:[%s647 + $0x278] sm:$0xff]
    %v698 = vld [vmem:[%s647 + $0x288] sm:$0xff]
    %v699 = vld [vmem:[%s647 + $0x290] sm:$0xff]
    %v700 = vld [vmem:[%s647 + $0x2a0] sm:$0xff]
    %v701 = vld [vmem:[%s647 + $0x2a8] sm:$0xff]
    %v702 = vld [vmem:[%s647 + $0x2b8] sm:$0xff]
    %v703 = vld [vmem:[%s647 + $0x2c0] sm:$0xff]
    %v704 = vld [vmem:[%s647 + $0x2d0] sm:$0xff]
    %v705 = vld [vmem:[%s647 + $0x2d8] sm:$0xff]
    %v706 = vld [vmem:[%s647 + $0x2e8] sm:$0xff]
    %v707 = vld [vmem:[%s647 + $0x2f0] sm:$0xff]
    %v708 = vld [vmem:[%s647 + $0x300] sm:$0xff]
    %v709 = vld [vmem:[%s647 + $0x308] sm:$0xff]
    %v710 = vld [vmem:[%s647 + $0x318] sm:$0xff]
    %v711 = vld [vmem:[%s647 + $0x320] sm:$0xff]
    %v712 = vld [vmem:[%s647 + $0x1] sm:$0xff]
    %v713 = vld [vmem:[%s647 + $0x9] sm:$0xff]
    %v714 = vld [vmem:[%s647 + $0x19] sm:$0xff]
    %v715 = vld [vmem:[%s647 + $0x21] sm:$0xff]
    %v716 = vld [vmem:[%s647 + $0x31] sm:$0xff]
    %v717 = vld [vmem:[%s647 + $0x39] sm:$0xff]
    %v718 = vld [vmem:[%s647 + $0x49] sm:$0xff]
    %v719 = vld [vmem:[%s647 + $0x51] sm:$0xff]
    %v720 = vld [vmem:[%s647 + $0x61] sm:$0xff]
    %v721 = vld [vmem:[%s647 + $0x69] sm:$0xff]
    %v722 = vld [vmem:[%s647 + $0x79] sm:$0xff]
    %v723 = vld [vmem:[%s647 + $0x81] sm:$0xff]
    %v724 = vld [vmem:[%s647 + $0x91] sm:$0xff]
    %v725 = vld [vmem:[%s647 + $0x99] sm:$0xff]
    %v726 = vld [vmem:[%s647 + $0xa9] sm:$0xff]
    %v727 = vld [vmem:[%s647 + $0xb1] sm:$0xff]
    %v728 = vld [vmem:[%s647 + $0xc1] sm:$0xff]
    %v729 = vld [vmem:[%s647 + $0xc9] sm:$0xff]
    %v730 = vld [vmem:[%s647 + $0xd9] sm:$0xff]
    %v731 = vld [vmem:[%s647 + $0xe1] sm:$0xff]
    %v732 = vld [vmem:[%s647 + $0xf1] sm:$0xff]
    %v733 = vld [vmem:[%s647 + $0xf9] sm:$0xff]
    %v734 = vld [vmem:[%s647 + $0x109] sm:$0xff]
    %v735 = vld [vmem:[%s647 + $0x111] sm:$0xff]
    %v736 = vld [vmem:[%s647 + $0x121] sm:$0xff]
    %v737 = vld [vmem:[%s647 + $0x129] sm:$0xff]
    %v738 = vld [vmem:[%s647 + $0x139] sm:$0xff]
    %v739 = vld [vmem:[%s647 + $0x141] sm:$0xff]
    %v740 = vld [vmem:[%s647 + $0x151] sm:$0xff]
    %v741 = vld [vmem:[%s647 + $0x159] sm:$0xff]
    %v742 = vld [vmem:[%s647 + $0x169] sm:$0xff]
    %v743 = vld [vmem:[%s647 + $0x171] sm:$0xff]
    %v744 = vld [vmem:[%s647 + $0x1b1] sm:$0xff]
    %v745 = vld [vmem:[%s647 + $0x1b9] sm:$0xff]
    %v746 = vld [vmem:[%s647 + $0x1c9] sm:$0xff]
    %v747 = vld [vmem:[%s647 + $0x1d1] sm:$0xff]
    %v748 = vld [vmem:[%s647 + $0x1e1] sm:$0xff]
    %v749 = vld [vmem:[%s647 + $0x1e9] sm:$0xff]
    %v750 = vld [vmem:[%s647 + $0x1f9] sm:$0xff]
    %v751 = vld [vmem:[%s647 + $0x201] sm:$0xff]
    %v752 = vld [vmem:[%s647 + $0x211] sm:$0xff]
    %v753 = vld [vmem:[%s647 + $0x219] sm:$0xff]
    %v754 = vld [vmem:[%s647 + $0x229] sm:$0xff]
    %v755 = vld [vmem:[%s647 + $0x231] sm:$0xff]
    %v756 = vld [vmem:[%s647 + $0x241] sm:$0xff]
    %v757 = vld [vmem:[%s647 + $0x249] sm:$0xff]
    %v758 = vld [vmem:[%s647 + $0x259] sm:$0xff]
    %v759 = vld [vmem:[%s647 + $0x261] sm:$0xff]
    %v760 = vld [vmem:[%s647 + $0x271] sm:$0xff]
    %v761 = vld [vmem:[%s647 + $0x279] sm:$0xff]
    %v762 = vld [vmem:[%s647 + $0x289] sm:$0xff]
    %v763 = vld [vmem:[%s647 + $0x291] sm:$0xff]
    %v764 = vld [vmem:[%s647 + $0x2a1] sm:$0xff]
    %v765 = vld [vmem:[%s647 + $0x2a9] sm:$0xff]
    %v766 = vld [vmem:[%s647 + $0x2b9] sm:$0xff]
    %v767 = vld [vmem:[%s647 + $0x2c1] sm:$0xff]
    %v768 = vld [vmem:[%s647 + $0x2d1] sm:$0xff]
    %v769 = vld [vmem:[%s647 + $0x2d9] sm:$0xff]
    %v770 = vld [vmem:[%s647 + $0x2e9] sm:$0xff]
    %v771 = vld [vmem:[%s647 + $0x2f1] sm:$0xff]
    %v772 = vld [vmem:[%s647 + $0x301] sm:$0xff]
    %v773 = vld [vmem:[%s647 + $0x309] sm:$0xff]
    %v774 = vld [vmem:[%s647 + $0x319] sm:$0xff]
    %v775 = vld [vmem:[%s647 + $0x321] sm:$0xff]
    %v776 = vld [vmem:[%s647 + $0x2] sm:$0xff]
    %v777 = vld [vmem:[%s647 + $0xa] sm:$0xff]
    %v778 = vld [vmem:[%s647 + $0x1a] sm:$0xff]
    %v779 = vld [vmem:[%s647 + $0x22] sm:$0xff]
    %v780 = vld [vmem:[%s647 + $0x32] sm:$0xff]
    %v781 = vld [vmem:[%s647 + $0x3a] sm:$0xff]
    %v782 = vld [vmem:[%s647 + $0x4a] sm:$0xff]
    %v783 = vld [vmem:[%s647 + $0x52] sm:$0xff]
    %v784 = vld [vmem:[%s647 + $0x62] sm:$0xff]
    %v785 = vld [vmem:[%s647 + $0x6a] sm:$0xff]
    %v786 = vld [vmem:[%s647 + $0x7a] sm:$0xff]
    %v787 = vld [vmem:[%s647 + $0x82] sm:$0xff]
    %v788 = vld [vmem:[%s647 + $0x92] sm:$0xff]
    %v789 = vld [vmem:[%s647 + $0x9a] sm:$0xff]
    %v790 = vld [vmem:[%s647 + $0xaa] sm:$0xff]
    %v791 = vld [vmem:[%s647 + $0xb2] sm:$0xff]
    %v792 = vld [vmem:[%s647 + $0xc2] sm:$0xff]
    %v793 = vld [vmem:[%s647 + $0xca] sm:$0xff]
    %v794 = vld [vmem:[%s647 + $0xda] sm:$0xff]
    %v795 = vld [vmem:[%s647 + $0xe2] sm:$0xff]
    %v796 = vld [vmem:[%s647 + $0xf2] sm:$0xff]
    %v797 = vld [vmem:[%s647 + $0xfa] sm:$0xff]
    %v798 = vld [vmem:[%s647 + $0x10a] sm:$0xff]
    %v799 = vld [vmem:[%s647 + $0x112] sm:$0xff]
    %v800 = vld [vmem:[%s647 + $0x122] sm:$0xff]
    %v801 = vld [vmem:[%s647 + $0x12a] sm:$0xff]
    %v802 = vld [vmem:[%s647 + $0x13a] sm:$0xff]
    %v803 = vld [vmem:[%s647 + $0x142] sm:$0xff]
    %v804 = vld [vmem:[%s647 + $0x152] sm:$0xff]
    %v805 = vld [vmem:[%s647 + $0x15a] sm:$0xff]
    %v806 = vld [vmem:[%s647 + $0x16a] sm:$0xff]
    %v807 = vld [vmem:[%s647 + $0x172] sm:$0xff]
    %v808 = vld [vmem:[%s647 + $0x1b2] sm:$0xff]
    %v809 = vld [vmem:[%s647 + $0x1ba] sm:$0xff]
    %v810 = vld [vmem:[%s647 + $0x1ca] sm:$0xff]
    %v811 = vld [vmem:[%s647 + $0x1d2] sm:$0xff]
    %v812 = vld [vmem:[%s647 + $0x1e2] sm:$0xff]
    %v813 = vld [vmem:[%s647 + $0x1ea] sm:$0xff]
    %v814 = vld [vmem:[%s647 + $0x1fa] sm:$0xff]
    %v815 = vld [vmem:[%s647 + $0x202] sm:$0xff]
    %v816 = vld [vmem:[%s647 + $0x212] sm:$0xff]
    %v817 = vld [vmem:[%s647 + $0x21a] sm:$0xff]
    %v818 = vld [vmem:[%s647 + $0x22a] sm:$0xff]
    %v819 = vld [vmem:[%s647 + $0x232] sm:$0xff]
    %v820 = vld [vmem:[%s647 + $0x242] sm:$0xff]
    %v821 = vld [vmem:[%s647 + $0x24a] sm:$0xff]
    %v822 = vld [vmem:[%s647 + $0x25a] sm:$0xff]
    %v823 = vld [vmem:[%s647 + $0x262] sm:$0xff]
    %v824 = vld [vmem:[%s647 + $0x272] sm:$0xff]
    %v825 = vld [vmem:[%s647 + $0x27a] sm:$0xff]
    %v826 = vld [vmem:[%s647 + $0x28a] sm:$0xff]
    %v827 = vld [vmem:[%s647 + $0x292] sm:$0xff]
    %v828 = vld [vmem:[%s647 + $0x2a2] sm:$0xff]
    %v829 = vld [vmem:[%s647 + $0x2aa] sm:$0xff]
    %v830 = vld [vmem:[%s647 + $0x2ba] sm:$0xff]
    %v831 = vld [vmem:[%s647 + $0x2c2] sm:$0xff]
    %v832 = vld [vmem:[%s647 + $0x2d2] sm:$0xff]
    %v833 = vld [vmem:[%s647 + $0x2da] sm:$0xff]
    %v834 = vld [vmem:[%s647 + $0x2ea] sm:$0xff]
    %v835 = vld [vmem:[%s647 + $0x2f2] sm:$0xff]
    %v836 = vld [vmem:[%s647 + $0x302] sm:$0xff]
    %v837 = vld [vmem:[%s647 + $0x30a] sm:$0xff]
    %v838 = vld [vmem:[%s647 + $0x31a] sm:$0xff]
    %v839 = vld [vmem:[%s647 + $0x322] sm:$0xff]
    %904 = vrot.lane.b32.xlu0 %v327, 4
    %v905 = vpop.permute.xlu0 %904
    %906 = vrot.lane.b32.xlu0 %v328, 4
    %v907 = vpop.permute.xlu0 %906
    %908 = vrot.lane.b32.xlu0 %v329, 4
    %v909 = vpop.permute.xlu0 %908
    %910 = vrot.lane.b32.xlu0 %v330, 4
    %v911 = vpop.permute.xlu0 %910
    %912 = vrot.lane.b32.xlu0 %v331, 4
    %v913 = vpop.permute.xlu0 %912
    %914 = vrot.lane.b32.xlu0 %v332, 4
    %v915 = vpop.permute.xlu0 %914
    %916 = vrot.lane.b32.xlu0 %v333, 4
    %v917 = vpop.permute.xlu0 %916
    %918 = vrot.lane.b32.xlu0 %v334, 4
    %v919 = vpop.permute.xlu0 %918
    %920 = vrot.lane.b32.xlu0 %v335, 4
    %v921 = vpop.permute.xlu0 %920
    %922 = vrot.lane.b32.xlu0 %v336, 4
    %v923 = vpop.permute.xlu0 %922
    %924 = vrot.lane.b32.xlu0 %v337, 4
    %v925 = vpop.permute.xlu0 %924
    %926 = vrot.lane.b32.xlu0 %v338, 4
    %v927 = vpop.permute.xlu0 %926
    %928 = vrot.lane.b32.xlu0 %v339, 4
    %v929 = vpop.permute.xlu0 %928
    %930 = vrot.lane.b32.xlu0 %v340, 4
    %v931 = vpop.permute.xlu0 %930
    %932 = vrot.lane.b32.xlu0 %v341, 4
    %v933 = vpop.permute.xlu0 %932
    %934 = vrot.lane.b32.xlu0 %v342, 4
    %v935 = vpop.permute.xlu0 %934
    %936 = vrot.lane.b32.xlu0 %v343, 4
    %v937 = vpop.permute.xlu0 %936
    %938 = vrot.lane.b32.xlu0 %v344, 4
    %v939 = vpop.permute.xlu0 %938
    %940 = vrot.lane.b32.xlu0 %v345, 4
    %v941 = vpop.permute.xlu0 %940
    %942 = vrot.lane.b32.xlu0 %v346, 4
    %v943 = vpop.permute.xlu0 %942
    %944 = vrot.lane.b32.xlu0 %v347, 4
    %v945 = vpop.permute.xlu0 %944
    %946 = vrot.lane.b32.xlu0 %v348, 4
    %v947 = vpop.permute.xlu0 %946
    %948 = vrot.lane.b32.xlu0 %v349, 4
    %v949 = vpop.permute.xlu0 %948
    %950 = vrot.lane.b32.xlu0 %v350, 4
    %v951 = vpop.permute.xlu0 %950
    %952 = vrot.lane.b32.xlu0 %v351, 4
    %v953 = vpop.permute.xlu0 %952
    %954 = vrot.lane.b32.xlu0 %v352, 4
    %v955 = vpop.permute.xlu0 %954
    %956 = vrot.lane.b32.xlu0 %v353, 4
    %v957 = vpop.permute.xlu0 %956
    %958 = vrot.lane.b32.xlu0 %v354, 4
    %v959 = vpop.permute.xlu0 %958
    %960 = vrot.lane.b32.xlu0 %v355, 4
    %v961 = vpop.permute.xlu0 %960
    %962 = vrot.lane.b32.xlu0 %v356, 4
    %v963 = vpop.permute.xlu0 %962
    %964 = vrot.lane.b32.xlu0 %v357, 4
    %v965 = vpop.permute.xlu0 %964
    %966 = vrot.lane.b32.xlu0 %v358, 4
    %v967 = vpop.permute.xlu0 %966
    %968 = vrot.lane.b32.xlu0 %v359, 4
    %v969 = vpop.permute.xlu0 %968
    %970 = vrot.lane.b32.xlu0 %v360, 4
    %v971 = vpop.permute.xlu0 %970
    %972 = vrot.lane.b32.xlu0 %v361, 4
    %v973 = vpop.permute.xlu0 %972
    %974 = vrot.lane.b32.xlu0 %v362, 4
    %v975 = vpop.permute.xlu0 %974
    %976 = vrot.lane.b32.xlu0 %v363, 4
    %v977 = vpop.permute.xlu0 %976
    %978 = vrot.lane.b32.xlu0 %v364, 4
    %v979 = vpop.permute.xlu0 %978
    %980 = vrot.lane.b32.xlu0 %v365, 4
    %v981 = vpop.permute.xlu0 %980
    %982 = vrot.lane.b32.xlu0 %v366, 4
    %v983 = vpop.permute.xlu0 %982
    %984 = vrot.lane.b32.xlu0 %v367, 4
    %v985 = vpop.permute.xlu0 %984
    %986 = vrot.lane.b32.xlu0 %v368, 4
    %v987 = vpop.permute.xlu0 %986
    %988 = vrot.lane.b32.xlu0 %v369, 4
    %v989 = vpop.permute.xlu0 %988
    %990 = vrot.lane.b32.xlu0 %v370, 4
    %v991 = vpop.permute.xlu0 %990
    %992 = vrot.lane.b32.xlu0 %v371, 4
    %v993 = vpop.permute.xlu0 %992
    %994 = vrot.lane.b32.xlu0 %v372, 4
    %v995 = vpop.permute.xlu0 %994
    %996 = vrot.lane.b32.xlu0 %v373, 4
    %v997 = vpop.permute.xlu0 %996
    %998 = vrot.lane.b32.xlu0 %v374, 4
    %v999 = vpop.permute.xlu0 %998
    %1000 = vrot.lane.b32.xlu0 %v375, 4
    %v1001 = vpop.permute.xlu0 %1000
    %1002 = vrot.lane.b32.xlu0 %v376, 4
    %v1003 = vpop.permute.xlu0 %1002
    %1004 = vrot.lane.b32.xlu0 %v377, 4
    %v1005 = vpop.permute.xlu0 %1004
    %1006 = vrot.lane.b32.xlu0 %v378, 4
    %v1007 = vpop.permute.xlu0 %1006
    %1008 = vrot.lane.b32.xlu0 %v379, 4
    %v1009 = vpop.permute.xlu0 %1008
    %1010 = vrot.lane.b32.xlu0 %v380, 4
    %v1011 = vpop.permute.xlu0 %1010
    %1012 = vrot.lane.b32.xlu0 %v381, 4
    %v1013 = vpop.permute.xlu0 %1012
    %1014 = vrot.lane.b32.xlu0 %v382, 4
    %v1015 = vpop.permute.xlu0 %1014
    %1016 = vrot.lane.b32.xlu0 %v383, 4
    %v1017 = vpop.permute.xlu0 %1016
    %1018 = vrot.lane.b32.xlu0 %v384, 4
    %v1019 = vpop.permute.xlu0 %1018
    %1020 = vrot.lane.b32.xlu0 %v385, 4
    %v1021 = vpop.permute.xlu0 %1020
    %1022 = vrot.lane.b32.xlu0 %v386, 4
    %v1023 = vpop.permute.xlu0 %1022
    %1024 = vrot.lane.b32.xlu0 %v387, 4
    %v1025 = vpop.permute.xlu0 %1024
    %1026 = vrot.lane.b32.xlu0 %v388, 4
    %v1027 = vpop.permute.xlu0 %1026
    %1028 = vrot.lane.b32.xlu0 %v389, 4
    %v1029 = vpop.permute.xlu0 %1028
    %1030 = vrot.lane.b32.xlu0 %v390, 4
    %v1031 = vpop.permute.xlu0 %1030
    %1160 = vrot.lane.b32.xlu0 %v391, 8
    %v1161 = vpop.permute.xlu0 %1160
    %1162 = vrot.lane.b32.xlu0 %v392, 8
    %v1163 = vpop.permute.xlu0 %1162
    %1164 = vrot.lane.b32.xlu0 %v393, 8
    %v1165 = vpop.permute.xlu0 %1164
    %1166 = vrot.lane.b32.xlu0 %v394, 8
    %v1167 = vpop.permute.xlu0 %1166
    %1168 = vrot.lane.b32.xlu0 %v395, 8
    %v1169 = vpop.permute.xlu0 %1168
    %1170 = vrot.lane.b32.xlu0 %v396, 8
    %v1171 = vpop.permute.xlu0 %1170
    %1172 = vrot.lane.b32.xlu0 %v397, 8
    %v1173 = vpop.permute.xlu0 %1172
    %1174 = vrot.lane.b32.xlu0 %v398, 8
    %v1175 = vpop.permute.xlu0 %1174
    %1176 = vrot.lane.b32.xlu0 %v399, 8
    %v1177 = vpop.permute.xlu0 %1176
    %1178 = vrot.lane.b32.xlu0 %v400, 8
    %v1179 = vpop.permute.xlu0 %1178
    %1180 = vrot.lane.b32.xlu0 %v401, 8
    %v1181 = vpop.permute.xlu0 %1180
    %1182 = vrot.lane.b32.xlu0 %v402, 8
    %v1183 = vpop.permute.xlu0 %1182
    %1184 = vrot.lane.b32.xlu0 %v403, 8
    %v1185 = vpop.permute.xlu0 %1184
    %1186 = vrot.lane.b32.xlu0 %v404, 8
    %v1187 = vpop.permute.xlu0 %1186
    %1188 = vrot.lane.b32.xlu0 %v405, 8
    %v1189 = vpop.permute.xlu0 %1188
    %1190 = vrot.lane.b32.xlu0 %v406, 8
    %v1191 = vpop.permute.xlu0 %1190
    %1192 = vrot.lane.b32.xlu0 %v407, 8
    %v1193 = vpop.permute.xlu0 %1192
    %1194 = vrot.lane.b32.xlu0 %v408, 8
    %v1195 = vpop.permute.xlu0 %1194
    %1196 = vrot.lane.b32.xlu0 %v409, 8
    %v1197 = vpop.permute.xlu0 %1196
    %1198 = vrot.lane.b32.xlu0 %v410, 8
    %v1199 = vpop.permute.xlu0 %1198
    %1200 = vrot.lane.b32.xlu0 %v411, 8
    %v1201 = vpop.permute.xlu0 %1200
    %1202 = vrot.lane.b32.xlu0 %v412, 8
    %v1203 = vpop.permute.xlu0 %1202
    %1204 = vrot.lane.b32.xlu0 %v413, 8
    %v1205 = vpop.permute.xlu0 %1204
    %1206 = vrot.lane.b32.xlu0 %v414, 8
    %v1207 = vpop.permute.xlu0 %1206
    %1208 = vrot.lane.b32.xlu0 %v415, 8
    %v1209 = vpop.permute.xlu0 %1208
    %1210 = vrot.lane.b32.xlu0 %v416, 8
    %v1211 = vpop.permute.xlu0 %1210
    %1212 = vrot.lane.b32.xlu0 %v417, 8
    %v1213 = vpop.permute.xlu0 %1212
    %1214 = vrot.lane.b32.xlu0 %v418, 8
    %v1215 = vpop.permute.xlu0 %1214
    %1216 = vrot.lane.b32.xlu0 %v419, 8
    %v1217 = vpop.permute.xlu0 %1216
    %1218 = vrot.lane.b32.xlu0 %v420, 8
    %v1219 = vpop.permute.xlu0 %1218
    %1220 = vrot.lane.b32.xlu0 %v421, 8
    %v1221 = vpop.permute.xlu0 %1220
    %1222 = vrot.lane.b32.xlu0 %v422, 8
    %v1223 = vpop.permute.xlu0 %1222
    %1224 = vrot.lane.b32.xlu0 %v423, 8
    %v1225 = vpop.permute.xlu0 %1224
    %1226 = vrot.lane.b32.xlu0 %v424, 8
    %v1227 = vpop.permute.xlu0 %1226
    %1228 = vrot.lane.b32.xlu0 %v425, 8
    %v1229 = vpop.permute.xlu0 %1228
    %1230 = vrot.lane.b32.xlu0 %v426, 8
    %v1231 = vpop.permute.xlu0 %1230
    %1232 = vrot.lane.b32.xlu0 %v427, 8
    %v1233 = vpop.permute.xlu0 %1232
    %1234 = vrot.lane.b32.xlu0 %v428, 8
    %v1235 = vpop.permute.xlu0 %1234
    %1236 = vrot.lane.b32.xlu0 %v429, 8
    %v1237 = vpop.permute.xlu0 %1236
    %1238 = vrot.lane.b32.xlu0 %v430, 8
    %v1239 = vpop.permute.xlu0 %1238
    %1240 = vrot.lane.b32.xlu0 %v431, 8
    %v1241 = vpop.permute.xlu0 %1240
    %1242 = vrot.lane.b32.xlu0 %v432, 8
    %v1243 = vpop.permute.xlu0 %1242
    %1244 = vrot.lane.b32.xlu0 %v433, 8
    %v1245 = vpop.permute.xlu0 %1244
    %1246 = vrot.lane.b32.xlu0 %v434, 8
    %v1247 = vpop.permute.xlu0 %1246
    %1248 = vrot.lane.b32.xlu0 %v435, 8
    %v1249 = vpop.permute.xlu0 %1248
    %1250 = vrot.lane.b32.xlu0 %v436, 8
    %v1251 = vpop.permute.xlu0 %1250
    %1252 = vrot.lane.b32.xlu0 %v437, 8
    %v1253 = vpop.permute.xlu0 %1252
    %1254 = vrot.lane.b32.xlu0 %v438, 8
    %v1255 = vpop.permute.xlu0 %1254
    %1256 = vrot.lane.b32.xlu0 %v439, 8
    %v1257 = vpop.permute.xlu0 %1256
    %1258 = vrot.lane.b32.xlu0 %v440, 8
    %v1259 = vpop.permute.xlu0 %1258
    %1260 = vrot.lane.b32.xlu0 %v441, 8
    %v1261 = vpop.permute.xlu0 %1260
    %1262 = vrot.lane.b32.xlu0 %v442, 8
    %v1263 = vpop.permute.xlu0 %1262
    %1264 = vrot.lane.b32.xlu0 %v443, 8
    %v1265 = vpop.permute.xlu0 %1264
    %1266 = vrot.lane.b32.xlu0 %v444, 8
    %v1267 = vpop.permute.xlu0 %1266
    %1268 = vrot.lane.b32.xlu0 %v445, 8
    %v1269 = vpop.permute.xlu0 %1268
    %1270 = vrot.lane.b32.xlu0 %v446, 8
    %v1271 = vpop.permute.xlu0 %1270
    %1272 = vrot.lane.b32.xlu0 %v447, 8
    %v1273 = vpop.permute.xlu0 %1272
    %1274 = vrot.lane.b32.xlu0 %v448, 8
    %v1275 = vpop.permute.xlu0 %1274
    %1276 = vrot.lane.b32.xlu0 %v449, 8
    %v1277 = vpop.permute.xlu0 %1276
    %1278 = vrot.lane.b32.xlu0 %v450, 8
    %v1279 = vpop.permute.xlu0 %1278
    %1280 = vrot.lane.b32.xlu0 %v451, 8
    %v1281 = vpop.permute.xlu0 %1280
    %1282 = vrot.lane.b32.xlu0 %v452, 8
    %v1283 = vpop.permute.xlu0 %1282
    %1284 = vrot.lane.b32.xlu0 %v453, 8
    %v1285 = vpop.permute.xlu0 %1284
    %1286 = vrot.lane.b32.xlu0 %v454, 8
    %v1287 = vpop.permute.xlu0 %1286
    %1416 = vrot.lane.b32.xlu0 %v455, 12
    %v1417 = vpop.permute.xlu0 %1416
    %1418 = vrot.lane.b32.xlu0 %v456, 12
    %v1419 = vpop.permute.xlu0 %1418
    %1420 = vrot.lane.b32.xlu0 %v457, 12
    %v1421 = vpop.permute.xlu0 %1420
    %1422 = vrot.lane.b32.xlu0 %v458, 12
    %v1423 = vpop.permute.xlu0 %1422
    %1424 = vrot.lane.b32.xlu0 %v459, 12
    %v1425 = vpop.permute.xlu0 %1424
    %1426 = vrot.lane.b32.xlu0 %v460, 12
    %v1427 = vpop.permute.xlu0 %1426
    %1428 = vrot.lane.b32.xlu0 %v461, 12
    %v1429 = vpop.permute.xlu0 %1428
    %1430 = vrot.lane.b32.xlu0 %v462, 12
    %v1431 = vpop.permute.xlu0 %1430
    %1432 = vrot.lane.b32.xlu0 %v463, 12
    %v1433 = vpop.permute.xlu0 %1432
    %1434 = vrot.lane.b32.xlu0 %v464, 12
    %v1435 = vpop.permute.xlu0 %1434
    %1436 = vrot.lane.b32.xlu0 %v465, 12
    %v1437 = vpop.permute.xlu0 %1436
    %1438 = vrot.lane.b32.xlu0 %v466, 12
    %v1439 = vpop.permute.xlu0 %1438
    %1440 = vrot.lane.b32.xlu0 %v467, 12
    %v1441 = vpop.permute.xlu0 %1440
    %1442 = vrot.lane.b32.xlu0 %v468, 12
    %v1443 = vpop.permute.xlu0 %1442
    %1444 = vrot.lane.b32.xlu0 %v469, 12
    %v1445 = vpop.permute.xlu0 %1444
    %1446 = vrot.lane.b32.xlu0 %v470, 12
    %v1447 = vpop.permute.xlu0 %1446
    %1448 = vrot.lane.b32.xlu0 %v471, 12
    %v1449 = vpop.permute.xlu0 %1448
    %1450 = vrot.lane.b32.xlu0 %v472, 12
    %v1451 = vpop.permute.xlu0 %1450
    %1452 = vrot.lane.b32.xlu0 %v473, 12
    %v1453 = vpop.permute.xlu0 %1452
    %1454 = vrot.lane.b32.xlu0 %v474, 12
    %v1455 = vpop.permute.xlu0 %1454
    %1456 = vrot.lane.b32.xlu0 %v475, 12
    %v1457 = vpop.permute.xlu0 %1456
    %1458 = vrot.lane.b32.xlu0 %v476, 12
    %v1459 = vpop.permute.xlu0 %1458
    %1460 = vrot.lane.b32.xlu0 %v477, 12
    %v1461 = vpop.permute.xlu0 %1460
    %1462 = vrot.lane.b32.xlu0 %v478, 12
    %v1463 = vpop.permute.xlu0 %1462
    %1464 = vrot.lane.b32.xlu0 %v479, 12
    %v1465 = vpop.permute.xlu0 %1464
    %1466 = vrot.lane.b32.xlu0 %v480, 12
    %v1467 = vpop.permute.xlu0 %1466
    %1468 = vrot.lane.b32.xlu0 %v481, 12
    %v1469 = vpop.permute.xlu0 %1468
    %1470 = vrot.lane.b32.xlu0 %v482, 12
    %v1471 = vpop.permute.xlu0 %1470
    %1472 = vrot.lane.b32.xlu0 %v483, 12
    %v1473 = vpop.permute.xlu0 %1472
    %1474 = vrot.lane.b32.xlu0 %v484, 12
    %v1475 = vpop.permute.xlu0 %1474
    %1476 = vrot.lane.b32.xlu0 %v485, 12
    %v1477 = vpop.permute.xlu0 %1476
    %1478 = vrot.lane.b32.xlu0 %v486, 12
    %v1479 = vpop.permute.xlu0 %1478
    %1480 = vrot.lane.b32.xlu0 %v487, 12
    %v1481 = vpop.permute.xlu0 %1480
    %1482 = vrot.lane.b32.xlu0 %v488, 12
    %v1483 = vpop.permute.xlu0 %1482
    %1484 = vrot.lane.b32.xlu0 %v489, 12
    %v1485 = vpop.permute.xlu0 %1484
    %1486 = vrot.lane.b32.xlu0 %v490, 12
    %v1487 = vpop.permute.xlu0 %1486
    %1488 = vrot.lane.b32.xlu0 %v491, 12
    %v1489 = vpop.permute.xlu0 %1488
    %1490 = vrot.lane.b32.xlu0 %v492, 12
    %v1491 = vpop.permute.xlu0 %1490
    %1492 = vrot.lane.b32.xlu0 %v493, 12
    %v1493 = vpop.permute.xlu0 %1492
    %1494 = vrot.lane.b32.xlu0 %v494, 12
    %v1495 = vpop.permute.xlu0 %1494
    %1496 = vrot.lane.b32.xlu0 %v495, 12
    %v1497 = vpop.permute.xlu0 %1496
    %1498 = vrot.lane.b32.xlu0 %v496, 12
    %v1499 = vpop.permute.xlu0 %1498
    %1500 = vrot.lane.b32.xlu0 %v497, 12
    %v1501 = vpop.permute.xlu0 %1500
    %1502 = vrot.lane.b32.xlu0 %v498, 12
    %v1503 = vpop.permute.xlu0 %1502
    %1504 = vrot.lane.b32.xlu0 %v499, 12
    %v1505 = vpop.permute.xlu0 %1504
    %1506 = vrot.lane.b32.xlu0 %v500, 12
    %v1507 = vpop.permute.xlu0 %1506
    %1508 = vrot.lane.b32.xlu0 %v501, 12
    %v1509 = vpop.permute.xlu0 %1508
    %1510 = vrot.lane.b32.xlu0 %v502, 12
    %v1511 = vpop.permute.xlu0 %1510
    %1512 = vrot.lane.b32.xlu0 %v503, 12
    %v1513 = vpop.permute.xlu0 %1512
    %1514 = vrot.lane.b32.xlu0 %v504, 12
    %v1515 = vpop.permute.xlu0 %1514
    %1516 = vrot.lane.b32.xlu0 %v505, 12
    %v1517 = vpop.permute.xlu0 %1516
    %1518 = vrot.lane.b32.xlu0 %v506, 12
    %v1519 = vpop.permute.xlu0 %1518
    %1520 = vrot.lane.b32.xlu0 %v507, 12
    %v1521 = vpop.permute.xlu0 %1520
    %1522 = vrot.lane.b32.xlu0 %v508, 12
    %v1523 = vpop.permute.xlu0 %1522
    %1524 = vrot.lane.b32.xlu0 %v509, 12
    %v1525 = vpop.permute.xlu0 %1524
    %1526 = vrot.lane.b32.xlu0 %v510, 12
    %v1527 = vpop.permute.xlu0 %1526
    %1528 = vrot.lane.b32.xlu0 %v511, 12
    %v1529 = vpop.permute.xlu0 %1528
    %1530 = vrot.lane.b32.xlu0 %v512, 12
    %v1531 = vpop.permute.xlu0 %1530
    %1532 = vrot.lane.b32.xlu0 %v513, 12
    %v1533 = vpop.permute.xlu0 %1532
    %1534 = vrot.lane.b32.xlu0 %v514, 12
    %v1535 = vpop.permute.xlu0 %1534
    %1536 = vrot.lane.b32.xlu0 %v515, 12
    %v1537 = vpop.permute.xlu0 %1536
    %1538 = vrot.lane.b32.xlu0 %v516, 12
    %v1539 = vpop.permute.xlu0 %1538
    %1540 = vrot.lane.b32.xlu0 %v517, 12
    %v1541 = vpop.permute.xlu0 %1540
    %1542 = vrot.lane.b32.xlu0 %v518, 12
    %v1543 = vpop.permute.xlu0 %1542
    %1672 = vrot.lane.b32.xlu0 %v519, 16
    %v1673 = vpop.permute.xlu0 %1672
    %1674 = vrot.lane.b32.xlu0 %v520, 16
    %v1675 = vpop.permute.xlu0 %1674
    %1676 = vrot.lane.b32.xlu0 %v521, 16
    %v1677 = vpop.permute.xlu0 %1676
    %1678 = vrot.lane.b32.xlu0 %v522, 16
    %v1679 = vpop.permute.xlu0 %1678
    %1680 = vrot.lane.b32.xlu0 %v523, 16
    %v1681 = vpop.permute.xlu0 %1680
    %1682 = vrot.lane.b32.xlu0 %v524, 16
    %v1683 = vpop.permute.xlu0 %1682
    %1684 = vrot.lane.b32.xlu0 %v525, 16
    %v1685 = vpop.permute.xlu0 %1684
    %1686 = vrot.lane.b32.xlu0 %v526, 16
    %v1687 = vpop.permute.xlu0 %1686
    %1688 = vrot.lane.b32.xlu0 %v527, 16
    %v1689 = vpop.permute.xlu0 %1688
    %1690 = vrot.lane.b32.xlu0 %v528, 16
    %v1691 = vpop.permute.xlu0 %1690
    %1692 = vrot.lane.b32.xlu0 %v529, 16
    %v1693 = vpop.permute.xlu0 %1692
    %1694 = vrot.lane.b32.xlu0 %v530, 16
    %v1695 = vpop.permute.xlu0 %1694
    %1696 = vrot.lane.b32.xlu0 %v531, 16
    %v1697 = vpop.permute.xlu0 %1696
    %1698 = vrot.lane.b32.xlu0 %v532, 16
    %v1699 = vpop.permute.xlu0 %1698
    %1700 = vrot.lane.b32.xlu0 %v533, 16
    %v1701 = vpop.permute.xlu0 %1700
    %1702 = vrot.lane.b32.xlu0 %v534, 16
    %v1703 = vpop.permute.xlu0 %1702
    %1704 = vrot.lane.b32.xlu0 %v535, 16
    %v1705 = vpop.permute.xlu0 %1704
    %1706 = vrot.lane.b32.xlu0 %v536, 16
    %v1707 = vpop.permute.xlu0 %1706
    %1708 = vrot.lane.b32.xlu0 %v537, 16
    %v1709 = vpop.permute.xlu0 %1708
    %1710 = vrot.lane.b32.xlu0 %v538, 16
    %v1711 = vpop.permute.xlu0 %1710
    %1712 = vrot.lane.b32.xlu0 %v539, 16
    %v1713 = vpop.permute.xlu0 %1712
    %1714 = vrot.lane.b32.xlu0 %v540, 16
    %v1715 = vpop.permute.xlu0 %1714
    %1716 = vrot.lane.b32.xlu0 %v541, 16
    %v1717 = vpop.permute.xlu0 %1716
    %1718 = vrot.lane.b32.xlu0 %v542, 16
    %v1719 = vpop.permute.xlu0 %1718
    %1720 = vrot.lane.b32.xlu0 %v543, 16
    %v1721 = vpop.permute.xlu0 %1720
    %1722 = vrot.lane.b32.xlu0 %v544, 16
    %v1723 = vpop.permute.xlu0 %1722
    %1724 = vrot.lane.b32.xlu0 %v545, 16
    %v1725 = vpop.permute.xlu0 %1724
    %1726 = vrot.lane.b32.xlu0 %v546, 16
    %v1727 = vpop.permute.xlu0 %1726
    %1728 = vrot.lane.b32.xlu0 %v547, 16
    %v1729 = vpop.permute.xlu0 %1728
    %1730 = vrot.lane.b32.xlu0 %v548, 16
    %v1731 = vpop.permute.xlu0 %1730
    %1732 = vrot.lane.b32.xlu0 %v549, 16
    %v1733 = vpop.permute.xlu0 %1732
    %1734 = vrot.lane.b32.xlu0 %v550, 16
    %v1735 = vpop.permute.xlu0 %1734
    %1736 = vrot.lane.b32.xlu0 %v551, 16
    %v1737 = vpop.permute.xlu0 %1736
    %1738 = vrot.lane.b32.xlu0 %v552, 16
    %v1739 = vpop.permute.xlu0 %1738
    %1740 = vrot.lane.b32.xlu0 %v553, 16
    %v1741 = vpop.permute.xlu0 %1740
    %1742 = vrot.lane.b32.xlu0 %v554, 16
    %v1743 = vpop.permute.xlu0 %1742
    %1744 = vrot.lane.b32.xlu0 %v555, 16
    %v1745 = vpop.permute.xlu0 %1744
    %1746 = vrot.lane.b32.xlu0 %v556, 16
    %v1747 = vpop.permute.xlu0 %1746
    %1748 = vrot.lane.b32.xlu0 %v557, 16
    %v1749 = vpop.permute.xlu0 %1748
    %1750 = vrot.lane.b32.xlu0 %v558, 16
    %v1751 = vpop.permute.xlu0 %1750
    %1752 = vrot.lane.b32.xlu0 %v559, 16
    %v1753 = vpop.permute.xlu0 %1752
    %1754 = vrot.lane.b32.xlu0 %v560, 16
    %v1755 = vpop.permute.xlu0 %1754
    %1756 = vrot.lane.b32.xlu0 %v561, 16
    %v1757 = vpop.permute.xlu0 %1756
    %1758 = vrot.lane.b32.xlu0 %v562, 16
    %v1759 = vpop.permute.xlu0 %1758
    %1760 = vrot.lane.b32.xlu0 %v563, 16
    %v1761 = vpop.permute.xlu0 %1760
    %1762 = vrot.lane.b32.xlu0 %v564, 16
    %v1763 = vpop.permute.xlu0 %1762
    %1764 = vrot.lane.b32.xlu0 %v565, 16
    %v1765 = vpop.permute.xlu0 %1764
    %1766 = vrot.lane.b32.xlu0 %v566, 16
    %v1767 = vpop.permute.xlu0 %1766
    %1768 = vrot.lane.b32.xlu0 %v567, 16
    %v1769 = vpop.permute.xlu0 %1768
    %1770 = vrot.lane.b32.xlu0 %v568, 16
    %v1771 = vpop.permute.xlu0 %1770
    %1772 = vrot.lane.b32.xlu0 %v569, 16
    %v1773 = vpop.permute.xlu0 %1772
    %1774 = vrot.lane.b32.xlu0 %v570, 16
    %v1775 = vpop.permute.xlu0 %1774
    %1776 = vrot.lane.b32.xlu0 %v571, 16
    %v1777 = vpop.permute.xlu0 %1776
    %1778 = vrot.lane.b32.xlu0 %v572, 16
    %v1779 = vpop.permute.xlu0 %1778
    %1780 = vrot.lane.b32.xlu0 %v573, 16
    %v1781 = vpop.permute.xlu0 %1780
    %1782 = vrot.lane.b32.xlu0 %v574, 16
    %v1783 = vpop.permute.xlu0 %1782
    %1784 = vrot.lane.b32.xlu0 %v575, 16
    %v1785 = vpop.permute.xlu0 %1784
    %1786 = vrot.lane.b32.xlu0 %v576, 16
    %v1787 = vpop.permute.xlu0 %1786
    %1788 = vrot.lane.b32.xlu0 %v577, 16
    %v1789 = vpop.permute.xlu0 %1788
    %1790 = vrot.lane.b32.xlu0 %v578, 16
    %v1791 = vpop.permute.xlu0 %1790
    %1792 = vrot.lane.b32.xlu0 %v579, 16
    %v1793 = vpop.permute.xlu0 %1792
    %1794 = vrot.lane.b32.xlu0 %v580, 16
    %v1795 = vpop.permute.xlu0 %1794
    %1796 = vrot.lane.b32.xlu0 %v581, 16
    %v1797 = vpop.permute.xlu0 %1796
    %1798 = vrot.lane.b32.xlu0 %v582, 16
    %v1799 = vpop.permute.xlu0 %1798
    %1928 = vrot.lane.b32.xlu0 %v583, 20
    %v1929 = vpop.permute.xlu0 %1928
    %1930 = vrot.lane.b32.xlu0 %v584, 20
    %v1931 = vpop.permute.xlu0 %1930
    %1932 = vrot.lane.b32.xlu0 %v585, 20
    %v1933 = vpop.permute.xlu0 %1932
    %1934 = vrot.lane.b32.xlu0 %v586, 20
    %v1935 = vpop.permute.xlu0 %1934
    %1936 = vrot.lane.b32.xlu0 %v587, 20
    %v1937 = vpop.permute.xlu0 %1936
    %1938 = vrot.lane.b32.xlu0 %v588, 20
    %v1939 = vpop.permute.xlu0 %1938
    %1940 = vrot.lane.b32.xlu0 %v589, 20
    %v1941 = vpop.permute.xlu0 %1940
    %1942 = vrot.lane.b32.xlu0 %v590, 20
    %v1943 = vpop.permute.xlu0 %1942
    %1944 = vrot.lane.b32.xlu0 %v591, 20
    %v1945 = vpop.permute.xlu0 %1944
    %1946 = vrot.lane.b32.xlu0 %v592, 20
    %v1947 = vpop.permute.xlu0 %1946
    %1948 = vrot.lane.b32.xlu0 %v593, 20
    %v1949 = vpop.permute.xlu0 %1948
    %1950 = vrot.lane.b32.xlu0 %v594, 20
    %v1951 = vpop.permute.xlu0 %1950
    %1952 = vrot.lane.b32.xlu0 %v595, 20
    %v1953 = vpop.permute.xlu0 %1952
    %1954 = vrot.lane.b32.xlu0 %v596, 20
    %v1955 = vpop.permute.xlu0 %1954
    %1956 = vrot.lane.b32.xlu0 %v597, 20
    %v1957 = vpop.permute.xlu0 %1956
    %1958 = vrot.lane.b32.xlu0 %v598, 20
    %v1959 = vpop.permute.xlu0 %1958
    %1960 = vrot.lane.b32.xlu0 %v599, 20
    %v1961 = vpop.permute.xlu0 %1960
    %1962 = vrot.lane.b32.xlu0 %v600, 20
    %v1963 = vpop.permute.xlu0 %1962
    %1964 = vrot.lane.b32.xlu0 %v601, 20
    %v1965 = vpop.permute.xlu0 %1964
    %1966 = vrot.lane.b32.xlu0 %v602, 20
    %v1967 = vpop.permute.xlu0 %1966
    %1968 = vrot.lane.b32.xlu0 %v603, 20
    %v1969 = vpop.permute.xlu0 %1968
    %1970 = vrot.lane.b32.xlu0 %v604, 20
    %v1971 = vpop.permute.xlu0 %1970
    %1972 = vrot.lane.b32.xlu0 %v605, 20
    %v1973 = vpop.permute.xlu0 %1972
    %1974 = vrot.lane.b32.xlu0 %v606, 20
    %v1975 = vpop.permute.xlu0 %1974
    %1976 = vrot.lane.b32.xlu0 %v607, 20
    %v1977 = vpop.permute.xlu0 %1976
    %1978 = vrot.lane.b32.xlu0 %v608, 20
    %v1979 = vpop.permute.xlu0 %1978
    %1980 = vrot.lane.b32.xlu0 %v609, 20
    %v1981 = vpop.permute.xlu0 %1980
    %1982 = vrot.lane.b32.xlu0 %v610, 20
    %v1983 = vpop.permute.xlu0 %1982
    %1984 = vrot.lane.b32.xlu0 %v611, 20
    %v1985 = vpop.permute.xlu0 %1984
    %1986 = vrot.lane.b32.xlu0 %v612, 20
    %v1987 = vpop.permute.xlu0 %1986
    %1988 = vrot.lane.b32.xlu0 %v613, 20
    %v1989 = vpop.permute.xlu0 %1988
    %1990 = vrot.lane.b32.xlu0 %v614, 20
    %v1991 = vpop.permute.xlu0 %1990
    %1992 = vrot.lane.b32.xlu0 %v615, 20
    %v1993 = vpop.permute.xlu0 %1992
    %1994 = vrot.lane.b32.xlu0 %v616, 20
    %v1995 = vpop.permute.xlu0 %1994
    %1996 = vrot.lane.b32.xlu0 %v617, 20
    %v1997 = vpop.permute.xlu0 %1996
    %1998 = vrot.lane.b32.xlu0 %v618, 20
    %v1999 = vpop.permute.xlu0 %1998
    %2000 = vrot.lane.b32.xlu0 %v619, 20
    %v2001 = vpop.permute.xlu0 %2000
    %2002 = vrot.lane.b32.xlu0 %v620, 20
    %v2003 = vpop.permute.xlu0 %2002
    %2004 = vrot.lane.b32.xlu0 %v621, 20
    %v2005 = vpop.permute.xlu0 %2004
    %2006 = vrot.lane.b32.xlu0 %v622, 20
    %v2007 = vpop.permute.xlu0 %2006
    %2008 = vrot.lane.b32.xlu0 %v623, 20
    %v2009 = vpop.permute.xlu0 %2008
    %2010 = vrot.lane.b32.xlu0 %v624, 20
    %v2011 = vpop.permute.xlu0 %2010
    %2012 = vrot.lane.b32.xlu0 %v625, 20
    %v2013 = vpop.permute.xlu0 %2012
    %2014 = vrot.lane.b32.xlu0 %v626, 20
    %v2015 = vpop.permute.xlu0 %2014
    %2016 = vrot.lane.b32.xlu0 %v627, 20
    %v2017 = vpop.permute.xlu0 %2016
    %2018 = vrot.lane.b32.xlu0 %v628, 20
    %v2019 = vpop.permute.xlu0 %2018
    %2020 = vrot.lane.b32.xlu0 %v629, 20
    %v2021 = vpop.permute.xlu0 %2020
    %2022 = vrot.lane.b32.xlu0 %v630, 20
    %v2023 = vpop.permute.xlu0 %2022
    %2024 = vrot.lane.b32.xlu0 %v631, 20
    %v2025 = vpop.permute.xlu0 %2024
    %2026 = vrot.lane.b32.xlu0 %v632, 20
    %v2027 = vpop.permute.xlu0 %2026
    %2028 = vrot.lane.b32.xlu0 %v633, 20
    %v2029 = vpop.permute.xlu0 %2028
    %2030 = vrot.lane.b32.xlu0 %v634, 20
    %v2031 = vpop.permute.xlu0 %2030
    %2032 = vrot.lane.b32.xlu0 %v635, 20
    %v2033 = vpop.permute.xlu0 %2032
    %2034 = vrot.lane.b32.xlu0 %v636, 20
    %v2035 = vpop.permute.xlu0 %2034
    %2036 = vrot.lane.b32.xlu0 %v637, 20
    %v2037 = vpop.permute.xlu0 %2036
    %2038 = vrot.lane.b32.xlu0 %v638, 20
    %v2039 = vpop.permute.xlu0 %2038
    %2040 = vrot.lane.b32.xlu0 %v639, 20
    %v2041 = vpop.permute.xlu0 %2040
    %2042 = vrot.lane.b32.xlu0 %v640, 20
    %v2043 = vpop.permute.xlu0 %2042
    %2044 = vrot.lane.b32.xlu0 %v641, 20
    %v2045 = vpop.permute.xlu0 %2044
    %2046 = vrot.lane.b32.xlu0 %v642, 20
    %v2047 = vpop.permute.xlu0 %2046
    %2048 = vrot.lane.b32.xlu0 %v643, 20
    %v2049 = vpop.permute.xlu0 %2048
    %2050 = vrot.lane.b32.xlu0 %v644, 20
    %v2051 = vpop.permute.xlu0 %2050
    %2052 = vrot.lane.b32.xlu0 %v645, 20
    %v2053 = vpop.permute.xlu0 %2052
    %2054 = vrot.lane.b32.xlu0 %v646, 20
    %v2055 = vpop.permute.xlu0 %2054
    %2184 = vrot.lane.b32.xlu0 %v648, 24
    %v2185 = vpop.permute.xlu0 %2184
    %2186 = vrot.lane.b32.xlu0 %v649, 24
    %v2187 = vpop.permute.xlu0 %2186
    %2188 = vrot.lane.b32.xlu0 %v650, 24
    %v2189 = vpop.permute.xlu0 %2188
    %2190 = vrot.lane.b32.xlu0 %v651, 24
    %v2191 = vpop.permute.xlu0 %2190
    %2192 = vrot.lane.b32.xlu0 %v652, 24
    %v2193 = vpop.permute.xlu0 %2192
    %2194 = vrot.lane.b32.xlu0 %v653, 24
    %v2195 = vpop.permute.xlu0 %2194
    %2196 = vrot.lane.b32.xlu0 %v654, 24
    %v2197 = vpop.permute.xlu0 %2196
    %2198 = vrot.lane.b32.xlu0 %v655, 24
    %v2199 = vpop.permute.xlu0 %2198
    %2200 = vrot.lane.b32.xlu0 %v656, 24
    %v2201 = vpop.permute.xlu0 %2200
    %2202 = vrot.lane.b32.xlu0 %v657, 24
    %v2203 = vpop.permute.xlu0 %2202
    %2204 = vrot.lane.b32.xlu0 %v658, 24
    %v2205 = vpop.permute.xlu0 %2204
    %2206 = vrot.lane.b32.xlu0 %v659, 24
    %v2207 = vpop.permute.xlu0 %2206
    %2208 = vrot.lane.b32.xlu0 %v660, 24
    %v2209 = vpop.permute.xlu0 %2208
    %2210 = vrot.lane.b32.xlu0 %v661, 24
    %v2211 = vpop.permute.xlu0 %2210
    %2212 = vrot.lane.b32.xlu0 %v662, 24
    %v2213 = vpop.permute.xlu0 %2212
    %2214 = vrot.lane.b32.xlu0 %v663, 24
    %v2215 = vpop.permute.xlu0 %2214
    %2216 = vrot.lane.b32.xlu0 %v664, 24
    %v2217 = vpop.permute.xlu0 %2216
    %2218 = vrot.lane.b32.xlu0 %v665, 24
    %v2219 = vpop.permute.xlu0 %2218
    %2220 = vrot.lane.b32.xlu0 %v666, 24
    %v2221 = vpop.permute.xlu0 %2220
    %2222 = vrot.lane.b32.xlu0 %v667, 24
    %v2223 = vpop.permute.xlu0 %2222
    %2224 = vrot.lane.b32.xlu0 %v668, 24
    %v2225 = vpop.permute.xlu0 %2224
    %2226 = vrot.lane.b32.xlu0 %v669, 24
    %v2227 = vpop.permute.xlu0 %2226
    %2228 = vrot.lane.b32.xlu0 %v670, 24
    %v2229 = vpop.permute.xlu0 %2228
    %2230 = vrot.lane.b32.xlu0 %v671, 24
    %v2231 = vpop.permute.xlu0 %2230
    %2232 = vrot.lane.b32.xlu0 %v672, 24
    %v2233 = vpop.permute.xlu0 %2232
    %2234 = vrot.lane.b32.xlu0 %v673, 24
    %v2235 = vpop.permute.xlu0 %2234
    %2236 = vrot.lane.b32.xlu0 %v674, 24
    %v2237 = vpop.permute.xlu0 %2236
    %2238 = vrot.lane.b32.xlu0 %v675, 24
    %v2239 = vpop.permute.xlu0 %2238
    %2240 = vrot.lane.b32.xlu0 %v676, 24
    %v2241 = vpop.permute.xlu0 %2240
    %2242 = vrot.lane.b32.xlu0 %v677, 24
    %v2243 = vpop.permute.xlu0 %2242
    %2244 = vrot.lane.b32.xlu0 %v678, 24
    %v2245 = vpop.permute.xlu0 %2244
    %2246 = vrot.lane.b32.xlu0 %v679, 24
    %v2247 = vpop.permute.xlu0 %2246
    %2248 = vrot.lane.b32.xlu0 %v680, 24
    %v2249 = vpop.permute.xlu0 %2248
    %2250 = vrot.lane.b32.xlu0 %v681, 24
    %v2251 = vpop.permute.xlu0 %2250
    %2252 = vrot.lane.b32.xlu0 %v682, 24
    %v2253 = vpop.permute.xlu0 %2252
    %2254 = vrot.lane.b32.xlu0 %v683, 24
    %v2255 = vpop.permute.xlu0 %2254
    %2256 = vrot.lane.b32.xlu0 %v684, 24
    %v2257 = vpop.permute.xlu0 %2256
    %2258 = vrot.lane.b32.xlu0 %v685, 24
    %v2259 = vpop.permute.xlu0 %2258
    %2260 = vrot.lane.b32.xlu0 %v686, 24
    %v2261 = vpop.permute.xlu0 %2260
    %2262 = vrot.lane.b32.xlu0 %v687, 24
    %v2263 = vpop.permute.xlu0 %2262
    %2264 = vrot.lane.b32.xlu0 %v688, 24
    %v2265 = vpop.permute.xlu0 %2264
    %2266 = vrot.lane.b32.xlu0 %v689, 24
    %v2267 = vpop.permute.xlu0 %2266
    %2268 = vrot.lane.b32.xlu0 %v690, 24
    %v2269 = vpop.permute.xlu0 %2268
    %2270 = vrot.lane.b32.xlu0 %v691, 24
    %v2271 = vpop.permute.xlu0 %2270
    %2272 = vrot.lane.b32.xlu0 %v692, 24
    %v2273 = vpop.permute.xlu0 %2272
    %2274 = vrot.lane.b32.xlu0 %v693, 24
    %v2275 = vpop.permute.xlu0 %2274
    %2276 = vrot.lane.b32.xlu0 %v694, 24
    %v2277 = vpop.permute.xlu0 %2276
    %2278 = vrot.lane.b32.xlu0 %v695, 24
    %v2279 = vpop.permute.xlu0 %2278
    %2280 = vrot.lane.b32.xlu0 %v696, 24
    %v2281 = vpop.permute.xlu0 %2280
    %2282 = vrot.lane.b32.xlu0 %v697, 24
    %v2283 = vpop.permute.xlu0 %2282
    %2284 = vrot.lane.b32.xlu0 %v698, 24
    %v2285 = vpop.permute.xlu0 %2284
    %2286 = vrot.lane.b32.xlu0 %v699, 24
    %v2287 = vpop.permute.xlu0 %2286
    %2288 = vrot.lane.b32.xlu0 %v700, 24
    %v2289 = vpop.permute.xlu0 %2288
    %2290 = vrot.lane.b32.xlu0 %v701, 24
    %v2291 = vpop.permute.xlu0 %2290
    %2292 = vrot.lane.b32.xlu0 %v702, 24
    %v2293 = vpop.permute.xlu0 %2292
    %2294 = vrot.lane.b32.xlu0 %v703, 24
    %v2295 = vpop.permute.xlu0 %2294
    %2296 = vrot.lane.b32.xlu0 %v704, 24
    %v2297 = vpop.permute.xlu0 %2296
    %2298 = vrot.lane.b32.xlu0 %v705, 24
    %v2299 = vpop.permute.xlu0 %2298
    %2300 = vrot.lane.b32.xlu0 %v706, 24
    %v2301 = vpop.permute.xlu0 %2300
    %2302 = vrot.lane.b32.xlu0 %v707, 24
    %v2303 = vpop.permute.xlu0 %2302
    %2304 = vrot.lane.b32.xlu0 %v708, 24
    %v2305 = vpop.permute.xlu0 %2304
    %2306 = vrot.lane.b32.xlu0 %v709, 24
    %v2307 = vpop.permute.xlu0 %2306
    %2308 = vrot.lane.b32.xlu0 %v710, 24
    %v2309 = vpop.permute.xlu0 %2308
    %2310 = vrot.lane.b32.xlu0 %v711, 24
    %v2311 = vpop.permute.xlu0 %2310
    %2440 = vrot.lane.b32.xlu0 %v712, 28
    %v2441 = vpop.permute.xlu0 %2440
    %2442 = vrot.lane.b32.xlu0 %v713, 28
    %v2443 = vpop.permute.xlu0 %2442
    %2444 = vrot.lane.b32.xlu0 %v714, 28
    %v2445 = vpop.permute.xlu0 %2444
    %2446 = vrot.lane.b32.xlu0 %v715, 28
    %v2447 = vpop.permute.xlu0 %2446
    %2448 = vrot.lane.b32.xlu0 %v716, 28
    %v2449 = vpop.permute.xlu0 %2448
    %2450 = vrot.lane.b32.xlu0 %v717, 28
    %v2451 = vpop.permute.xlu0 %2450
    %2452 = vrot.lane.b32.xlu0 %v718, 28
    %v2453 = vpop.permute.xlu0 %2452
    %2454 = vrot.lane.b32.xlu0 %v719, 28
    %v2455 = vpop.permute.xlu0 %2454
    %2456 = vrot.lane.b32.xlu0 %v720, 28
    %v2457 = vpop.permute.xlu0 %2456
    %2458 = vrot.lane.b32.xlu0 %v721, 28
    %v2459 = vpop.permute.xlu0 %2458
    %2460 = vrot.lane.b32.xlu0 %v722, 28
    %v2461 = vpop.permute.xlu0 %2460
    %2462 = vrot.lane.b32.xlu0 %v723, 28
    %v2463 = vpop.permute.xlu0 %2462
    %2464 = vrot.lane.b32.xlu0 %v724, 28
    %v2465 = vpop.permute.xlu0 %2464
    %2466 = vrot.lane.b32.xlu0 %v725, 28
    %v2467 = vpop.permute.xlu0 %2466
    %2468 = vrot.lane.b32.xlu0 %v726, 28
    %v2469 = vpop.permute.xlu0 %2468
    %2470 = vrot.lane.b32.xlu0 %v727, 28
    %v2471 = vpop.permute.xlu0 %2470
    %2472 = vrot.lane.b32.xlu0 %v728, 28
    %v2473 = vpop.permute.xlu0 %2472
    %2474 = vrot.lane.b32.xlu0 %v729, 28
    %v2475 = vpop.permute.xlu0 %2474
    %2476 = vrot.lane.b32.xlu0 %v730, 28
    %v2477 = vpop.permute.xlu0 %2476
    %2478 = vrot.lane.b32.xlu0 %v731, 28
    %v2479 = vpop.permute.xlu0 %2478
    %2480 = vrot.lane.b32.xlu0 %v732, 28
    %v2481 = vpop.permute.xlu0 %2480
    %2482 = vrot.lane.b32.xlu0 %v733, 28
    %v2483 = vpop.permute.xlu0 %2482
    %2484 = vrot.lane.b32.xlu0 %v734, 28
    %v2485 = vpop.permute.xlu0 %2484
    %2486 = vrot.lane.b32.xlu0 %v735, 28
    %v2487 = vpop.permute.xlu0 %2486
    %2488 = vrot.lane.b32.xlu0 %v736, 28
    %v2489 = vpop.permute.xlu0 %2488
    %2490 = vrot.lane.b32.xlu0 %v737, 28
    %v2491 = vpop.permute.xlu0 %2490
    %2492 = vrot.lane.b32.xlu0 %v738, 28
    %v2493 = vpop.permute.xlu0 %2492
    %2494 = vrot.lane.b32.xlu0 %v739, 28
    %v2495 = vpop.permute.xlu0 %2494
    %2496 = vrot.lane.b32.xlu0 %v740, 28
    %v2497 = vpop.permute.xlu0 %2496
    %2498 = vrot.lane.b32.xlu0 %v741, 28
    %v2499 = vpop.permute.xlu0 %2498
    %2500 = vrot.lane.b32.xlu0 %v742, 28
    %v2501 = vpop.permute.xlu0 %2500
    %2502 = vrot.lane.b32.xlu0 %v743, 28
    %v2503 = vpop.permute.xlu0 %2502
    %2504 = vrot.lane.b32.xlu0 %v744, 28
    %v2505 = vpop.permute.xlu0 %2504
    %2506 = vrot.lane.b32.xlu0 %v745, 28
    %v2507 = vpop.permute.xlu0 %2506
    %2508 = vrot.lane.b32.xlu0 %v746, 28
    %v2509 = vpop.permute.xlu0 %2508
    %2510 = vrot.lane.b32.xlu0 %v747, 28
    %v2511 = vpop.permute.xlu0 %2510
    %2512 = vrot.lane.b32.xlu0 %v748, 28
    %v2513 = vpop.permute.xlu0 %2512
    %2514 = vrot.lane.b32.xlu0 %v749, 28
    %v2515 = vpop.permute.xlu0 %2514
    %2516 = vrot.lane.b32.xlu0 %v750, 28
    %v2517 = vpop.permute.xlu0 %2516
    %2518 = vrot.lane.b32.xlu0 %v751, 28
    %v2519 = vpop.permute.xlu0 %2518
    %2520 = vrot.lane.b32.xlu0 %v752, 28
    %v2521 = vpop.permute.xlu0 %2520
    %2522 = vrot.lane.b32.xlu0 %v753, 28
    %v2523 = vpop.permute.xlu0 %2522
    %2524 = vrot.lane.b32.xlu0 %v754, 28
    %v2525 = vpop.permute.xlu0 %2524
    %2526 = vrot.lane.b32.xlu0 %v755, 28
    %v2527 = vpop.permute.xlu0 %2526
    %2528 = vrot.lane.b32.xlu0 %v756, 28
    %v2529 = vpop.permute.xlu0 %2528
    %2530 = vrot.lane.b32.xlu0 %v757, 28
    %v2531 = vpop.permute.xlu0 %2530
    %2532 = vrot.lane.b32.xlu0 %v758, 28
    %v2533 = vpop.permute.xlu0 %2532
    %2534 = vrot.lane.b32.xlu0 %v759, 28
    %v2535 = vpop.permute.xlu0 %2534
    %2536 = vrot.lane.b32.xlu0 %v760, 28
    %v2537 = vpop.permute.xlu0 %2536
    %2538 = vrot.lane.b32.xlu0 %v761, 28
    %v2539 = vpop.permute.xlu0 %2538
    %2540 = vrot.lane.b32.xlu0 %v762, 28
    %v2541 = vpop.permute.xlu0 %2540
    %2542 = vrot.lane.b32.xlu0 %v763, 28
    %v2543 = vpop.permute.xlu0 %2542
    %2544 = vrot.lane.b32.xlu0 %v764, 28
    %v2545 = vpop.permute.xlu0 %2544
    %2546 = vrot.lane.b32.xlu0 %v765, 28
    %v2547 = vpop.permute.xlu0 %2546
    %2548 = vrot.lane.b32.xlu0 %v766, 28
    %v2549 = vpop.permute.xlu0 %2548
    %2550 = vrot.lane.b32.xlu0 %v767, 28
    %v2551 = vpop.permute.xlu0 %2550
    %2552 = vrot.lane.b32.xlu0 %v768, 28
    %v2553 = vpop.permute.xlu0 %2552
    %2554 = vrot.lane.b32.xlu0 %v769, 28
    %v2555 = vpop.permute.xlu0 %2554
    %2556 = vrot.lane.b32.xlu0 %v770, 28
    %v2557 = vpop.permute.xlu0 %2556
    %2558 = vrot.lane.b32.xlu0 %v771, 28
    %v2559 = vpop.permute.xlu0 %2558
    %2560 = vrot.lane.b32.xlu0 %v772, 28
    %v2561 = vpop.permute.xlu0 %2560
    %2562 = vrot.lane.b32.xlu0 %v773, 28
    %v2563 = vpop.permute.xlu0 %2562
    %2564 = vrot.lane.b32.xlu0 %v774, 28
    %v2565 = vpop.permute.xlu0 %2564
    %2566 = vrot.lane.b32.xlu0 %v775, 28
    %v2567 = vpop.permute.xlu0 %2566
    %2696 = vrot.lane.b32.xlu0 %v776, 32
    %v2697 = vpop.permute.xlu0 %2696
    %2698 = vrot.lane.b32.xlu0 %v777, 32
    %v2699 = vpop.permute.xlu0 %2698
    %2700 = vrot.lane.b32.xlu0 %v778, 32
    %v2701 = vpop.permute.xlu0 %2700
    %2702 = vrot.lane.b32.xlu0 %v779, 32
    %v2703 = vpop.permute.xlu0 %2702
    %2704 = vrot.lane.b32.xlu0 %v780, 32
    %v2705 = vpop.permute.xlu0 %2704
    %2706 = vrot.lane.b32.xlu0 %v781, 32
    %v2707 = vpop.permute.xlu0 %2706
    %2708 = vrot.lane.b32.xlu0 %v782, 32
    %v2709 = vpop.permute.xlu0 %2708
    %2710 = vrot.lane.b32.xlu0 %v783, 32
    %v2711 = vpop.permute.xlu0 %2710
    %2712 = vrot.lane.b32.xlu0 %v784, 32
    %v2713 = vpop.permute.xlu0 %2712
    %2714 = vrot.lane.b32.xlu0 %v785, 32
    %v2715 = vpop.permute.xlu0 %2714
    %2716 = vrot.lane.b32.xlu0 %v786, 32
    %v2717 = vpop.permute.xlu0 %2716
    %2718 = vrot.lane.b32.xlu0 %v787, 32
    %v2719 = vpop.permute.xlu0 %2718
    %2720 = vrot.lane.b32.xlu0 %v788, 32
    %v2721 = vpop.permute.xlu0 %2720
    %2722 = vrot.lane.b32.xlu0 %v789, 32
    %v2723 = vpop.permute.xlu0 %2722
    %2724 = vrot.lane.b32.xlu0 %v790, 32
    %v2725 = vpop.permute.xlu0 %2724
    %2726 = vrot.lane.b32.xlu0 %v791, 32
    %v2727 = vpop.permute.xlu0 %2726
    %2728 = vrot.lane.b32.xlu0 %v792, 32
    %v2729 = vpop.permute.xlu0 %2728
    %2730 = vrot.lane.b32.xlu0 %v793, 32
    %v2731 = vpop.permute.xlu0 %2730
    %2732 = vrot.lane.b32.xlu0 %v794, 32
    %v2733 = vpop.permute.xlu0 %2732
    %2734 = vrot.lane.b32.xlu0 %v795, 32
    %v2735 = vpop.permute.xlu0 %2734
    %2736 = vrot.lane.b32.xlu0 %v796, 32
    %v2737 = vpop.permute.xlu0 %2736
    %2738 = vrot.lane.b32.xlu0 %v797, 32
    %v2739 = vpop.permute.xlu0 %2738
    %2740 = vrot.lane.b32.xlu0 %v798, 32
    %v2741 = vpop.permute.xlu0 %2740
    %2742 = vrot.lane.b32.xlu0 %v799, 32
    %v2743 = vpop.permute.xlu0 %2742
    %2744 = vrot.lane.b32.xlu0 %v800, 32
    %v2745 = vpop.permute.xlu0 %2744
    %2746 = vrot.lane.b32.xlu0 %v801, 32
    %v2747 = vpop.permute.xlu0 %2746
    %2748 = vrot.lane.b32.xlu0 %v802, 32
    %v2749 = vpop.permute.xlu0 %2748
    %2750 = vrot.lane.b32.xlu0 %v803, 32
    %v2751 = vpop.permute.xlu0 %2750
    %2752 = vrot.lane.b32.xlu0 %v804, 32
    %v2753 = vpop.permute.xlu0 %2752
    %2754 = vrot.lane.b32.xlu0 %v805, 32
    %v2755 = vpop.permute.xlu0 %2754
    %2756 = vrot.lane.b32.xlu0 %v806, 32
    %v2757 = vpop.permute.xlu0 %2756
    %2758 = vrot.lane.b32.xlu0 %v807, 32
    %v2759 = vpop.permute.xlu0 %2758
    %2760 = vrot.lane.b32.xlu0 %v808, 32
    %v2761 = vpop.permute.xlu0 %2760
    %2762 = vrot.lane.b32.xlu0 %v809, 32
    %v2763 = vpop.permute.xlu0 %2762
    %2764 = vrot.lane.b32.xlu0 %v810, 32
    %v2765 = vpop.permute.xlu0 %2764
    %2766 = vrot.lane.b32.xlu0 %v811, 32
    %v2767 = vpop.permute.xlu0 %2766
    %2768 = vrot.lane.b32.xlu0 %v812, 32
    %v2769 = vpop.permute.xlu0 %2768
    %2770 = vrot.lane.b32.xlu0 %v813, 32
    %v2771 = vpop.permute.xlu0 %2770
    %2772 = vrot.lane.b32.xlu0 %v814, 32
    %v2773 = vpop.permute.xlu0 %2772
    %2774 = vrot.lane.b32.xlu0 %v815, 32
    %v2775 = vpop.permute.xlu0 %2774
    %2776 = vrot.lane.b32.xlu0 %v816, 32
    %v2777 = vpop.permute.xlu0 %2776
    %2778 = vrot.lane.b32.xlu0 %v817, 32
    %v2779 = vpop.permute.xlu0 %2778
    %2780 = vrot.lane.b32.xlu0 %v818, 32
    %v2781 = vpop.permute.xlu0 %2780
    %2782 = vrot.lane.b32.xlu0 %v819, 32
    %v2783 = vpop.permute.xlu0 %2782
    %2784 = vrot.lane.b32.xlu0 %v820, 32
    %v2785 = vpop.permute.xlu0 %2784
    %2786 = vrot.lane.b32.xlu0 %v821, 32
    %v2787 = vpop.permute.xlu0 %2786
    %2788 = vrot.lane.b32.xlu0 %v822, 32
    %v2789 = vpop.permute.xlu0 %2788
    %2790 = vrot.lane.b32.xlu0 %v823, 32
    %v2791 = vpop.permute.xlu0 %2790
    %2792 = vrot.lane.b32.xlu0 %v824, 32
    %v2793 = vpop.permute.xlu0 %2792
    %2794 = vrot.lane.b32.xlu0 %v825, 32
    %v2795 = vpop.permute.xlu0 %2794
    %2796 = vrot.lane.b32.xlu0 %v826, 32
    %v2797 = vpop.permute.xlu0 %2796
    %2798 = vrot.lane.b32.xlu0 %v827, 32
    %v2799 = vpop.permute.xlu0 %2798
    %2800 = vrot.lane.b32.xlu0 %v828, 32
    %v2801 = vpop.permute.xlu0 %2800
    %2802 = vrot.lane.b32.xlu0 %v829, 32
    %v2803 = vpop.permute.xlu0 %2802
    %2804 = vrot.lane.b32.xlu0 %v830, 32
    %v2805 = vpop.permute.xlu0 %2804
    %2806 = vrot.lane.b32.xlu0 %v831, 32
    %v2807 = vpop.permute.xlu0 %2806
    %2808 = vrot.lane.b32.xlu0 %v832, 32
    %v2809 = vpop.permute.xlu0 %2808
    %2810 = vrot.lane.b32.xlu0 %v833, 32
    %v2811 = vpop.permute.xlu0 %2810
    %2812 = vrot.lane.b32.xlu0 %v834, 32
    %v2813 = vpop.permute.xlu0 %2812
    %2814 = vrot.lane.b32.xlu0 %v835, 32
    %v2815 = vpop.permute.xlu0 %2814
    %2816 = vrot.lane.b32.xlu0 %v836, 32
    %v2817 = vpop.permute.xlu0 %2816
    %2818 = vrot.lane.b32.xlu0 %v837, 32
    %v2819 = vpop.permute.xlu0 %2818
    %2820 = vrot.lane.b32.xlu0 %v838, 32
    %v2821 = vpop.permute.xlu0 %2820
    %2822 = vrot.lane.b32.xlu0 %v839, 32
    %v2823 = vpop.permute.xlu0 %2822
    %v2888 = vsel %vm110, %v263, %v905
    %v2889 = vsel %vm110, %v264, %v907
    %v2890 = vsel %vm110, %v265, %v909
    %v2891 = vsel %vm110, %v266, %v911
    %v2892 = vsel %vm110, %v267, %v913
    %v2893 = vsel %vm110, %v268, %v915
    %v2894 = vsel %vm110, %v269, %v917
    %v2895 = vsel %vm110, %v270, %v919
    %v2896 = vsel %vm110, %v271, %v921
    %v2897 = vsel %vm110, %v272, %v923
    %v2898 = vsel %vm110, %v273, %v925
    %v2899 = vsel %vm110, %v274, %v927
    %v2900 = vsel %vm110, %v275, %v929
    %v2901 = vsel %vm110, %v276, %v931
    %v2902 = vsel %vm110, %v277, %v933
    %v2903 = vsel %vm110, %v278, %v935
    %v2904 = vsel %vm110, %v279, %v937
    %v2905 = vsel %vm110, %v280, %v939
    %v2906 = vsel %vm110, %v281, %v941
    %v2907 = vsel %vm110, %v282, %v943
    %v2908 = vsel %vm110, %v283, %v945
    %v2909 = vsel %vm110, %v284, %v947
    %v2910 = vsel %vm110, %v285, %v949
    %v2911 = vsel %vm110, %v286, %v951
    %v2912 = vsel %vm110, %v287, %v953
    %v2913 = vsel %vm110, %v288, %v955
    %v2914 = vsel %vm110, %v289, %v957
    %v2915 = vsel %vm110, %v290, %v959
    %v2916 = vsel %vm110, %v291, %v961
    %v2917 = vsel %vm110, %v292, %v963
    %v2918 = vsel %vm110, %v293, %v965
    %v2919 = vsel %vm110, %v294, %v967
    %v2920 = vsel %vm110, %v295, %v969
    %v2921 = vsel %vm110, %v296, %v971
    %v2922 = vsel %vm110, %v297, %v973
    %v2923 = vsel %vm110, %v298, %v975
    %v2924 = vsel %vm110, %v299, %v977
    %v2925 = vsel %vm110, %v300, %v979
    %v2926 = vsel %vm110, %v301, %v981
    %v2927 = vsel %vm110, %v302, %v983
    %v2928 = vsel %vm110, %v303, %v985
    %v2929 = vsel %vm110, %v304, %v987
    %v2930 = vsel %vm110, %v305, %v989
    %v2931 = vsel %vm110, %v306, %v991
    %v2932 = vsel %vm110, %v307, %v993
    %v2933 = vsel %vm110, %v308, %v995
    %v2934 = vsel %vm110, %v309, %v997
    %v2935 = vsel %vm110, %v310, %v999
    %v2936 = vsel %vm110, %v311, %v1001
    %v2937 = vsel %vm110, %v312, %v1003
    %v2938 = vsel %vm110, %v313, %v1005
    %v2939 = vsel %vm110, %v314, %v1007
    %v2940 = vsel %vm110, %v315, %v1009
    %v2941 = vsel %vm110, %v316, %v1011
    %v2942 = vsel %vm110, %v317, %v1013
    %v2943 = vsel %vm110, %v318, %v1015
    %v2944 = vsel %vm110, %v319, %v1017
    %v2945 = vsel %vm110, %v320, %v1019
    %v2946 = vsel %vm110, %v321, %v1021
    %v2947 = vsel %vm110, %v322, %v1023
    %v2948 = vsel %vm110, %v323, %v1025
    %v2949 = vsel %vm110, %v324, %v1027
    %v2950 = vsel %vm110, %v325, %v1029
    %v2951 = vsel %vm110, %v326, %v1031
    %vm2952 = vcmask 64512
    %v2953 = vsel %vm2952, %v2888, %v1161
    %v2954 = vsel %vm2952, %v2889, %v1163
    %v2955 = vsel %vm2952, %v2890, %v1165
    %v2956 = vsel %vm2952, %v2891, %v1167
    %v2957 = vsel %vm2952, %v2892, %v1169
    %v2958 = vsel %vm2952, %v2893, %v1171
    %v2959 = vsel %vm2952, %v2894, %v1173
    %v2960 = vsel %vm2952, %v2895, %v1175
    %v2961 = vsel %vm2952, %v2896, %v1177
    %v2962 = vsel %vm2952, %v2897, %v1179
    %v2963 = vsel %vm2952, %v2898, %v1181
    %v2964 = vsel %vm2952, %v2899, %v1183
    %v2965 = vsel %vm2952, %v2900, %v1185
    %v2966 = vsel %vm2952, %v2901, %v1187
    %v2967 = vsel %vm2952, %v2902, %v1189
    %v2968 = vsel %vm2952, %v2903, %v1191
    %v2969 = vsel %vm2952, %v2904, %v1193
    %v2970 = vsel %vm2952, %v2905, %v1195
    %v2971 = vsel %vm2952, %v2906, %v1197
    %v2972 = vsel %vm2952, %v2907, %v1199
    %v2973 = vsel %vm2952, %v2908, %v1201
    %v2974 = vsel %vm2952, %v2909, %v1203
    %v2975 = vsel %vm2952, %v2910, %v1205
    %v2976 = vsel %vm2952, %v2911, %v1207
    %v2977 = vsel %vm2952, %v2912, %v1209
    %v2978 = vsel %vm2952, %v2913, %v1211
    %v2979 = vsel %vm2952, %v2914, %v1213
    %v2980 = vsel %vm2952, %v2915, %v1215
    %v2981 = vsel %vm2952, %v2916, %v1217
    %v2982 = vsel %vm2952, %v2917, %v1219
    %v2983 = vsel %vm2952, %v2918, %v1221
    %v2984 = vsel %vm2952, %v2919, %v1223
    %v2985 = vsel %vm2952, %v2920, %v1225
    %v2986 = vsel %vm2952, %v2921, %v1227
    %v2987 = vsel %vm2952, %v2922, %v1229
    %v2988 = vsel %vm2952, %v2923, %v1231
    %v2989 = vsel %vm2952, %v2924, %v1233
    %v2990 = vsel %vm2952, %v2925, %v1235
    %v2991 = vsel %vm2952, %v2926, %v1237
    %v2992 = vsel %vm2952, %v2927, %v1239
    %v2993 = vsel %vm2952, %v2928, %v1241
    %v2994 = vsel %vm2952, %v2929, %v1243
    %v2995 = vsel %vm2952, %v2930, %v1245
    %v2996 = vsel %vm2952, %v2931, %v1247
    %v2997 = vsel %vm2952, %v2932, %v1249
    %v2998 = vsel %vm2952, %v2933, %v1251
    %v2999 = vsel %vm2952, %v2934, %v1253
    %v3000 = vsel %vm2952, %v2935, %v1255
    %v3001 = vsel %vm2952, %v2936, %v1257
    %v3002 = vsel %vm2952, %v2937, %v1259
    %v3003 = vsel %vm2952, %v2938, %v1261
    %v3004 = vsel %vm2952, %v2939, %v1263
    %v3005 = vsel %vm2952, %v2940, %v1265
    %v3006 = vsel %vm2952, %v2941, %v1267
    %v3007 = vsel %vm2952, %v2942, %v1269
    %v3008 = vsel %vm2952, %v2943, %v1271
    %v3009 = vsel %vm2952, %v2944, %v1273
    %v3010 = vsel %vm2952, %v2945, %v1275
    %v3011 = vsel %vm2952, %v2946, %v1277
    %v3012 = vsel %vm2952, %v2947, %v1279
    %v3013 = vsel %vm2952, %v2948, %v1281
    %v3014 = vsel %vm2952, %v2949, %v1283
    %v3015 = vsel %vm2952, %v2950, %v1285
    %v3016 = vsel %vm2952, %v2951, %v1287
    %vm3017 = vcmask 97280
    %v3018 = vsel %vm3017, %v2953, %v1417
    %v3019 = vsel %vm3017, %v2954, %v1419
    %v3020 = vsel %vm3017, %v2955, %v1421
    %v3021 = vsel %vm3017, %v2956, %v1423
    %v3022 = vsel %vm3017, %v2957, %v1425
    %v3023 = vsel %vm3017, %v2958, %v1427
    %v3024 = vsel %vm3017, %v2959, %v1429
    %v3025 = vsel %vm3017, %v2960, %v1431
    %v3026 = vsel %vm3017, %v2961, %v1433
    %v3027 = vsel %vm3017, %v2962, %v1435
    %v3028 = vsel %vm3017, %v2963, %v1437
    %v3029 = vsel %vm3017, %v2964, %v1439
    %v3030 = vsel %vm3017, %v2965, %v1441
    %v3031 = vsel %vm3017, %v2966, %v1443
    %v3032 = vsel %vm3017, %v2967, %v1445
    %v3033 = vsel %vm3017, %v2968, %v1447
    %v3034 = vsel %vm3017, %v2969, %v1449
    %v3035 = vsel %vm3017, %v2970, %v1451
    %v3036 = vsel %vm3017, %v2971, %v1453
    %v3037 = vsel %vm3017, %v2972, %v1455
    %v3038 = vsel %vm3017, %v2973, %v1457
    %v3039 = vsel %vm3017, %v2974, %v1459
    %v3040 = vsel %vm3017, %v2975, %v1461
    %v3041 = vsel %vm3017, %v2976, %v1463
    %v3042 = vsel %vm3017, %v2977, %v1465
    %v3043 = vsel %vm3017, %v2978, %v1467
    %v3044 = vsel %vm3017, %v2979, %v1469
    %v3045 = vsel %vm3017, %v2980, %v1471
    %v3046 = vsel %vm3017, %v2981, %v1473
    %v3047 = vsel %vm3017, %v2982, %v1475
    %v3048 = vsel %vm3017, %v2983, %v1477
    %v3049 = vsel %vm3017, %v2984, %v1479
    %v3050 = vsel %vm3017, %v2985, %v1481
    %v3051 = vsel %vm3017, %v2986, %v1483
    %v3052 = vsel %vm3017, %v2987, %v1485
    %v3053 = vsel %vm3017, %v2988, %v1487
    %v3054 = vsel %vm3017, %v2989, %v1489
    %v3055 = vsel %vm3017, %v2990, %v1491
    %v3056 = vsel %vm3017, %v2991, %v1493
    %v3057 = vsel %vm3017, %v2992, %v1495
    %v3058 = vsel %vm3017, %v2993, %v1497
    %v3059 = vsel %vm3017, %v2994, %v1499
    %v3060 = vsel %vm3017, %v2995, %v1501
    %v3061 = vsel %vm3017, %v2996, %v1503
    %v3062 = vsel %vm3017, %v2997, %v1505
    %v3063 = vsel %vm3017, %v2998, %v1507
    %v3064 = vsel %vm3017, %v2999, %v1509
    %v3065 = vsel %vm3017, %v3000, %v1511
    %v3066 = vsel %vm3017, %v3001, %v1513
    %v3067 = vsel %vm3017, %v3002, %v1515
    %v3068 = vsel %vm3017, %v3003, %v1517
    %v3069 = vsel %vm3017, %v3004, %v1519
    %v3070 = vsel %vm3017, %v3005, %v1521
    %v3071 = vsel %vm3017, %v3006, %v1523
    %v3072 = vsel %vm3017, %v3007, %v1525
    %v3073 = vsel %vm3017, %v3008, %v1527
    %v3074 = vsel %vm3017, %v3009, %v1529
    %v3075 = vsel %vm3017, %v3010, %v1531
    %v3076 = vsel %vm3017, %v3011, %v1533
    %v3077 = vsel %vm3017, %v3012, %v1535
    %v3078 = vsel %vm3017, %v3013, %v1537
    %v3079 = vsel %vm3017, %v3014, %v1539
    %v3080 = vsel %vm3017, %v3015, %v1541
    %v3081 = vsel %vm3017, %v3016, %v1543
    %vm3082 = vcmask 130048
    %v3083 = vsel %vm3082, %v3018, %v1673
    %v3084 = vsel %vm3082, %v3019, %v1675
    %v3085 = vsel %vm3082, %v3020, %v1677
    %v3086 = vsel %vm3082, %v3021, %v1679
    %v3087 = vsel %vm3082, %v3022, %v1681
    %v3088 = vsel %vm3082, %v3023, %v1683
    %v3089 = vsel %vm3082, %v3024, %v1685
    %v3090 = vsel %vm3082, %v3025, %v1687
    %v3091 = vsel %vm3082, %v3026, %v1689
    %v3092 = vsel %vm3082, %v3027, %v1691
    %v3093 = vsel %vm3082, %v3028, %v1693
    %v3094 = vsel %vm3082, %v3029, %v1695
    %v3095 = vsel %vm3082, %v3030, %v1697
    %v3096 = vsel %vm3082, %v3031, %v1699
    %v3097 = vsel %vm3082, %v3032, %v1701
    %v3098 = vsel %vm3082, %v3033, %v1703
    %v3099 = vsel %vm3082, %v3034, %v1705
    %v3100 = vsel %vm3082, %v3035, %v1707
    %v3101 = vsel %vm3082, %v3036, %v1709
    %v3102 = vsel %vm3082, %v3037, %v1711
    %v3103 = vsel %vm3082, %v3038, %v1713
    %v3104 = vsel %vm3082, %v3039, %v1715
    %v3105 = vsel %vm3082, %v3040, %v1717
    %v3106 = vsel %vm3082, %v3041, %v1719
    %v3107 = vsel %vm3082, %v3042, %v1721
    %v3108 = vsel %vm3082, %v3043, %v1723
    %v3109 = vsel %vm3082, %v3044, %v1725
    %v3110 = vsel %vm3082, %v3045, %v1727
    %v3111 = vsel %vm3082, %v3046, %v1729
    %v3112 = vsel %vm3082, %v3047, %v1731
    %v3113 = vsel %vm3082, %v3048, %v1733
    %v3114 = vsel %vm3082, %v3049, %v1735
    %v3115 = vsel %vm3082, %v3050, %v1737
    %v3116 = vsel %vm3082, %v3051, %v1739
    %v3117 = vsel %vm3082, %v3052, %v1741
    %v3118 = vsel %vm3082, %v3053, %v1743
    %v3119 = vsel %vm3082, %v3054, %v1745
    %v3120 = vsel %vm3082, %v3055, %v1747
    %v3121 = vsel %vm3082, %v3056, %v1749
    %v3122 = vsel %vm3082, %v3057, %v1751
    %v3123 = vsel %vm3082, %v3058, %v1753
    %v3124 = vsel %vm3082, %v3059, %v1755
    %v3125 = vsel %vm3082, %v3060, %v1757
    %v3126 = vsel %vm3082, %v3061, %v1759
    %v3127 = vsel %vm3082, %v3062, %v1761
    %v3128 = vsel %vm3082, %v3063, %v1763
    %v3129 = vsel %vm3082, %v3064, %v1765
    %v3130 = vsel %vm3082, %v3065, %v1767
    %v3131 = vsel %vm3082, %v3066, %v1769
    %v3132 = vsel %vm3082, %v3067, %v1771
    %v3133 = vsel %vm3082, %v3068, %v1773
    %v3134 = vsel %vm3082, %v3069, %v1775
    %v3135 = vsel %vm3082, %v3070, %v1777
    %v3136 = vsel %vm3082, %v3071, %v1779
    %v3137 = vsel %vm3082, %v3072, %v1781
    %v3138 = vsel %vm3082, %v3073, %v1783
    %v3139 = vsel %vm3082, %v3074, %v1785
    %v3140 = vsel %vm3082, %v3075, %v1787
    %v3141 = vsel %vm3082, %v3076, %v1789
    %v3142 = vsel %vm3082, %v3077, %v1791
    %v3143 = vsel %vm3082, %v3078, %v1793
    %v3144 = vsel %vm3082, %v3079, %v1795
    %v3145 = vsel %vm3082, %v3080, %v1797
    %v3146 = vsel %vm3082, %v3081, %v1799
    %vm3147 = vcmask 162816
    %v3148 = vsel %vm3147, %v3083, %v1929
    %v3149 = vsel %vm3147, %v3084, %v1931
    %v3150 = vsel %vm3147, %v3085, %v1933
    %v3151 = vsel %vm3147, %v3086, %v1935
    %v3152 = vsel %vm3147, %v3087, %v1937
    %v3153 = vsel %vm3147, %v3088, %v1939
    %v3154 = vsel %vm3147, %v3089, %v1941
    %v3155 = vsel %vm3147, %v3090, %v1943
    %v3156 = vsel %vm3147, %v3091, %v1945
    %v3157 = vsel %vm3147, %v3092, %v1947
    %v3158 = vsel %vm3147, %v3093, %v1949
    %v3159 = vsel %vm3147, %v3094, %v1951
    %v3160 = vsel %vm3147, %v3095, %v1953
    %v3161 = vsel %vm3147, %v3096, %v1955
    %v3162 = vsel %vm3147, %v3097, %v1957
    %v3163 = vsel %vm3147, %v3098, %v1959
    %v3164 = vsel %vm3147, %v3099, %v1961
    %v3165 = vsel %vm3147, %v3100, %v1963
    %v3166 = vsel %vm3147, %v3101, %v1965
    %v3167 = vsel %vm3147, %v3102, %v1967
    %v3168 = vsel %vm3147, %v3103, %v1969
    %v3169 = vsel %vm3147, %v3104, %v1971
    %v3170 = vsel %vm3147, %v3105, %v1973
    %v3171 = vsel %vm3147, %v3106, %v1975
    %v3172 = vsel %vm3147, %v3107, %v1977
    %v3173 = vsel %vm3147, %v3108, %v1979
    %v3174 = vsel %vm3147, %v3109, %v1981
    %v3175 = vsel %vm3147, %v3110, %v1983
    %v3176 = vsel %vm3147, %v3111, %v1985
    %v3177 = vsel %vm3147, %v3112, %v1987
    %v3178 = vsel %vm3147, %v3113, %v1989
    %v3179 = vsel %vm3147, %v3114, %v1991
    %v3180 = vsel %vm3147, %v3115, %v1993
    %v3181 = vsel %vm3147, %v3116, %v1995
    %v3182 = vsel %vm3147, %v3117, %v1997
    %v3183 = vsel %vm3147, %v3118, %v1999
    %v3184 = vsel %vm3147, %v3119, %v2001
    %v3185 = vsel %vm3147, %v3120, %v2003
    %v3186 = vsel %vm3147, %v3121, %v2005
    %v3187 = vsel %vm3147, %v3122, %v2007
    %v3188 = vsel %vm3147, %v3123, %v2009
    %v3189 = vsel %vm3147, %v3124, %v2011
    %v3190 = vsel %vm3147, %v3125, %v2013
    %v3191 = vsel %vm3147, %v3126, %v2015
    %v3192 = vsel %vm3147, %v3127, %v2017
    %v3193 = vsel %vm3147, %v3128, %v2019
    %v3194 = vsel %vm3147, %v3129, %v2021
    %v3195 = vsel %vm3147, %v3130, %v2023
    %v3196 = vsel %vm3147, %v3131, %v2025
    %v3197 = vsel %vm3147, %v3132, %v2027
    %v3198 = vsel %vm3147, %v3133, %v2029
    %v3199 = vsel %vm3147, %v3134, %v2031
    %v3200 = vsel %vm3147, %v3135, %v2033
    %v3201 = vsel %vm3147, %v3136, %v2035
    %v3202 = vsel %vm3147, %v3137, %v2037
    %v3203 = vsel %vm3147, %v3138, %v2039
    %v3204 = vsel %vm3147, %v3139, %v2041
    %v3205 = vsel %vm3147, %v3140, %v2043
    %v3206 = vsel %vm3147, %v3141, %v2045
    %v3207 = vsel %vm3147, %v3142, %v2047
    %v3208 = vsel %vm3147, %v3143, %v2049
    %v3209 = vsel %vm3147, %v3144, %v2051
    %v3210 = vsel %vm3147, %v3145, %v2053
    %v3211 = vsel %vm3147, %v3146, %v2055
    %vm3212 = vcmask 195584
    %v3213 = vsel %vm3212, %v3148, %v2185
    %v3214 = vsel %vm3212, %v3149, %v2187
    %v3215 = vsel %vm3212, %v3150, %v2189
    %v3216 = vsel %vm3212, %v3151, %v2191
    %v3217 = vsel %vm3212, %v3152, %v2193
    %v3218 = vsel %vm3212, %v3153, %v2195
    %v3219 = vsel %vm3212, %v3154, %v2197
    %v3220 = vsel %vm3212, %v3155, %v2199
    %v3221 = vsel %vm3212, %v3156, %v2201
    %v3222 = vsel %vm3212, %v3157, %v2203
    %v3223 = vsel %vm3212, %v3158, %v2205
    %v3224 = vsel %vm3212, %v3159, %v2207
    %v3225 = vsel %vm3212, %v3160, %v2209
    %v3226 = vsel %vm3212, %v3161, %v2211
    %v3227 = vsel %vm3212, %v3162, %v2213
    %v3228 = vsel %vm3212, %v3163, %v2215
    %v3229 = vsel %vm3212, %v3164, %v2217
    %v3230 = vsel %vm3212, %v3165, %v2219
    %v3231 = vsel %vm3212, %v3166, %v2221
    %v3232 = vsel %vm3212, %v3167, %v2223
    %v3233 = vsel %vm3212, %v3168, %v2225
    %v3234 = vsel %vm3212, %v3169, %v2227
    %v3235 = vsel %vm3212, %v3170, %v2229
    %v3236 = vsel %vm3212, %v3171, %v2231
    %v3237 = vsel %vm3212, %v3172, %v2233
    %v3238 = vsel %vm3212, %v3173, %v2235
    %v3239 = vsel %vm3212, %v3174, %v2237
    %v3240 = vsel %vm3212, %v3175, %v2239
    %v3241 = vsel %vm3212, %v3176, %v2241
    %v3242 = vsel %vm3212, %v3177, %v2243
    %v3243 = vsel %vm3212, %v3178, %v2245
    %v3244 = vsel %vm3212, %v3179, %v2247
    %v3245 = vsel %vm3212, %v3180, %v2249
    %v3246 = vsel %vm3212, %v3181, %v2251
    %v3247 = vsel %vm3212, %v3182, %v2253
    %v3248 = vsel %vm3212, %v3183, %v2255
    %v3249 = vsel %vm3212, %v3184, %v2257
    %v3250 = vsel %vm3212, %v3185, %v2259
    %v3251 = vsel %vm3212, %v3186, %v2261
    %v3252 = vsel %vm3212, %v3187, %v2263
    %v3253 = vsel %vm3212, %v3188, %v2265
    %v3254 = vsel %vm3212, %v3189, %v2267
    %v3255 = vsel %vm3212, %v3190, %v2269
    %v3256 = vsel %vm3212, %v3191, %v2271
    %v3257 = vsel %vm3212, %v3192, %v2273
    %v3258 = vsel %vm3212, %v3193, %v2275
    %v3259 = vsel %vm3212, %v3194, %v2277
    %v3260 = vsel %vm3212, %v3195, %v2279
    %v3261 = vsel %vm3212, %v3196, %v2281
    %v3262 = vsel %vm3212, %v3197, %v2283
    %v3263 = vsel %vm3212, %v3198, %v2285
    %v3264 = vsel %vm3212, %v3199, %v2287
    %v3265 = vsel %vm3212, %v3200, %v2289
    %v3266 = vsel %vm3212, %v3201, %v2291
    %v3267 = vsel %vm3212, %v3202, %v2293
    %v3268 = vsel %vm3212, %v3203, %v2295
    %v3269 = vsel %vm3212, %v3204, %v2297
    %v3270 = vsel %vm3212, %v3205, %v2299
    %v3271 = vsel %vm3212, %v3206, %v2301
    %v3272 = vsel %vm3212, %v3207, %v2303
    %v3273 = vsel %vm3212, %v3208, %v2305
    %v3274 = vsel %vm3212, %v3209, %v2307
    %v3275 = vsel %vm3212, %v3210, %v2309
    %v3276 = vsel %vm3212, %v3211, %v2311
    %vm3277 = vcmask 228352
    %v3278 = vsel %vm3277, %v3213, %v2441
    %v3279 = vsel %vm3277, %v3214, %v2443
    %v3280 = vsel %vm3277, %v3215, %v2445
    %v3281 = vsel %vm3277, %v3216, %v2447
    %v3282 = vsel %vm3277, %v3217, %v2449
    %v3283 = vsel %vm3277, %v3218, %v2451
    %v3284 = vsel %vm3277, %v3219, %v2453
    %v3285 = vsel %vm3277, %v3220, %v2455
    %v3286 = vsel %vm3277, %v3221, %v2457
    %v3287 = vsel %vm3277, %v3222, %v2459
    %v3288 = vsel %vm3277, %v3223, %v2461
    %v3289 = vsel %vm3277, %v3224, %v2463
    %v3290 = vsel %vm3277, %v3225, %v2465
    %v3291 = vsel %vm3277, %v3226, %v2467
    %v3292 = vsel %vm3277, %v3227, %v2469
    %v3293 = vsel %vm3277, %v3228, %v2471
    %v3294 = vsel %vm3277, %v3229, %v2473
    %v3295 = vsel %vm3277, %v3230, %v2475
    %v3296 = vsel %vm3277, %v3231, %v2477
    %v3297 = vsel %vm3277, %v3232, %v2479
    %v3298 = vsel %vm3277, %v3233, %v2481
    %v3299 = vsel %vm3277, %v3234, %v2483
    %v3300 = vsel %vm3277, %v3235, %v2485
    %v3301 = vsel %vm3277, %v3236, %v2487
    %v3302 = vsel %vm3277, %v3237, %v2489
    %v3303 = vsel %vm3277, %v3238, %v2491
    %v3304 = vsel %vm3277, %v3239, %v2493
    %v3305 = vsel %vm3277, %v3240, %v2495
    %v3306 = vsel %vm3277, %v3241, %v2497
    %v3307 = vsel %vm3277, %v3242, %v2499
    %v3308 = vsel %vm3277, %v3243, %v2501
    %v3309 = vsel %vm3277, %v3244, %v2503
    %v3310 = vsel %vm3277, %v3245, %v2505
    %v3311 = vsel %vm3277, %v3246, %v2507
    %v3312 = vsel %vm3277, %v3247, %v2509
    %v3313 = vsel %vm3277, %v3248, %v2511
    %v3314 = vsel %vm3277, %v3249, %v2513
    %v3315 = vsel %vm3277, %v3250, %v2515
    %v3316 = vsel %vm3277, %v3251, %v2517
    %v3317 = vsel %vm3277, %v3252, %v2519
    %v3318 = vsel %vm3277, %v3253, %v2521
    %v3319 = vsel %vm3277, %v3254, %v2523
    %v3320 = vsel %vm3277, %v3255, %v2525
    %v3321 = vsel %vm3277, %v3256, %v2527
    %v3322 = vsel %vm3277, %v3257, %v2529
    %v3323 = vsel %vm3277, %v3258, %v2531
    %v3324 = vsel %vm3277, %v3259, %v2533
    %v3325 = vsel %vm3277, %v3260, %v2535
    %v3326 = vsel %vm3277, %v3261, %v2537
    %v3327 = vsel %vm3277, %v3262, %v2539
    %v3328 = vsel %vm3277, %v3263, %v2541
    %v3329 = vsel %vm3277, %v3264, %v2543
    %v3330 = vsel %vm3277, %v3265, %v2545
    %v3331 = vsel %vm3277, %v3266, %v2547
    %v3332 = vsel %vm3277, %v3267, %v2549
    %v3333 = vsel %vm3277, %v3268, %v2551
    %v3334 = vsel %vm3277, %v3269, %v2553
    %v3335 = vsel %vm3277, %v3270, %v2555
    %v3336 = vsel %vm3277, %v3271, %v2557
    %v3337 = vsel %vm3277, %v3272, %v2559
    %v3338 = vsel %vm3277, %v3273, %v2561
    %v3339 = vsel %vm3277, %v3274, %v2563
    %v3340 = vsel %vm3277, %v3275, %v2565
    %v3341 = vsel %vm3277, %v3276, %v2567
    %vm3342 = vcmask 261120
    %v3343 = vsel %vm3342, %v3278, %v2697
    %v3344 = vsel %vm3342, %v3279, %v2699
    %v3345 = vsel %vm3342, %v3280, %v2701
    %v3346 = vsel %vm3342, %v3281, %v2703
    %v3347 = vsel %vm3342, %v3282, %v2705
    %v3348 = vsel %vm3342, %v3283, %v2707
    %v3349 = vsel %vm3342, %v3284, %v2709
    %v3350 = vsel %vm3342, %v3285, %v2711
    %v3351 = vsel %vm3342, %v3286, %v2713
    %v3352 = vsel %vm3342, %v3287, %v2715
    %v3353 = vsel %vm3342, %v3288, %v2717
    %v3354 = vsel %vm3342, %v3289, %v2719
    %v3355 = vsel %vm3342, %v3290, %v2721
    %v3356 = vsel %vm3342, %v3291, %v2723
    %v3357 = vsel %vm3342, %v3292, %v2725
    %v3358 = vsel %vm3342, %v3293, %v2727
    %v3359 = vsel %vm3342, %v3294, %v2729
    %v3360 = vsel %vm3342, %v3295, %v2731
    %v3361 = vsel %vm3342, %v3296, %v2733
    %v3362 = vsel %vm3342, %v3297, %v2735
    %v3363 = vsel %vm3342, %v3298, %v2737
    %v3364 = vsel %vm3342, %v3299, %v2739
    %v3365 = vsel %vm3342, %v3300, %v2741
    %v3366 = vsel %vm3342, %v3301, %v2743
    %v3367 = vsel %vm3342, %v3302, %v2745
    %v3368 = vsel %vm3342, %v3303, %v2747
    %v3369 = vsel %vm3342, %v3304, %v2749
    %v3370 = vsel %vm3342, %v3305, %v2751
    %v3371 = vsel %vm3342, %v3306, %v2753
    %v3372 = vsel %vm3342, %v3307, %v2755
    %v3373 = vsel %vm3342, %v3308, %v2757
    %v3374 = vsel %vm3342, %v3309, %v2759
    %v3375 = vsel %vm3342, %v3310, %v2761
    %v3376 = vsel %vm3342, %v3311, %v2763
    %v3377 = vsel %vm3342, %v3312, %v2765
    %v3378 = vsel %vm3342, %v3313, %v2767
    %v3379 = vsel %vm3342, %v3314, %v2769
    %v3380 = vsel %vm3342, %v3315, %v2771
    %v3381 = vsel %vm3342, %v3316, %v2773
    %v3382 = vsel %vm3342, %v3317, %v2775
    %v3383 = vsel %vm3342, %v3318, %v2777
    %v3384 = vsel %vm3342, %v3319, %v2779
    %v3385 = vsel %vm3342, %v3320, %v2781
    %v3386 = vsel %vm3342, %v3321, %v2783
    %v3387 = vsel %vm3342, %v3322, %v2785
    %v3388 = vsel %vm3342, %v3323, %v2787
    %v3389 = vsel %vm3342, %v3324, %v2789
    %v3390 = vsel %vm3342, %v3325, %v2791
    %v3391 = vsel %vm3342, %v3326, %v2793
    %v3392 = vsel %vm3342, %v3327, %v2795
    %v3393 = vsel %vm3342, %v3328, %v2797
    %v3394 = vsel %vm3342, %v3329, %v2799
    %v3395 = vsel %vm3342, %v3330, %v2801
    %v3396 = vsel %vm3342, %v3331, %v2803
    %v3397 = vsel %vm3342, %v3332, %v2805
    %v3398 = vsel %vm3342, %v3333, %v2807
    %v3399 = vsel %vm3342, %v3334, %v2809
    %v3400 = vsel %vm3342, %v3335, %v2811
    %v3401 = vsel %vm3342, %v3336, %v2813
    %v3402 = vsel %vm3342, %v3337, %v2815
    %v3403 = vsel %vm3342, %v3338, %v2817
    %v3404 = vsel %vm3342, %v3339, %v2819
    %v3405 = vsel %vm3342, %v3340, %v2821
    %v3406 = vsel %vm3342, %v3341, %v2823
    %v3407 = vld [vmem:[%s1] sm:$0xff]
    %v3408 = vld [vmem:[%s1 + $0x8] sm:$0xff]
    %v3409 = vld [vmem:[%s1 + $0x10] sm:$0xff]
    %v3410 = vld [vmem:[%s1 + $0x18] sm:$0xff]
    %v3411 = vld [vmem:[%s1 + $0x20] sm:$0xf]
    %vm3412 = vcmask 293888
    %v3414 = vsel %vm3412, %v3343, 0
    %v3417 = vsel %vm3412, %v3344, 0
    %v3420 = vsel %vm3412, %v3345, 0
    %v3423 = vsel %vm3412, %v3346, 0
    %v3426 = vsel %vm3412, %v3347, 0
    %v3429 = vsel %vm3412, %v3348, 0
    %v3432 = vsel %vm3412, %v3349, 0
    %v3435 = vsel %vm3412, %v3350, 0
    %v3438 = vsel %vm3412, %v3351, 0
    %v3441 = vsel %vm3412, %v3352, 0
    %v3444 = vsel %vm3412, %v3353, 0
    %v3447 = vsel %vm3412, %v3354, 0
    %v3450 = vsel %vm3412, %v3355, 0
    %v3453 = vsel %vm3412, %v3356, 0
    %v3456 = vsel %vm3412, %v3357, 0
    %v3459 = vsel %vm3412, %v3358, 0
    %v3462 = vsel %vm3412, %v3359, 0
    %v3465 = vsel %vm3412, %v3360, 0
    %v3468 = vsel %vm3412, %v3361, 0
    %v3471 = vsel %vm3412, %v3362, 0
    %v3474 = vsel %vm3412, %v3363, 0
    %v3477 = vsel %vm3412, %v3364, 0
    %v3480 = vsel %vm3412, %v3365, 0
    %v3483 = vsel %vm3412, %v3366, 0
    %v3486 = vsel %vm3412, %v3367, 0
    %v3489 = vsel %vm3412, %v3368, 0
    %v3492 = vsel %vm3412, %v3369, 0
    %v3495 = vsel %vm3412, %v3370, 0
    %v3498 = vsel %vm3412, %v3371, 0
    %v3501 = vsel %vm3412, %v3372, 0
    %v3504 = vsel %vm3412, %v3373, 0
    %v3507 = vsel %vm3412, %v3374, 0
    %v3510 = vsel %vm3412, %v3375, 0
    %v3513 = vsel %vm3412, %v3376, 0
    %v3516 = vsel %vm3412, %v3377, 0
    %v3519 = vsel %vm3412, %v3378, 0
    %v3522 = vsel %vm3412, %v3379, 0
    %v3525 = vsel %vm3412, %v3380, 0
    %v3528 = vsel %vm3412, %v3381, 0
    %v3531 = vsel %vm3412, %v3382, 0
    %v3534 = vsel %vm3412, %v3383, 0
    %v3537 = vsel %vm3412, %v3384, 0
    %v3540 = vsel %vm3412, %v3385, 0
    %v3543 = vsel %vm3412, %v3386, 0
    %v3546 = vsel %vm3412, %v3387, 0
    %v3549 = vsel %vm3412, %v3388, 0
    %v3552 = vsel %vm3412, %v3389, 0
    %v3555 = vsel %vm3412, %v3390, 0
    %v3558 = vsel %vm3412, %v3391, 0
    %v3561 = vsel %vm3412, %v3392, 0
    %v3564 = vsel %vm3412, %v3393, 0
    %v3567 = vsel %vm3412, %v3394, 0
    %v3570 = vsel %vm3412, %v3395, 0
    %v3573 = vsel %vm3412, %v3396, 0
    %v3576 = vsel %vm3412, %v3397, 0
    %v3579 = vsel %vm3412, %v3398, 0
    %v3582 = vsel %vm3412, %v3399, 0
    %v3585 = vsel %vm3412, %v3400, 0
    %v3588 = vsel %vm3412, %v3401, 0
    %v3591 = vsel %vm3412, %v3402, 0
    %v3594 = vsel %vm3412, %v3403, 0
    %v3597 = vsel %vm3412, %v3404, 0
    %v3600 = vsel %vm3412, %v3405, 0
    %v3603 = vsel %vm3412, %v3406, 0
    %vm3605 = vcmask 1043456
    %v3607 = vsel %vm3605, %v3411, 0
    %3609 = vmatpush.msra.mxu0 0.0
    %3610 = vmatpush.msra.mxu0 0.0
    %3611 = vmatpush.msra.mxu0 0.0
    %3612 = vmatpush.msra.mxu0 0.0
    %3613 = vmatpush.msra.mxu0 0.0
    %3614 = vmatpush.msra.mxu0 0.0
    %3615 = vmatpush.msra.mxu0 0.0
    %3616 = vmatpush.msra.mxu0 0.0
    %3617 = vmatpush.msra.mxu0 0.0
    %3618 = vmatpush.msra.mxu0 0.0
    %3619 = vmatpush.msra.mxu0 0.0
    %3620 = vmatpush.msra.mxu0 %v3607
    %3621 = vmatpush.msra.mxu0 %v3410
    %3622 = vmatpush.msra.mxu0 %v3409
    %3623 = vmatpush.msra.mxu0 %v3408
    %3624 = vmatpush.msra.mxu0 %v3407
    %3625 = vmatmul.f32.gmra.mxu0 %v3414
    %v3626 = vpop.f32.mrf.mxu0
    %v3627 = vadd.f32 0.0, %v3626
    %3628 = vmatmul.f32.gmra.mxu0 %v3417
    %v3629 = vpop.f32.mrf.mxu0
    %v3630 = vadd.f32 0.0, %v3629
    %3631 = vmatmul.f32.gmra.mxu0 %v3420
    %v3632 = vpop.f32.mrf.mxu0
    %v3633 = vadd.f32 0.0, %v3632
    %3634 = vmatmul.f32.gmra.mxu0 %v3423
    %v3635 = vpop.f32.mrf.mxu0
    %v3636 = vadd.f32 0.0, %v3635
    %3637 = vmatmul.f32.gmra.mxu0 %v3426
    %v3638 = vpop.f32.mrf.mxu0
    %v3639 = vadd.f32 0.0, %v3638
    %3640 = vmatmul.f32.gmra.mxu0 %v3429
    %v3641 = vpop.f32.mrf.mxu0
    %v3642 = vadd.f32 0.0, %v3641
    %3643 = vmatmul.f32.gmra.mxu0 %v3432
    %v3644 = vpop.f32.mrf.mxu0
    %v3645 = vadd.f32 0.0, %v3644
    %3646 = vmatmul.f32.gmra.mxu0 %v3435
    %v3647 = vpop.f32.mrf.mxu0
    %v3648 = vadd.f32 0.0, %v3647
    %3649 = vmatmul.f32.gmra.mxu0 %v3438
    %v3650 = vpop.f32.mrf.mxu0
    %v3651 = vadd.f32 0.0, %v3650
    %3652 = vmatmul.f32.gmra.mxu0 %v3441
    %v3653 = vpop.f32.mrf.mxu0
    %v3654 = vadd.f32 0.0, %v3653
    %3655 = vmatmul.f32.gmra.mxu0 %v3444
    %v3656 = vpop.f32.mrf.mxu0
    %v3657 = vadd.f32 0.0, %v3656
    %3658 = vmatmul.f32.gmra.mxu0 %v3447
    %v3659 = vpop.f32.mrf.mxu0
    %v3660 = vadd.f32 0.0, %v3659
    %3661 = vmatmul.f32.gmra.mxu0 %v3450
    %v3662 = vpop.f32.mrf.mxu0
    %v3663 = vadd.f32 0.0, %v3662
    %3664 = vmatmul.f32.gmra.mxu0 %v3453
    %v3665 = vpop.f32.mrf.mxu0
    %v3666 = vadd.f32 0.0, %v3665
    %3667 = vmatmul.f32.gmra.mxu0 %v3456
    %v3668 = vpop.f32.mrf.mxu0
    %v3669 = vadd.f32 0.0, %v3668
    %3670 = vmatmul.f32.gmra.mxu0 %v3459
    %v3671 = vpop.f32.mrf.mxu0
    %v3672 = vadd.f32 0.0, %v3671
    %3673 = vmatmul.f32.gmra.mxu0 %v3462
    %v3674 = vpop.f32.mrf.mxu0
    %v3675 = vadd.f32 0.0, %v3674
    %3676 = vmatmul.f32.gmra.mxu0 %v3465
    %v3677 = vpop.f32.mrf.mxu0
    %v3678 = vadd.f32 0.0, %v3677
    %3679 = vmatmul.f32.gmra.mxu0 %v3468
    %v3680 = vpop.f32.mrf.mxu0
    %v3681 = vadd.f32 0.0, %v3680
    %3682 = vmatmul.f32.gmra.mxu0 %v3471
    %v3683 = vpop.f32.mrf.mxu0
    %v3684 = vadd.f32 0.0, %v3683
    %3685 = vmatmul.f32.gmra.mxu0 %v3474
    %v3686 = vpop.f32.mrf.mxu0
    %v3687 = vadd.f32 0.0, %v3686
    %3688 = vmatmul.f32.gmra.mxu0 %v3477
    %v3689 = vpop.f32.mrf.mxu0
    %v3690 = vadd.f32 0.0, %v3689
    %3691 = vmatmul.f32.gmra.mxu0 %v3480
    %v3692 = vpop.f32.mrf.mxu0
    %v3693 = vadd.f32 0.0, %v3692
    %3694 = vmatmul.f32.gmra.mxu0 %v3483
    %v3695 = vpop.f32.mrf.mxu0
    %v3696 = vadd.f32 0.0, %v3695
    %3697 = vmatmul.f32.gmra.mxu0 %v3486
    %v3698 = vpop.f32.mrf.mxu0
    %v3699 = vadd.f32 0.0, %v3698
    %3700 = vmatmul.f32.gmra.mxu0 %v3489
    %v3701 = vpop.f32.mrf.mxu0
    %v3702 = vadd.f32 0.0, %v3701
    %3703 = vmatmul.f32.gmra.mxu0 %v3492
    %v3704 = vpop.f32.mrf.mxu0
    %v3705 = vadd.f32 0.0, %v3704
    %3706 = vmatmul.f32.gmra.mxu0 %v3495
    %v3707 = vpop.f32.mrf.mxu0
    %v3708 = vadd.f32 0.0, %v3707
    %3709 = vmatmul.f32.gmra.mxu0 %v3498
    %v3710 = vpop.f32.mrf.mxu0
    %v3711 = vadd.f32 0.0, %v3710
    %3712 = vmatmul.f32.gmra.mxu0 %v3501
    %v3713 = vpop.f32.mrf.mxu0
    %v3714 = vadd.f32 0.0, %v3713
    %3715 = vmatmul.f32.gmra.mxu0 %v3504
    %v3716 = vpop.f32.mrf.mxu0
    %v3717 = vadd.f32 0.0, %v3716
    %3718 = vmatmul.f32.gmra.mxu0 %v3507
    %v3719 = vpop.f32.mrf.mxu0
    %v3720 = vadd.f32 0.0, %v3719
    %3721 = vmatmul.f32.gmra.mxu0 %v3510
    %v3722 = vpop.f32.mrf.mxu0
    %v3723 = vadd.f32 0.0, %v3722
    %3724 = vmatmul.f32.gmra.mxu0 %v3513
    %v3725 = vpop.f32.mrf.mxu0
    %v3726 = vadd.f32 0.0, %v3725
    %3727 = vmatmul.f32.gmra.mxu0 %v3516
    %v3728 = vpop.f32.mrf.mxu0
    %v3729 = vadd.f32 0.0, %v3728
    %3730 = vmatmul.f32.gmra.mxu0 %v3519
    %v3731 = vpop.f32.mrf.mxu0
    %v3732 = vadd.f32 0.0, %v3731
    %3733 = vmatmul.f32.gmra.mxu0 %v3522
    %v3734 = vpop.f32.mrf.mxu0
    %v3735 = vadd.f32 0.0, %v3734
    %3736 = vmatmul.f32.gmra.mxu0 %v3525
    %v3737 = vpop.f32.mrf.mxu0
    %v3738 = vadd.f32 0.0, %v3737
    %3739 = vmatmul.f32.gmra.mxu0 %v3528
    %v3740 = vpop.f32.mrf.mxu0
    %v3741 = vadd.f32 0.0, %v3740
    %3742 = vmatmul.f32.gmra.mxu0 %v3531
    %v3743 = vpop.f32.mrf.mxu0
    %v3744 = vadd.f32 0.0, %v3743
    %3745 = vmatmul.f32.gmra.mxu0 %v3534
    %v3746 = vpop.f32.mrf.mxu0
    %v3747 = vadd.f32 0.0, %v3746
    %3748 = vmatmul.f32.gmra.mxu0 %v3537
    %v3749 = vpop.f32.mrf.mxu0
    %v3750 = vadd.f32 0.0, %v3749
    %3751 = vmatmul.f32.gmra.mxu0 %v3540
    %v3752 = vpop.f32.mrf.mxu0
    %v3753 = vadd.f32 0.0, %v3752
    %3754 = vmatmul.f32.gmra.mxu0 %v3543
    %v3755 = vpop.f32.mrf.mxu0
    %v3756 = vadd.f32 0.0, %v3755
    %3757 = vmatmul.f32.gmra.mxu0 %v3546
    %v3758 = vpop.f32.mrf.mxu0
    %v3759 = vadd.f32 0.0, %v3758
    %3760 = vmatmul.f32.gmra.mxu0 %v3549
    %v3761 = vpop.f32.mrf.mxu0
    %v3762 = vadd.f32 0.0, %v3761
    %3763 = vmatmul.f32.gmra.mxu0 %v3552
    %v3764 = vpop.f32.mrf.mxu0
    %v3765 = vadd.f32 0.0, %v3764
    %3766 = vmatmul.f32.gmra.mxu0 %v3555
    %v3767 = vpop.f32.mrf.mxu0
    %v3768 = vadd.f32 0.0, %v3767
    %3769 = vmatmul.f32.gmra.mxu0 %v3558
    %v3770 = vpop.f32.mrf.mxu0
    %v3771 = vadd.f32 0.0, %v3770
    %3772 = vmatmul.f32.gmra.mxu0 %v3561
    %v3773 = vpop.f32.mrf.mxu0
    %v3774 = vadd.f32 0.0, %v3773
    %3775 = vmatmul.f32.gmra.mxu0 %v3564
    %v3776 = vpop.f32.mrf.mxu0
    %v3777 = vadd.f32 0.0, %v3776
    %3778 = vmatmul.f32.gmra.mxu0 %v3567
    %v3779 = vpop.f32.mrf.mxu0
    %v3780 = vadd.f32 0.0, %v3779
    %3781 = vmatmul.f32.gmra.mxu0 %v3570
    %v3782 = vpop.f32.mrf.mxu0
    %v3783 = vadd.f32 0.0, %v3782
    %3784 = vmatmul.f32.gmra.mxu0 %v3573
    %v3785 = vpop.f32.mrf.mxu0
    %v3786 = vadd.f32 0.0, %v3785
    %3787 = vmatmul.f32.gmra.mxu0 %v3576
    %v3788 = vpop.f32.mrf.mxu0
    %v3789 = vadd.f32 0.0, %v3788
    %3790 = vmatmul.f32.gmra.mxu0 %v3579
    %v3791 = vpop.f32.mrf.mxu0
    %v3792 = vadd.f32 0.0, %v3791
    %3793 = vmatmul.f32.gmra.mxu0 %v3582
    %v3794 = vpop.f32.mrf.mxu0
    %v3795 = vadd.f32 0.0, %v3794
    %3796 = vmatmul.f32.gmra.mxu0 %v3585
    %v3797 = vpop.f32.mrf.mxu0
    %v3798 = vadd.f32 0.0, %v3797
    %3799 = vmatmul.f32.gmra.mxu0 %v3588
    %v3800 = vpop.f32.mrf.mxu0
    %v3801 = vadd.f32 0.0, %v3800
    %3802 = vmatmul.f32.gmra.mxu0 %v3591
    %v3803 = vpop.f32.mrf.mxu0
    %v3804 = vadd.f32 0.0, %v3803
    %3805 = vmatmul.f32.gmra.mxu0 %v3594
    %v3806 = vpop.f32.mrf.mxu0
    %v3807 = vadd.f32 0.0, %v3806
    %3808 = vmatmul.f32.gmra.mxu0 %v3597
    %v3809 = vpop.f32.mrf.mxu0
    %v3810 = vadd.f32 0.0, %v3809
    %3811 = vmatmul.f32.gmra.mxu0 %v3600
    %v3812 = vpop.f32.mrf.mxu0
    %v3813 = vadd.f32 0.0, %v3812
    %3814 = vmatmul.f32.gmra.mxu0 %v3603
    %v3815 = vpop.f32.mrf.mxu0
    %v3816 = vadd.f32 0.0, %v3815
    %3817 = vdwg.mxu0
    %v3818 = vadd.f32 %v3627, %v3630
    %v3819 = vadd.f32 %v3818, %v3633
    %v3820 = vadd.f32 %v3819, %v3636
    %v3821 = vadd.f32 %v3820, %v3639
    %v3822 = vadd.f32 %v3821, %v3642
    %v3823 = vadd.f32 %v3822, %v3645
    %v3824 = vadd.f32 %v3823, %v3648
    %v3825 = vadd.f32 %v3824, %v3651
    %v3826 = vadd.f32 %v3825, %v3654
    %v3827 = vadd.f32 %v3826, %v3657
    %v3828 = vadd.f32 %v3827, %v3660
    %v3829 = vadd.f32 %v3828, %v3663
    %v3830 = vadd.f32 %v3829, %v3666
    %v3831 = vadd.f32 %v3830, %v3669
    %v3832 = vadd.f32 %v3831, %v3672
    %v3833 = vadd.f32 %v3832, %v3675
    %v3834 = vadd.f32 %v3833, %v3678
    %v3835 = vadd.f32 %v3834, %v3681
    %v3836 = vadd.f32 %v3835, %v3684
    %v3837 = vadd.f32 %v3836, %v3687
    %v3838 = vadd.f32 %v3837, %v3690
    %v3839 = vadd.f32 %v3838, %v3693
    %v3840 = vadd.f32 %v3839, %v3696
    %v3841 = vadd.f32 %v3840, %v3699
    %v3842 = vadd.f32 %v3841, %v3702
    %v3843 = vadd.f32 %v3842, %v3705
    %v3844 = vadd.f32 %v3843, %v3708
    %v3845 = vadd.f32 %v3844, %v3711
    %v3846 = vadd.f32 %v3845, %v3714
    %v3847 = vadd.f32 %v3846, %v3717
    %v3848 = vadd.f32 %v3847, %v3720
    %v3849 = vadd.f32 %v3848, %v3723
    %v3850 = vadd.f32 %v3849, %v3726
    %v3851 = vadd.f32 %v3850, %v3729
    %v3852 = vadd.f32 %v3851, %v3732
    %v3853 = vadd.f32 %v3852, %v3735
    %v3854 = vadd.f32 %v3853, %v3738
    %v3855 = vadd.f32 %v3854, %v3741
    %v3856 = vadd.f32 %v3855, %v3744
    %v3857 = vadd.f32 %v3856, %v3747
    %v3858 = vadd.f32 %v3857, %v3750
    %v3859 = vadd.f32 %v3858, %v3753
    %v3860 = vadd.f32 %v3859, %v3756
    %v3861 = vadd.f32 %v3860, %v3759
    %v3862 = vadd.f32 %v3861, %v3762
    %v3863 = vadd.f32 %v3862, %v3765
    %v3864 = vadd.f32 %v3863, %v3768
    %v3865 = vadd.f32 %v3864, %v3771
    %v3866 = vadd.f32 %v3865, %v3774
    %v3867 = vadd.f32 %v3866, %v3777
    %v3868 = vadd.f32 %v3867, %v3780
    %v3869 = vadd.f32 %v3868, %v3783
    %v3870 = vadd.f32 %v3869, %v3786
    %v3871 = vadd.f32 %v3870, %v3789
    %v3872 = vadd.f32 %v3871, %v3792
    %v3873 = vadd.f32 %v3872, %v3795
    %v3874 = vadd.f32 %v3873, %v3798
    %v3875 = vadd.f32 %v3874, %v3801
    %v3876 = vadd.f32 %v3875, %v3804
    %v3877 = vadd.f32 %v3876, %v3807
    %v3878 = vadd.f32 %v3877, %v3810
    %v3879 = vadd.f32 %v3878, %v3813
    %v3880 = vadd.f32 %v3879, %v3816
    %v3881 = vrot.slane %v3880, 4
    %v3882 = vadd.f32 %v3880, %v3881
    %v3883 = vrot.slane %v3882, 2
    %v3884 = vadd.f32 %v3882, %v3883
    %v3885 = vrot.slane %v3884, 1
    %v3886 = vadd.f32 %v3884, %v3885
    %v3887 = vrcp.pop 512.0
    %v3888 = vmul.f32 512.0, %v3887
    %v3889 = vsub.f32 1.0, %v3888
    %v3890 = vmul.f32 %v3887, %v3889
    %v3891 = vadd.f32 %v3887, %v3890
    %vm3892 = vweird.f32 %v3887
    %v3893 = vsel %vm3892, %v3887, %v3891
    %v3894 = vmul.f32 %v3886, %v3893
    %v3895 = vmul.f32 %v3627, %v3627
    %v3896 = vmul.f32 %v3630, %v3630
    %v3897 = vmul.f32 %v3633, %v3633
    %v3898 = vmul.f32 %v3636, %v3636
    %v3899 = vmul.f32 %v3639, %v3639
    %v3900 = vmul.f32 %v3642, %v3642
    %v3901 = vmul.f32 %v3645, %v3645
    %v3902 = vmul.f32 %v3648, %v3648
    %v3903 = vmul.f32 %v3651, %v3651
    %v3904 = vmul.f32 %v3654, %v3654
    %v3905 = vmul.f32 %v3657, %v3657
    %v3906 = vmul.f32 %v3660, %v3660
    %v3907 = vmul.f32 %v3663, %v3663
    %v3908 = vmul.f32 %v3666, %v3666
    %v3909 = vmul.f32 %v3669, %v3669
    %v3910 = vmul.f32 %v3672, %v3672
    %v3911 = vmul.f32 %v3675, %v3675
    %v3912 = vmul.f32 %v3678, %v3678
    %v3913 = vmul.f32 %v3681, %v3681
    %v3914 = vmul.f32 %v3684, %v3684
    %v3915 = vmul.f32 %v3687, %v3687
    %v3916 = vmul.f32 %v3690, %v3690
    %v3917 = vmul.f32 %v3693, %v3693
    %v3918 = vmul.f32 %v3696, %v3696
    %v3919 = vmul.f32 %v3699, %v3699
    %v3920 = vmul.f32 %v3702, %v3702
    %v3921 = vmul.f32 %v3705, %v3705
    %v3922 = vmul.f32 %v3708, %v3708
    %v3923 = vmul.f32 %v3711, %v3711
    %v3924 = vmul.f32 %v3714, %v3714
    %v3925 = vmul.f32 %v3717, %v3717
    %v3926 = vmul.f32 %v3720, %v3720
    %v3927 = vmul.f32 %v3723, %v3723
    %v3928 = vmul.f32 %v3726, %v3726
    %v3929 = vmul.f32 %v3729, %v3729
    %v3930 = vmul.f32 %v3732, %v3732
    %v3931 = vmul.f32 %v3735, %v3735
    %v3932 = vmul.f32 %v3738, %v3738
    %v3933 = vmul.f32 %v3741, %v3741
    %v3934 = vmul.f32 %v3744, %v3744
    %v3935 = vmul.f32 %v3747, %v3747
    %v3936 = vmul.f32 %v3750, %v3750
    %v3937 = vmul.f32 %v3753, %v3753
    %v3938 = vmul.f32 %v3756, %v3756
    %v3939 = vmul.f32 %v3759, %v3759
    %v3940 = vmul.f32 %v3762, %v3762
    %v3941 = vmul.f32 %v3765, %v3765
    %v3942 = vmul.f32 %v3768, %v3768
    %v3943 = vmul.f32 %v3771, %v3771
    %v3944 = vmul.f32 %v3774, %v3774
    %v3945 = vmul.f32 %v3777, %v3777
    %v3946 = vmul.f32 %v3780, %v3780
    %v3947 = vmul.f32 %v3783, %v3783
    %v3948 = vmul.f32 %v3786, %v3786
    %v3949 = vmul.f32 %v3789, %v3789
    %v3950 = vmul.f32 %v3792, %v3792
    %v3951 = vmul.f32 %v3795, %v3795
    %v3952 = vmul.f32 %v3798, %v3798
    %v3953 = vmul.f32 %v3801, %v3801
    %v3954 = vmul.f32 %v3804, %v3804
    %v3955 = vmul.f32 %v3807, %v3807
    %v3956 = vmul.f32 %v3810, %v3810
    %v3957 = vmul.f32 %v3813, %v3813
    %v3958 = vmul.f32 %v3816, %v3816
    %v3959 = vadd.f32 %v3895, %v3896
    %v3960 = vadd.f32 %v3959, %v3897
    %v3961 = vadd.f32 %v3960, %v3898
    %v3962 = vadd.f32 %v3961, %v3899
    %v3963 = vadd.f32 %v3962, %v3900
    %v3964 = vadd.f32 %v3963, %v3901
    %v3965 = vadd.f32 %v3964, %v3902
    %v3966 = vadd.f32 %v3965, %v3903
    %v3967 = vadd.f32 %v3966, %v3904
    %v3968 = vadd.f32 %v3967, %v3905
    %v3969 = vadd.f32 %v3968, %v3906
    %v3970 = vadd.f32 %v3969, %v3907
    %v3971 = vadd.f32 %v3970, %v3908
    %v3972 = vadd.f32 %v3971, %v3909
    %v3973 = vadd.f32 %v3972, %v3910
    %v3974 = vadd.f32 %v3973, %v3911
    %v3975 = vadd.f32 %v3974, %v3912
    %v3976 = vadd.f32 %v3975, %v3913
    %v3977 = vadd.f32 %v3976, %v3914
    %v3978 = vadd.f32 %v3977, %v3915
    %v3979 = vadd.f32 %v3978, %v3916
    %v3980 = vadd.f32 %v3979, %v3917
    %v3981 = vadd.f32 %v3980, %v3918
    %v3982 = vadd.f32 %v3981, %v3919
    %v3983 = vadd.f32 %v3982, %v3920
    %v3984 = vadd.f32 %v3983, %v3921
    %v3985 = vadd.f32 %v3984, %v3922
    %v3986 = vadd.f32 %v3985, %v3923
    %v3987 = vadd.f32 %v3986, %v3924
    %v3988 = vadd.f32 %v3987, %v3925
    %v3989 = vadd.f32 %v3988, %v3926
    %v3990 = vadd.f32 %v3989, %v3927
    %v3991 = vadd.f32 %v3990, %v3928
    %v3992 = vadd.f32 %v3991, %v3929
    %v3993 = vadd.f32 %v3992, %v3930
    %v3994 = vadd.f32 %v3993, %v3931
    %v3995 = vadd.f32 %v3994, %v3932
    %v3996 = vadd.f32 %v3995, %v3933
    %v3997 = vadd.f32 %v3996, %v3934
    %v3998 = vadd.f32 %v3997, %v3935
    %v3999 = vadd.f32 %v3998, %v3936
    %v4000 = vadd.f32 %v3999, %v3937
    %v4001 = vadd.f32 %v4000, %v3938
    %v4002 = vadd.f32 %v4001, %v3939
    %v4003 = vadd.f32 %v4002, %v3940
    %v4004 = vadd.f32 %v4003, %v3941
    %v4005 = vadd.f32 %v4004, %v3942
    %v4006 = vadd.f32 %v4005, %v3943
    %v4007 = vadd.f32 %v4006, %v3944
    %v4008 = vadd.f32 %v4007, %v3945
    %v4009 = vadd.f32 %v4008, %v3946
    %v4010 = vadd.f32 %v4009, %v3947
    %v4011 = vadd.f32 %v4010, %v3948
    %v4012 = vadd.f32 %v4011, %v3949
    %v4013 = vadd.f32 %v4012, %v3950
    %v4014 = vadd.f32 %v4013, %v3951
    %v4015 = vadd.f32 %v4014, %v3952
    %v4016 = vadd.f32 %v4015, %v3953
    %v4017 = vadd.f32 %v4016, %v3954
    %v4018 = vadd.f32 %v4017, %v3955
    %v4019 = vadd.f32 %v4018, %v3956
    %v4020 = vadd.f32 %v4019, %v3957
    %v4021 = vadd.f32 %v4020, %v3958
    %v4022 = vrot.slane %v4021, 4
    %v4023 = vadd.f32 %v4021, %v4022
    %v4024 = vrot.slane %v4023, 2
    %v4025 = vadd.f32 %v4023, %v4024
    %v4026 = vrot.slane %v4025, 1
    %v4027 = vadd.f32 %v4025, %v4026
    %v4028 = vmul.f32 %v4027, %v3893
    %v4029 = vmul.f32 %v3894, %v3894
    %v4030 = vsub.f32 %v4028, %v4029
    %v4031 = vmax.f32 %v4030, 0.0
    %v4032 = vsub.f32 %v3627, %v3894
    %v4033 = vsub.f32 %v3630, %v3894
    %v4034 = vsub.f32 %v3633, %v3894
    %v4035 = vsub.f32 %v3636, %v3894
    %v4036 = vsub.f32 %v3639, %v3894
    %v4037 = vsub.f32 %v3642, %v3894
    %v4038 = vsub.f32 %v3645, %v3894
    %v4039 = vsub.f32 %v3648, %v3894
    %v4040 = vsub.f32 %v3651, %v3894
    %v4041 = vsub.f32 %v3654, %v3894
    %v4042 = vsub.f32 %v3657, %v3894
    %v4043 = vsub.f32 %v3660, %v3894
    %v4044 = vsub.f32 %v3663, %v3894
    %v4045 = vsub.f32 %v3666, %v3894
    %v4046 = vsub.f32 %v3669, %v3894
    %v4047 = vsub.f32 %v3672, %v3894
    %v4048 = vsub.f32 %v3675, %v3894
    %v4049 = vsub.f32 %v3678, %v3894
    %v4050 = vsub.f32 %v3681, %v3894
    %v4051 = vsub.f32 %v3684, %v3894
    %v4052 = vsub.f32 %v3687, %v3894
    %v4053 = vsub.f32 %v3690, %v3894
    %v4054 = vsub.f32 %v3693, %v3894
    %v4055 = vsub.f32 %v3696, %v3894
    %v4056 = vsub.f32 %v3699, %v3894
    %v4057 = vsub.f32 %v3702, %v3894
    %v4058 = vsub.f32 %v3705, %v3894
    %v4059 = vsub.f32 %v3708, %v3894
    %v4060 = vsub.f32 %v3711, %v3894
    %v4061 = vsub.f32 %v3714, %v3894
    %v4062 = vsub.f32 %v3717, %v3894
    %v4063 = vsub.f32 %v3720, %v3894
    %v4064 = vsub.f32 %v3723, %v3894
    %v4065 = vsub.f32 %v3726, %v3894
    %v4066 = vsub.f32 %v3729, %v3894
    %v4067 = vsub.f32 %v3732, %v3894
    %v4068 = vsub.f32 %v3735, %v3894
    %v4069 = vsub.f32 %v3738, %v3894
    %v4070 = vsub.f32 %v3741, %v3894
    %v4071 = vsub.f32 %v3744, %v3894
    %v4072 = vsub.f32 %v3747, %v3894
    %v4073 = vsub.f32 %v3750, %v3894
    %v4074 = vsub.f32 %v3753, %v3894
    %v4075 = vsub.f32 %v3756, %v3894
    %v4076 = vsub.f32 %v3759, %v3894
    %v4077 = vsub.f32 %v3762, %v3894
    %v4078 = vsub.f32 %v3765, %v3894
    %v4079 = vsub.f32 %v3768, %v3894
    %v4080 = vsub.f32 %v3771, %v3894
    %v4081 = vsub.f32 %v3774, %v3894
    %v4082 = vsub.f32 %v3777, %v3894
    %v4083 = vsub.f32 %v3780, %v3894
    %v4084 = vsub.f32 %v3783, %v3894
    %v4085 = vsub.f32 %v3786, %v3894
    %v4086 = vsub.f32 %v3789, %v3894
    %v4087 = vsub.f32 %v3792, %v3894
    %v4088 = vsub.f32 %v3795, %v3894
    %v4089 = vsub.f32 %v3798, %v3894
    %v4090 = vsub.f32 %v3801, %v3894
    %v4091 = vsub.f32 %v3804, %v3894
    %v4092 = vsub.f32 %v3807, %v3894
    %v4093 = vsub.f32 %v3810, %v3894
    %v4094 = vsub.f32 %v3813, %v3894
    %v4095 = vsub.f32 %v3816, %v3894
    %v4096 = vadd.f32 %v4031, 1e-05
    %v4097 = vrsqrt.pop %v4096
    %v4098 = vmul.f32 %v4097, %v4096
    %v4099 = vmul.f32 %v4098, %v4097
    %v4100 = vmul.f32 0.5, %v4099
    %v4101 = vsub.f32 1.5, %v4100
    %v4102 = vmul.f32 %v4097, %v4101
    %vm4103 = vweird.f32 %v4096
    %vm4104 = vweird.f32 %v4097
    %vm4105 = vmor %vm4103, %vm4104
    %v4106 = vsel %vm4105, %v4097, %v4102
    %v4107 = vmul.f32 %v4032, %v4106
    %v4108 = vmul.f32 %v4033, %v4106
    %v4109 = vmul.f32 %v4034, %v4106
    %v4110 = vmul.f32 %v4035, %v4106
    %v4111 = vmul.f32 %v4036, %v4106
    %v4112 = vmul.f32 %v4037, %v4106
    %v4113 = vmul.f32 %v4038, %v4106
    %v4114 = vmul.f32 %v4039, %v4106
    %v4115 = vmul.f32 %v4040, %v4106
    %v4116 = vmul.f32 %v4041, %v4106
    %v4117 = vmul.f32 %v4042, %v4106
    %v4118 = vmul.f32 %v4043, %v4106
    %v4119 = vmul.f32 %v4044, %v4106
    %v4120 = vmul.f32 %v4045, %v4106
    %v4121 = vmul.f32 %v4046, %v4106
    %v4122 = vmul.f32 %v4047, %v4106
    %v4123 = vmul.f32 %v4048, %v4106
    %v4124 = vmul.f32 %v4049, %v4106
    %v4125 = vmul.f32 %v4050, %v4106
    %v4126 = vmul.f32 %v4051, %v4106
    %v4127 = vmul.f32 %v4052, %v4106
    %v4128 = vmul.f32 %v4053, %v4106
    %v4129 = vmul.f32 %v4054, %v4106
    %v4130 = vmul.f32 %v4055, %v4106
    %v4131 = vmul.f32 %v4056, %v4106
    %v4132 = vmul.f32 %v4057, %v4106
    %v4133 = vmul.f32 %v4058, %v4106
    %v4134 = vmul.f32 %v4059, %v4106
    %v4135 = vmul.f32 %v4060, %v4106
    %v4136 = vmul.f32 %v4061, %v4106
    %v4137 = vmul.f32 %v4062, %v4106
    %v4138 = vmul.f32 %v4063, %v4106
    %v4139 = vmul.f32 %v4064, %v4106
    %v4140 = vmul.f32 %v4065, %v4106
    %v4141 = vmul.f32 %v4066, %v4106
    %v4142 = vmul.f32 %v4067, %v4106
    %v4143 = vmul.f32 %v4068, %v4106
    %v4144 = vmul.f32 %v4069, %v4106
    %v4145 = vmul.f32 %v4070, %v4106
    %v4146 = vmul.f32 %v4071, %v4106
    %v4147 = vmul.f32 %v4072, %v4106
    %v4148 = vmul.f32 %v4073, %v4106
    %v4149 = vmul.f32 %v4074, %v4106
    %v4150 = vmul.f32 %v4075, %v4106
    %v4151 = vmul.f32 %v4076, %v4106
    %v4152 = vmul.f32 %v4077, %v4106
    %v4153 = vmul.f32 %v4078, %v4106
    %v4154 = vmul.f32 %v4079, %v4106
    %v4155 = vmul.f32 %v4080, %v4106
    %v4156 = vmul.f32 %v4081, %v4106
    %v4157 = vmul.f32 %v4082, %v4106
    %v4158 = vmul.f32 %v4083, %v4106
    %v4159 = vmul.f32 %v4084, %v4106
    %v4160 = vmul.f32 %v4085, %v4106
    %v4161 = vmul.f32 %v4086, %v4106
    %v4162 = vmul.f32 %v4087, %v4106
    %v4163 = vmul.f32 %v4088, %v4106
    %v4164 = vmul.f32 %v4089, %v4106
    %v4165 = vmul.f32 %v4090, %v4106
    %v4166 = vmul.f32 %v4091, %v4106
    %v4167 = vmul.f32 %v4092, %v4106
    %v4168 = vmul.f32 %v4093, %v4106
    %v4169 = vmul.f32 %v4094, %v4106
    %v4170 = vmul.f32 %v4095, %v4106
    %v4171 = vld [vmem:[%s3] sm:$0x1]
    %v4173 = vperm.slane %v4171, 0
    %v4175 = vmul.f32 %v4107, %v4173
    %v4176 = vmul.f32 %v4108, %v4173
    %v4177 = vmul.f32 %v4109, %v4173
    %v4178 = vmul.f32 %v4110, %v4173
    %v4179 = vmul.f32 %v4111, %v4173
    %v4180 = vmul.f32 %v4112, %v4173
    %v4181 = vmul.f32 %v4113, %v4173
    %v4182 = vmul.f32 %v4114, %v4173
    %v4183 = vmul.f32 %v4115, %v4173
    %v4184 = vmul.f32 %v4116, %v4173
    %v4185 = vmul.f32 %v4117, %v4173
    %v4186 = vmul.f32 %v4118, %v4173
    %v4187 = vmul.f32 %v4119, %v4173
    %v4188 = vmul.f32 %v4120, %v4173
    %v4189 = vmul.f32 %v4121, %v4173
    %v4190 = vmul.f32 %v4122, %v4173
    %v4191 = vmul.f32 %v4123, %v4173
    %v4192 = vmul.f32 %v4124, %v4173
    %v4193 = vmul.f32 %v4125, %v4173
    %v4194 = vmul.f32 %v4126, %v4173
    %v4195 = vmul.f32 %v4127, %v4173
    %v4196 = vmul.f32 %v4128, %v4173
    %v4197 = vmul.f32 %v4129, %v4173
    %v4198 = vmul.f32 %v4130, %v4173
    %v4199 = vmul.f32 %v4131, %v4173
    %v4200 = vmul.f32 %v4132, %v4173
    %v4201 = vmul.f32 %v4133, %v4173
    %v4202 = vmul.f32 %v4134, %v4173
    %v4203 = vmul.f32 %v4135, %v4173
    %v4204 = vmul.f32 %v4136, %v4173
    %v4205 = vmul.f32 %v4137, %v4173
    %v4206 = vmul.f32 %v4138, %v4173
    %v4207 = vmul.f32 %v4139, %v4173
    %v4208 = vmul.f32 %v4140, %v4173
    %v4209 = vmul.f32 %v4141, %v4173
    %v4210 = vmul.f32 %v4142, %v4173
    %v4211 = vmul.f32 %v4143, %v4173
    %v4212 = vmul.f32 %v4144, %v4173
    %v4213 = vmul.f32 %v4145, %v4173
    %v4214 = vmul.f32 %v4146, %v4173
    %v4215 = vmul.f32 %v4147, %v4173
    %v4216 = vmul.f32 %v4148, %v4173
    %v4217 = vmul.f32 %v4149, %v4173
    %v4218 = vmul.f32 %v4150, %v4173
    %v4219 = vmul.f32 %v4151, %v4173
    %v4220 = vmul.f32 %v4152, %v4173
    %v4221 = vmul.f32 %v4153, %v4173
    %v4222 = vmul.f32 %v4154, %v4173
    %v4223 = vmul.f32 %v4155, %v4173
    %v4224 = vmul.f32 %v4156, %v4173
    %v4225 = vmul.f32 %v4157, %v4173
    %v4226 = vmul.f32 %v4158, %v4173
    %v4227 = vmul.f32 %v4159, %v4173
    %v4228 = vmul.f32 %v4160, %v4173
    %v4229 = vmul.f32 %v4161, %v4173
    %v4230 = vmul.f32 %v4162, %v4173
    %v4231 = vmul.f32 %v4163, %v4173
    %v4232 = vmul.f32 %v4164, %v4173
    %v4233 = vmul.f32 %v4165, %v4173
    %v4234 = vmul.f32 %v4166, %v4173
    %v4235 = vmul.f32 %v4167, %v4173
    %v4236 = vmul.f32 %v4168, %v4173
    %v4237 = vmul.f32 %v4169, %v4173
    %v4238 = vmul.f32 %v4170, %v4173
    %v4239 = vld [vmem:[%s4] sm:$0x1]
    %v4241 = vperm.slane %v4239, 0
    %v4243 = vadd.f32 %v4175, %v4241
    %v4244 = vadd.f32 %v4176, %v4241
    %v4245 = vadd.f32 %v4177, %v4241
    %v4246 = vadd.f32 %v4178, %v4241
    %v4247 = vadd.f32 %v4179, %v4241
    %v4248 = vadd.f32 %v4180, %v4241
    %v4249 = vadd.f32 %v4181, %v4241
    %v4250 = vadd.f32 %v4182, %v4241
    %v4251 = vadd.f32 %v4183, %v4241
    %v4252 = vadd.f32 %v4184, %v4241
    %v4253 = vadd.f32 %v4185, %v4241
    %v4254 = vadd.f32 %v4186, %v4241
    %v4255 = vadd.f32 %v4187, %v4241
    %v4256 = vadd.f32 %v4188, %v4241
    %v4257 = vadd.f32 %v4189, %v4241
    %v4258 = vadd.f32 %v4190, %v4241
    %v4259 = vadd.f32 %v4191, %v4241
    %v4260 = vadd.f32 %v4192, %v4241
    %v4261 = vadd.f32 %v4193, %v4241
    %v4262 = vadd.f32 %v4194, %v4241
    %v4263 = vadd.f32 %v4195, %v4241
    %v4264 = vadd.f32 %v4196, %v4241
    %v4265 = vadd.f32 %v4197, %v4241
    %v4266 = vadd.f32 %v4198, %v4241
    %v4267 = vadd.f32 %v4199, %v4241
    %v4268 = vadd.f32 %v4200, %v4241
    %v4269 = vadd.f32 %v4201, %v4241
    %v4270 = vadd.f32 %v4202, %v4241
    %v4271 = vadd.f32 %v4203, %v4241
    %v4272 = vadd.f32 %v4204, %v4241
    %v4273 = vadd.f32 %v4205, %v4241
    %v4274 = vadd.f32 %v4206, %v4241
    %v4275 = vadd.f32 %v4207, %v4241
    %v4276 = vadd.f32 %v4208, %v4241
    %v4277 = vadd.f32 %v4209, %v4241
    %v4278 = vadd.f32 %v4210, %v4241
    %v4279 = vadd.f32 %v4211, %v4241
    %v4280 = vadd.f32 %v4212, %v4241
    %v4281 = vadd.f32 %v4213, %v4241
    %v4282 = vadd.f32 %v4214, %v4241
    %v4283 = vadd.f32 %v4215, %v4241
    %v4284 = vadd.f32 %v4216, %v4241
    %v4285 = vadd.f32 %v4217, %v4241
    %v4286 = vadd.f32 %v4218, %v4241
    %v4287 = vadd.f32 %v4219, %v4241
    %v4288 = vadd.f32 %v4220, %v4241
    %v4289 = vadd.f32 %v4221, %v4241
    %v4290 = vadd.f32 %v4222, %v4241
    %v4291 = vadd.f32 %v4223, %v4241
    %v4292 = vadd.f32 %v4224, %v4241
    %v4293 = vadd.f32 %v4225, %v4241
    %v4294 = vadd.f32 %v4226, %v4241
    %v4295 = vadd.f32 %v4227, %v4241
    %v4296 = vadd.f32 %v4228, %v4241
    %v4297 = vadd.f32 %v4229, %v4241
    %v4298 = vadd.f32 %v4230, %v4241
    %v4299 = vadd.f32 %v4231, %v4241
    %v4300 = vadd.f32 %v4232, %v4241
    %v4301 = vadd.f32 %v4233, %v4241
    %v4302 = vadd.f32 %v4234, %v4241
    %v4303 = vadd.f32 %v4235, %v4241
    %v4304 = vadd.f32 %v4236, %v4241
    %v4305 = vadd.f32 %v4237, %v4241
    %v4306 = vadd.f32 %v4238, %v4241
    %v4307 = vmax.f32 %v4243, 0.0
    %v4308 = vmax.f32 %v4244, 0.0
    %v4309 = vmax.f32 %v4245, 0.0
    %v4310 = vmax.f32 %v4246, 0.0
    %v4311 = vmax.f32 %v4247, 0.0
    %v4312 = vmax.f32 %v4248, 0.0
    %v4313 = vmax.f32 %v4249, 0.0
    %v4314 = vmax.f32 %v4250, 0.0
    %v4315 = vmax.f32 %v4251, 0.0
    %v4316 = vmax.f32 %v4252, 0.0
    %v4317 = vmax.f32 %v4253, 0.0
    %v4318 = vmax.f32 %v4254, 0.0
    %v4319 = vmax.f32 %v4255, 0.0
    %v4320 = vmax.f32 %v4256, 0.0
    %v4321 = vmax.f32 %v4257, 0.0
    %v4322 = vmax.f32 %v4258, 0.0
    %v4323 = vmax.f32 %v4259, 0.0
    %v4324 = vmax.f32 %v4260, 0.0
    %v4325 = vmax.f32 %v4261, 0.0
    %v4326 = vmax.f32 %v4262, 0.0
    %v4327 = vmax.f32 %v4263, 0.0
    %v4328 = vmax.f32 %v4264, 0.0
    %v4329 = vmax.f32 %v4265, 0.0
    %v4330 = vmax.f32 %v4266, 0.0
    %v4331 = vmax.f32 %v4267, 0.0
    %v4332 = vmax.f32 %v4268, 0.0
    %v4333 = vmax.f32 %v4269, 0.0
    %v4334 = vmax.f32 %v4270, 0.0
    %v4335 = vmax.f32 %v4271, 0.0
    %v4336 = vmax.f32 %v4272, 0.0
    %v4337 = vmax.f32 %v4273, 0.0
    %v4338 = vmax.f32 %v4274, 0.0
    %v4339 = vmax.f32 %v4275, 0.0
    %v4340 = vmax.f32 %v4276, 0.0
    %v4341 = vmax.f32 %v4277, 0.0
    %v4342 = vmax.f32 %v4278, 0.0
    %v4343 = vmax.f32 %v4279, 0.0
    %v4344 = vmax.f32 %v4280, 0.0
    %v4345 = vmax.f32 %v4281, 0.0
    %v4346 = vmax.f32 %v4282, 0.0
    %v4347 = vmax.f32 %v4283, 0.0
    %v4348 = vmax.f32 %v4284, 0.0
    %v4349 = vmax.f32 %v4285, 0.0
    %v4350 = vmax.f32 %v4286, 0.0
    %v4351 = vmax.f32 %v4287, 0.0
    %v4352 = vmax.f32 %v4288, 0.0
    %v4353 = vmax.f32 %v4289, 0.0
    %v4354 = vmax.f32 %v4290, 0.0
    %v4355 = vmax.f32 %v4291, 0.0
    %v4356 = vmax.f32 %v4292, 0.0
    %v4357 = vmax.f32 %v4293, 0.0
    %v4358 = vmax.f32 %v4294, 0.0
    %v4359 = vmax.f32 %v4295, 0.0
    %v4360 = vmax.f32 %v4296, 0.0
    %v4361 = vmax.f32 %v4297, 0.0
    %v4362 = vmax.f32 %v4298, 0.0
    %v4363 = vmax.f32 %v4299, 0.0
    %v4364 = vmax.f32 %v4300, 0.0
    %v4365 = vmax.f32 %v4301, 0.0
    %v4366 = vmax.f32 %v4302, 0.0
    %v4367 = vmax.f32 %v4303, 0.0
    %v4368 = vmax.f32 %v4304, 0.0
    %v4369 = vmax.f32 %v4305, 0.0
    %v4370 = vmax.f32 %v4306, 0.0
    %4371 = vst [vmem:[#allocation3] sm:$0xff] 0.0
    %4372 = vst [vmem:[#allocation3 + $0x8] sm:$0xff] 0.0
    %4373 = vst [vmem:[#allocation3 + $0x10] sm:$0x3] 0.0
    %4374 = vst [vmem:[#allocation3 + $0x1b0] sm:$0xff] 0.0
    %4375 = vst [vmem:[#allocation3 + $0x1b8] sm:$0xff] 0.0
    %4376 = vst [vmem:[#allocation3 + $0x1c0] sm:$0x3] 0.0
    %s4377 = scalar_lea.vmem [#allocation3], 408
    %4378 = vst [vmem:[%s4377] sm:$0xff] 0.0
    %4379 = vst [vmem:[%s4377 + $0x8] sm:$0xff] 0.0
    %4380 = vst [vmem:[%s4377 + $0x10] sm:$0x3] 0.0
    %4381 = vst [vmem:[%s4377 + $0x1b0] sm:$0xff] 0.0
    %4382 = vst [vmem:[%s4377 + $0x1b8] sm:$0xff] 0.0
    %4383 = vst [vmem:[%s4377 + $0x1c0] sm:$0x3] 0.0
    %4384 = vst [vmem:[#allocation3] sm:$0x1] 0.0
    %4385 = vst [vmem:[#allocation3 + $0x18] sm:$0x1] 0.0
    %4386 = vst [vmem:[#allocation3 + $0x30] sm:$0x1] 0.0
    %4387 = vst [vmem:[#allocation3 + $0x48] sm:$0x1] 0.0
    %4388 = vst [vmem:[#allocation3 + $0x60] sm:$0x1] 0.0
    %4389 = vst [vmem:[#allocation3 + $0x78] sm:$0x1] 0.0
    %4390 = vst [vmem:[#allocation3 + $0x90] sm:$0x1] 0.0
    %4391 = vst [vmem:[#allocation3 + $0xa8] sm:$0x1] 0.0
    %4392 = vst [vmem:[#allocation3 + $0xc0] sm:$0x1] 0.0
    %4393 = vst [vmem:[#allocation3 + $0xd8] sm:$0x1] 0.0
    %4394 = vst [vmem:[#allocation3 + $0xf0] sm:$0x1] 0.0
    %4395 = vst [vmem:[#allocation3 + $0x108] sm:$0x1] 0.0
    %4396 = vst [vmem:[#allocation3 + $0x120] sm:$0x1] 0.0
    %4397 = vst [vmem:[#allocation3 + $0x138] sm:$0x1] 0.0
    %4398 = vst [vmem:[#allocation3 + $0x150] sm:$0x1] 0.0
    %4399 = vst [vmem:[#allocation3 + $0x168] sm:$0x1] 0.0
    %4400 = vst [vmem:[#allocation3 + $0x180] sm:$0x1] 0.0
    %4401 = vst [vmem:[#allocation3 + $0x198] sm:$0x1] 0.0
    %4402 = vst [vmem:[#allocation3 + $0x1b0] sm:$0x1] 0.0
    %4403 = vst [vmem:[#allocation3 + $0x1c8] sm:$0x1] 0.0
    %4404 = vst [vmem:[#allocation3 + $0x1e0] sm:$0x1] 0.0
    %4405 = vst [vmem:[#allocation3 + $0x1f8] sm:$0x1] 0.0
    %4406 = vst [vmem:[#allocation3 + $0x210] sm:$0x1] 0.0
    %4407 = vst [vmem:[#allocation3 + $0x228] sm:$0x1] 0.0
    %4408 = vst [vmem:[#allocation3 + $0x240] sm:$0x1] 0.0
    %4409 = vst [vmem:[#allocation3 + $0x258] sm:$0x1] 0.0
    %4410 = vst [vmem:[#allocation3 + $0x270] sm:$0x1] 0.0
    %4411 = vst [vmem:[#allocation3 + $0x288] sm:$0x1] 0.0
    %4412 = vst [vmem:[#allocation3 + $0x2a0] sm:$0x1] 0.0
    %4413 = vst [vmem:[#allocation3 + $0x2b8] sm:$0x1] 0.0
    %4414 = vst [vmem:[#allocation3 + $0x2d0] sm:$0x1] 0.0
    %4415 = vst [vmem:[#allocation3 + $0x2e8] sm:$0x1] 0.0
    %4416 = vst [vmem:[#allocation3 + $0x300] sm:$0x1] 0.0
    %4417 = vst [vmem:[#allocation3 + $0x318] sm:$0x1] 0.0
    %4418 = vst [vmem:[#allocation3 + $0x330] sm:$0x1] 0.0
    %4419 = vst [vmem:[#allocation3 + $0x348] sm:$0x1] 0.0
    %4420 = vst [vmem:[#allocation3 + $0x11] sm:$0x1] 0.0
    %4421 = vst [vmem:[#allocation3 + $0x29] sm:$0x1] 0.0
    %4422 = vst [vmem:[#allocation3 + $0x41] sm:$0x1] 0.0
    %4423 = vst [vmem:[#allocation3 + $0x59] sm:$0x1] 0.0
    %4424 = vst [vmem:[#allocation3 + $0x71] sm:$0x1] 0.0
    %4425 = vst [vmem:[#allocation3 + $0x89] sm:$0x1] 0.0
    %4426 = vst [vmem:[#allocation3 + $0xa1] sm:$0x1] 0.0
    %4427 = vst [vmem:[#allocation3 + $0xb9] sm:$0x1] 0.0
    %4428 = vst [vmem:[#allocation3 + $0xd1] sm:$0x1] 0.0
    %4429 = vst [vmem:[#allocation3 + $0xe9] sm:$0x1] 0.0
    %4430 = vst [vmem:[#allocation3 + $0x101] sm:$0x1] 0.0
    %4431 = vst [vmem:[#allocation3 + $0x119] sm:$0x1] 0.0
    %4432 = vst [vmem:[#allocation3 + $0x131] sm:$0x1] 0.0
    %4433 = vst [vmem:[#allocation3 + $0x149] sm:$0x1] 0.0
    %4434 = vst [vmem:[#allocation3 + $0x161] sm:$0x1] 0.0
    %4435 = vst [vmem:[#allocation3 + $0x179] sm:$0x1] 0.0
    %4436 = vst [vmem:[#allocation3 + $0x191] sm:$0x1] 0.0
    %4437 = vst [vmem:[#allocation3 + $0x1a9] sm:$0x1] 0.0
    %4438 = vst [vmem:[#allocation3 + $0x1c1] sm:$0x1] 0.0
    %4439 = vst [vmem:[#allocation3 + $0x1d9] sm:$0x1] 0.0
    %4440 = vst [vmem:[#allocation3 + $0x1f1] sm:$0x1] 0.0
    %4441 = vst [vmem:[#allocation3 + $0x209] sm:$0x1] 0.0
    %4442 = vst [vmem:[#allocation3 + $0x221] sm:$0x1] 0.0
    %4443 = vst [vmem:[#allocation3 + $0x239] sm:$0x1] 0.0
    %4444 = vst [vmem:[#allocation3 + $0x251] sm:$0x1] 0.0
    %4445 = vst [vmem:[#allocation3 + $0x269] sm:$0x1] 0.0
    %4446 = vst [vmem:[#allocation3 + $0x281] sm:$0x1] 0.0
    %4447 = vst [vmem:[#allocation3 + $0x299] sm:$0x1] 0.0
    %4448 = vst [vmem:[#allocation3 + $0x2b1] sm:$0x1] 0.0
    %4449 = vst [vmem:[#allocation3 + $0x2c9] sm:$0x1] 0.0
    %4450 = vst [vmem:[#allocation3 + $0x2e1] sm:$0x1] 0.0
    %4451 = vst [vmem:[#allocation3 + $0x2f9] sm:$0x1] 0.0
    %4452 = vst [vmem:[#allocation3 + $0x311] sm:$0x1] 0.0
    %4453 = vst [vmem:[#allocation3 + $0x329] sm:$0x1] 0.0
    %4454 = vst [vmem:[#allocation3 + $0x341] sm:$0x1] 0.0
    %4455 = vst [vmem:[#allocation3 + $0x359] sm:$0x1] 0.0
    %s4456 = scalar_lea.vmem [#allocation3], 24
    %4457 = vst [vmem:[%s4456 + $0x1] sm:$0xff] %v4307
    %4458 = vst [vmem:[%s4456 + $0x9] sm:$0xff] %v4308
    %4459 = vst [vmem:[%s4456 + $0x19] sm:$0xff] %v4309
    %4460 = vst [vmem:[%s4456 + $0x21] sm:$0xff] %v4310
    %4461 = vst [vmem:[%s4456 + $0x31] sm:$0xff] %v4311
    %4462 = vst [vmem:[%s4456 + $0x39] sm:$0xff] %v4312
    %4463 = vst [vmem:[%s4456 + $0x49] sm:$0xff] %v4313
    %4464 = vst [vmem:[%s4456 + $0x51] sm:$0xff] %v4314
    %4465 = vst [vmem:[%s4456 + $0x61] sm:$0xff] %v4315
    %4466 = vst [vmem:[%s4456 + $0x69] sm:$0xff] %v4316
    %4467 = vst [vmem:[%s4456 + $0x79] sm:$0xff] %v4317
    %4468 = vst [vmem:[%s4456 + $0x81] sm:$0xff] %v4318
    %4469 = vst [vmem:[%s4456 + $0x91] sm:$0xff] %v4319
    %4470 = vst [vmem:[%s4456 + $0x99] sm:$0xff] %v4320
    %4471 = vst [vmem:[%s4456 + $0xa9] sm:$0xff] %v4321
    %4472 = vst [vmem:[%s4456 + $0xb1] sm:$0xff] %v4322
    %4473 = vst [vmem:[%s4456 + $0xc1] sm:$0xff] %v4323
    %4474 = vst [vmem:[%s4456 + $0xc9] sm:$0xff] %v4324
    %4475 = vst [vmem:[%s4456 + $0xd9] sm:$0xff] %v4325
    %4476 = vst [vmem:[%s4456 + $0xe1] sm:$0xff] %v4326
    %4477 = vst [vmem:[%s4456 + $0xf1] sm:$0xff] %v4327
    %4478 = vst [vmem:[%s4456 + $0xf9] sm:$0xff] %v4328
    %4479 = vst [vmem:[%s4456 + $0x109] sm:$0xff] %v4329
    %4480 = vst [vmem:[%s4456 + $0x111] sm:$0xff] %v4330
    %4481 = vst [vmem:[%s4456 + $0x121] sm:$0xff] %v4331
    %4482 = vst [vmem:[%s4456 + $0x129] sm:$0xff] %v4332
    %4483 = vst [vmem:[%s4456 + $0x139] sm:$0xff] %v4333
    %4484 = vst [vmem:[%s4456 + $0x141] sm:$0xff] %v4334
    %4485 = vst [vmem:[%s4456 + $0x151] sm:$0xff] %v4335
    %4486 = vst [vmem:[%s4456 + $0x159] sm:$0xff] %v4336
    %4487 = vst [vmem:[%s4456 + $0x169] sm:$0xff] %v4337
    %4488 = vst [vmem:[%s4456 + $0x171] sm:$0xff] %v4338
    %4489 = vst [vmem:[%s4456 + $0x1b1] sm:$0xff] %v4339
    %4490 = vst [vmem:[%s4456 + $0x1b9] sm:$0xff] %v4340
    %4491 = vst [vmem:[%s4456 + $0x1c9] sm:$0xff] %v4341
    %4492 = vst [vmem:[%s4456 + $0x1d1] sm:$0xff] %v4342
    %4493 = vst [vmem:[%s4456 + $0x1e1] sm:$0xff] %v4343
    %4494 = vst [vmem:[%s4456 + $0x1e9] sm:$0xff] %v4344
    %4495 = vst [vmem:[%s4456 + $0x1f9] sm:$0xff] %v4345
    %4496 = vst [vmem:[%s4456 + $0x201] sm:$0xff] %v4346
    %4497 = vst [vmem:[%s4456 + $0x211] sm:$0xff] %v4347
    %4498 = vst [vmem:[%s4456 + $0x219] sm:$0xff] %v4348
    %4499 = vst [vmem:[%s4456 + $0x229] sm:$0xff] %v4349
    %4500 = vst [vmem:[%s4456 + $0x231] sm:$0xff] %v4350
    %4501 = vst [vmem:[%s4456 + $0x241] sm:$0xff] %v4351
    %4502 = vst [vmem:[%s4456 + $0x249] sm:$0xff] %v4352
    %4503 = vst [vmem:[%s4456 + $0x259] sm:$0xff] %v4353
    %4504 = vst [vmem:[%s4456 + $0x261] sm:$0xff] %v4354
    %4505 = vst [vmem:[%s4456 + $0x271] sm:$0xff] %v4355
    %4506 = vst [vmem:[%s4456 + $0x279] sm:$0xff] %v4356
    %4507 = vst [vmem:[%s4456 + $0x289] sm:$0xff] %v4357
    %4508 = vst [vmem:[%s4456 + $0x291] sm:$0xff] %v4358
    %4509 = vst [vmem:[%s4456 + $0x2a1] sm:$0xff] %v4359
    %4510 = vst [vmem:[%s4456 + $0x2a9] sm:$0xff] %v4360
    %4511 = vst [vmem:[%s4456 + $0x2b9] sm:$0xff] %v4361
    %4512 = vst [vmem:[%s4456 + $0x2c1] sm:$0xff] %v4362
    %4513 = vst [vmem:[%s4456 + $0x2d1] sm:$0xff] %v4363
    %4514 = vst [vmem:[%s4456 + $0x2d9] sm:$0xff] %v4364
    %4515 = vst [vmem:[%s4456 + $0x2e9] sm:$0xff] %v4365
    %4516 = vst [vmem:[%s4456 + $0x2f1] sm:$0xff] %v4366
    %4517 = vst [vmem:[%s4456 + $0x301] sm:$0xff] %v4367
    %4518 = vst [vmem:[%s4456 + $0x309] sm:$0xff] %v4368
    %4519 = vst [vmem:[%s4456 + $0x319] sm:$0xff] %v4369
    %4520 = vst [vmem:[%s4456 + $0x321] sm:$0xff] %v4370
    %v4521 = vld [vmem:[#allocation3] sm:$0xff]
    %v4522 = vld [vmem:[#allocation3 + $0x8] sm:$0xff]
    %v4523 = vld [vmem:[#allocation3 + $0x18] sm:$0xff]
    %v4524 = vld [vmem:[#allocation3 + $0x20] sm:$0xff]
    %v4525 = vld [vmem:[#allocation3 + $0x30] sm:$0xff]
    %v4526 = vld [vmem:[#allocation3 + $0x38] sm:$0xff]
    %v4527 = vld [vmem:[#allocation3 + $0x48] sm:$0xff]
    %v4528 = vld [vmem:[#allocation3 + $0x50] sm:$0xff]
    %v4529 = vld [vmem:[#allocation3 + $0x60] sm:$0xff]
    %v4530 = vld [vmem:[#allocation3 + $0x68] sm:$0xff]
    %v4531 = vld [vmem:[#allocation3 + $0x78] sm:$0xff]
    %v4532 = vld [vmem:[#allocation3 + $0x80] sm:$0xff]
    %v4533 = vld [vmem:[#allocation3 + $0x90] sm:$0xff]
    %v4534 = vld [vmem:[#allocation3 + $0x98] sm:$0xff]
    %v4535 = vld [vmem:[#allocation3 + $0xa8] sm:$0xff]
    %v4536 = vld [vmem:[#allocation3 + $0xb0] sm:$0xff]
    %v4537 = vld [vmem:[#allocation3 + $0xc0] sm:$0xff]
    %v4538 = vld [vmem:[#allocation3 + $0xc8] sm:$0xff]
    %v4539 = vld [vmem:[#allocation3 + $0xd8] sm:$0xff]
    %v4540 = vld [vmem:[#allocation3 + $0xe0] sm:$0xff]
    %v4541 = vld [vmem:[#allocation3 + $0xf0] sm:$0xff]
    %v4542 = vld [vmem:[#allocation3 + $0xf8] sm:$0xff]
    %v4543 = vld [vmem:[#allocation3 + $0x108] sm:$0xff]
    %v4544 = vld [vmem:[#allocation3 + $0x110] sm:$0xff]
    %v4545 = vld [vmem:[#allocation3 + $0x120] sm:$0xff]
    %v4546 = vld [vmem:[#allocation3 + $0x128] sm:$0xff]
    %v4547 = vld [vmem:[#allocation3 + $0x138] sm:$0xff]
    %v4548 = vld [vmem:[#allocation3 + $0x140] sm:$0xff]
    %v4549 = vld [vmem:[#allocation3 + $0x150] sm:$0xff]
    %v4550 = vld [vmem:[#allocation3 + $0x158] sm:$0xff]
    %v4551 = vld [vmem:[#allocation3 + $0x168] sm:$0xff]
    %v4552 = vld [vmem:[#allocation3 + $0x170] sm:$0xff]
    %v4553 = vld [vmem:[#allocation3 + $0x1b0] sm:$0xff]
    %v4554 = vld [vmem:[#allocation3 + $0x1b8] sm:$0xff]
    %v4555 = vld [vmem:[#allocation3 + $0x1c8] sm:$0xff]
    %v4556 = vld [vmem:[#allocation3 + $0x1d0] sm:$0xff]
    %v4557 = vld [vmem:[#allocation3 + $0x1e0] sm:$0xff]
    %v4558 = vld [vmem:[#allocation3 + $0x1e8] sm:$0xff]
    %v4559 = vld [vmem:[#allocation3 + $0x1f8] sm:$0xff]
    %v4560 = vld [vmem:[#allocation3 + $0x200] sm:$0xff]
    %v4561 = vld [vmem:[#allocation3 + $0x210] sm:$0xff]
    %v4562 = vld [vmem:[#allocation3 + $0x218] sm:$0xff]
    %v4563 = vld [vmem:[#allocation3 + $0x228] sm:$0xff]
    %v4564 = vld [vmem:[#allocation3 + $0x230] sm:$0xff]
    %v4565 = vld [vmem:[#allocation3 + $0x240] sm:$0xff]
    %v4566 = vld [vmem:[#allocation3 + $0x248] sm:$0xff]
    %v4567 = vld [vmem:[#allocation3 + $0x258] sm:$0xff]
    %v4568 = vld [vmem:[#allocation3 + $0x260] sm:$0xff]
    %v4569 = vld [vmem:[#allocation3 + $0x270] sm:$0xff]
    %v4570 = vld [vmem:[#allocation3 + $0x278] sm:$0xff]
    %v4571 = vld [vmem:[#allocation3 + $0x288] sm:$0xff]
    %v4572 = vld [vmem:[#allocation3 + $0x290] sm:$0xff]
    %v4573 = vld [vmem:[#allocation3 + $0x2a0] sm:$0xff]
    %v4574 = vld [vmem:[#allocation3 + $0x2a8] sm:$0xff]
    %v4575 = vld [vmem:[#allocation3 + $0x2b8] sm:$0xff]
    %v4576 = vld [vmem:[#allocation3 + $0x2c0] sm:$0xff]
    %v4577 = vld [vmem:[#allocation3 + $0x2d0] sm:$0xff]
    %v4578 = vld [vmem:[#allocation3 + $0x2d8] sm:$0xff]
    %v4579 = vld [vmem:[#allocation3 + $0x2e8] sm:$0xff]
    %v4580 = vld [vmem:[#allocation3 + $0x2f0] sm:$0xff]
    %v4581 = vld [vmem:[#allocation3 + $0x300] sm:$0xff]
    %v4582 = vld [vmem:[#allocation3 + $0x308] sm:$0xff]
    %v4583 = vld [vmem:[#allocation3 + $0x318] sm:$0xff]
    %v4584 = vld [vmem:[#allocation3 + $0x320] sm:$0xff]
    %v4585 = vld [vmem:[#allocation3 + $0x1] sm:$0xff]
    %v4586 = vld [vmem:[#allocation3 + $0x9] sm:$0xff]
    %v4587 = vld [vmem:[#allocation3 + $0x19] sm:$0xff]
    %v4588 = vld [vmem:[#allocation3 + $0x21] sm:$0xff]
    %v4589 = vld [vmem:[#allocation3 + $0x31] sm:$0xff]
    %v4590 = vld [vmem:[#allocation3 + $0x39] sm:$0xff]
    %v4591 = vld [vmem:[#allocation3 + $0x49] sm:$0xff]
    %v4592 = vld [vmem:[#allocation3 + $0x51] sm:$0xff]
    %v4593 = vld [vmem:[#allocation3 + $0x61] sm:$0xff]
    %v4594 = vld [vmem:[#allocation3 + $0x69] sm:$0xff]
    %v4595 = vld [vmem:[#allocation3 + $0x79] sm:$0xff]
    %v4596 = vld [vmem:[#allocation3 + $0x81] sm:$0xff]
    %v4597 = vld [vmem:[#allocation3 + $0x91] sm:$0xff]
    %v4598 = vld [vmem:[#allocation3 + $0x99] sm:$0xff]
    %v4599 = vld [vmem:[#allocation3 + $0xa9] sm:$0xff]
    %v4600 = vld [vmem:[#allocation3 + $0xb1] sm:$0xff]
    %v4601 = vld [vmem:[#allocation3 + $0xc1] sm:$0xff]
    %v4602 = vld [vmem:[#allocation3 + $0xc9] sm:$0xff]
    %v4603 = vld [vmem:[#allocation3 + $0xd9] sm:$0xff]
    %v4604 = vld [vmem:[#allocation3 + $0xe1] sm:$0xff]
    %v4605 = vld [vmem:[#allocation3 + $0xf1] sm:$0xff]
    %v4606 = vld [vmem:[#allocation3 + $0xf9] sm:$0xff]
    %v4607 = vld [vmem:[#allocation3 + $0x109] sm:$0xff]
    %v4608 = vld [vmem:[#allocation3 + $0x111] sm:$0xff]
    %v4609 = vld [vmem:[#allocation3 + $0x121] sm:$0xff]
    %v4610 = vld [vmem:[#allocation3 + $0x129] sm:$0xff]
    %v4611 = vld [vmem:[#allocation3 + $0x139] sm:$0xff]
    %v4612 = vld [vmem:[#allocation3 + $0x141] sm:$0xff]
    %v4613 = vld [vmem:[#allocation3 + $0x151] sm:$0xff]
    %v4614 = vld [vmem:[#allocation3 + $0x159] sm:$0xff]
    %v4615 = vld [vmem:[#allocation3 + $0x169] sm:$0xff]
    %v4616 = vld [vmem:[#allocation3 + $0x171] sm:$0xff]
    %v4617 = vld [vmem:[#allocation3 + $0x1b1] sm:$0xff]
    %v4618 = vld [vmem:[#allocation3 + $0x1b9] sm:$0xff]
    %v4619 = vld [vmem:[#allocation3 + $0x1c9] sm:$0xff]
    %v4620 = vld [vmem:[#allocation3 + $0x1d1] sm:$0xff]
    %v4621 = vld [vmem:[#allocation3 + $0x1e1] sm:$0xff]
    %v4622 = vld [vmem:[#allocation3 + $0x1e9] sm:$0xff]
    %v4623 = vld [vmem:[#allocation3 + $0x1f9] sm:$0xff]
    %v4624 = vld [vmem:[#allocation3 + $0x201] sm:$0xff]
    %v4625 = vld [vmem:[#allocation3 + $0x211] sm:$0xff]
    %v4626 = vld [vmem:[#allocation3 + $0x219] sm:$0xff]
    %v4627 = vld [vmem:[#allocation3 + $0x229] sm:$0xff]
    %v4628 = vld [vmem:[#allocation3 + $0x231] sm:$0xff]
    %v4629 = vld [vmem:[#allocation3 + $0x241] sm:$0xff]
    %v4630 = vld [vmem:[#allocation3 + $0x249] sm:$0xff]
    %v4631 = vld [vmem:[#allocation3 + $0x259] sm:$0xff]
    %v4632 = vld [vmem:[#allocation3 + $0x261] sm:$0xff]
    %v4633 = vld [vmem:[#allocation3 + $0x271] sm:$0xff]
    %v4634 = vld [vmem:[#allocation3 + $0x279] sm:$0xff]
    %v4635 = vld [vmem:[#allocation3 + $0x289] sm:$0xff]
    %v4636 = vld [vmem:[#allocation3 + $0x291] sm:$0xff]
    %v4637 = vld [vmem:[#allocation3 + $0x2a1] sm:$0xff]
    %v4638 = vld [vmem:[#allocation3 + $0x2a9] sm:$0xff]
    %v4639 = vld [vmem:[#allocation3 + $0x2b9] sm:$0xff]
    %v4640 = vld [vmem:[#allocation3 + $0x2c1] sm:$0xff]
    %v4641 = vld [vmem:[#allocation3 + $0x2d1] sm:$0xff]
    %v4642 = vld [vmem:[#allocation3 + $0x2d9] sm:$0xff]
    %v4643 = vld [vmem:[#allocation3 + $0x2e9] sm:$0xff]
    %v4644 = vld [vmem:[#allocation3 + $0x2f1] sm:$0xff]
    %v4645 = vld [vmem:[#allocation3 + $0x301] sm:$0xff]
    %v4646 = vld [vmem:[#allocation3 + $0x309] sm:$0xff]
    %v4647 = vld [vmem:[#allocation3 + $0x319] sm:$0xff]
    %v4648 = vld [vmem:[#allocation3 + $0x321] sm:$0xff]
    %v4649 = vld [vmem:[#allocation3 + $0x2] sm:$0xff]
    %v4650 = vld [vmem:[#allocation3 + $0xa] sm:$0xff]
    %v4651 = vld [vmem:[#allocation3 + $0x1a] sm:$0xff]
    %v4652 = vld [vmem:[#allocation3 + $0x22] sm:$0xff]
    %v4653 = vld [vmem:[#allocation3 + $0x32] sm:$0xff]
    %v4654 = vld [vmem:[#allocation3 + $0x3a] sm:$0xff]
    %v4655 = vld [vmem:[#allocation3 + $0x4a] sm:$0xff]
    %v4656 = vld [vmem:[#allocation3 + $0x52] sm:$0xff]
    %v4657 = vld [vmem:[#allocation3 + $0x62] sm:$0xff]
    %v4658 = vld [vmem:[#allocation3 + $0x6a] sm:$0xff]
    %v4659 = vld [vmem:[#allocation3 + $0x7a] sm:$0xff]
    %v4660 = vld [vmem:[#allocation3 + $0x82] sm:$0xff]
    %v4661 = vld [vmem:[#allocation3 + $0x92] sm:$0xff]
    %v4662 = vld [vmem:[#allocation3 + $0x9a] sm:$0xff]
    %v4663 = vld [vmem:[#allocation3 + $0xaa] sm:$0xff]
    %v4664 = vld [vmem:[#allocation3 + $0xb2] sm:$0xff]
    %v4665 = vld [vmem:[#allocation3 + $0xc2] sm:$0xff]
    %v4666 = vld [vmem:[#allocation3 + $0xca] sm:$0xff]
    %v4667 = vld [vmem:[#allocation3 + $0xda] sm:$0xff]
    %v4668 = vld [vmem:[#allocation3 + $0xe2] sm:$0xff]
    %v4669 = vld [vmem:[#allocation3 + $0xf2] sm:$0xff]
    %v4670 = vld [vmem:[#allocation3 + $0xfa] sm:$0xff]
    %v4671 = vld [vmem:[#allocation3 + $0x10a] sm:$0xff]
    %v4672 = vld [vmem:[#allocation3 + $0x112] sm:$0xff]
    %v4673 = vld [vmem:[#allocation3 + $0x122] sm:$0xff]
    %v4674 = vld [vmem:[#allocation3 + $0x12a] sm:$0xff]
    %v4675 = vld [vmem:[#allocation3 + $0x13a] sm:$0xff]
    %v4676 = vld [vmem:[#allocation3 + $0x142] sm:$0xff]
    %v4677 = vld [vmem:[#allocation3 + $0x152] sm:$0xff]
    %v4678 = vld [vmem:[#allocation3 + $0x15a] sm:$0xff]
    %v4679 = vld [vmem:[#allocation3 + $0x16a] sm:$0xff]
    %v4680 = vld [vmem:[#allocation3 + $0x172] sm:$0xff]
    %v4681 = vld [vmem:[#allocation3 + $0x1b2] sm:$0xff]
    %v4682 = vld [vmem:[#allocation3 + $0x1ba] sm:$0xff]
    %v4683 = vld [vmem:[#allocation3 + $0x1ca] sm:$0xff]
    %v4684 = vld [vmem:[#allocation3 + $0x1d2] sm:$0xff]
    %v4685 = vld [vmem:[#allocation3 + $0x1e2] sm:$0xff]
    %v4686 = vld [vmem:[#allocation3 + $0x1ea] sm:$0xff]
    %v4687 = vld [vmem:[#allocation3 + $0x1fa] sm:$0xff]
    %v4688 = vld [vmem:[#allocation3 + $0x202] sm:$0xff]
    %v4689 = vld [vmem:[#allocation3 + $0x212] sm:$0xff]
    %v4690 = vld [vmem:[#allocation3 + $0x21a] sm:$0xff]
    %v4691 = vld [vmem:[#allocation3 + $0x22a] sm:$0xff]
    %v4692 = vld [vmem:[#allocation3 + $0x232] sm:$0xff]
    %v4693 = vld [vmem:[#allocation3 + $0x242] sm:$0xff]
    %v4694 = vld [vmem:[#allocation3 + $0x24a] sm:$0xff]
    %v4695 = vld [vmem:[#allocation3 + $0x25a] sm:$0xff]
    %v4696 = vld [vmem:[#allocation3 + $0x262] sm:$0xff]
    %v4697 = vld [vmem:[#allocation3 + $0x272] sm:$0xff]
    %v4698 = vld [vmem:[#allocation3 + $0x27a] sm:$0xff]
    %v4699 = vld [vmem:[#allocation3 + $0x28a] sm:$0xff]
    %v4700 = vld [vmem:[#allocation3 + $0x292] sm:$0xff]
    %v4701 = vld [vmem:[#allocation3 + $0x2a2] sm:$0xff]
    %v4702 = vld [vmem:[#allocation3 + $0x2aa] sm:$0xff]
    %v4703 = vld [vmem:[#allocation3 + $0x2ba] sm:$0xff]
    %v4704 = vld [vmem:[#allocation3 + $0x2c2] sm:$0xff]
    %v4705 = vld [vmem:[#allocation3 + $0x2d2] sm:$0xff]
    %v4706 = vld [vmem:[#allocation3 + $0x2da] sm:$0xff]
    %v4707 = vld [vmem:[#allocation3 + $0x2ea] sm:$0xff]
    %v4708 = vld [vmem:[#allocation3 + $0x2f2] sm:$0xff]
    %v4709 = vld [vmem:[#allocation3 + $0x302] sm:$0xff]
    %v4710 = vld [vmem:[#allocation3 + $0x30a] sm:$0xff]
    %v4711 = vld [vmem:[#allocation3 + $0x31a] sm:$0xff]
    %v4712 = vld [vmem:[#allocation3 + $0x322] sm:$0xff]
    %v4713 = vld [vmem:[%s4456] sm:$0xff]
    %v4714 = vld [vmem:[%s4456 + $0x8] sm:$0xff]
    %v4715 = vld [vmem:[%s4456 + $0x18] sm:$0xff]
    %v4716 = vld [vmem:[%s4456 + $0x20] sm:$0xff]
    %v4717 = vld [vmem:[%s4456 + $0x30] sm:$0xff]
    %v4718 = vld [vmem:[%s4456 + $0x38] sm:$0xff]
    %v4719 = vld [vmem:[%s4456 + $0x48] sm:$0xff]
    %v4720 = vld [vmem:[%s4456 + $0x50] sm:$0xff]
    %v4721 = vld [vmem:[%s4456 + $0x60] sm:$0xff]
    %v4722 = vld [vmem:[%s4456 + $0x68] sm:$0xff]
    %v4723 = vld [vmem:[%s4456 + $0x78] sm:$0xff]
    %v4724 = vld [vmem:[%s4456 + $0x80] sm:$0xff]
    %v4725 = vld [vmem:[%s4456 + $0x90] sm:$0xff]
    %v4726 = vld [vmem:[%s4456 + $0x98] sm:$0xff]
    %v4727 = vld [vmem:[%s4456 + $0xa8] sm:$0xff]
    %v4728 = vld [vmem:[%s4456 + $0xb0] sm:$0xff]
    %v4729 = vld [vmem:[%s4456 + $0xc0] sm:$0xff]
    %v4730 = vld [vmem:[%s4456 + $0xc8] sm:$0xff]
    %v4731 = vld [vmem:[%s4456 + $0xd8] sm:$0xff]
    %v4732 = vld [vmem:[%s4456 + $0xe0] sm:$0xff]
    %v4733 = vld [vmem:[%s4456 + $0xf0] sm:$0xff]
    %v4734 = vld [vmem:[%s4456 + $0xf8] sm:$0xff]
    %v4735 = vld [vmem:[%s4456 + $0x108] sm:$0xff]
    %v4736 = vld [vmem:[%s4456 + $0x110] sm:$0xff]
    %v4737 = vld [vmem:[%s4456 + $0x120] sm:$0xff]
    %v4738 = vld [vmem:[%s4456 + $0x128] sm:$0xff]
    %v4739 = vld [vmem:[%s4456 + $0x138] sm:$0xff]
    %v4740 = vld [vmem:[%s4456 + $0x140] sm:$0xff]
    %v4741 = vld [vmem:[%s4456 + $0x150] sm:$0xff]
    %v4742 = vld [vmem:[%s4456 + $0x158] sm:$0xff]
    %v4743 = vld [vmem:[%s4456 + $0x168] sm:$0xff]
    %v4744 = vld [vmem:[%s4456 + $0x170] sm:$0xff]
    %v4745 = vld [vmem:[%s4456 + $0x1b0] sm:$0xff]
    %v4746 = vld [vmem:[%s4456 + $0x1b8] sm:$0xff]
    %v4747 = vld [vmem:[%s4456 + $0x1c8] sm:$0xff]
    %v4748 = vld [vmem:[%s4456 + $0x1d0] sm:$0xff]
    %v4749 = vld [vmem:[%s4456 + $0x1e0] sm:$0xff]
    %v4750 = vld [vmem:[%s4456 + $0x1e8] sm:$0xff]
    %v4751 = vld [vmem:[%s4456 + $0x1f8] sm:$0xff]
    %v4752 = vld [vmem:[%s4456 + $0x200] sm:$0xff]
    %v4753 = vld [vmem:[%s4456 + $0x210] sm:$0xff]
    %v4754 = vld [vmem:[%s4456 + $0x218] sm:$0xff]
    %v4755 = vld [vmem:[%s4456 + $0x228] sm:$0xff]
    %v4756 = vld [vmem:[%s4456 + $0x230] sm:$0xff]
    %v4757 = vld [vmem:[%s4456 + $0x240] sm:$0xff]
    %v4758 = vld [vmem:[%s4456 + $0x248] sm:$0xff]
    %v4759 = vld [vmem:[%s4456 + $0x258] sm:$0xff]
    %v4760 = vld [vmem:[%s4456 + $0x260] sm:$0xff]
    %v4761 = vld [vmem:[%s4456 + $0x270] sm:$0xff]
    %v4762 = vld [vmem:[%s4456 + $0x278] sm:$0xff]
    %v4763 = vld [vmem:[%s4456 + $0x288] sm:$0xff]
    %v4764 = vld [vmem:[%s4456 + $0x290] sm:$0xff]
    %v4765 = vld [vmem:[%s4456 + $0x2a0] sm:$0xff]
    %v4766 = vld [vmem:[%s4456 + $0x2a8] sm:$0xff]
    %v4767 = vld [vmem:[%s4456 + $0x2b8] sm:$0xff]
    %v4768 = vld [vmem:[%s4456 + $0x2c0] sm:$0xff]
    %v4769 = vld [vmem:[%s4456 + $0x2d0] sm:$0xff]
    %v4770 = vld [vmem:[%s4456 + $0x2d8] sm:$0xff]
    %v4771 = vld [vmem:[%s4456 + $0x2e8] sm:$0xff]
    %v4772 = vld [vmem:[%s4456 + $0x2f0] sm:$0xff]
    %v4773 = vld [vmem:[%s4456 + $0x300] sm:$0xff]
    %v4774 = vld [vmem:[%s4456 + $0x308] sm:$0xff]
    %v4775 = vld [vmem:[%s4456 + $0x318] sm:$0xff]
    %v4776 = vld [vmem:[%s4456 + $0x320] sm:$0xff]
    %v4777 = vld [vmem:[%s4456 + $0x1] sm:$0xff]
    %v4778 = vld [vmem:[%s4456 + $0x9] sm:$0xff]
    %v4779 = vld [vmem:[%s4456 + $0x19] sm:$0xff]
    %v4780 = vld [vmem:[%s4456 + $0x21] sm:$0xff]
    %v4781 = vld [vmem:[%s4456 + $0x31] sm:$0xff]
    %v4782 = vld [vmem:[%s4456 + $0x39] sm:$0xff]
    %v4783 = vld [vmem:[%s4456 + $0x49] sm:$0xff]
    %v4784 = vld [vmem:[%s4456 + $0x51] sm:$0xff]
    %v4785 = vld [vmem:[%s4456 + $0x61] sm:$0xff]
    %v4786 = vld [vmem:[%s4456 + $0x69] sm:$0xff]
    %v4787 = vld [vmem:[%s4456 + $0x79] sm:$0xff]
    %v4788 = vld [vmem:[%s4456 + $0x81] sm:$0xff]
    %v4789 = vld [vmem:[%s4456 + $0x91] sm:$0xff]
    %v4790 = vld [vmem:[%s4456 + $0x99] sm:$0xff]
    %v4791 = vld [vmem:[%s4456 + $0xa9] sm:$0xff]
    %v4792 = vld [vmem:[%s4456 + $0xb1] sm:$0xff]
    %v4793 = vld [vmem:[%s4456 + $0xc1] sm:$0xff]
    %v4794 = vld [vmem:[%s4456 + $0xc9] sm:$0xff]
    %v4795 = vld [vmem:[%s4456 + $0xd9] sm:$0xff]
    %v4796 = vld [vmem:[%s4456 + $0xe1] sm:$0xff]
    %v4797 = vld [vmem:[%s4456 + $0xf1] sm:$0xff]
    %v4798 = vld [vmem:[%s4456 + $0xf9] sm:$0xff]
    %v4799 = vld [vmem:[%s4456 + $0x109] sm:$0xff]
    %v4800 = vld [vmem:[%s4456 + $0x111] sm:$0xff]
    %v4801 = vld [vmem:[%s4456 + $0x121] sm:$0xff]
    %v4802 = vld [vmem:[%s4456 + $0x129] sm:$0xff]
    %v4803 = vld [vmem:[%s4456 + $0x139] sm:$0xff]
    %v4804 = vld [vmem:[%s4456 + $0x141] sm:$0xff]
    %v4805 = vld [vmem:[%s4456 + $0x151] sm:$0xff]
    %v4806 = vld [vmem:[%s4456 + $0x159] sm:$0xff]
    %v4807 = vld [vmem:[%s4456 + $0x169] sm:$0xff]
    %v4808 = vld [vmem:[%s4456 + $0x171] sm:$0xff]
    %v4809 = vld [vmem:[%s4456 + $0x1b1] sm:$0xff]
    %v4810 = vld [vmem:[%s4456 + $0x1b9] sm:$0xff]
    %v4811 = vld [vmem:[%s4456 + $0x1c9] sm:$0xff]
    %v4812 = vld [vmem:[%s4456 + $0x1d1] sm:$0xff]
    %v4813 = vld [vmem:[%s4456 + $0x1e1] sm:$0xff]
    %v4814 = vld [vmem:[%s4456 + $0x1e9] sm:$0xff]
    %v4815 = vld [vmem:[%s4456 + $0x1f9] sm:$0xff]
    %v4816 = vld [vmem:[%s4456 + $0x201] sm:$0xff]
    %v4817 = vld [vmem:[%s4456 + $0x211] sm:$0xff]
    %v4818 = vld [vmem:[%s4456 + $0x219] sm:$0xff]
    %v4819 = vld [vmem:[%s4456 + $0x229] sm:$0xff]
    %v4820 = vld [vmem:[%s4456 + $0x231] sm:$0xff]
    %v4821 = vld [vmem:[%s4456 + $0x241] sm:$0xff]
    %v4822 = vld [vmem:[%s4456 + $0x249] sm:$0xff]
    %v4823 = vld [vmem:[%s4456 + $0x259] sm:$0xff]
    %v4824 = vld [vmem:[%s4456 + $0x261] sm:$0xff]
    %v4825 = vld [vmem:[%s4456 + $0x271] sm:$0xff]
    %v4826 = vld [vmem:[%s4456 + $0x279] sm:$0xff]
    %v4827 = vld [vmem:[%s4456 + $0x289] sm:$0xff]
    %v4828 = vld [vmem:[%s4456 + $0x291] sm:$0xff]
    %v4829 = vld [vmem:[%s4456 + $0x2a1] sm:$0xff]
    %v4830 = vld [vmem:[%s4456 + $0x2a9] sm:$0xff]
    %v4831 = vld [vmem:[%s4456 + $0x2b9] sm:$0xff]
    %v4832 = vld [vmem:[%s4456 + $0x2c1] sm:$0xff]
    %v4833 = vld [vmem:[%s4456 + $0x2d1] sm:$0xff]
    %v4834 = vld [vmem:[%s4456 + $0x2d9] sm:$0xff]
    %v4835 = vld [vmem:[%s4456 + $0x2e9] sm:$0xff]
    %v4836 = vld [vmem:[%s4456 + $0x2f1] sm:$0xff]
    %v4837 = vld [vmem:[%s4456 + $0x301] sm:$0xff]
    %v4838 = vld [vmem:[%s4456 + $0x309] sm:$0xff]
    %v4839 = vld [vmem:[%s4456 + $0x319] sm:$0xff]
    %v4840 = vld [vmem:[%s4456 + $0x321] sm:$0xff]
    %v4841 = vld [vmem:[%s4456 + $0x2] sm:$0xff]
    %v4842 = vld [vmem:[%s4456 + $0xa] sm:$0xff]
    %v4843 = vld [vmem:[%s4456 + $0x1a] sm:$0xff]
    %v4844 = vld [vmem:[%s4456 + $0x22] sm:$0xff]
    %v4845 = vld [vmem:[%s4456 + $0x32] sm:$0xff]
    %v4846 = vld [vmem:[%s4456 + $0x3a] sm:$0xff]
    %v4847 = vld [vmem:[%s4456 + $0x4a] sm:$0xff]
    %v4848 = vld [vmem:[%s4456 + $0x52] sm:$0xff]
    %v4849 = vld [vmem:[%s4456 + $0x62] sm:$0xff]
    %v4850 = vld [vmem:[%s4456 + $0x6a] sm:$0xff]
    %v4851 = vld [vmem:[%s4456 + $0x7a] sm:$0xff]
    %v4852 = vld [vmem:[%s4456 + $0x82] sm:$0xff]
    %v4853 = vld [vmem:[%s4456 + $0x92] sm:$0xff]
    %v4854 = vld [vmem:[%s4456 + $0x9a] sm:$0xff]
    %v4855 = vld [vmem:[%s4456 + $0xaa] sm:$0xff]
    %v4856 = vld [vmem:[%s4456 + $0xb2] sm:$0xff]
    %v4857 = vld [vmem:[%s4456 + $0xc2] sm:$0xff]
    %v4858 = vld [vmem:[%s4456 + $0xca] sm:$0xff]
    %v4859 = vld [vmem:[%s4456 + $0xda] sm:$0xff]
    %v4860 = vld [vmem:[%s4456 + $0xe2] sm:$0xff]
    %v4861 = vld [vmem:[%s4456 + $0xf2] sm:$0xff]
    %v4862 = vld [vmem:[%s4456 + $0xfa] sm:$0xff]
    %v4863 = vld [vmem:[%s4456 + $0x10a] sm:$0xff]
    %v4864 = vld [vmem:[%s4456 + $0x112] sm:$0xff]
    %v4865 = vld [vmem:[%s4456 + $0x122] sm:$0xff]
    %v4866 = vld [vmem:[%s4456 + $0x12a] sm:$0xff]
    %v4867 = vld [vmem:[%s4456 + $0x13a] sm:$0xff]
    %v4868 = vld [vmem:[%s4456 + $0x142] sm:$0xff]
    %v4869 = vld [vmem:[%s4456 + $0x152] sm:$0xff]
    %v4870 = vld [vmem:[%s4456 + $0x15a] sm:$0xff]
    %v4871 = vld [vmem:[%s4456 + $0x16a] sm:$0xff]
    %v4872 = vld [vmem:[%s4456 + $0x172] sm:$0xff]
    %v4873 = vld [vmem:[%s4456 + $0x1b2] sm:$0xff]
    %v4874 = vld [vmem:[%s4456 + $0x1ba] sm:$0xff]
    %v4875 = vld [vmem:[%s4456 + $0x1ca] sm:$0xff]
    %v4876 = vld [vmem:[%s4456 + $0x1d2] sm:$0xff]
    %v4877 = vld [vmem:[%s4456 + $0x1e2] sm:$0xff]
    %v4878 = vld [vmem:[%s4456 + $0x1ea] sm:$0xff]
    %v4879 = vld [vmem:[%s4456 + $0x1fa] sm:$0xff]
    %v4880 = vld [vmem:[%s4456 + $0x202] sm:$0xff]
    %v4881 = vld [vmem:[%s4456 + $0x212] sm:$0xff]
    %v4882 = vld [vmem:[%s4456 + $0x21a] sm:$0xff]
    %v4883 = vld [vmem:[%s4456 + $0x22a] sm:$0xff]
    %v4884 = vld [vmem:[%s4456 + $0x232] sm:$0xff]
    %v4885 = vld [vmem:[%s4456 + $0x242] sm:$0xff]
    %v4886 = vld [vmem:[%s4456 + $0x24a] sm:$0xff]
    %v4887 = vld [vmem:[%s4456 + $0x25a] sm:$0xff]
    %v4888 = vld [vmem:[%s4456 + $0x262] sm:$0xff]
    %v4889 = vld [vmem:[%s4456 + $0x272] sm:$0xff]
    %v4890 = vld [vmem:[%s4456 + $0x27a] sm:$0xff]
    %v4891 = vld [vmem:[%s4456 + $0x28a] sm:$0xff]
    %v4892 = vld [vmem:[%s4456 + $0x292] sm:$0xff]
    %v4893 = vld [vmem:[%s4456 + $0x2a2] sm:$0xff]
    %v4894 = vld [vmem:[%s4456 + $0x2aa] sm:$0xff]
    %v4895 = vld [vmem:[%s4456 + $0x2ba] sm:$0xff]
    %v4896 = vld [vmem:[%s4456 + $0x2c2] sm:$0xff]
    %v4897 = vld [vmem:[%s4456 + $0x2d2] sm:$0xff]
    %v4898 = vld [vmem:[%s4456 + $0x2da] sm:$0xff]
    %v4899 = vld [vmem:[%s4456 + $0x2ea] sm:$0xff]
    %v4900 = vld [vmem:[%s4456 + $0x2f2] sm:$0xff]
    %v4901 = vld [vmem:[%s4456 + $0x302] sm:$0xff]
    %v4902 = vld [vmem:[%s4456 + $0x30a] sm:$0xff]
    %v4903 = vld [vmem:[%s4456 + $0x31a] sm:$0xff]
    %v4904 = vld [vmem:[%s4456 + $0x322] sm:$0xff]
    %s4905 = scalar_lea.vmem [#allocation3], 48
    %v4906 = vld [vmem:[%s4905] sm:$0xff]
    %v4907 = vld [vmem:[%s4905 + $0x8] sm:$0xff]
    %v4908 = vld [vmem:[%s4905 + $0x18] sm:$0xff]
    %v4909 = vld [vmem:[%s4905 + $0x20] sm:$0xff]
    %v4910 = vld [vmem:[%s4905 + $0x30] sm:$0xff]
    %v4911 = vld [vmem:[%s4905 + $0x38] sm:$0xff]
    %v4912 = vld [vmem:[%s4905 + $0x48] sm:$0xff]
    %v4913 = vld [vmem:[%s4905 + $0x50] sm:$0xff]
    %v4914 = vld [vmem:[%s4905 + $0x60] sm:$0xff]
    %v4915 = vld [vmem:[%s4905 + $0x68] sm:$0xff]
    %v4916 = vld [vmem:[%s4905 + $0x78] sm:$0xff]
    %v4917 = vld [vmem:[%s4905 + $0x80] sm:$0xff]
    %v4918 = vld [vmem:[%s4905 + $0x90] sm:$0xff]
    %v4919 = vld [vmem:[%s4905 + $0x98] sm:$0xff]
    %v4920 = vld [vmem:[%s4905 + $0xa8] sm:$0xff]
    %v4921 = vld [vmem:[%s4905 + $0xb0] sm:$0xff]
    %v4922 = vld [vmem:[%s4905 + $0xc0] sm:$0xff]
    %v4923 = vld [vmem:[%s4905 + $0xc8] sm:$0xff]
    %v4924 = vld [vmem:[%s4905 + $0xd8] sm:$0xff]
    %v4925 = vld [vmem:[%s4905 + $0xe0] sm:$0xff]
    %v4926 = vld [vmem:[%s4905 + $0xf0] sm:$0xff]
    %v4927 = vld [vmem:[%s4905 + $0xf8] sm:$0xff]
    %v4928 = vld [vmem:[%s4905 + $0x108] sm:$0xff]
    %v4929 = vld [vmem:[%s4905 + $0x110] sm:$0xff]
    %v4930 = vld [vmem:[%s4905 + $0x120] sm:$0xff]
    %v4931 = vld [vmem:[%s4905 + $0x128] sm:$0xff]
    %v4932 = vld [vmem:[%s4905 + $0x138] sm:$0xff]
    %v4933 = vld [vmem:[%s4905 + $0x140] sm:$0xff]
    %v4934 = vld [vmem:[%s4905 + $0x150] sm:$0xff]
    %v4935 = vld [vmem:[%s4905 + $0x158] sm:$0xff]
    %v4936 = vld [vmem:[%s4905 + $0x168] sm:$0xff]
    %v4937 = vld [vmem:[%s4905 + $0x170] sm:$0xff]
    %v4938 = vld [vmem:[%s4905 + $0x1b0] sm:$0xff]
    %v4939 = vld [vmem:[%s4905 + $0x1b8] sm:$0xff]
    %v4940 = vld [vmem:[%s4905 + $0x1c8] sm:$0xff]
    %v4941 = vld [vmem:[%s4905 + $0x1d0] sm:$0xff]
    %v4942 = vld [vmem:[%s4905 + $0x1e0] sm:$0xff]
    %v4943 = vld [vmem:[%s4905 + $0x1e8] sm:$0xff]
    %v4944 = vld [vmem:[%s4905 + $0x1f8] sm:$0xff]
    %v4945 = vld [vmem:[%s4905 + $0x200] sm:$0xff]
    %v4946 = vld [vmem:[%s4905 + $0x210] sm:$0xff]
    %v4947 = vld [vmem:[%s4905 + $0x218] sm:$0xff]
    %v4948 = vld [vmem:[%s4905 + $0x228] sm:$0xff]
    %v4949 = vld [vmem:[%s4905 + $0x230] sm:$0xff]
    %v4950 = vld [vmem:[%s4905 + $0x240] sm:$0xff]
    %v4951 = vld [vmem:[%s4905 + $0x248] sm:$0xff]
    %v4952 = vld [vmem:[%s4905 + $0x258] sm:$0xff]
    %v4953 = vld [vmem:[%s4905 + $0x260] sm:$0xff]
    %v4954 = vld [vmem:[%s4905 + $0x270] sm:$0xff]
    %v4955 = vld [vmem:[%s4905 + $0x278] sm:$0xff]
    %v4956 = vld [vmem:[%s4905 + $0x288] sm:$0xff]
    %v4957 = vld [vmem:[%s4905 + $0x290] sm:$0xff]
    %v4958 = vld [vmem:[%s4905 + $0x2a0] sm:$0xff]
    %v4959 = vld [vmem:[%s4905 + $0x2a8] sm:$0xff]
    %v4960 = vld [vmem:[%s4905 + $0x2b8] sm:$0xff]
    %v4961 = vld [vmem:[%s4905 + $0x2c0] sm:$0xff]
    %v4962 = vld [vmem:[%s4905 + $0x2d0] sm:$0xff]
    %v4963 = vld [vmem:[%s4905 + $0x2d8] sm:$0xff]
    %v4964 = vld [vmem:[%s4905 + $0x2e8] sm:$0xff]
    %v4965 = vld [vmem:[%s4905 + $0x2f0] sm:$0xff]
    %v4966 = vld [vmem:[%s4905 + $0x300] sm:$0xff]
    %v4967 = vld [vmem:[%s4905 + $0x308] sm:$0xff]
    %v4968 = vld [vmem:[%s4905 + $0x318] sm:$0xff]
    %v4969 = vld [vmem:[%s4905 + $0x320] sm:$0xff]
    %v4970 = vld [vmem:[%s4905 + $0x1] sm:$0xff]
    %v4971 = vld [vmem:[%s4905 + $0x9] sm:$0xff]
    %v4972 = vld [vmem:[%s4905 + $0x19] sm:$0xff]
    %v4973 = vld [vmem:[%s4905 + $0x21] sm:$0xff]
    %v4974 = vld [vmem:[%s4905 + $0x31] sm:$0xff]
    %v4975 = vld [vmem:[%s4905 + $0x39] sm:$0xff]
    %v4976 = vld [vmem:[%s4905 + $0x49] sm:$0xff]
    %v4977 = vld [vmem:[%s4905 + $0x51] sm:$0xff]
    %v4978 = vld [vmem:[%s4905 + $0x61] sm:$0xff]
    %v4979 = vld [vmem:[%s4905 + $0x69] sm:$0xff]
    %v4980 = vld [vmem:[%s4905 + $0x79] sm:$0xff]
    %v4981 = vld [vmem:[%s4905 + $0x81] sm:$0xff]
    %v4982 = vld [vmem:[%s4905 + $0x91] sm:$0xff]
    %v4983 = vld [vmem:[%s4905 + $0x99] sm:$0xff]
    %v4984 = vld [vmem:[%s4905 + $0xa9] sm:$0xff]
    %v4985 = vld [vmem:[%s4905 + $0xb1] sm:$0xff]
    %v4986 = vld [vmem:[%s4905 + $0xc1] sm:$0xff]
    %v4987 = vld [vmem:[%s4905 + $0xc9] sm:$0xff]
    %v4988 = vld [vmem:[%s4905 + $0xd9] sm:$0xff]
    %v4989 = vld [vmem:[%s4905 + $0xe1] sm:$0xff]
    %v4990 = vld [vmem:[%s4905 + $0xf1] sm:$0xff]
    %v4991 = vld [vmem:[%s4905 + $0xf9] sm:$0xff]
    %v4992 = vld [vmem:[%s4905 + $0x109] sm:$0xff]
    %v4993 = vld [vmem:[%s4905 + $0x111] sm:$0xff]
    %v4994 = vld [vmem:[%s4905 + $0x121] sm:$0xff]
    %v4995 = vld [vmem:[%s4905 + $0x129] sm:$0xff]
    %v4996 = vld [vmem:[%s4905 + $0x139] sm:$0xff]
    %v4997 = vld [vmem:[%s4905 + $0x141] sm:$0xff]
    %v4998 = vld [vmem:[%s4905 + $0x151] sm:$0xff]
    %v4999 = vld [vmem:[%s4905 + $0x159] sm:$0xff]
    %v5000 = vld [vmem:[%s4905 + $0x169] sm:$0xff]
    %v5001 = vld [vmem:[%s4905 + $0x171] sm:$0xff]
    %v5002 = vld [vmem:[%s4905 + $0x1b1] sm:$0xff]
    %v5003 = vld [vmem:[%s4905 + $0x1b9] sm:$0xff]
    %v5004 = vld [vmem:[%s4905 + $0x1c9] sm:$0xff]
    %v5005 = vld [vmem:[%s4905 + $0x1d1] sm:$0xff]
    %v5006 = vld [vmem:[%s4905 + $0x1e1] sm:$0xff]
    %v5007 = vld [vmem:[%s4905 + $0x1e9] sm:$0xff]
    %v5008 = vld [vmem:[%s4905 + $0x1f9] sm:$0xff]
    %v5009 = vld [vmem:[%s4905 + $0x201] sm:$0xff]
    %v5010 = vld [vmem:[%s4905 + $0x211] sm:$0xff]
    %v5011 = vld [vmem:[%s4905 + $0x219] sm:$0xff]
    %v5012 = vld [vmem:[%s4905 + $0x229] sm:$0xff]
    %v5013 = vld [vmem:[%s4905 + $0x231] sm:$0xff]
    %v5014 = vld [vmem:[%s4905 + $0x241] sm:$0xff]
    %v5015 = vld [vmem:[%s4905 + $0x249] sm:$0xff]
    %v5016 = vld [vmem:[%s4905 + $0x259] sm:$0xff]
    %v5017 = vld [vmem:[%s4905 + $0x261] sm:$0xff]
    %v5018 = vld [vmem:[%s4905 + $0x271] sm:$0xff]
    %v5019 = vld [vmem:[%s4905 + $0x279] sm:$0xff]
    %v5020 = vld [vmem:[%s4905 + $0x289] sm:$0xff]
    %v5021 = vld [vmem:[%s4905 + $0x291] sm:$0xff]
    %v5022 = vld [vmem:[%s4905 + $0x2a1] sm:$0xff]
    %v5023 = vld [vmem:[%s4905 + $0x2a9] sm:$0xff]
    %v5024 = vld [vmem:[%s4905 + $0x2b9] sm:$0xff]
    %v5025 = vld [vmem:[%s4905 + $0x2c1] sm:$0xff]
    %v5026 = vld [vmem:[%s4905 + $0x2d1] sm:$0xff]
    %v5027 = vld [vmem:[%s4905 + $0x2d9] sm:$0xff]
    %v5028 = vld [vmem:[%s4905 + $0x2e9] sm:$0xff]
    %v5029 = vld [vmem:[%s4905 + $0x2f1] sm:$0xff]
    %v5030 = vld [vmem:[%s4905 + $0x301] sm:$0xff]
    %v5031 = vld [vmem:[%s4905 + $0x309] sm:$0xff]
    %v5032 = vld [vmem:[%s4905 + $0x319] sm:$0xff]
    %v5033 = vld [vmem:[%s4905 + $0x321] sm:$0xff]
    %v5034 = vld [vmem:[%s4905 + $0x2] sm:$0xff]
    %v5035 = vld [vmem:[%s4905 + $0xa] sm:$0xff]
    %v5036 = vld [vmem:[%s4905 + $0x1a] sm:$0xff]
    %v5037 = vld [vmem:[%s4905 + $0x22] sm:$0xff]
    %v5038 = vld [vmem:[%s4905 + $0x32] sm:$0xff]
    %v5039 = vld [vmem:[%s4905 + $0x3a] sm:$0xff]
    %v5040 = vld [vmem:[%s4905 + $0x4a] sm:$0xff]
    %v5041 = vld [vmem:[%s4905 + $0x52] sm:$0xff]
    %v5042 = vld [vmem:[%s4905 + $0x62] sm:$0xff]
    %v5043 = vld [vmem:[%s4905 + $0x6a] sm:$0xff]
    %v5044 = vld [vmem:[%s4905 + $0x7a] sm:$0xff]
    %v5045 = vld [vmem:[%s4905 + $0x82] sm:$0xff]
    %v5046 = vld [vmem:[%s4905 + $0x92] sm:$0xff]
    %v5047 = vld [vmem:[%s4905 + $0x9a] sm:$0xff]
    %v5048 = vld [vmem:[%s4905 + $0xaa] sm:$0xff]
    %v5049 = vld [vmem:[%s4905 + $0xb2] sm:$0xff]
    %v5050 = vld [vmem:[%s4905 + $0xc2] sm:$0xff]
    %v5051 = vld [vmem:[%s4905 + $0xca] sm:$0xff]
    %v5052 = vld [vmem:[%s4905 + $0xda] sm:$0xff]
    %v5053 = vld [vmem:[%s4905 + $0xe2] sm:$0xff]
    %v5054 = vld [vmem:[%s4905 + $0xf2] sm:$0xff]
    %v5055 = vld [vmem:[%s4905 + $0xfa] sm:$0xff]
    %v5056 = vld [vmem:[%s4905 + $0x10a] sm:$0xff]
    %v5057 = vld [vmem:[%s4905 + $0x112] sm:$0xff]
    %v5058 = vld [vmem:[%s4905 + $0x122] sm:$0xff]
    %v5059 = vld [vmem:[%s4905 + $0x12a] sm:$0xff]
    %v5060 = vld [vmem:[%s4905 + $0x13a] sm:$0xff]
    %v5061 = vld [vmem:[%s4905 + $0x142] sm:$0xff]
    %v5062 = vld [vmem:[%s4905 + $0x152] sm:$0xff]
    %v5063 = vld [vmem:[%s4905 + $0x15a] sm:$0xff]
    %v5064 = vld [vmem:[%s4905 + $0x16a] sm:$0xff]
    %v5065 = vld [vmem:[%s4905 + $0x172] sm:$0xff]
    %v5066 = vld [vmem:[%s4905 + $0x1b2] sm:$0xff]
    %v5067 = vld [vmem:[%s4905 + $0x1ba] sm:$0xff]
    %v5068 = vld [vmem:[%s4905 + $0x1ca] sm:$0xff]
    %v5069 = vld [vmem:[%s4905 + $0x1d2] sm:$0xff]
    %v5070 = vld [vmem:[%s4905 + $0x1e2] sm:$0xff]
    %v5071 = vld [vmem:[%s4905 + $0x1ea] sm:$0xff]
    %v5072 = vld [vmem:[%s4905 + $0x1fa] sm:$0xff]
    %v5073 = vld [vmem:[%s4905 + $0x202] sm:$0xff]
    %v5074 = vld [vmem:[%s4905 + $0x212] sm:$0xff]
    %v5075 = vld [vmem:[%s4905 + $0x21a] sm:$0xff]
    %v5076 = vld [vmem:[%s4905 + $0x22a] sm:$0xff]
    %v5077 = vld [vmem:[%s4905 + $0x232] sm:$0xff]
    %v5078 = vld [vmem:[%s4905 + $0x242] sm:$0xff]
    %v5079 = vld [vmem:[%s4905 + $0x24a] sm:$0xff]
    %v5080 = vld [vmem:[%s4905 + $0x25a] sm:$0xff]
    %v5081 = vld [vmem:[%s4905 + $0x262] sm:$0xff]
    %v5082 = vld [vmem:[%s4905 + $0x272] sm:$0xff]
    %v5083 = vld [vmem:[%s4905 + $0x27a] sm:$0xff]
    %v5084 = vld [vmem:[%s4905 + $0x28a] sm:$0xff]
    %v5085 = vld [vmem:[%s4905 + $0x292] sm:$0xff]
    %v5086 = vld [vmem:[%s4905 + $0x2a2] sm:$0xff]
    %v5087 = vld [vmem:[%s4905 + $0x2aa] sm:$0xff]
    %v5088 = vld [vmem:[%s4905 + $0x2ba] sm:$0xff]
    %v5089 = vld [vmem:[%s4905 + $0x2c2] sm:$0xff]
    %v5090 = vld [vmem:[%s4905 + $0x2d2] sm:$0xff]
    %v5091 = vld [vmem:[%s4905 + $0x2da] sm:$0xff]
    %v5092 = vld [vmem:[%s4905 + $0x2ea] sm:$0xff]
    %v5093 = vld [vmem:[%s4905 + $0x2f2] sm:$0xff]
    %v5094 = vld [vmem:[%s4905 + $0x302] sm:$0xff]
    %v5095 = vld [vmem:[%s4905 + $0x30a] sm:$0xff]
    %v5096 = vld [vmem:[%s4905 + $0x31a] sm:$0xff]
    %v5097 = vld [vmem:[%s4905 + $0x322] sm:$0xff]
    %v5098 = vld [vmem:[#allocation5] sm:$0xff]
    %v5099 = vld [vmem:[#allocation5 + $0x8] sm:$0xff]
    %v5100 = vld [vmem:[#allocation5 + $0x10] sm:$0xff]
    %v5101 = vld [vmem:[#allocation5 + $0x18] sm:$0xff]
    %v5102 = vld [vmem:[#allocation5 + $0x20] sm:$0xff]
    %v5103 = vld [vmem:[#allocation5 + $0x28] sm:$0xff]
    %v5104 = vld [vmem:[#allocation5 + $0x30] sm:$0xff]
    %v5105 = vld [vmem:[#allocation5 + $0x38] sm:$0xff]
    %v5106 = vld [vmem:[#allocation5 + $0x40] sm:$0xff]
    %v5107 = vld [vmem:[#allocation5 + $0x48] sm:$0xff]
    %v5108 = vld [vmem:[#allocation5 + $0x50] sm:$0xff]
    %v5109 = vld [vmem:[#allocation5 + $0x58] sm:$0xff]
    %v5110 = vld [vmem:[#allocation5 + $0x60] sm:$0xff]
    %v5111 = vld [vmem:[#allocation5 + $0x68] sm:$0xff]
    %v5112 = vld [vmem:[#allocation5 + $0x70] sm:$0xff]
    %v5113 = vld [vmem:[#allocation5 + $0x78] sm:$0xff]
    %v5114 = vld [vmem:[#allocation5 + $0x80] sm:$0xff]
    %v5115 = vld [vmem:[#allocation5 + $0x88] sm:$0xff]
    %v5116 = vld [vmem:[#allocation5 + $0x90] sm:$0xff]
    %v5117 = vld [vmem:[#allocation5 + $0x98] sm:$0xff]
    %v5118 = vld [vmem:[#allocation5 + $0xa0] sm:$0xff]
    %v5119 = vld [vmem:[#allocation5 + $0xa8] sm:$0xff]
    %v5120 = vld [vmem:[#allocation5 + $0xb0] sm:$0xff]
    %v5121 = vld [vmem:[#allocation5 + $0xb8] sm:$0xff]
    %v5122 = vld [vmem:[#allocation5 + $0xc0] sm:$0xff]
    %v5123 = vld [vmem:[#allocation5 + $0xc8] sm:$0xff]
    %v5124 = vld [vmem:[#allocation5 + $0xd0] sm:$0xff]
    %v5125 = vld [vmem:[#allocation5 + $0xd8] sm:$0xff]
    %v5126 = vld [vmem:[#allocation5 + $0xe0] sm:$0xff]
    %v5127 = vld [vmem:[#allocation5 + $0xe8] sm:$0xff]
    %v5128 = vld [vmem:[#allocation5 + $0xf0] sm:$0xff]
    %v5129 = vld [vmem:[#allocation5 + $0xf8] sm:$0xff]
    %v5130 = vld [vmem:[#allocation5 + $0x100] sm:$0xff]
    %v5131 = vld [vmem:[#allocation5 + $0x108] sm:$0xff]
    %v5132 = vld [vmem:[#allocation5 + $0x110] sm:$0xff]
    %v5133 = vld [vmem:[#allocation5 + $0x118] sm:$0xff]
    %v5134 = vld [vmem:[#allocation5 + $0x120] sm:$0xff]
    %v5135 = vld [vmem:[#allocation5 + $0x128] sm:$0xff]
    %v5136 = vld [vmem:[#allocation5 + $0x130] sm:$0xff]
    %v5137 = vld [vmem:[#allocation5 + $0x138] sm:$0xff]
    %v5138 = vld [vmem:[#allocation5 + $0x140] sm:$0xff]
    %v5139 = vld [vmem:[#allocation5 + $0x148] sm:$0xff]
    %v5140 = vld [vmem:[#allocation5 + $0x150] sm:$0xff]
    %v5141 = vld [vmem:[#allocation5 + $0x158] sm:$0xff]
    %v5142 = vld [vmem:[#allocation5 + $0x160] sm:$0xff]
    %v5143 = vld [vmem:[#allocation5 + $0x168] sm:$0xff]
    %v5144 = vld [vmem:[#allocation5 + $0x170] sm:$0xff]
    %v5145 = vld [vmem:[#allocation5 + $0x178] sm:$0xff]
    %v5146 = vld [vmem:[#allocation5 + $0x180] sm:$0xff]
    %v5147 = vld [vmem:[#allocation5 + $0x188] sm:$0xff]
    %v5148 = vld [vmem:[#allocation5 + $0x190] sm:$0xff]
    %v5149 = vld [vmem:[#allocation5 + $0x198] sm:$0xff]
    %v5150 = vld [vmem:[#allocation5 + $0x1a0] sm:$0xff]
    %v5151 = vld [vmem:[#allocation5 + $0x1a8] sm:$0xff]
    %v5152 = vld [vmem:[#allocation5 + $0x1b0] sm:$0xff]
    %v5153 = vld [vmem:[#allocation5 + $0x1b8] sm:$0xff]
    %v5154 = vld [vmem:[#allocation5 + $0x1c0] sm:$0xff]
    %v5155 = vld [vmem:[#allocation5 + $0x1c8] sm:$0xff]
    %v5156 = vld [vmem:[#allocation5 + $0x1d0] sm:$0xff]
    %v5157 = vld [vmem:[#allocation5 + $0x1d8] sm:$0xff]
    %v5158 = vld [vmem:[#allocation5 + $0x1e0] sm:$0xff]
    %v5159 = vld [vmem:[#allocation5 + $0x1e8] sm:$0xff]
    %v5160 = vld [vmem:[#allocation5 + $0x1f0] sm:$0xff]
    %v5161 = vld [vmem:[#allocation5 + $0x1f8] sm:$0xff]
    %v5162 = vld [vmem:[#allocation5 + $0x200] sm:$0xff]
    %v5163 = vld [vmem:[#allocation5 + $0x208] sm:$0xff]
    %v5164 = vld [vmem:[#allocation5 + $0x210] sm:$0xff]
    %v5165 = vld [vmem:[#allocation5 + $0x218] sm:$0xff]
    %v5166 = vld [vmem:[#allocation5 + $0x220] sm:$0xff]
    %v5167 = vld [vmem:[#allocation5 + $0x228] sm:$0xff]
    %v5168 = vld [vmem:[#allocation5 + $0x230] sm:$0xff]
    %v5169 = vld [vmem:[#allocation5 + $0x238] sm:$0xff]
    %v5170 = vld [vmem:[#allocation5 + $0x240] sm:$0xff]
    %v5171 = vld [vmem:[#allocation5 + $0x248] sm:$0xff]
    %v5172 = vld [vmem:[#allocation5 + $0x250] sm:$0xff]
    %v5173 = vld [vmem:[#allocation5 + $0x258] sm:$0xff]
    %v5174 = vld [vmem:[#allocation5 + $0x260] sm:$0xff]
    %v5175 = vld [vmem:[#allocation5 + $0x268] sm:$0xff]
    %v5176 = vld [vmem:[#allocation5 + $0x270] sm:$0xff]
    %v5177 = vld [vmem:[#allocation5 + $0x278] sm:$0xff]
    %v5178 = vld [vmem:[#allocation5 + $0x280] sm:$0xff]
    %v5179 = vld [vmem:[#allocation5 + $0x288] sm:$0xff]
    %v5180 = vld [vmem:[#allocation5 + $0x290] sm:$0xff]
    %v5181 = vld [vmem:[#allocation5 + $0x298] sm:$0xff]
    %v5182 = vld [vmem:[#allocation5 + $0x2a0] sm:$0xff]
    %v5183 = vld [vmem:[#allocation5 + $0x2a8] sm:$0xff]
    %v5184 = vld [vmem:[#allocation5 + $0x2b0] sm:$0xff]
    %v5185 = vld [vmem:[#allocation5 + $0x2b8] sm:$0xff]
    %v5186 = vld [vmem:[#allocation5 + $0x2c0] sm:$0xff]
    %v5187 = vld [vmem:[#allocation5 + $0x2c8] sm:$0xff]
    %v5188 = vld [vmem:[#allocation5 + $0x2d0] sm:$0xff]
    %v5189 = vld [vmem:[#allocation5 + $0x2d8] sm:$0xff]
    %v5190 = vld [vmem:[#allocation5 + $0x2e0] sm:$0xff]
    %v5191 = vld [vmem:[#allocation5 + $0x2e8] sm:$0xff]
    %v5192 = vld [vmem:[#allocation5 + $0x2f0] sm:$0xff]
    %v5193 = vld [vmem:[#allocation5 + $0x2f8] sm:$0xff]
    %v5194 = vld [vmem:[#allocation5 + $0x300] sm:$0xff]
    %v5195 = vld [vmem:[#allocation5 + $0x308] sm:$0xff]
    %v5196 = vld [vmem:[#allocation5 + $0x310] sm:$0xff]
    %v5197 = vld [vmem:[#allocation5 + $0x318] sm:$0xff]
    %v5198 = vld [vmem:[#allocation5 + $0x320] sm:$0xff]
    %v5199 = vld [vmem:[#allocation5 + $0x328] sm:$0xff]
    %v5200 = vld [vmem:[#allocation5 + $0x330] sm:$0xff]
    %v5201 = vld [vmem:[#allocation5 + $0x338] sm:$0xff]
    %v5202 = vld [vmem:[#allocation5 + $0x340] sm:$0xff]
    %v5203 = vld [vmem:[#allocation5 + $0x348] sm:$0xff]
    %v5204 = vld [vmem:[#allocation5 + $0x350] sm:$0xff]
    %v5205 = vld [vmem:[#allocation5 + $0x358] sm:$0xff]
    %v5206 = vld [vmem:[#allocation5 + $0x360] sm:$0xff]
    %v5207 = vld [vmem:[#allocation5 + $0x368] sm:$0xff]
    %v5208 = vld [vmem:[#allocation5 + $0x370] sm:$0xff]
    %v5209 = vld [vmem:[#allocation5 + $0x378] sm:$0xff]
    %v5210 = vld [vmem:[#allocation5 + $0x380] sm:$0xff]
    %v5211 = vld [vmem:[#allocation5 + $0x388] sm:$0xff]
    %v5212 = vld [vmem:[#allocation5 + $0x390] sm:$0xff]
    %v5213 = vld [vmem:[#allocation5 + $0x398] sm:$0xff]
    %v5214 = vld [vmem:[#allocation5 + $0x3a0] sm:$0xff]
    %v5215 = vld [vmem:[#allocation5 + $0x3a8] sm:$0xff]
    %v5216 = vld [vmem:[#allocation5 + $0x3b0] sm:$0xff]
    %v5217 = vld [vmem:[#allocation5 + $0x3b8] sm:$0xff]
    %v5218 = vld [vmem:[#allocation5 + $0x3c0] sm:$0xff]
    %v5219 = vld [vmem:[#allocation5 + $0x3c8] sm:$0xff]
    %v5220 = vld [vmem:[#allocation5 + $0x3d0] sm:$0xff]
    %v5221 = vld [vmem:[#allocation5 + $0x3d8] sm:$0xff]
    %v5222 = vld [vmem:[#allocation5 + $0x3e0] sm:$0xff]
    %v5223 = vld [vmem:[#allocation5 + $0x3e8] sm:$0xff]
    %v5224 = vld [vmem:[#allocation5 + $0x3f0] sm:$0xff]
    %v5225 = vld [vmem:[#allocation5 + $0x3f8] sm:$0xff]
    %v5226 = vld [vmem:[#allocation5 + $0x400] sm:$0xff]
    %v5227 = vld [vmem:[#allocation5 + $0x408] sm:$0xff]
    %v5228 = vld [vmem:[#allocation5 + $0x410] sm:$0xff]
    %v5229 = vld [vmem:[#allocation5 + $0x418] sm:$0xff]
    %v5230 = vld [vmem:[#allocation5 + $0x420] sm:$0xff]
    %v5231 = vld [vmem:[#allocation5 + $0x428] sm:$0xff]
    %v5232 = vld [vmem:[#allocation5 + $0x430] sm:$0xff]
    %v5233 = vld [vmem:[#allocation5 + $0x438] sm:$0xff]
    %v5234 = vld [vmem:[#allocation5 + $0x440] sm:$0xff]
    %v5235 = vld [vmem:[#allocation5 + $0x448] sm:$0xff]
    %v5236 = vld [vmem:[#allocation5 + $0x450] sm:$0xff]
    %v5237 = vld [vmem:[#allocation5 + $0x458] sm:$0xff]
    %v5238 = vld [vmem:[#allocation5 + $0x460] sm:$0xff]
    %v5239 = vld [vmem:[#allocation5 + $0x468] sm:$0xff]
    %v5240 = vld [vmem:[#allocation5 + $0x470] sm:$0xff]
    %v5241 = vld [vmem:[#allocation5 + $0x478] sm:$0xff]
    %5242 = vmatpush.msra.mxu0 %v5113
    %5243 = vmatpush.msra.mxu0 %v5112
    %5244 = vmatpush.msra.mxu0 %v5111
    %5245 = vmatpush.msra.mxu0 %v5110
    %5246 = vmatpush.msra.mxu0 %v5109
    %5247 = vmatpush.msra.mxu0 %v5108
    %5248 = vmatpush.msra.mxu0 %v5107
    %5249 = vmatpush.msra.mxu0 %v5106
    %5250 = vmatpush.msra.mxu0 %v5105
    %5251 = vmatpush.msra.mxu0 %v5104
    %5252 = vmatpush.msra.mxu0 %v5103
    %5253 = vmatpush.msra.mxu0 %v5102
    %5254 = vmatpush.msra.mxu0 %v5101
    %5255 = vmatpush.msra.mxu0 %v5100
    %5256 = vmatpush.msra.mxu0 %v5099
    %5257 = vmatpush.msra.mxu0 %v5098
    %5258 = vmatmul.f32.gmra.mxu0 %v4521
    %v5259 = vpop.f32.mrf.mxu0
    %v5260 = vadd.f32 0.0, %v5259
    %5261 = vmatmul.f32.gmra.mxu0 %v4522
    %v5262 = vpop.f32.mrf.mxu0
    %v5263 = vadd.f32 0.0, %v5262
    %5264 = vmatmul.f32.gmra.mxu0 %v4523
    %v5265 = vpop.f32.mrf.mxu0
    %v5266 = vadd.f32 0.0, %v5265
    %5267 = vmatmul.f32.gmra.mxu0 %v4524
    %v5268 = vpop.f32.mrf.mxu0
    %v5269 = vadd.f32 0.0, %v5268
    %5270 = vmatmul.f32.gmra.mxu0 %v4525
    %v5271 = vpop.f32.mrf.mxu0
    %v5272 = vadd.f32 0.0, %v5271
    %5273 = vmatmul.f32.gmra.mxu0 %v4526
    %v5274 = vpop.f32.mrf.mxu0
    %v5275 = vadd.f32 0.0, %v5274
    %5276 = vmatmul.f32.gmra.mxu0 %v4527
    %v5277 = vpop.f32.mrf.mxu0
    %v5278 = vadd.f32 0.0, %v5277
    %5279 = vmatmul.f32.gmra.mxu0 %v4528
    %v5280 = vpop.f32.mrf.mxu0
    %v5281 = vadd.f32 0.0, %v5280
    %5282 = vmatmul.f32.gmra.mxu0 %v4529
    %v5283 = vpop.f32.mrf.mxu0
    %v5284 = vadd.f32 0.0, %v5283
    %5285 = vmatmul.f32.gmra.mxu0 %v4530
    %v5286 = vpop.f32.mrf.mxu0
    %v5287 = vadd.f32 0.0, %v5286
    %5288 = vmatmul.f32.gmra.mxu0 %v4531
    %v5289 = vpop.f32.mrf.mxu0
    %v5290 = vadd.f32 0.0, %v5289
    %5291 = vmatmul.f32.gmra.mxu0 %v4532
    %v5292 = vpop.f32.mrf.mxu0
    %v5293 = vadd.f32 0.0, %v5292
    %5294 = vmatmul.f32.gmra.mxu0 %v4533
    %v5295 = vpop.f32.mrf.mxu0
    %v5296 = vadd.f32 0.0, %v5295
    %5297 = vmatmul.f32.gmra.mxu0 %v4534
    %v5298 = vpop.f32.mrf.mxu0
    %v5299 = vadd.f32 0.0, %v5298
    %5300 = vmatmul.f32.gmra.mxu0 %v4535
    %v5301 = vpop.f32.mrf.mxu0
    %v5302 = vadd.f32 0.0, %v5301
    %5303 = vmatmul.f32.gmra.mxu0 %v4536
    %v5304 = vpop.f32.mrf.mxu0
    %v5305 = vadd.f32 0.0, %v5304
    %5306 = vmatmul.f32.gmra.mxu0 %v4537
    %v5307 = vpop.f32.mrf.mxu0
    %v5308 = vadd.f32 0.0, %v5307
    %5309 = vmatmul.f32.gmra.mxu0 %v4538
    %v5310 = vpop.f32.mrf.mxu0
    %v5311 = vadd.f32 0.0, %v5310
    %5312 = vmatmul.f32.gmra.mxu0 %v4539
    %v5313 = vpop.f32.mrf.mxu0
    %v5314 = vadd.f32 0.0, %v5313
    %5315 = vmatmul.f32.gmra.mxu0 %v4540
    %v5316 = vpop.f32.mrf.mxu0
    %v5317 = vadd.f32 0.0, %v5316
    %5318 = vmatmul.f32.gmra.mxu0 %v4541
    %v5319 = vpop.f32.mrf.mxu0
    %v5320 = vadd.f32 0.0, %v5319
    %5321 = vmatmul.f32.gmra.mxu0 %v4542
    %v5322 = vpop.f32.mrf.mxu0
    %v5323 = vadd.f32 0.0, %v5322
    %5324 = vmatmul.f32.gmra.mxu0 %v4543
    %v5325 = vpop.f32.mrf.mxu0
    %v5326 = vadd.f32 0.0, %v5325
    %5327 = vmatmul.f32.gmra.mxu0 %v4544
    %v5328 = vpop.f32.mrf.mxu0
    %v5329 = vadd.f32 0.0, %v5328
    %5330 = vmatmul.f32.gmra.mxu0 %v4545
    %v5331 = vpop.f32.mrf.mxu0
    %v5332 = vadd.f32 0.0, %v5331
    %5333 = vmatmul.f32.gmra.mxu0 %v4546
    %v5334 = vpop.f32.mrf.mxu0
    %v5335 = vadd.f32 0.0, %v5334
    %5336 = vmatmul.f32.gmra.mxu0 %v4547
    %v5337 = vpop.f32.mrf.mxu0
    %v5338 = vadd.f32 0.0, %v5337
    %5339 = vmatmul.f32.gmra.mxu0 %v4548
    %v5340 = vpop.f32.mrf.mxu0
    %v5341 = vadd.f32 0.0, %v5340
    %5342 = vmatmul.f32.gmra.mxu0 %v4549
    %v5343 = vpop.f32.mrf.mxu0
    %v5344 = vadd.f32 0.0, %v5343
    %5345 = vmatmul.f32.gmra.mxu0 %v4550
    %v5346 = vpop.f32.mrf.mxu0
    %v5347 = vadd.f32 0.0, %v5346
    %5348 = vmatmul.f32.gmra.mxu0 %v4551
    %v5349 = vpop.f32.mrf.mxu0
    %v5350 = vadd.f32 0.0, %v5349
    %5351 = vmatmul.f32.gmra.mxu0 %v4552
    %v5352 = vpop.f32.mrf.mxu0
    %v5353 = vadd.f32 0.0, %v5352
    %5354 = vmatmul.f32.gmra.mxu0 %v4553
    %v5355 = vpop.f32.mrf.mxu0
    %v5356 = vadd.f32 0.0, %v5355
    %5357 = vmatmul.f32.gmra.mxu0 %v4554
    %v5358 = vpop.f32.mrf.mxu0
    %v5359 = vadd.f32 0.0, %v5358
    %5360 = vmatmul.f32.gmra.mxu0 %v4555
    %v5361 = vpop.f32.mrf.mxu0
    %v5362 = vadd.f32 0.0, %v5361
    %5363 = vmatmul.f32.gmra.mxu0 %v4556
    %v5364 = vpop.f32.mrf.mxu0
    %v5365 = vadd.f32 0.0, %v5364
    %5366 = vmatmul.f32.gmra.mxu0 %v4557
    %v5367 = vpop.f32.mrf.mxu0
    %v5368 = vadd.f32 0.0, %v5367
    %5369 = vmatmul.f32.gmra.mxu0 %v4558
    %v5370 = vpop.f32.mrf.mxu0
    %v5371 = vadd.f32 0.0, %v5370
    %5372 = vmatmul.f32.gmra.mxu0 %v4559
    %v5373 = vpop.f32.mrf.mxu0
    %v5374 = vadd.f32 0.0, %v5373
    %5375 = vmatmul.f32.gmra.mxu0 %v4560
    %v5376 = vpop.f32.mrf.mxu0
    %v5377 = vadd.f32 0.0, %v5376
    %5378 = vmatmul.f32.gmra.mxu0 %v4561
    %v5379 = vpop.f32.mrf.mxu0
    %v5380 = vadd.f32 0.0, %v5379
    %5381 = vmatmul.f32.gmra.mxu0 %v4562
    %v5382 = vpop.f32.mrf.mxu0
    %v5383 = vadd.f32 0.0, %v5382
    %5384 = vmatmul.f32.gmra.mxu0 %v4563
    %v5385 = vpop.f32.mrf.mxu0
    %v5386 = vadd.f32 0.0, %v5385
    %5387 = vmatmul.f32.gmra.mxu0 %v4564
    %v5388 = vpop.f32.mrf.mxu0
    %v5389 = vadd.f32 0.0, %v5388
    %5390 = vmatmul.f32.gmra.mxu0 %v4565
    %v5391 = vpop.f32.mrf.mxu0
    %v5392 = vadd.f32 0.0, %v5391
    %5393 = vmatmul.f32.gmra.mxu0 %v4566
    %v5394 = vpop.f32.mrf.mxu0
    %v5395 = vadd.f32 0.0, %v5394
    %5396 = vmatmul.f32.gmra.mxu0 %v4567
    %v5397 = vpop.f32.mrf.mxu0
    %v5398 = vadd.f32 0.0, %v5397
    %5399 = vmatmul.f32.gmra.mxu0 %v4568
    %v5400 = vpop.f32.mrf.mxu0
    %v5401 = vadd.f32 0.0, %v5400
    %5402 = vmatmul.f32.gmra.mxu0 %v4569
    %v5403 = vpop.f32.mrf.mxu0
    %v5404 = vadd.f32 0.0, %v5403
    %5405 = vmatmul.f32.gmra.mxu0 %v4570
    %v5406 = vpop.f32.mrf.mxu0
    %v5407 = vadd.f32 0.0, %v5406
    %5408 = vmatmul.f32.gmra.mxu0 %v4571
    %v5409 = vpop.f32.mrf.mxu0
    %v5410 = vadd.f32 0.0, %v5409
    %5411 = vmatmul.f32.gmra.mxu0 %v4572
    %v5412 = vpop.f32.mrf.mxu0
    %v5413 = vadd.f32 0.0, %v5412
    %5414 = vmatmul.f32.gmra.mxu0 %v4573
    %v5415 = vpop.f32.mrf.mxu0
    %v5416 = vadd.f32 0.0, %v5415
    %5417 = vmatmul.f32.gmra.mxu0 %v4574
    %v5418 = vpop.f32.mrf.mxu0
    %v5419 = vadd.f32 0.0, %v5418
    %5420 = vmatmul.f32.gmra.mxu0 %v4575
    %v5421 = vpop.f32.mrf.mxu0
    %v5422 = vadd.f32 0.0, %v5421
    %5423 = vmatmul.f32.gmra.mxu0 %v4576
    %v5424 = vpop.f32.mrf.mxu0
    %v5425 = vadd.f32 0.0, %v5424
    %5426 = vmatmul.f32.gmra.mxu0 %v4577
    %v5427 = vpop.f32.mrf.mxu0
    %v5428 = vadd.f32 0.0, %v5427
    %5429 = vmatmul.f32.gmra.mxu0 %v4578
    %v5430 = vpop.f32.mrf.mxu0
    %v5431 = vadd.f32 0.0, %v5430
    %5432 = vmatmul.f32.gmra.mxu0 %v4579
    %v5433 = vpop.f32.mrf.mxu0
    %v5434 = vadd.f32 0.0, %v5433
    %5435 = vmatmul.f32.gmra.mxu0 %v4580
    %v5436 = vpop.f32.mrf.mxu0
    %v5437 = vadd.f32 0.0, %v5436
    %5438 = vmatmul.f32.gmra.mxu0 %v4581
    %v5439 = vpop.f32.mrf.mxu0
    %v5440 = vadd.f32 0.0, %v5439
    %5441 = vmatmul.f32.gmra.mxu0 %v4582
    %v5442 = vpop.f32.mrf.mxu0
    %v5443 = vadd.f32 0.0, %v5442
    %5444 = vmatmul.f32.gmra.mxu0 %v4583
    %v5445 = vpop.f32.mrf.mxu0
    %v5446 = vadd.f32 0.0, %v5445
    %5447 = vmatmul.f32.gmra.mxu0 %v4584
    %v5448 = vpop.f32.mrf.mxu0
    %v5449 = vadd.f32 0.0, %v5448
    %5450 = vdwg.mxu0
    %5451 = vmatpush.msra.mxu0 %v5129
    %5452 = vmatpush.msra.mxu0 %v5128
    %5453 = vmatpush.msra.mxu0 %v5127
    %5454 = vmatpush.msra.mxu0 %v5126
    %5455 = vmatpush.msra.mxu0 %v5125
    %5456 = vmatpush.msra.mxu0 %v5124
    %5457 = vmatpush.msra.mxu0 %v5123
    %5458 = vmatpush.msra.mxu0 %v5122
    %5459 = vmatpush.msra.mxu0 %v5121
    %5460 = vmatpush.msra.mxu0 %v5120
    %5461 = vmatpush.msra.mxu0 %v5119
    %5462 = vmatpush.msra.mxu0 %v5118
    %5463 = vmatpush.msra.mxu0 %v5117
    %5464 = vmatpush.msra.mxu0 %v5116
    %5465 = vmatpush.msra.mxu0 %v5115
    %5466 = vmatpush.msra.mxu0 %v5114
    %5467 = vmatmul.f32.gmra.mxu0 %v4585
    %v5468 = vpop.f32.mrf.mxu0
    %v5469 = vadd.f32 %v5260, %v5468
    %5470 = vmatmul.f32.gmra.mxu0 %v4586
    %v5471 = vpop.f32.mrf.mxu0
    %v5472 = vadd.f32 %v5263, %v5471
    %5473 = vmatmul.f32.gmra.mxu0 %v4587
    %v5474 = vpop.f32.mrf.mxu0
    %v5475 = vadd.f32 %v5266, %v5474
    %5476 = vmatmul.f32.gmra.mxu0 %v4588
    %v5477 = vpop.f32.mrf.mxu0
    %v5478 = vadd.f32 %v5269, %v5477
    %5479 = vmatmul.f32.gmra.mxu0 %v4589
    %v5480 = vpop.f32.mrf.mxu0
    %v5481 = vadd.f32 %v5272, %v5480
    %5482 = vmatmul.f32.gmra.mxu0 %v4590
    %v5483 = vpop.f32.mrf.mxu0
    %v5484 = vadd.f32 %v5275, %v5483
    %5485 = vmatmul.f32.gmra.mxu0 %v4591
    %v5486 = vpop.f32.mrf.mxu0
    %v5487 = vadd.f32 %v5278, %v5486
    %5488 = vmatmul.f32.gmra.mxu0 %v4592
    %v5489 = vpop.f32.mrf.mxu0
    %v5490 = vadd.f32 %v5281, %v5489
    %5491 = vmatmul.f32.gmra.mxu0 %v4593
    %v5492 = vpop.f32.mrf.mxu0
    %v5493 = vadd.f32 %v5284, %v5492
    %5494 = vmatmul.f32.gmra.mxu0 %v4594
    %v5495 = vpop.f32.mrf.mxu0
    %v5496 = vadd.f32 %v5287, %v5495
    %5497 = vmatmul.f32.gmra.mxu0 %v4595
    %v5498 = vpop.f32.mrf.mxu0
    %v5499 = vadd.f32 %v5290, %v5498
    %5500 = vmatmul.f32.gmra.mxu0 %v4596
    %v5501 = vpop.f32.mrf.mxu0
    %v5502 = vadd.f32 %v5293, %v5501
    %5503 = vmatmul.f32.gmra.mxu0 %v4597
    %v5504 = vpop.f32.mrf.mxu0
    %v5505 = vadd.f32 %v5296, %v5504
    %5506 = vmatmul.f32.gmra.mxu0 %v4598
    %v5507 = vpop.f32.mrf.mxu0
    %v5508 = vadd.f32 %v5299, %v5507
    %5509 = vmatmul.f32.gmra.mxu0 %v4599
    %v5510 = vpop.f32.mrf.mxu0
    %v5511 = vadd.f32 %v5302, %v5510
    %5512 = vmatmul.f32.gmra.mxu0 %v4600
    %v5513 = vpop.f32.mrf.mxu0
    %v5514 = vadd.f32 %v5305, %v5513
    %5515 = vmatmul.f32.gmra.mxu0 %v4601
    %v5516 = vpop.f32.mrf.mxu0
    %v5517 = vadd.f32 %v5308, %v5516
    %5518 = vmatmul.f32.gmra.mxu0 %v4602
    %v5519 = vpop.f32.mrf.mxu0
    %v5520 = vadd.f32 %v5311, %v5519
    %5521 = vmatmul.f32.gmra.mxu0 %v4603
    %v5522 = vpop.f32.mrf.mxu0
    %v5523 = vadd.f32 %v5314, %v5522
    %5524 = vmatmul.f32.gmra.mxu0 %v4604
    %v5525 = vpop.f32.mrf.mxu0
    %v5526 = vadd.f32 %v5317, %v5525
    %5527 = vmatmul.f32.gmra.mxu0 %v4605
    %v5528 = vpop.f32.mrf.mxu0
    %v5529 = vadd.f32 %v5320, %v5528
    %5530 = vmatmul.f32.gmra.mxu0 %v4606
    %v5531 = vpop.f32.mrf.mxu0
    %v5532 = vadd.f32 %v5323, %v5531
    %5533 = vmatmul.f32.gmra.mxu0 %v4607
    %v5534 = vpop.f32.mrf.mxu0
    %v5535 = vadd.f32 %v5326, %v5534
    %5536 = vmatmul.f32.gmra.mxu0 %v4608
    %v5537 = vpop.f32.mrf.mxu0
    %v5538 = vadd.f32 %v5329, %v5537
    %5539 = vmatmul.f32.gmra.mxu0 %v4609
    %v5540 = vpop.f32.mrf.mxu0
    %v5541 = vadd.f32 %v5332, %v5540
    %5542 = vmatmul.f32.gmra.mxu0 %v4610
    %v5543 = vpop.f32.mrf.mxu0
    %v5544 = vadd.f32 %v5335, %v5543
    %5545 = vmatmul.f32.gmra.mxu0 %v4611
    %v5546 = vpop.f32.mrf.mxu0
    %v5547 = vadd.f32 %v5338, %v5546
    %5548 = vmatmul.f32.gmra.mxu0 %v4612
    %v5549 = vpop.f32.mrf.mxu0
    %v5550 = vadd.f32 %v5341, %v5549
    %5551 = vmatmul.f32.gmra.mxu0 %v4613
    %v5552 = vpop.f32.mrf.mxu0
    %v5553 = vadd.f32 %v5344, %v5552
    %5554 = vmatmul.f32.gmra.mxu0 %v4614
    %v5555 = vpop.f32.mrf.mxu0
    %v5556 = vadd.f32 %v5347, %v5555
    %5557 = vmatmul.f32.gmra.mxu0 %v4615
    %v5558 = vpop.f32.mrf.mxu0
    %v5559 = vadd.f32 %v5350, %v5558
    %5560 = vmatmul.f32.gmra.mxu0 %v4616
    %v5561 = vpop.f32.mrf.mxu0
    %v5562 = vadd.f32 %v5353, %v5561
    %5563 = vmatmul.f32.gmra.mxu0 %v4617
    %v5564 = vpop.f32.mrf.mxu0
    %v5565 = vadd.f32 %v5356, %v5564
    %5566 = vmatmul.f32.gmra.mxu0 %v4618
    %v5567 = vpop.f32.mrf.mxu0
    %v5568 = vadd.f32 %v5359, %v5567
    %5569 = vmatmul.f32.gmra.mxu0 %v4619
    %v5570 = vpop.f32.mrf.mxu0
    %v5571 = vadd.f32 %v5362, %v5570
    %5572 = vmatmul.f32.gmra.mxu0 %v4620
    %v5573 = vpop.f32.mrf.mxu0
    %v5574 = vadd.f32 %v5365, %v5573
    %5575 = vmatmul.f32.gmra.mxu0 %v4621
    %v5576 = vpop.f32.mrf.mxu0
    %v5577 = vadd.f32 %v5368, %v5576
    %5578 = vmatmul.f32.gmra.mxu0 %v4622
    %v5579 = vpop.f32.mrf.mxu0
    %v5580 = vadd.f32 %v5371, %v5579
    %5581 = vmatmul.f32.gmra.mxu0 %v4623
    %v5582 = vpop.f32.mrf.mxu0
    %v5583 = vadd.f32 %v5374, %v5582
    %5584 = vmatmul.f32.gmra.mxu0 %v4624
    %v5585 = vpop.f32.mrf.mxu0
    %v5586 = vadd.f32 %v5377, %v5585
    %5587 = vmatmul.f32.gmra.mxu0 %v4625
    %v5588 = vpop.f32.mrf.mxu0
    %v5589 = vadd.f32 %v5380, %v5588
    %5590 = vmatmul.f32.gmra.mxu0 %v4626
    %v5591 = vpop.f32.mrf.mxu0
    %v5592 = vadd.f32 %v5383, %v5591
    %5593 = vmatmul.f32.gmra.mxu0 %v4627
    %v5594 = vpop.f32.mrf.mxu0
    %v5595 = vadd.f32 %v5386, %v5594
    %5596 = vmatmul.f32.gmra.mxu0 %v4628
    %v5597 = vpop.f32.mrf.mxu0
    %v5598 = vadd.f32 %v5389, %v5597
    %5599 = vmatmul.f32.gmra.mxu0 %v4629
    %v5600 = vpop.f32.mrf.mxu0
    %v5601 = vadd.f32 %v5392, %v5600
    %5602 = vmatmul.f32.gmra.mxu0 %v4630
    %v5603 = vpop.f32.mrf.mxu0
    %v5604 = vadd.f32 %v5395, %v5603
    %5605 = vmatmul.f32.gmra.mxu0 %v4631
    %v5606 = vpop.f32.mrf.mxu0
    %v5607 = vadd.f32 %v5398, %v5606
    %5608 = vmatmul.f32.gmra.mxu0 %v4632
    %v5609 = vpop.f32.mrf.mxu0
    %v5610 = vadd.f32 %v5401, %v5609
    %5611 = vmatmul.f32.gmra.mxu0 %v4633
    %v5612 = vpop.f32.mrf.mxu0
    %v5613 = vadd.f32 %v5404, %v5612
    %5614 = vmatmul.f32.gmra.mxu0 %v4634
    %v5615 = vpop.f32.mrf.mxu0
    %v5616 = vadd.f32 %v5407, %v5615
    %5617 = vmatmul.f32.gmra.mxu0 %v4635
    %v5618 = vpop.f32.mrf.mxu0
    %v5619 = vadd.f32 %v5410, %v5618
    %5620 = vmatmul.f32.gmra.mxu0 %v4636
    %v5621 = vpop.f32.mrf.mxu0
    %v5622 = vadd.f32 %v5413, %v5621
    %5623 = vmatmul.f32.gmra.mxu0 %v4637
    %v5624 = vpop.f32.mrf.mxu0
    %v5625 = vadd.f32 %v5416, %v5624
    %5626 = vmatmul.f32.gmra.mxu0 %v4638
    %v5627 = vpop.f32.mrf.mxu0
    %v5628 = vadd.f32 %v5419, %v5627
    %5629 = vmatmul.f32.gmra.mxu0 %v4639
    %v5630 = vpop.f32.mrf.mxu0
    %v5631 = vadd.f32 %v5422, %v5630
    %5632 = vmatmul.f32.gmra.mxu0 %v4640
    %v5633 = vpop.f32.mrf.mxu0
    %v5634 = vadd.f32 %v5425, %v5633
    %5635 = vmatmul.f32.gmra.mxu0 %v4641
    %v5636 = vpop.f32.mrf.mxu0
    %v5637 = vadd.f32 %v5428, %v5636
    %5638 = vmatmul.f32.gmra.mxu0 %v4642
    %v5639 = vpop.f32.mrf.mxu0
    %v5640 = vadd.f32 %v5431, %v5639
    %5641 = vmatmul.f32.gmra.mxu0 %v4643
    %v5642 = vpop.f32.mrf.mxu0
    %v5643 = vadd.f32 %v5434, %v5642
    %5644 = vmatmul.f32.gmra.mxu0 %v4644
    %v5645 = vpop.f32.mrf.mxu0
    %v5646 = vadd.f32 %v5437, %v5645
    %5647 = vmatmul.f32.gmra.mxu0 %v4645
    %v5648 = vpop.f32.mrf.mxu0
    %v5649 = vadd.f32 %v5440, %v5648
    %5650 = vmatmul.f32.gmra.mxu0 %v4646
    %v5651 = vpop.f32.mrf.mxu0
    %v5652 = vadd.f32 %v5443, %v5651
    %5653 = vmatmul.f32.gmra.mxu0 %v4647
    %v5654 = vpop.f32.mrf.mxu0
    %v5655 = vadd.f32 %v5446, %v5654
    %5656 = vmatmul.f32.gmra.mxu0 %v4648
    %v5657 = vpop.f32.mrf.mxu0
    %v5658 = vadd.f32 %v5449, %v5657
    %5659 = vdwg.mxu0
    %5660 = vmatpush.msra.mxu0 %v5145
    %5661 = vmatpush.msra.mxu0 %v5144
    %5662 = vmatpush.msra.mxu0 %v5143
    %5663 = vmatpush.msra.mxu0 %v5142
    %5664 = vmatpush.msra.mxu0 %v5141
    %5665 = vmatpush.msra.mxu0 %v5140
    %5666 = vmatpush.msra.mxu0 %v5139
    %5667 = vmatpush.msra.mxu0 %v5138
    %5668 = vmatpush.msra.mxu0 %v5137
    %5669 = vmatpush.msra.mxu0 %v5136
    %5670 = vmatpush.msra.mxu0 %v5135
    %5671 = vmatpush.msra.mxu0 %v5134
    %5672 = vmatpush.msra.mxu0 %v5133
    %5673 = vmatpush.msra.mxu0 %v5132
    %5674 = vmatpush.msra.mxu0 %v5131
    %5675 = vmatpush.msra.mxu0 %v5130
    %5676 = vmatmul.f32.gmra.mxu0 %v4649
    %v5677 = vpop.f32.mrf.mxu0
    %v5678 = vadd.f32 %v5469, %v5677
    %5679 = vmatmul.f32.gmra.mxu0 %v4650
    %v5680 = vpop.f32.mrf.mxu0
    %v5681 = vadd.f32 %v5472, %v5680
    %5682 = vmatmul.f32.gmra.mxu0 %v4651
    %v5683 = vpop.f32.mrf.mxu0
    %v5684 = vadd.f32 %v5475, %v5683
    %5685 = vmatmul.f32.gmra.mxu0 %v4652
    %v5686 = vpop.f32.mrf.mxu0
    %v5687 = vadd.f32 %v5478, %v5686
    %5688 = vmatmul.f32.gmra.mxu0 %v4653
    %v5689 = vpop.f32.mrf.mxu0
    %v5690 = vadd.f32 %v5481, %v5689
    %5691 = vmatmul.f32.gmra.mxu0 %v4654
    %v5692 = vpop.f32.mrf.mxu0
    %v5693 = vadd.f32 %v5484, %v5692
    %5694 = vmatmul.f32.gmra.mxu0 %v4655
    %v5695 = vpop.f32.mrf.mxu0
    %v5696 = vadd.f32 %v5487, %v5695
    %5697 = vmatmul.f32.gmra.mxu0 %v4656
    %v5698 = vpop.f32.mrf.mxu0
    %v5699 = vadd.f32 %v5490, %v5698
    %5700 = vmatmul.f32.gmra.mxu0 %v4657
    %v5701 = vpop.f32.mrf.mxu0
    %v5702 = vadd.f32 %v5493, %v5701
    %5703 = vmatmul.f32.gmra.mxu0 %v4658
    %v5704 = vpop.f32.mrf.mxu0
    %v5705 = vadd.f32 %v5496, %v5704
    %5706 = vmatmul.f32.gmra.mxu0 %v4659
    %v5707 = vpop.f32.mrf.mxu0
    %v5708 = vadd.f32 %v5499, %v5707
    %5709 = vmatmul.f32.gmra.mxu0 %v4660
    %v5710 = vpop.f32.mrf.mxu0
    %v5711 = vadd.f32 %v5502, %v5710
    %5712 = vmatmul.f32.gmra.mxu0 %v4661
    %v5713 = vpop.f32.mrf.mxu0
    %v5714 = vadd.f32 %v5505, %v5713
    %5715 = vmatmul.f32.gmra.mxu0 %v4662
    %v5716 = vpop.f32.mrf.mxu0
    %v5717 = vadd.f32 %v5508, %v5716
    %5718 = vmatmul.f32.gmra.mxu0 %v4663
    %v5719 = vpop.f32.mrf.mxu0
    %v5720 = vadd.f32 %v5511, %v5719
    %5721 = vmatmul.f32.gmra.mxu0 %v4664
    %v5722 = vpop.f32.mrf.mxu0
    %v5723 = vadd.f32 %v5514, %v5722
    %5724 = vmatmul.f32.gmra.mxu0 %v4665
    %v5725 = vpop.f32.mrf.mxu0
    %v5726 = vadd.f32 %v5517, %v5725
    %5727 = vmatmul.f32.gmra.mxu0 %v4666
    %v5728 = vpop.f32.mrf.mxu0
    %v5729 = vadd.f32 %v5520, %v5728
    %5730 = vmatmul.f32.gmra.mxu0 %v4667
    %v5731 = vpop.f32.mrf.mxu0
    %v5732 = vadd.f32 %v5523, %v5731
    %5733 = vmatmul.f32.gmra.mxu0 %v4668
    %v5734 = vpop.f32.mrf.mxu0
    %v5735 = vadd.f32 %v5526, %v5734
    %5736 = vmatmul.f32.gmra.mxu0 %v4669
    %v5737 = vpop.f32.mrf.mxu0
    %v5738 = vadd.f32 %v5529, %v5737
    %5739 = vmatmul.f32.gmra.mxu0 %v4670
    %v5740 = vpop.f32.mrf.mxu0
    %v5741 = vadd.f32 %v5532, %v5740
    %5742 = vmatmul.f32.gmra.mxu0 %v4671
    %v5743 = vpop.f32.mrf.mxu0
    %v5744 = vadd.f32 %v5535, %v5743
    %5745 = vmatmul.f32.gmra.mxu0 %v4672
    %v5746 = vpop.f32.mrf.mxu0
    %v5747 = vadd.f32 %v5538, %v5746
    %5748 = vmatmul.f32.gmra.mxu0 %v4673
    %v5749 = vpop.f32.mrf.mxu0
    %v5750 = vadd.f32 %v5541, %v5749
    %5751 = vmatmul.f32.gmra.mxu0 %v4674
    %v5752 = vpop.f32.mrf.mxu0
    %v5753 = vadd.f32 %v5544, %v5752
    %5754 = vmatmul.f32.gmra.mxu0 %v4675
    %v5755 = vpop.f32.mrf.mxu0
    %v5756 = vadd.f32 %v5547, %v5755
    %5757 = vmatmul.f32.gmra.mxu0 %v4676
    %v5758 = vpop.f32.mrf.mxu0
    %v5759 = vadd.f32 %v5550, %v5758
    %5760 = vmatmul.f32.gmra.mxu0 %v4677
    %v5761 = vpop.f32.mrf.mxu0
    %v5762 = vadd.f32 %v5553, %v5761
    %5763 = vmatmul.f32.gmra.mxu0 %v4678
    %v5764 = vpop.f32.mrf.mxu0
    %v5765 = vadd.f32 %v5556, %v5764
    %5766 = vmatmul.f32.gmra.mxu0 %v4679
    %v5767 = vpop.f32.mrf.mxu0
    %v5768 = vadd.f32 %v5559, %v5767
    %5769 = vmatmul.f32.gmra.mxu0 %v4680
    %v5770 = vpop.f32.mrf.mxu0
    %v5771 = vadd.f32 %v5562, %v5770
    %5772 = vmatmul.f32.gmra.mxu0 %v4681
    %v5773 = vpop.f32.mrf.mxu0
    %v5774 = vadd.f32 %v5565, %v5773
    %5775 = vmatmul.f32.gmra.mxu0 %v4682
    %v5776 = vpop.f32.mrf.mxu0
    %v5777 = vadd.f32 %v5568, %v5776
    %5778 = vmatmul.f32.gmra.mxu0 %v4683
    %v5779 = vpop.f32.mrf.mxu0
    %v5780 = vadd.f32 %v5571, %v5779
    %5781 = vmatmul.f32.gmra.mxu0 %v4684
    %v5782 = vpop.f32.mrf.mxu0
    %v5783 = vadd.f32 %v5574, %v5782
    %5784 = vmatmul.f32.gmra.mxu0 %v4685
    %v5785 = vpop.f32.mrf.mxu0
    %v5786 = vadd.f32 %v5577, %v5785
    %5787 = vmatmul.f32.gmra.mxu0 %v4686
    %v5788 = vpop.f32.mrf.mxu0
    %v5789 = vadd.f32 %v5580, %v5788
    %5790 = vmatmul.f32.gmra.mxu0 %v4687
    %v5791 = vpop.f32.mrf.mxu0
    %v5792 = vadd.f32 %v5583, %v5791
    %5793 = vmatmul.f32.gmra.mxu0 %v4688
    %v5794 = vpop.f32.mrf.mxu0
    %v5795 = vadd.f32 %v5586, %v5794
    %5796 = vmatmul.f32.gmra.mxu0 %v4689
    %v5797 = vpop.f32.mrf.mxu0
    %v5798 = vadd.f32 %v5589, %v5797
    %5799 = vmatmul.f32.gmra.mxu0 %v4690
    %v5800 = vpop.f32.mrf.mxu0
    %v5801 = vadd.f32 %v5592, %v5800
    %5802 = vmatmul.f32.gmra.mxu0 %v4691
    %v5803 = vpop.f32.mrf.mxu0
    %v5804 = vadd.f32 %v5595, %v5803
    %5805 = vmatmul.f32.gmra.mxu0 %v4692
    %v5806 = vpop.f32.mrf.mxu0
    %v5807 = vadd.f32 %v5598, %v5806
    %5808 = vmatmul.f32.gmra.mxu0 %v4693
    %v5809 = vpop.f32.mrf.mxu0
    %v5810 = vadd.f32 %v5601, %v5809
    %5811 = vmatmul.f32.gmra.mxu0 %v4694
    %v5812 = vpop.f32.mrf.mxu0
    %v5813 = vadd.f32 %v5604, %v5812
    %5814 = vmatmul.f32.gmra.mxu0 %v4695
    %v5815 = vpop.f32.mrf.mxu0
    %v5816 = vadd.f32 %v5607, %v5815
    %5817 = vmatmul.f32.gmra.mxu0 %v4696
    %v5818 = vpop.f32.mrf.mxu0
    %v5819 = vadd.f32 %v5610, %v5818
    %5820 = vmatmul.f32.gmra.mxu0 %v4697
    %v5821 = vpop.f32.mrf.mxu0
    %v5822 = vadd.f32 %v5613, %v5821
    %5823 = vmatmul.f32.gmra.mxu0 %v4698
    %v5824 = vpop.f32.mrf.mxu0
    %v5825 = vadd.f32 %v5616, %v5824
    %5826 = vmatmul.f32.gmra.mxu0 %v4699
    %v5827 = vpop.f32.mrf.mxu0
    %v5828 = vadd.f32 %v5619, %v5827
    %5829 = vmatmul.f32.gmra.mxu0 %v4700
    %v5830 = vpop.f32.mrf.mxu0
    %v5831 = vadd.f32 %v5622, %v5830
    %5832 = vmatmul.f32.gmra.mxu0 %v4701
    %v5833 = vpop.f32.mrf.mxu0
    %v5834 = vadd.f32 %v5625, %v5833
    %5835 = vmatmul.f32.gmra.mxu0 %v4702
    %v5836 = vpop.f32.mrf.mxu0
    %v5837 = vadd.f32 %v5628, %v5836
    %5838 = vmatmul.f32.gmra.mxu0 %v4703
    %v5839 = vpop.f32.mrf.mxu0
    %v5840 = vadd.f32 %v5631, %v5839
    %5841 = vmatmul.f32.gmra.mxu0 %v4704
    %v5842 = vpop.f32.mrf.mxu0
    %v5843 = vadd.f32 %v5634, %v5842
    %5844 = vmatmul.f32.gmra.mxu0 %v4705
    %v5845 = vpop.f32.mrf.mxu0
    %v5846 = vadd.f32 %v5637, %v5845
    %5847 = vmatmul.f32.gmra.mxu0 %v4706
    %v5848 = vpop.f32.mrf.mxu0
    %v5849 = vadd.f32 %v5640, %v5848
    %5850 = vmatmul.f32.gmra.mxu0 %v4707
    %v5851 = vpop.f32.mrf.mxu0
    %v5852 = vadd.f32 %v5643, %v5851
    %5853 = vmatmul.f32.gmra.mxu0 %v4708
    %v5854 = vpop.f32.mrf.mxu0
    %v5855 = vadd.f32 %v5646, %v5854
    %5856 = vmatmul.f32.gmra.mxu0 %v4709
    %v5857 = vpop.f32.mrf.mxu0
    %v5858 = vadd.f32 %v5649, %v5857
    %5859 = vmatmul.f32.gmra.mxu0 %v4710
    %v5860 = vpop.f32.mrf.mxu0
    %v5861 = vadd.f32 %v5652, %v5860
    %5862 = vmatmul.f32.gmra.mxu0 %v4711
    %v5863 = vpop.f32.mrf.mxu0
    %v5864 = vadd.f32 %v5655, %v5863
    %5865 = vmatmul.f32.gmra.mxu0 %v4712
    %v5866 = vpop.f32.mrf.mxu0
    %v5867 = vadd.f32 %v5658, %v5866
    %5868 = vdwg.mxu0
    %5869 = vmatpush.msra.mxu0 %v5161
    %5870 = vmatpush.msra.mxu0 %v5160
    %5871 = vmatpush.msra.mxu0 %v5159
    %5872 = vmatpush.msra.mxu0 %v5158
    %5873 = vmatpush.msra.mxu0 %v5157
    %5874 = vmatpush.msra.mxu0 %v5156
    %5875 = vmatpush.msra.mxu0 %v5155
    %5876 = vmatpush.msra.mxu0 %v5154
    %5877 = vmatpush.msra.mxu0 %v5153
    %5878 = vmatpush.msra.mxu0 %v5152
    %5879 = vmatpush.msra.mxu0 %v5151
    %5880 = vmatpush.msra.mxu0 %v5150
    %5881 = vmatpush.msra.mxu0 %v5149
    %5882 = vmatpush.msra.mxu0 %v5148
    %5883 = vmatpush.msra.mxu0 %v5147
    %5884 = vmatpush.msra.mxu0 %v5146
    %5885 = vmatmul.f32.gmra.mxu0 %v4713
    %v5886 = vpop.f32.mrf.mxu0
    %v5887 = vadd.f32 %v5678, %v5886
    %5888 = vmatmul.f32.gmra.mxu0 %v4714
    %v5889 = vpop.f32.mrf.mxu0
    %v5890 = vadd.f32 %v5681, %v5889
    %5891 = vmatmul.f32.gmra.mxu0 %v4715
    %v5892 = vpop.f32.mrf.mxu0
    %v5893 = vadd.f32 %v5684, %v5892
    %5894 = vmatmul.f32.gmra.mxu0 %v4716
    %v5895 = vpop.f32.mrf.mxu0
    %v5896 = vadd.f32 %v5687, %v5895
    %5897 = vmatmul.f32.gmra.mxu0 %v4717
    %v5898 = vpop.f32.mrf.mxu0
    %v5899 = vadd.f32 %v5690, %v5898
    %5900 = vmatmul.f32.gmra.mxu0 %v4718
    %v5901 = vpop.f32.mrf.mxu0
    %v5902 = vadd.f32 %v5693, %v5901
    %5903 = vmatmul.f32.gmra.mxu0 %v4719
    %v5904 = vpop.f32.mrf.mxu0
    %v5905 = vadd.f32 %v5696, %v5904
    %5906 = vmatmul.f32.gmra.mxu0 %v4720
    %v5907 = vpop.f32.mrf.mxu0
    %v5908 = vadd.f32 %v5699, %v5907
    %5909 = vmatmul.f32.gmra.mxu0 %v4721
    %v5910 = vpop.f32.mrf.mxu0
    %v5911 = vadd.f32 %v5702, %v5910
    %5912 = vmatmul.f32.gmra.mxu0 %v4722
    %v5913 = vpop.f32.mrf.mxu0
    %v5914 = vadd.f32 %v5705, %v5913
    %5915 = vmatmul.f32.gmra.mxu0 %v4723
    %v5916 = vpop.f32.mrf.mxu0
    %v5917 = vadd.f32 %v5708, %v5916
    %5918 = vmatmul.f32.gmra.mxu0 %v4724
    %v5919 = vpop.f32.mrf.mxu0
    %v5920 = vadd.f32 %v5711, %v5919
    %5921 = vmatmul.f32.gmra.mxu0 %v4725
    %v5922 = vpop.f32.mrf.mxu0
    %v5923 = vadd.f32 %v5714, %v5922
    %5924 = vmatmul.f32.gmra.mxu0 %v4726
    %v5925 = vpop.f32.mrf.mxu0
    %v5926 = vadd.f32 %v5717, %v5925
    %5927 = vmatmul.f32.gmra.mxu0 %v4727
    %v5928 = vpop.f32.mrf.mxu0
    %v5929 = vadd.f32 %v5720, %v5928
    %5930 = vmatmul.f32.gmra.mxu0 %v4728
    %v5931 = vpop.f32.mrf.mxu0
    %v5932 = vadd.f32 %v5723, %v5931
    %5933 = vmatmul.f32.gmra.mxu0 %v4729
    %v5934 = vpop.f32.mrf.mxu0
    %v5935 = vadd.f32 %v5726, %v5934
    %5936 = vmatmul.f32.gmra.mxu0 %v4730
    %v5937 = vpop.f32.mrf.mxu0
    %v5938 = vadd.f32 %v5729, %v5937
    %5939 = vmatmul.f32.gmra.mxu0 %v4731
    %v5940 = vpop.f32.mrf.mxu0
    %v5941 = vadd.f32 %v5732, %v5940
    %5942 = vmatmul.f32.gmra.mxu0 %v4732
    %v5943 = vpop.f32.mrf.mxu0
    %v5944 = vadd.f32 %v5735, %v5943
    %5945 = vmatmul.f32.gmra.mxu0 %v4733
    %v5946 = vpop.f32.mrf.mxu0
    %v5947 = vadd.f32 %v5738, %v5946
    %5948 = vmatmul.f32.gmra.mxu0 %v4734
    %v5949 = vpop.f32.mrf.mxu0
    %v5950 = vadd.f32 %v5741, %v5949
    %5951 = vmatmul.f32.gmra.mxu0 %v4735
    %v5952 = vpop.f32.mrf.mxu0
    %v5953 = vadd.f32 %v5744, %v5952
    %5954 = vmatmul.f32.gmra.mxu0 %v4736
    %v5955 = vpop.f32.mrf.mxu0
    %v5956 = vadd.f32 %v5747, %v5955
    %5957 = vmatmul.f32.gmra.mxu0 %v4737
    %v5958 = vpop.f32.mrf.mxu0
    %v5959 = vadd.f32 %v5750, %v5958
    %5960 = vmatmul.f32.gmra.mxu0 %v4738
    %v5961 = vpop.f32.mrf.mxu0
    %v5962 = vadd.f32 %v5753, %v5961
    %5963 = vmatmul.f32.gmra.mxu0 %v4739
    %v5964 = vpop.f32.mrf.mxu0
    %v5965 = vadd.f32 %v5756, %v5964
    %5966 = vmatmul.f32.gmra.mxu0 %v4740
    %v5967 = vpop.f32.mrf.mxu0
    %v5968 = vadd.f32 %v5759, %v5967
    %5969 = vmatmul.f32.gmra.mxu0 %v4741
    %v5970 = vpop.f32.mrf.mxu0
    %v5971 = vadd.f32 %v5762, %v5970
    %5972 = vmatmul.f32.gmra.mxu0 %v4742
    %v5973 = vpop.f32.mrf.mxu0
    %v5974 = vadd.f32 %v5765, %v5973
    %5975 = vmatmul.f32.gmra.mxu0 %v4743
    %v5976 = vpop.f32.mrf.mxu0
    %v5977 = vadd.f32 %v5768, %v5976
    %5978 = vmatmul.f32.gmra.mxu0 %v4744
    %v5979 = vpop.f32.mrf.mxu0
    %v5980 = vadd.f32 %v5771, %v5979
    %5981 = vmatmul.f32.gmra.mxu0 %v4745
    %v5982 = vpop.f32.mrf.mxu0
    %v5983 = vadd.f32 %v5774, %v5982
    %5984 = vmatmul.f32.gmra.mxu0 %v4746
    %v5985 = vpop.f32.mrf.mxu0
    %v5986 = vadd.f32 %v5777, %v5985
    %5987 = vmatmul.f32.gmra.mxu0 %v4747
    %v5988 = vpop.f32.mrf.mxu0
    %v5989 = vadd.f32 %v5780, %v5988
    %5990 = vmatmul.f32.gmra.mxu0 %v4748
    %v5991 = vpop.f32.mrf.mxu0
    %v5992 = vadd.f32 %v5783, %v5991
    %5993 = vmatmul.f32.gmra.mxu0 %v4749
    %v5994 = vpop.f32.mrf.mxu0
    %v5995 = vadd.f32 %v5786, %v5994
    %5996 = vmatmul.f32.gmra.mxu0 %v4750
    %v5997 = vpop.f32.mrf.mxu0
    %v5998 = vadd.f32 %v5789, %v5997
    %5999 = vmatmul.f32.gmra.mxu0 %v4751
    %v6000 = vpop.f32.mrf.mxu0
    %v6001 = vadd.f32 %v5792, %v6000
    %6002 = vmatmul.f32.gmra.mxu0 %v4752
    %v6003 = vpop.f32.mrf.mxu0
    %v6004 = vadd.f32 %v5795, %v6003
    %6005 = vmatmul.f32.gmra.mxu0 %v4753
    %v6006 = vpop.f32.mrf.mxu0
    %v6007 = vadd.f32 %v5798, %v6006
    %6008 = vmatmul.f32.gmra.mxu0 %v4754
    %v6009 = vpop.f32.mrf.mxu0
    %v6010 = vadd.f32 %v5801, %v6009
    %6011 = vmatmul.f32.gmra.mxu0 %v4755
    %v6012 = vpop.f32.mrf.mxu0
    %v6013 = vadd.f32 %v5804, %v6012
    %6014 = vmatmul.f32.gmra.mxu0 %v4756
    %v6015 = vpop.f32.mrf.mxu0
    %v6016 = vadd.f32 %v5807, %v6015
    %6017 = vmatmul.f32.gmra.mxu0 %v4757
    %v6018 = vpop.f32.mrf.mxu0
    %v6019 = vadd.f32 %v5810, %v6018
    %6020 = vmatmul.f32.gmra.mxu0 %v4758
    %v6021 = vpop.f32.mrf.mxu0
    %v6022 = vadd.f32 %v5813, %v6021
    %6023 = vmatmul.f32.gmra.mxu0 %v4759
    %v6024 = vpop.f32.mrf.mxu0
    %v6025 = vadd.f32 %v5816, %v6024
    %6026 = vmatmul.f32.gmra.mxu0 %v4760
    %v6027 = vpop.f32.mrf.mxu0
    %v6028 = vadd.f32 %v5819, %v6027
    %6029 = vmatmul.f32.gmra.mxu0 %v4761
    %v6030 = vpop.f32.mrf.mxu0
    %v6031 = vadd.f32 %v5822, %v6030
    %6032 = vmatmul.f32.gmra.mxu0 %v4762
    %v6033 = vpop.f32.mrf.mxu0
    %v6034 = vadd.f32 %v5825, %v6033
    %6035 = vmatmul.f32.gmra.mxu0 %v4763
    %v6036 = vpop.f32.mrf.mxu0
    %v6037 = vadd.f32 %v5828, %v6036
    %6038 = vmatmul.f32.gmra.mxu0 %v4764
    %v6039 = vpop.f32.mrf.mxu0
    %v6040 = vadd.f32 %v5831, %v6039
    %6041 = vmatmul.f32.gmra.mxu0 %v4765
    %v6042 = vpop.f32.mrf.mxu0
    %v6043 = vadd.f32 %v5834, %v6042
    %6044 = vmatmul.f32.gmra.mxu0 %v4766
    %v6045 = vpop.f32.mrf.mxu0
    %v6046 = vadd.f32 %v5837, %v6045
    %6047 = vmatmul.f32.gmra.mxu0 %v4767
    %v6048 = vpop.f32.mrf.mxu0
    %v6049 = vadd.f32 %v5840, %v6048
    %6050 = vmatmul.f32.gmra.mxu0 %v4768
    %v6051 = vpop.f32.mrf.mxu0
    %v6052 = vadd.f32 %v5843, %v6051
    %6053 = vmatmul.f32.gmra.mxu0 %v4769
    %v6054 = vpop.f32.mrf.mxu0
    %v6055 = vadd.f32 %v5846, %v6054
    %6056 = vmatmul.f32.gmra.mxu0 %v4770
    %v6057 = vpop.f32.mrf.mxu0
    %v6058 = vadd.f32 %v5849, %v6057
    %6059 = vmatmul.f32.gmra.mxu0 %v4771
    %v6060 = vpop.f32.mrf.mxu0
    %v6061 = vadd.f32 %v5852, %v6060
    %6062 = vmatmul.f32.gmra.mxu0 %v4772
    %v6063 = vpop.f32.mrf.mxu0
    %v6064 = vadd.f32 %v5855, %v6063
    %6065 = vmatmul.f32.gmra.mxu0 %v4773
    %v6066 = vpop.f32.mrf.mxu0
    %v6067 = vadd.f32 %v5858, %v6066
    %6068 = vmatmul.f32.gmra.mxu0 %v4774
    %v6069 = vpop.f32.mrf.mxu0
    %v6070 = vadd.f32 %v5861, %v6069
    %6071 = vmatmul.f32.gmra.mxu0 %v4775
    %v6072 = vpop.f32.mrf.mxu0
    %v6073 = vadd.f32 %v5864, %v6072
    %6074 = vmatmul.f32.gmra.mxu0 %v4776
    %v6075 = vpop.f32.mrf.mxu0
    %v6076 = vadd.f32 %v5867, %v6075
    %6077 = vdwg.mxu0
    %6078 = vmatpush.msra.mxu0 %v5177
    %6079 = vmatpush.msra.mxu0 %v5176
    %6080 = vmatpush.msra.mxu0 %v5175
    %6081 = vmatpush.msra.mxu0 %v5174
    %6082 = vmatpush.msra.mxu0 %v5173
    %6083 = vmatpush.msra.mxu0 %v5172
    %6084 = vmatpush.msra.mxu0 %v5171
    %6085 = vmatpush.msra.mxu0 %v5170
    %6086 = vmatpush.msra.mxu0 %v5169
    %6087 = vmatpush.msra.mxu0 %v5168
    %6088 = vmatpush.msra.mxu0 %v5167
    %6089 = vmatpush.msra.mxu0 %v5166
    %6090 = vmatpush.msra.mxu0 %v5165
    %6091 = vmatpush.msra.mxu0 %v5164
    %6092 = vmatpush.msra.mxu0 %v5163
    %6093 = vmatpush.msra.mxu0 %v5162
    %6094 = vmatmul.f32.gmra.mxu0 %v4777
    %v6095 = vpop.f32.mrf.mxu0
    %v6096 = vadd.f32 %v5887, %v6095
    %6097 = vmatmul.f32.gmra.mxu0 %v4778
    %v6098 = vpop.f32.mrf.mxu0
    %v6099 = vadd.f32 %v5890, %v6098
    %6100 = vmatmul.f32.gmra.mxu0 %v4779
    %v6101 = vpop.f32.mrf.mxu0
    %v6102 = vadd.f32 %v5893, %v6101
    %6103 = vmatmul.f32.gmra.mxu0 %v4780
    %v6104 = vpop.f32.mrf.mxu0
    %v6105 = vadd.f32 %v5896, %v6104
    %6106 = vmatmul.f32.gmra.mxu0 %v4781
    %v6107 = vpop.f32.mrf.mxu0
    %v6108 = vadd.f32 %v5899, %v6107
    %6109 = vmatmul.f32.gmra.mxu0 %v4782
    %v6110 = vpop.f32.mrf.mxu0
    %v6111 = vadd.f32 %v5902, %v6110
    %6112 = vmatmul.f32.gmra.mxu0 %v4783
    %v6113 = vpop.f32.mrf.mxu0
    %v6114 = vadd.f32 %v5905, %v6113
    %6115 = vmatmul.f32.gmra.mxu0 %v4784
    %v6116 = vpop.f32.mrf.mxu0
    %v6117 = vadd.f32 %v5908, %v6116
    %6118 = vmatmul.f32.gmra.mxu0 %v4785
    %v6119 = vpop.f32.mrf.mxu0
    %v6120 = vadd.f32 %v5911, %v6119
    %6121 = vmatmul.f32.gmra.mxu0 %v4786
    %v6122 = vpop.f32.mrf.mxu0
    %v6123 = vadd.f32 %v5914, %v6122
    %6124 = vmatmul.f32.gmra.mxu0 %v4787
    %v6125 = vpop.f32.mrf.mxu0
    %v6126 = vadd.f32 %v5917, %v6125
    %6127 = vmatmul.f32.gmra.mxu0 %v4788
    %v6128 = vpop.f32.mrf.mxu0
    %v6129 = vadd.f32 %v5920, %v6128
    %6130 = vmatmul.f32.gmra.mxu0 %v4789
    %v6131 = vpop.f32.mrf.mxu0
    %v6132 = vadd.f32 %v5923, %v6131
    %6133 = vmatmul.f32.gmra.mxu0 %v4790
    %v6134 = vpop.f32.mrf.mxu0
    %v6135 = vadd.f32 %v5926, %v6134
    %6136 = vmatmul.f32.gmra.mxu0 %v4791
    %v6137 = vpop.f32.mrf.mxu0
    %v6138 = vadd.f32 %v5929, %v6137
    %6139 = vmatmul.f32.gmra.mxu0 %v4792
    %v6140 = vpop.f32.mrf.mxu0
    %v6141 = vadd.f32 %v5932, %v6140
    %6142 = vmatmul.f32.gmra.mxu0 %v4793
    %v6143 = vpop.f32.mrf.mxu0
    %v6144 = vadd.f32 %v5935, %v6143
    %6145 = vmatmul.f32.gmra.mxu0 %v4794
    %v6146 = vpop.f32.mrf.mxu0
    %v6147 = vadd.f32 %v5938, %v6146
    %6148 = vmatmul.f32.gmra.mxu0 %v4795
    %v6149 = vpop.f32.mrf.mxu0
    %v6150 = vadd.f32 %v5941, %v6149
    %6151 = vmatmul.f32.gmra.mxu0 %v4796
    %v6152 = vpop.f32.mrf.mxu0
    %v6153 = vadd.f32 %v5944, %v6152
    %6154 = vmatmul.f32.gmra.mxu0 %v4797
    %v6155 = vpop.f32.mrf.mxu0
    %v6156 = vadd.f32 %v5947, %v6155
    %6157 = vmatmul.f32.gmra.mxu0 %v4798
    %v6158 = vpop.f32.mrf.mxu0
    %v6159 = vadd.f32 %v5950, %v6158
    %6160 = vmatmul.f32.gmra.mxu0 %v4799
    %v6161 = vpop.f32.mrf.mxu0
    %v6162 = vadd.f32 %v5953, %v6161
    %6163 = vmatmul.f32.gmra.mxu0 %v4800
    %v6164 = vpop.f32.mrf.mxu0
    %v6165 = vadd.f32 %v5956, %v6164
    %6166 = vmatmul.f32.gmra.mxu0 %v4801
    %v6167 = vpop.f32.mrf.mxu0
    %v6168 = vadd.f32 %v5959, %v6167
    %6169 = vmatmul.f32.gmra.mxu0 %v4802
    %v6170 = vpop.f32.mrf.mxu0
    %v6171 = vadd.f32 %v5962, %v6170
    %6172 = vmatmul.f32.gmra.mxu0 %v4803
    %v6173 = vpop.f32.mrf.mxu0
    %v6174 = vadd.f32 %v5965, %v6173
    %6175 = vmatmul.f32.gmra.mxu0 %v4804
    %v6176 = vpop.f32.mrf.mxu0
    %v6177 = vadd.f32 %v5968, %v6176
    %6178 = vmatmul.f32.gmra.mxu0 %v4805
    %v6179 = vpop.f32.mrf.mxu0
    %v6180 = vadd.f32 %v5971, %v6179
    %6181 = vmatmul.f32.gmra.mxu0 %v4806
    %v6182 = vpop.f32.mrf.mxu0
    %v6183 = vadd.f32 %v5974, %v6182
    %6184 = vmatmul.f32.gmra.mxu0 %v4807
    %v6185 = vpop.f32.mrf.mxu0
    %v6186 = vadd.f32 %v5977, %v6185
    %6187 = vmatmul.f32.gmra.mxu0 %v4808
    %v6188 = vpop.f32.mrf.mxu0
    %v6189 = vadd.f32 %v5980, %v6188
    %6190 = vmatmul.f32.gmra.mxu0 %v4809
    %v6191 = vpop.f32.mrf.mxu0
    %v6192 = vadd.f32 %v5983, %v6191
    %6193 = vmatmul.f32.gmra.mxu0 %v4810
    %v6194 = vpop.f32.mrf.mxu0
    %v6195 = vadd.f32 %v5986, %v6194
    %6196 = vmatmul.f32.gmra.mxu0 %v4811
    %v6197 = vpop.f32.mrf.mxu0
    %v6198 = vadd.f32 %v5989, %v6197
    %6199 = vmatmul.f32.gmra.mxu0 %v4812
    %v6200 = vpop.f32.mrf.mxu0
    %v6201 = vadd.f32 %v5992, %v6200
    %6202 = vmatmul.f32.gmra.mxu0 %v4813
    %v6203 = vpop.f32.mrf.mxu0
    %v6204 = vadd.f32 %v5995, %v6203
    %6205 = vmatmul.f32.gmra.mxu0 %v4814
    %v6206 = vpop.f32.mrf.mxu0
    %v6207 = vadd.f32 %v5998, %v6206
    %6208 = vmatmul.f32.gmra.mxu0 %v4815
    %v6209 = vpop.f32.mrf.mxu0
    %v6210 = vadd.f32 %v6001, %v6209
    %6211 = vmatmul.f32.gmra.mxu0 %v4816
    %v6212 = vpop.f32.mrf.mxu0
    %v6213 = vadd.f32 %v6004, %v6212
    %6214 = vmatmul.f32.gmra.mxu0 %v4817
    %v6215 = vpop.f32.mrf.mxu0
    %v6216 = vadd.f32 %v6007, %v6215
    %6217 = vmatmul.f32.gmra.mxu0 %v4818
    %v6218 = vpop.f32.mrf.mxu0
    %v6219 = vadd.f32 %v6010, %v6218
    %6220 = vmatmul.f32.gmra.mxu0 %v4819
    %v6221 = vpop.f32.mrf.mxu0
    %v6222 = vadd.f32 %v6013, %v6221
    %6223 = vmatmul.f32.gmra.mxu0 %v4820
    %v6224 = vpop.f32.mrf.mxu0
    %v6225 = vadd.f32 %v6016, %v6224
    %6226 = vmatmul.f32.gmra.mxu0 %v4821
    %v6227 = vpop.f32.mrf.mxu0
    %v6228 = vadd.f32 %v6019, %v6227
    %6229 = vmatmul.f32.gmra.mxu0 %v4822
    %v6230 = vpop.f32.mrf.mxu0
    %v6231 = vadd.f32 %v6022, %v6230
    %6232 = vmatmul.f32.gmra.mxu0 %v4823
    %v6233 = vpop.f32.mrf.mxu0
    %v6234 = vadd.f32 %v6025, %v6233
    %6235 = vmatmul.f32.gmra.mxu0 %v4824
    %v6236 = vpop.f32.mrf.mxu0
    %v6237 = vadd.f32 %v6028, %v6236
    %6238 = vmatmul.f32.gmra.mxu0 %v4825
    %v6239 = vpop.f32.mrf.mxu0
    %v6240 = vadd.f32 %v6031, %v6239
    %6241 = vmatmul.f32.gmra.mxu0 %v4826
    %v6242 = vpop.f32.mrf.mxu0
    %v6243 = vadd.f32 %v6034, %v6242
    %6244 = vmatmul.f32.gmra.mxu0 %v4827
    %v6245 = vpop.f32.mrf.mxu0
    %v6246 = vadd.f32 %v6037, %v6245
    %6247 = vmatmul.f32.gmra.mxu0 %v4828
    %v6248 = vpop.f32.mrf.mxu0
    %v6249 = vadd.f32 %v6040, %v6248
    %6250 = vmatmul.f32.gmra.mxu0 %v4829
    %v6251 = vpop.f32.mrf.mxu0
    %v6252 = vadd.f32 %v6043, %v6251
    %6253 = vmatmul.f32.gmra.mxu0 %v4830
    %v6254 = vpop.f32.mrf.mxu0
    %v6255 = vadd.f32 %v6046, %v6254
    %6256 = vmatmul.f32.gmra.mxu0 %v4831
    %v6257 = vpop.f32.mrf.mxu0
    %v6258 = vadd.f32 %v6049, %v6257
    %6259 = vmatmul.f32.gmra.mxu0 %v4832
    %v6260 = vpop.f32.mrf.mxu0
    %v6261 = vadd.f32 %v6052, %v6260
    %6262 = vmatmul.f32.gmra.mxu0 %v4833
    %v6263 = vpop.f32.mrf.mxu0
    %v6264 = vadd.f32 %v6055, %v6263
    %6265 = vmatmul.f32.gmra.mxu0 %v4834
    %v6266 = vpop.f32.mrf.mxu0
    %v6267 = vadd.f32 %v6058, %v6266
    %6268 = vmatmul.f32.gmra.mxu0 %v4835
    %v6269 = vpop.f32.mrf.mxu0
    %v6270 = vadd.f32 %v6061, %v6269
    %6271 = vmatmul.f32.gmra.mxu0 %v4836
    %v6272 = vpop.f32.mrf.mxu0
    %v6273 = vadd.f32 %v6064, %v6272
    %6274 = vmatmul.f32.gmra.mxu0 %v4837
    %v6275 = vpop.f32.mrf.mxu0
    %v6276 = vadd.f32 %v6067, %v6275
    %6277 = vmatmul.f32.gmra.mxu0 %v4838
    %v6278 = vpop.f32.mrf.mxu0
    %v6279 = vadd.f32 %v6070, %v6278
    %6280 = vmatmul.f32.gmra.mxu0 %v4839
    %v6281 = vpop.f32.mrf.mxu0
    %v6282 = vadd.f32 %v6073, %v6281
    %6283 = vmatmul.f32.gmra.mxu0 %v4840
    %v6284 = vpop.f32.mrf.mxu0
    %v6285 = vadd.f32 %v6076, %v6284
    %6286 = vdwg.mxu0
    %6287 = vmatpush.msra.mxu0 %v5193
    %6288 = vmatpush.msra.mxu0 %v5192
    %6289 = vmatpush.msra.mxu0 %v5191
    %6290 = vmatpush.msra.mxu0 %v5190
    %6291 = vmatpush.msra.mxu0 %v5189
    %6292 = vmatpush.msra.mxu0 %v5188
    %6293 = vmatpush.msra.mxu0 %v5187
    %6294 = vmatpush.msra.mxu0 %v5186
    %6295 = vmatpush.msra.mxu0 %v5185
    %6296 = vmatpush.msra.mxu0 %v5184
    %6297 = vmatpush.msra.mxu0 %v5183
    %6298 = vmatpush.msra.mxu0 %v5182
    %6299 = vmatpush.msra.mxu0 %v5181
    %6300 = vmatpush.msra.mxu0 %v5180
    %6301 = vmatpush.msra.mxu0 %v5179
    %6302 = vmatpush.msra.mxu0 %v5178
    %6303 = vmatmul.f32.gmra.mxu0 %v4841
    %v6304 = vpop.f32.mrf.mxu0
    %v6305 = vadd.f32 %v6096, %v6304
    %6306 = vmatmul.f32.gmra.mxu0 %v4842
    %v6307 = vpop.f32.mrf.mxu0
    %v6308 = vadd.f32 %v6099, %v6307
    %6309 = vmatmul.f32.gmra.mxu0 %v4843
    %v6310 = vpop.f32.mrf.mxu0
    %v6311 = vadd.f32 %v6102, %v6310
    %6312 = vmatmul.f32.gmra.mxu0 %v4844
    %v6313 = vpop.f32.mrf.mxu0
    %v6314 = vadd.f32 %v6105, %v6313
    %6315 = vmatmul.f32.gmra.mxu0 %v4845
    %v6316 = vpop.f32.mrf.mxu0
    %v6317 = vadd.f32 %v6108, %v6316
    %6318 = vmatmul.f32.gmra.mxu0 %v4846
    %v6319 = vpop.f32.mrf.mxu0
    %v6320 = vadd.f32 %v6111, %v6319
    %6321 = vmatmul.f32.gmra.mxu0 %v4847
    %v6322 = vpop.f32.mrf.mxu0
    %v6323 = vadd.f32 %v6114, %v6322
    %6324 = vmatmul.f32.gmra.mxu0 %v4848
    %v6325 = vpop.f32.mrf.mxu0
    %v6326 = vadd.f32 %v6117, %v6325
    %6327 = vmatmul.f32.gmra.mxu0 %v4849
    %v6328 = vpop.f32.mrf.mxu0
    %v6329 = vadd.f32 %v6120, %v6328
    %6330 = vmatmul.f32.gmra.mxu0 %v4850
    %v6331 = vpop.f32.mrf.mxu0
    %v6332 = vadd.f32 %v6123, %v6331
    %6333 = vmatmul.f32.gmra.mxu0 %v4851
    %v6334 = vpop.f32.mrf.mxu0
    %v6335 = vadd.f32 %v6126, %v6334
    %6336 = vmatmul.f32.gmra.mxu0 %v4852
    %v6337 = vpop.f32.mrf.mxu0
    %v6338 = vadd.f32 %v6129, %v6337
    %6339 = vmatmul.f32.gmra.mxu0 %v4853
    %v6340 = vpop.f32.mrf.mxu0
    %v6341 = vadd.f32 %v6132, %v6340
    %6342 = vmatmul.f32.gmra.mxu0 %v4854
    %v6343 = vpop.f32.mrf.mxu0
    %v6344 = vadd.f32 %v6135, %v6343
    %6345 = vmatmul.f32.gmra.mxu0 %v4855
    %v6346 = vpop.f32.mrf.mxu0
    %v6347 = vadd.f32 %v6138, %v6346
    %6348 = vmatmul.f32.gmra.mxu0 %v4856
    %v6349 = vpop.f32.mrf.mxu0
    %v6350 = vadd.f32 %v6141, %v6349
    %6351 = vmatmul.f32.gmra.mxu0 %v4857
    %v6352 = vpop.f32.mrf.mxu0
    %v6353 = vadd.f32 %v6144, %v6352
    %6354 = vmatmul.f32.gmra.mxu0 %v4858
    %v6355 = vpop.f32.mrf.mxu0
    %v6356 = vadd.f32 %v6147, %v6355
    %6357 = vmatmul.f32.gmra.mxu0 %v4859
    %v6358 = vpop.f32.mrf.mxu0
    %v6359 = vadd.f32 %v6150, %v6358
    %6360 = vmatmul.f32.gmra.mxu0 %v4860
    %v6361 = vpop.f32.mrf.mxu0
    %v6362 = vadd.f32 %v6153, %v6361
    %6363 = vmatmul.f32.gmra.mxu0 %v4861
    %v6364 = vpop.f32.mrf.mxu0
    %v6365 = vadd.f32 %v6156, %v6364
    %6366 = vmatmul.f32.gmra.mxu0 %v4862
    %v6367 = vpop.f32.mrf.mxu0
    %v6368 = vadd.f32 %v6159, %v6367
    %6369 = vmatmul.f32.gmra.mxu0 %v4863
    %v6370 = vpop.f32.mrf.mxu0
    %v6371 = vadd.f32 %v6162, %v6370
    %6372 = vmatmul.f32.gmra.mxu0 %v4864
    %v6373 = vpop.f32.mrf.mxu0
    %v6374 = vadd.f32 %v6165, %v6373
    %6375 = vmatmul.f32.gmra.mxu0 %v4865
    %v6376 = vpop.f32.mrf.mxu0
    %v6377 = vadd.f32 %v6168, %v6376
    %6378 = vmatmul.f32.gmra.mxu0 %v4866
    %v6379 = vpop.f32.mrf.mxu0
    %v6380 = vadd.f32 %v6171, %v6379
    %6381 = vmatmul.f32.gmra.mxu0 %v4867
    %v6382 = vpop.f32.mrf.mxu0
    %v6383 = vadd.f32 %v6174, %v6382
    %6384 = vmatmul.f32.gmra.mxu0 %v4868
    %v6385 = vpop.f32.mrf.mxu0
    %v6386 = vadd.f32 %v6177, %v6385
    %6387 = vmatmul.f32.gmra.mxu0 %v4869
    %v6388 = vpop.f32.mrf.mxu0
    %v6389 = vadd.f32 %v6180, %v6388
    %6390 = vmatmul.f32.gmra.mxu0 %v4870
    %v6391 = vpop.f32.mrf.mxu0
    %v6392 = vadd.f32 %v6183, %v6391
    %6393 = vmatmul.f32.gmra.mxu0 %v4871
    %v6394 = vpop.f32.mrf.mxu0
    %v6395 = vadd.f32 %v6186, %v6394
    %6396 = vmatmul.f32.gmra.mxu0 %v4872
    %v6397 = vpop.f32.mrf.mxu0
    %v6398 = vadd.f32 %v6189, %v6397
    %6399 = vmatmul.f32.gmra.mxu0 %v4873
    %v6400 = vpop.f32.mrf.mxu0
    %v6401 = vadd.f32 %v6192, %v6400
    %6402 = vmatmul.f32.gmra.mxu0 %v4874
    %v6403 = vpop.f32.mrf.mxu0
    %v6404 = vadd.f32 %v6195, %v6403
    %6405 = vmatmul.f32.gmra.mxu0 %v4875
    %v6406 = vpop.f32.mrf.mxu0
    %v6407 = vadd.f32 %v6198, %v6406
    %6408 = vmatmul.f32.gmra.mxu0 %v4876
    %v6409 = vpop.f32.mrf.mxu0
    %v6410 = vadd.f32 %v6201, %v6409
    %6411 = vmatmul.f32.gmra.mxu0 %v4877
    %v6412 = vpop.f32.mrf.mxu0
    %v6413 = vadd.f32 %v6204, %v6412
    %6414 = vmatmul.f32.gmra.mxu0 %v4878
    %v6415 = vpop.f32.mrf.mxu0
    %v6416 = vadd.f32 %v6207, %v6415
    %6417 = vmatmul.f32.gmra.mxu0 %v4879
    %v6418 = vpop.f32.mrf.mxu0
    %v6419 = vadd.f32 %v6210, %v6418
    %6420 = vmatmul.f32.gmra.mxu0 %v4880
    %v6421 = vpop.f32.mrf.mxu0
    %v6422 = vadd.f32 %v6213, %v6421
    %6423 = vmatmul.f32.gmra.mxu0 %v4881
    %v6424 = vpop.f32.mrf.mxu0
    %v6425 = vadd.f32 %v6216, %v6424
    %6426 = vmatmul.f32.gmra.mxu0 %v4882
    %v6427 = vpop.f32.mrf.mxu0
    %v6428 = vadd.f32 %v6219, %v6427
    %6429 = vmatmul.f32.gmra.mxu0 %v4883
    %v6430 = vpop.f32.mrf.mxu0
    %v6431 = vadd.f32 %v6222, %v6430
    %6432 = vmatmul.f32.gmra.mxu0 %v4884
    %v6433 = vpop.f32.mrf.mxu0
    %v6434 = vadd.f32 %v6225, %v6433
    %6435 = vmatmul.f32.gmra.mxu0 %v4885
    %v6436 = vpop.f32.mrf.mxu0
    %v6437 = vadd.f32 %v6228, %v6436
    %6438 = vmatmul.f32.gmra.mxu0 %v4886
    %v6439 = vpop.f32.mrf.mxu0
    %v6440 = vadd.f32 %v6231, %v6439
    %6441 = vmatmul.f32.gmra.mxu0 %v4887
    %v6442 = vpop.f32.mrf.mxu0
    %v6443 = vadd.f32 %v6234, %v6442
    %6444 = vmatmul.f32.gmra.mxu0 %v4888
    %v6445 = vpop.f32.mrf.mxu0
    %v6446 = vadd.f32 %v6237, %v6445
    %6447 = vmatmul.f32.gmra.mxu0 %v4889
    %v6448 = vpop.f32.mrf.mxu0
    %v6449 = vadd.f32 %v6240, %v6448
    %6450 = vmatmul.f32.gmra.mxu0 %v4890
    %v6451 = vpop.f32.mrf.mxu0
    %v6452 = vadd.f32 %v6243, %v6451
    %6453 = vmatmul.f32.gmra.mxu0 %v4891
    %v6454 = vpop.f32.mrf.mxu0
    %v6455 = vadd.f32 %v6246, %v6454
    %6456 = vmatmul.f32.gmra.mxu0 %v4892
    %v6457 = vpop.f32.mrf.mxu0
    %v6458 = vadd.f32 %v6249, %v6457
    %6459 = vmatmul.f32.gmra.mxu0 %v4893
    %v6460 = vpop.f32.mrf.mxu0
    %v6461 = vadd.f32 %v6252, %v6460
    %6462 = vmatmul.f32.gmra.mxu0 %v4894
    %v6463 = vpop.f32.mrf.mxu0
    %v6464 = vadd.f32 %v6255, %v6463
    %6465 = vmatmul.f32.gmra.mxu0 %v4895
    %v6466 = vpop.f32.mrf.mxu0
    %v6467 = vadd.f32 %v6258, %v6466
    %6468 = vmatmul.f32.gmra.mxu0 %v4896
    %v6469 = vpop.f32.mrf.mxu0
    %v6470 = vadd.f32 %v6261, %v6469
    %6471 = vmatmul.f32.gmra.mxu0 %v4897
    %v6472 = vpop.f32.mrf.mxu0
    %v6473 = vadd.f32 %v6264, %v6472
    %6474 = vmatmul.f32.gmra.mxu0 %v4898
    %v6475 = vpop.f32.mrf.mxu0
    %v6476 = vadd.f32 %v6267, %v6475
    %6477 = vmatmul.f32.gmra.mxu0 %v4899
    %v6478 = vpop.f32.mrf.mxu0
    %v6479 = vadd.f32 %v6270, %v6478
    %6480 = vmatmul.f32.gmra.mxu0 %v4900
    %v6481 = vpop.f32.mrf.mxu0
    %v6482 = vadd.f32 %v6273, %v6481
    %6483 = vmatmul.f32.gmra.mxu0 %v4901
    %v6484 = vpop.f32.mrf.mxu0
    %v6485 = vadd.f32 %v6276, %v6484
    %6486 = vmatmul.f32.gmra.mxu0 %v4902
    %v6487 = vpop.f32.mrf.mxu0
    %v6488 = vadd.f32 %v6279, %v6487
    %6489 = vmatmul.f32.gmra.mxu0 %v4903
    %v6490 = vpop.f32.mrf.mxu0
    %v6491 = vadd.f32 %v6282, %v6490
    %6492 = vmatmul.f32.gmra.mxu0 %v4904
    %v6493 = vpop.f32.mrf.mxu0
    %v6494 = vadd.f32 %v6285, %v6493
    %6495 = vdwg.mxu0
    %6496 = vmatpush.msra.mxu0 %v5209
    %6497 = vmatpush.msra.mxu0 %v5208
    %6498 = vmatpush.msra.mxu0 %v5207
    %6499 = vmatpush.msra.mxu0 %v5206
    %6500 = vmatpush.msra.mxu0 %v5205
    %6501 = vmatpush.msra.mxu0 %v5204
    %6502 = vmatpush.msra.mxu0 %v5203
    %6503 = vmatpush.msra.mxu0 %v5202
    %6504 = vmatpush.msra.mxu0 %v5201
    %6505 = vmatpush.msra.mxu0 %v5200
    %6506 = vmatpush.msra.mxu0 %v5199
    %6507 = vmatpush.msra.mxu0 %v5198
    %6508 = vmatpush.msra.mxu0 %v5197
    %6509 = vmatpush.msra.mxu0 %v5196
    %6510 = vmatpush.msra.mxu0 %v5195
    %6511 = vmatpush.msra.mxu0 %v5194
    %6512 = vmatmul.f32.gmra.mxu0 %v4906
    %v6513 = vpop.f32.mrf.mxu0
    %v6514 = vadd.f32 %v6305, %v6513
    %6515 = vmatmul.f32.gmra.mxu0 %v4907
    %v6516 = vpop.f32.mrf.mxu0
    %v6517 = vadd.f32 %v6308, %v6516
    %6518 = vmatmul.f32.gmra.mxu0 %v4908
    %v6519 = vpop.f32.mrf.mxu0
    %v6520 = vadd.f32 %v6311, %v6519
    %6521 = vmatmul.f32.gmra.mxu0 %v4909
    %v6522 = vpop.f32.mrf.mxu0
    %v6523 = vadd.f32 %v6314, %v6522
    %6524 = vmatmul.f32.gmra.mxu0 %v4910
    %v6525 = vpop.f32.mrf.mxu0
    %v6526 = vadd.f32 %v6317, %v6525
    %6527 = vmatmul.f32.gmra.mxu0 %v4911
    %v6528 = vpop.f32.mrf.mxu0
    %v6529 = vadd.f32 %v6320, %v6528
    %6530 = vmatmul.f32.gmra.mxu0 %v4912
    %v6531 = vpop.f32.mrf.mxu0
    %v6532 = vadd.f32 %v6323, %v6531
    %6533 = vmatmul.f32.gmra.mxu0 %v4913
    %v6534 = vpop.f32.mrf.mxu0
    %v6535 = vadd.f32 %v6326, %v6534
    %6536 = vmatmul.f32.gmra.mxu0 %v4914
    %v6537 = vpop.f32.mrf.mxu0
    %v6538 = vadd.f32 %v6329, %v6537
    %6539 = vmatmul.f32.gmra.mxu0 %v4915
    %v6540 = vpop.f32.mrf.mxu0
    %v6541 = vadd.f32 %v6332, %v6540
    %6542 = vmatmul.f32.gmra.mxu0 %v4916
    %v6543 = vpop.f32.mrf.mxu0
    %v6544 = vadd.f32 %v6335, %v6543
    %6545 = vmatmul.f32.gmra.mxu0 %v4917
    %v6546 = vpop.f32.mrf.mxu0
    %v6547 = vadd.f32 %v6338, %v6546
    %6548 = vmatmul.f32.gmra.mxu0 %v4918
    %v6549 = vpop.f32.mrf.mxu0
    %v6550 = vadd.f32 %v6341, %v6549
    %6551 = vmatmul.f32.gmra.mxu0 %v4919
    %v6552 = vpop.f32.mrf.mxu0
    %v6553 = vadd.f32 %v6344, %v6552
    %6554 = vmatmul.f32.gmra.mxu0 %v4920
    %v6555 = vpop.f32.mrf.mxu0
    %v6556 = vadd.f32 %v6347, %v6555
    %6557 = vmatmul.f32.gmra.mxu0 %v4921
    %v6558 = vpop.f32.mrf.mxu0
    %v6559 = vadd.f32 %v6350, %v6558
    %6560 = vmatmul.f32.gmra.mxu0 %v4922
    %v6561 = vpop.f32.mrf.mxu0
    %v6562 = vadd.f32 %v6353, %v6561
    %6563 = vmatmul.f32.gmra.mxu0 %v4923
    %v6564 = vpop.f32.mrf.mxu0
    %v6565 = vadd.f32 %v6356, %v6564
    %6566 = vmatmul.f32.gmra.mxu0 %v4924
    %v6567 = vpop.f32.mrf.mxu0
    %v6568 = vadd.f32 %v6359, %v6567
    %6569 = vmatmul.f32.gmra.mxu0 %v4925
    %v6570 = vpop.f32.mrf.mxu0
    %v6571 = vadd.f32 %v6362, %v6570
    %6572 = vmatmul.f32.gmra.mxu0 %v4926
    %v6573 = vpop.f32.mrf.mxu0
    %v6574 = vadd.f32 %v6365, %v6573
    %6575 = vmatmul.f32.gmra.mxu0 %v4927
    %v6576 = vpop.f32.mrf.mxu0
    %v6577 = vadd.f32 %v6368, %v6576
    %6578 = vmatmul.f32.gmra.mxu0 %v4928
    %v6579 = vpop.f32.mrf.mxu0
    %v6580 = vadd.f32 %v6371, %v6579
    %6581 = vmatmul.f32.gmra.mxu0 %v4929
    %v6582 = vpop.f32.mrf.mxu0
    %v6583 = vadd.f32 %v6374, %v6582
    %6584 = vmatmul.f32.gmra.mxu0 %v4930
    %v6585 = vpop.f32.mrf.mxu0
    %v6586 = vadd.f32 %v6377, %v6585
    %6587 = vmatmul.f32.gmra.mxu0 %v4931
    %v6588 = vpop.f32.mrf.mxu0
    %v6589 = vadd.f32 %v6380, %v6588
    %6590 = vmatmul.f32.gmra.mxu0 %v4932
    %v6591 = vpop.f32.mrf.mxu0
    %v6592 = vadd.f32 %v6383, %v6591
    %6593 = vmatmul.f32.gmra.mxu0 %v4933
    %v6594 = vpop.f32.mrf.mxu0
    %v6595 = vadd.f32 %v6386, %v6594
    %6596 = vmatmul.f32.gmra.mxu0 %v4934
    %v6597 = vpop.f32.mrf.mxu0
    %v6598 = vadd.f32 %v6389, %v6597
    %6599 = vmatmul.f32.gmra.mxu0 %v4935
    %v6600 = vpop.f32.mrf.mxu0
    %v6601 = vadd.f32 %v6392, %v6600
    %6602 = vmatmul.f32.gmra.mxu0 %v4936
    %v6603 = vpop.f32.mrf.mxu0
    %v6604 = vadd.f32 %v6395, %v6603
    %6605 = vmatmul.f32.gmra.mxu0 %v4937
    %v6606 = vpop.f32.mrf.mxu0
    %v6607 = vadd.f32 %v6398, %v6606
    %6608 = vmatmul.f32.gmra.mxu0 %v4938
    %v6609 = vpop.f32.mrf.mxu0
    %v6610 = vadd.f32 %v6401, %v6609
    %6611 = vmatmul.f32.gmra.mxu0 %v4939
    %v6612 = vpop.f32.mrf.mxu0
    %v6613 = vadd.f32 %v6404, %v6612
    %6614 = vmatmul.f32.gmra.mxu0 %v4940
    %v6615 = vpop.f32.mrf.mxu0
    %v6616 = vadd.f32 %v6407, %v6615
    %6617 = vmatmul.f32.gmra.mxu0 %v4941
    %v6618 = vpop.f32.mrf.mxu0
    %v6619 = vadd.f32 %v6410, %v6618
    %6620 = vmatmul.f32.gmra.mxu0 %v4942
    %v6621 = vpop.f32.mrf.mxu0
    %v6622 = vadd.f32 %v6413, %v6621
    %6623 = vmatmul.f32.gmra.mxu0 %v4943
    %v6624 = vpop.f32.mrf.mxu0
    %v6625 = vadd.f32 %v6416, %v6624
    %6626 = vmatmul.f32.gmra.mxu0 %v4944
    %v6627 = vpop.f32.mrf.mxu0
    %v6628 = vadd.f32 %v6419, %v6627
    %6629 = vmatmul.f32.gmra.mxu0 %v4945
    %v6630 = vpop.f32.mrf.mxu0
    %v6631 = vadd.f32 %v6422, %v6630
    %6632 = vmatmul.f32.gmra.mxu0 %v4946
    %v6633 = vpop.f32.mrf.mxu0
    %v6634 = vadd.f32 %v6425, %v6633
    %6635 = vmatmul.f32.gmra.mxu0 %v4947
    %v6636 = vpop.f32.mrf.mxu0
    %v6637 = vadd.f32 %v6428, %v6636
    %6638 = vmatmul.f32.gmra.mxu0 %v4948
    %v6639 = vpop.f32.mrf.mxu0
    %v6640 = vadd.f32 %v6431, %v6639
    %6641 = vmatmul.f32.gmra.mxu0 %v4949
    %v6642 = vpop.f32.mrf.mxu0
    %v6643 = vadd.f32 %v6434, %v6642
    %6644 = vmatmul.f32.gmra.mxu0 %v4950
    %v6645 = vpop.f32.mrf.mxu0
    %v6646 = vadd.f32 %v6437, %v6645
    %6647 = vmatmul.f32.gmra.mxu0 %v4951
    %v6648 = vpop.f32.mrf.mxu0
    %v6649 = vadd.f32 %v6440, %v6648
    %6650 = vmatmul.f32.gmra.mxu0 %v4952
    %v6651 = vpop.f32.mrf.mxu0
    %v6652 = vadd.f32 %v6443, %v6651
    %6653 = vmatmul.f32.gmra.mxu0 %v4953
    %v6654 = vpop.f32.mrf.mxu0
    %v6655 = vadd.f32 %v6446, %v6654
    %6656 = vmatmul.f32.gmra.mxu0 %v4954
    %v6657 = vpop.f32.mrf.mxu0
    %v6658 = vadd.f32 %v6449, %v6657
    %6659 = vmatmul.f32.gmra.mxu0 %v4955
    %v6660 = vpop.f32.mrf.mxu0
    %v6661 = vadd.f32 %v6452, %v6660
    %6662 = vmatmul.f32.gmra.mxu0 %v4956
    %v6663 = vpop.f32.mrf.mxu0
    %v6664 = vadd.f32 %v6455, %v6663
    %6665 = vmatmul.f32.gmra.mxu0 %v4957
    %v6666 = vpop.f32.mrf.mxu0
    %v6667 = vadd.f32 %v6458, %v6666
    %6668 = vmatmul.f32.gmra.mxu0 %v4958
    %v6669 = vpop.f32.mrf.mxu0
    %v6670 = vadd.f32 %v6461, %v6669
    %6671 = vmatmul.f32.gmra.mxu0 %v4959
    %v6672 = vpop.f32.mrf.mxu0
    %v6673 = vadd.f32 %v6464, %v6672
    %6674 = vmatmul.f32.gmra.mxu0 %v4960
    %v6675 = vpop.f32.mrf.mxu0
    %v6676 = vadd.f32 %v6467, %v6675
    %6677 = vmatmul.f32.gmra.mxu0 %v4961
    %v6678 = vpop.f32.mrf.mxu0
    %v6679 = vadd.f32 %v6470, %v6678
    %6680 = vmatmul.f32.gmra.mxu0 %v4962
    %v6681 = vpop.f32.mrf.mxu0
    %v6682 = vadd.f32 %v6473, %v6681
    %6683 = vmatmul.f32.gmra.mxu0 %v4963
    %v6684 = vpop.f32.mrf.mxu0
    %v6685 = vadd.f32 %v6476, %v6684
    %6686 = vmatmul.f32.gmra.mxu0 %v4964
    %v6687 = vpop.f32.mrf.mxu0
    %v6688 = vadd.f32 %v6479, %v6687
    %6689 = vmatmul.f32.gmra.mxu0 %v4965
    %v6690 = vpop.f32.mrf.mxu0
    %v6691 = vadd.f32 %v6482, %v6690
    %6692 = vmatmul.f32.gmra.mxu0 %v4966
    %v6693 = vpop.f32.mrf.mxu0
    %v6694 = vadd.f32 %v6485, %v6693
    %6695 = vmatmul.f32.gmra.mxu0 %v4967
    %v6696 = vpop.f32.mrf.mxu0
    %v6697 = vadd.f32 %v6488, %v6696
    %6698 = vmatmul.f32.gmra.mxu0 %v4968
    %v6699 = vpop.f32.mrf.mxu0
    %v6700 = vadd.f32 %v6491, %v6699
    %6701 = vmatmul.f32.gmra.mxu0 %v4969
    %v6702 = vpop.f32.mrf.mxu0
    %v6703 = vadd.f32 %v6494, %v6702
    %6704 = vdwg.mxu0
    %6705 = vmatpush.msra.mxu0 %v5225
    %6706 = vmatpush.msra.mxu0 %v5224
    %6707 = vmatpush.msra.mxu0 %v5223
    %6708 = vmatpush.msra.mxu0 %v5222
    %6709 = vmatpush.msra.mxu0 %v5221
    %6710 = vmatpush.msra.mxu0 %v5220
    %6711 = vmatpush.msra.mxu0 %v5219
    %6712 = vmatpush.msra.mxu0 %v5218
    %6713 = vmatpush.msra.mxu0 %v5217
    %6714 = vmatpush.msra.mxu0 %v5216
    %6715 = vmatpush.msra.mxu0 %v5215
    %6716 = vmatpush.msra.mxu0 %v5214
    %6717 = vmatpush.msra.mxu0 %v5213
    %6718 = vmatpush.msra.mxu0 %v5212
    %6719 = vmatpush.msra.mxu0 %v5211
    %6720 = vmatpush.msra.mxu0 %v5210
    %6721 = vmatmul.f32.gmra.mxu0 %v4970
    %v6722 = vpop.f32.mrf.mxu0
    %v6723 = vadd.f32 %v6514, %v6722
    %6724 = vmatmul.f32.gmra.mxu0 %v4971
    %v6725 = vpop.f32.mrf.mxu0
    %v6726 = vadd.f32 %v6517, %v6725
    %6727 = vmatmul.f32.gmra.mxu0 %v4972
    %v6728 = vpop.f32.mrf.mxu0
    %v6729 = vadd.f32 %v6520, %v6728
    %6730 = vmatmul.f32.gmra.mxu0 %v4973
    %v6731 = vpop.f32.mrf.mxu0
    %v6732 = vadd.f32 %v6523, %v6731
    %6733 = vmatmul.f32.gmra.mxu0 %v4974
    %v6734 = vpop.f32.mrf.mxu0
    %v6735 = vadd.f32 %v6526, %v6734
    %6736 = vmatmul.f32.gmra.mxu0 %v4975
    %v6737 = vpop.f32.mrf.mxu0
    %v6738 = vadd.f32 %v6529, %v6737
    %6739 = vmatmul.f32.gmra.mxu0 %v4976
    %v6740 = vpop.f32.mrf.mxu0
    %v6741 = vadd.f32 %v6532, %v6740
    %6742 = vmatmul.f32.gmra.mxu0 %v4977
    %v6743 = vpop.f32.mrf.mxu0
    %v6744 = vadd.f32 %v6535, %v6743
    %6745 = vmatmul.f32.gmra.mxu0 %v4978
    %v6746 = vpop.f32.mrf.mxu0
    %v6747 = vadd.f32 %v6538, %v6746
    %6748 = vmatmul.f32.gmra.mxu0 %v4979
    %v6749 = vpop.f32.mrf.mxu0
    %v6750 = vadd.f32 %v6541, %v6749
    %6751 = vmatmul.f32.gmra.mxu0 %v4980
    %v6752 = vpop.f32.mrf.mxu0
    %v6753 = vadd.f32 %v6544, %v6752
    %6754 = vmatmul.f32.gmra.mxu0 %v4981
    %v6755 = vpop.f32.mrf.mxu0
    %v6756 = vadd.f32 %v6547, %v6755
    %6757 = vmatmul.f32.gmra.mxu0 %v4982
    %v6758 = vpop.f32.mrf.mxu0
    %v6759 = vadd.f32 %v6550, %v6758
    %6760 = vmatmul.f32.gmra.mxu0 %v4983
    %v6761 = vpop.f32.mrf.mxu0
    %v6762 = vadd.f32 %v6553, %v6761
    %6763 = vmatmul.f32.gmra.mxu0 %v4984
    %v6764 = vpop.f32.mrf.mxu0
    %v6765 = vadd.f32 %v6556, %v6764
    %6766 = vmatmul.f32.gmra.mxu0 %v4985
    %v6767 = vpop.f32.mrf.mxu0
    %v6768 = vadd.f32 %v6559, %v6767
    %6769 = vmatmul.f32.gmra.mxu0 %v4986
    %v6770 = vpop.f32.mrf.mxu0
    %v6771 = vadd.f32 %v6562, %v6770
    %6772 = vmatmul.f32.gmra.mxu0 %v4987
    %v6773 = vpop.f32.mrf.mxu0
    %v6774 = vadd.f32 %v6565, %v6773
    %6775 = vmatmul.f32.gmra.mxu0 %v4988
    %v6776 = vpop.f32.mrf.mxu0
    %v6777 = vadd.f32 %v6568, %v6776
    %6778 = vmatmul.f32.gmra.mxu0 %v4989
    %v6779 = vpop.f32.mrf.mxu0
    %v6780 = vadd.f32 %v6571, %v6779
    %6781 = vmatmul.f32.gmra.mxu0 %v4990
    %v6782 = vpop.f32.mrf.mxu0
    %v6783 = vadd.f32 %v6574, %v6782
    %6784 = vmatmul.f32.gmra.mxu0 %v4991
    %v6785 = vpop.f32.mrf.mxu0
    %v6786 = vadd.f32 %v6577, %v6785
    %6787 = vmatmul.f32.gmra.mxu0 %v4992
    %v6788 = vpop.f32.mrf.mxu0
    %v6789 = vadd.f32 %v6580, %v6788
    %6790 = vmatmul.f32.gmra.mxu0 %v4993
    %v6791 = vpop.f32.mrf.mxu0
    %v6792 = vadd.f32 %v6583, %v6791
    %6793 = vmatmul.f32.gmra.mxu0 %v4994
    %v6794 = vpop.f32.mrf.mxu0
    %v6795 = vadd.f32 %v6586, %v6794
    %6796 = vmatmul.f32.gmra.mxu0 %v4995
    %v6797 = vpop.f32.mrf.mxu0
    %v6798 = vadd.f32 %v6589, %v6797
    %6799 = vmatmul.f32.gmra.mxu0 %v4996
    %v6800 = vpop.f32.mrf.mxu0
    %v6801 = vadd.f32 %v6592, %v6800
    %6802 = vmatmul.f32.gmra.mxu0 %v4997
    %v6803 = vpop.f32.mrf.mxu0
    %v6804 = vadd.f32 %v6595, %v6803
    %6805 = vmatmul.f32.gmra.mxu0 %v4998
    %v6806 = vpop.f32.mrf.mxu0
    %v6807 = vadd.f32 %v6598, %v6806
    %6808 = vmatmul.f32.gmra.mxu0 %v4999
    %v6809 = vpop.f32.mrf.mxu0
    %v6810 = vadd.f32 %v6601, %v6809
    %6811 = vmatmul.f32.gmra.mxu0 %v5000
    %v6812 = vpop.f32.mrf.mxu0
    %v6813 = vadd.f32 %v6604, %v6812
    %6814 = vmatmul.f32.gmra.mxu0 %v5001
    %v6815 = vpop.f32.mrf.mxu0
    %v6816 = vadd.f32 %v6607, %v6815
    %6817 = vmatmul.f32.gmra.mxu0 %v5002
    %v6818 = vpop.f32.mrf.mxu0
    %v6819 = vadd.f32 %v6610, %v6818
    %6820 = vmatmul.f32.gmra.mxu0 %v5003
    %v6821 = vpop.f32.mrf.mxu0
    %v6822 = vadd.f32 %v6613, %v6821
    %6823 = vmatmul.f32.gmra.mxu0 %v5004
    %v6824 = vpop.f32.mrf.mxu0
    %v6825 = vadd.f32 %v6616, %v6824
    %6826 = vmatmul.f32.gmra.mxu0 %v5005
    %v6827 = vpop.f32.mrf.mxu0
    %v6828 = vadd.f32 %v6619, %v6827
    %6829 = vmatmul.f32.gmra.mxu0 %v5006
    %v6830 = vpop.f32.mrf.mxu0
    %v6831 = vadd.f32 %v6622, %v6830
    %6832 = vmatmul.f32.gmra.mxu0 %v5007
    %v6833 = vpop.f32.mrf.mxu0
    %v6834 = vadd.f32 %v6625, %v6833
    %6835 = vmatmul.f32.gmra.mxu0 %v5008
    %v6836 = vpop.f32.mrf.mxu0
    %v6837 = vadd.f32 %v6628, %v6836
    %6838 = vmatmul.f32.gmra.mxu0 %v5009
    %v6839 = vpop.f32.mrf.mxu0
    %v6840 = vadd.f32 %v6631, %v6839
    %6841 = vmatmul.f32.gmra.mxu0 %v5010
    %v6842 = vpop.f32.mrf.mxu0
    %v6843 = vadd.f32 %v6634, %v6842
    %6844 = vmatmul.f32.gmra.mxu0 %v5011
    %v6845 = vpop.f32.mrf.mxu0
    %v6846 = vadd.f32 %v6637, %v6845
    %6847 = vmatmul.f32.gmra.mxu0 %v5012
    %v6848 = vpop.f32.mrf.mxu0
    %v6849 = vadd.f32 %v6640, %v6848
    %6850 = vmatmul.f32.gmra.mxu0 %v5013
    %v6851 = vpop.f32.mrf.mxu0
    %v6852 = vadd.f32 %v6643, %v6851
    %6853 = vmatmul.f32.gmra.mxu0 %v5014
    %v6854 = vpop.f32.mrf.mxu0
    %v6855 = vadd.f32 %v6646, %v6854
    %6856 = vmatmul.f32.gmra.mxu0 %v5015
    %v6857 = vpop.f32.mrf.mxu0
    %v6858 = vadd.f32 %v6649, %v6857
    %6859 = vmatmul.f32.gmra.mxu0 %v5016
    %v6860 = vpop.f32.mrf.mxu0
    %v6861 = vadd.f32 %v6652, %v6860
    %6862 = vmatmul.f32.gmra.mxu0 %v5017
    %v6863 = vpop.f32.mrf.mxu0
    %v6864 = vadd.f32 %v6655, %v6863
    %6865 = vmatmul.f32.gmra.mxu0 %v5018
    %v6866 = vpop.f32.mrf.mxu0
    %v6867 = vadd.f32 %v6658, %v6866
    %6868 = vmatmul.f32.gmra.mxu0 %v5019
    %v6869 = vpop.f32.mrf.mxu0
    %v6870 = vadd.f32 %v6661, %v6869
    %6871 = vmatmul.f32.gmra.mxu0 %v5020
    %v6872 = vpop.f32.mrf.mxu0
    %v6873 = vadd.f32 %v6664, %v6872
    %6874 = vmatmul.f32.gmra.mxu0 %v5021
    %v6875 = vpop.f32.mrf.mxu0
    %v6876 = vadd.f32 %v6667, %v6875
    %6877 = vmatmul.f32.gmra.mxu0 %v5022
    %v6878 = vpop.f32.mrf.mxu0
    %v6879 = vadd.f32 %v6670, %v6878
    %6880 = vmatmul.f32.gmra.mxu0 %v5023
    %v6881 = vpop.f32.mrf.mxu0
    %v6882 = vadd.f32 %v6673, %v6881
    %6883 = vmatmul.f32.gmra.mxu0 %v5024
    %v6884 = vpop.f32.mrf.mxu0
    %v6885 = vadd.f32 %v6676, %v6884
    %6886 = vmatmul.f32.gmra.mxu0 %v5025
    %v6887 = vpop.f32.mrf.mxu0
    %v6888 = vadd.f32 %v6679, %v6887
    %6889 = vmatmul.f32.gmra.mxu0 %v5026
    %v6890 = vpop.f32.mrf.mxu0
    %v6891 = vadd.f32 %v6682, %v6890
    %6892 = vmatmul.f32.gmra.mxu0 %v5027
    %v6893 = vpop.f32.mrf.mxu0
    %v6894 = vadd.f32 %v6685, %v6893
    %6895 = vmatmul.f32.gmra.mxu0 %v5028
    %v6896 = vpop.f32.mrf.mxu0
    %v6897 = vadd.f32 %v6688, %v6896
    %6898 = vmatmul.f32.gmra.mxu0 %v5029
    %v6899 = vpop.f32.mrf.mxu0
    %v6900 = vadd.f32 %v6691, %v6899
    %6901 = vmatmul.f32.gmra.mxu0 %v5030
    %v6902 = vpop.f32.mrf.mxu0
    %v6903 = vadd.f32 %v6694, %v6902
    %6904 = vmatmul.f32.gmra.mxu0 %v5031
    %v6905 = vpop.f32.mrf.mxu0
    %v6906 = vadd.f32 %v6697, %v6905
    %6907 = vmatmul.f32.gmra.mxu0 %v5032
    %v6908 = vpop.f32.mrf.mxu0
    %v6909 = vadd.f32 %v6700, %v6908
    %6910 = vmatmul.f32.gmra.mxu0 %v5033
    %v6911 = vpop.f32.mrf.mxu0
    %v6912 = vadd.f32 %v6703, %v6911
    %6913 = vdwg.mxu0
    %6914 = vmatpush.msra.mxu0 %v5241
    %6915 = vmatpush.msra.mxu0 %v5240
    %6916 = vmatpush.msra.mxu0 %v5239
    %6917 = vmatpush.msra.mxu0 %v5238
    %6918 = vmatpush.msra.mxu0 %v5237
    %6919 = vmatpush.msra.mxu0 %v5236
    %6920 = vmatpush.msra.mxu0 %v5235
    %6921 = vmatpush.msra.mxu0 %v5234
    %6922 = vmatpush.msra.mxu0 %v5233
    %6923 = vmatpush.msra.mxu0 %v5232
    %6924 = vmatpush.msra.mxu0 %v5231
    %6925 = vmatpush.msra.mxu0 %v5230
    %6926 = vmatpush.msra.mxu0 %v5229
    %6927 = vmatpush.msra.mxu0 %v5228
    %6928 = vmatpush.msra.mxu0 %v5227
    %6929 = vmatpush.msra.mxu0 %v5226
    %6930 = vmatmul.f32.gmra.mxu0 %v5034
    %v6931 = vpop.f32.mrf.mxu0
    %v6932 = vadd.f32 %v6723, %v6931
    %6933 = vmatmul.f32.gmra.mxu0 %v5035
    %v6934 = vpop.f32.mrf.mxu0
    %v6935 = vadd.f32 %v6726, %v6934
    %6936 = vmatmul.f32.gmra.mxu0 %v5036
    %v6937 = vpop.f32.mrf.mxu0
    %v6938 = vadd.f32 %v6729, %v6937
    %6939 = vmatmul.f32.gmra.mxu0 %v5037
    %v6940 = vpop.f32.mrf.mxu0
    %v6941 = vadd.f32 %v6732, %v6940
    %6942 = vmatmul.f32.gmra.mxu0 %v5038
    %v6943 = vpop.f32.mrf.mxu0
    %v6944 = vadd.f32 %v6735, %v6943
    %6945 = vmatmul.f32.gmra.mxu0 %v5039
    %v6946 = vpop.f32.mrf.mxu0
    %v6947 = vadd.f32 %v6738, %v6946
    %6948 = vmatmul.f32.gmra.mxu0 %v5040
    %v6949 = vpop.f32.mrf.mxu0
    %v6950 = vadd.f32 %v6741, %v6949
    %6951 = vmatmul.f32.gmra.mxu0 %v5041
    %v6952 = vpop.f32.mrf.mxu0
    %v6953 = vadd.f32 %v6744, %v6952
    %6954 = vmatmul.f32.gmra.mxu0 %v5042
    %v6955 = vpop.f32.mrf.mxu0
    %v6956 = vadd.f32 %v6747, %v6955
    %6957 = vmatmul.f32.gmra.mxu0 %v5043
    %v6958 = vpop.f32.mrf.mxu0
    %v6959 = vadd.f32 %v6750, %v6958
    %6960 = vmatmul.f32.gmra.mxu0 %v5044
    %v6961 = vpop.f32.mrf.mxu0
    %v6962 = vadd.f32 %v6753, %v6961
    %6963 = vmatmul.f32.gmra.mxu0 %v5045
    %v6964 = vpop.f32.mrf.mxu0
    %v6965 = vadd.f32 %v6756, %v6964
    %6966 = vmatmul.f32.gmra.mxu0 %v5046
    %v6967 = vpop.f32.mrf.mxu0
    %v6968 = vadd.f32 %v6759, %v6967
    %6969 = vmatmul.f32.gmra.mxu0 %v5047
    %v6970 = vpop.f32.mrf.mxu0
    %v6971 = vadd.f32 %v6762, %v6970
    %6972 = vmatmul.f32.gmra.mxu0 %v5048
    %v6973 = vpop.f32.mrf.mxu0
    %v6974 = vadd.f32 %v6765, %v6973
    %6975 = vmatmul.f32.gmra.mxu0 %v5049
    %v6976 = vpop.f32.mrf.mxu0
    %v6977 = vadd.f32 %v6768, %v6976
    %6978 = vmatmul.f32.gmra.mxu0 %v5050
    %v6979 = vpop.f32.mrf.mxu0
    %v6980 = vadd.f32 %v6771, %v6979
    %6981 = vmatmul.f32.gmra.mxu0 %v5051
    %v6982 = vpop.f32.mrf.mxu0
    %v6983 = vadd.f32 %v6774, %v6982
    %6984 = vmatmul.f32.gmra.mxu0 %v5052
    %v6985 = vpop.f32.mrf.mxu0
    %v6986 = vadd.f32 %v6777, %v6985
    %6987 = vmatmul.f32.gmra.mxu0 %v5053
    %v6988 = vpop.f32.mrf.mxu0
    %v6989 = vadd.f32 %v6780, %v6988
    %6990 = vmatmul.f32.gmra.mxu0 %v5054
    %v6991 = vpop.f32.mrf.mxu0
    %v6992 = vadd.f32 %v6783, %v6991
    %6993 = vmatmul.f32.gmra.mxu0 %v5055
    %v6994 = vpop.f32.mrf.mxu0
    %v6995 = vadd.f32 %v6786, %v6994
    %6996 = vmatmul.f32.gmra.mxu0 %v5056
    %v6997 = vpop.f32.mrf.mxu0
    %v6998 = vadd.f32 %v6789, %v6997
    %6999 = vmatmul.f32.gmra.mxu0 %v5057
    %v7000 = vpop.f32.mrf.mxu0
    %v7001 = vadd.f32 %v6792, %v7000
    %7002 = vmatmul.f32.gmra.mxu0 %v5058
    %v7003 = vpop.f32.mrf.mxu0
    %v7004 = vadd.f32 %v6795, %v7003
    %7005 = vmatmul.f32.gmra.mxu0 %v5059
    %v7006 = vpop.f32.mrf.mxu0
    %v7007 = vadd.f32 %v6798, %v7006
    %7008 = vmatmul.f32.gmra.mxu0 %v5060
    %v7009 = vpop.f32.mrf.mxu0
    %v7010 = vadd.f32 %v6801, %v7009
    %7011 = vmatmul.f32.gmra.mxu0 %v5061
    %v7012 = vpop.f32.mrf.mxu0
    %v7013 = vadd.f32 %v6804, %v7012
    %7014 = vmatmul.f32.gmra.mxu0 %v5062
    %v7015 = vpop.f32.mrf.mxu0
    %v7016 = vadd.f32 %v6807, %v7015
    %7017 = vmatmul.f32.gmra.mxu0 %v5063
    %v7018 = vpop.f32.mrf.mxu0
    %v7019 = vadd.f32 %v6810, %v7018
    %7020 = vmatmul.f32.gmra.mxu0 %v5064
    %v7021 = vpop.f32.mrf.mxu0
    %v7022 = vadd.f32 %v6813, %v7021
    %7023 = vmatmul.f32.gmra.mxu0 %v5065
    %v7024 = vpop.f32.mrf.mxu0
    %v7025 = vadd.f32 %v6816, %v7024
    %7026 = vmatmul.f32.gmra.mxu0 %v5066
    %v7027 = vpop.f32.mrf.mxu0
    %v7028 = vadd.f32 %v6819, %v7027
    %7029 = vmatmul.f32.gmra.mxu0 %v5067
    %v7030 = vpop.f32.mrf.mxu0
    %v7031 = vadd.f32 %v6822, %v7030
    %7032 = vmatmul.f32.gmra.mxu0 %v5068
    %v7033 = vpop.f32.mrf.mxu0
    %v7034 = vadd.f32 %v6825, %v7033
    %7035 = vmatmul.f32.gmra.mxu0 %v5069
    %v7036 = vpop.f32.mrf.mxu0
    %v7037 = vadd.f32 %v6828, %v7036
    %7038 = vmatmul.f32.gmra.mxu0 %v5070
    %v7039 = vpop.f32.mrf.mxu0
    %v7040 = vadd.f32 %v6831, %v7039
    %7041 = vmatmul.f32.gmra.mxu0 %v5071
    %v7042 = vpop.f32.mrf.mxu0
    %v7043 = vadd.f32 %v6834, %v7042
    %7044 = vmatmul.f32.gmra.mxu0 %v5072
    %v7045 = vpop.f32.mrf.mxu0
    %v7046 = vadd.f32 %v6837, %v7045
    %7047 = vmatmul.f32.gmra.mxu0 %v5073
    %v7048 = vpop.f32.mrf.mxu0
    %v7049 = vadd.f32 %v6840, %v7048
    %7050 = vmatmul.f32.gmra.mxu0 %v5074
    %v7051 = vpop.f32.mrf.mxu0
    %v7052 = vadd.f32 %v6843, %v7051
    %7053 = vmatmul.f32.gmra.mxu0 %v5075
    %v7054 = vpop.f32.mrf.mxu0
    %v7055 = vadd.f32 %v6846, %v7054
    %7056 = vmatmul.f32.gmra.mxu0 %v5076
    %v7057 = vpop.f32.mrf.mxu0
    %v7058 = vadd.f32 %v6849, %v7057
    %7059 = vmatmul.f32.gmra.mxu0 %v5077
    %v7060 = vpop.f32.mrf.mxu0
    %v7061 = vadd.f32 %v6852, %v7060
    %7062 = vmatmul.f32.gmra.mxu0 %v5078
    %v7063 = vpop.f32.mrf.mxu0
    %v7064 = vadd.f32 %v6855, %v7063
    %7065 = vmatmul.f32.gmra.mxu0 %v5079
    %v7066 = vpop.f32.mrf.mxu0
    %v7067 = vadd.f32 %v6858, %v7066
    %7068 = vmatmul.f32.gmra.mxu0 %v5080
    %v7069 = vpop.f32.mrf.mxu0
    %v7070 = vadd.f32 %v6861, %v7069
    %7071 = vmatmul.f32.gmra.mxu0 %v5081
    %v7072 = vpop.f32.mrf.mxu0
    %v7073 = vadd.f32 %v6864, %v7072
    %7074 = vmatmul.f32.gmra.mxu0 %v5082
    %v7075 = vpop.f32.mrf.mxu0
    %v7076 = vadd.f32 %v6867, %v7075
    %7077 = vmatmul.f32.gmra.mxu0 %v5083
    %v7078 = vpop.f32.mrf.mxu0
    %v7079 = vadd.f32 %v6870, %v7078
    %7080 = vmatmul.f32.gmra.mxu0 %v5084
    %v7081 = vpop.f32.mrf.mxu0
    %v7082 = vadd.f32 %v6873, %v7081
    %7083 = vmatmul.f32.gmra.mxu0 %v5085
    %v7084 = vpop.f32.mrf.mxu0
    %v7085 = vadd.f32 %v6876, %v7084
    %7086 = vmatmul.f32.gmra.mxu0 %v5086
    %v7087 = vpop.f32.mrf.mxu0
    %v7088 = vadd.f32 %v6879, %v7087
    %7089 = vmatmul.f32.gmra.mxu0 %v5087
    %v7090 = vpop.f32.mrf.mxu0
    %v7091 = vadd.f32 %v6882, %v7090
    %7092 = vmatmul.f32.gmra.mxu0 %v5088
    %v7093 = vpop.f32.mrf.mxu0
    %v7094 = vadd.f32 %v6885, %v7093
    %7095 = vmatmul.f32.gmra.mxu0 %v5089
    %v7096 = vpop.f32.mrf.mxu0
    %v7097 = vadd.f32 %v6888, %v7096
    %7098 = vmatmul.f32.gmra.mxu0 %v5090
    %v7099 = vpop.f32.mrf.mxu0
    %v7100 = vadd.f32 %v6891, %v7099
    %7101 = vmatmul.f32.gmra.mxu0 %v5091
    %v7102 = vpop.f32.mrf.mxu0
    %v7103 = vadd.f32 %v6894, %v7102
    %7104 = vmatmul.f32.gmra.mxu0 %v5092
    %v7105 = vpop.f32.mrf.mxu0
    %v7106 = vadd.f32 %v6897, %v7105
    %7107 = vmatmul.f32.gmra.mxu0 %v5093
    %v7108 = vpop.f32.mrf.mxu0
    %v7109 = vadd.f32 %v6900, %v7108
    %7110 = vmatmul.f32.gmra.mxu0 %v5094
    %v7111 = vpop.f32.mrf.mxu0
    %v7112 = vadd.f32 %v6903, %v7111
    %7113 = vmatmul.f32.gmra.mxu0 %v5095
    %v7114 = vpop.f32.mrf.mxu0
    %v7115 = vadd.f32 %v6906, %v7114
    %7116 = vmatmul.f32.gmra.mxu0 %v5096
    %v7117 = vpop.f32.mrf.mxu0
    %v7118 = vadd.f32 %v6909, %v7117
    %7119 = vmatmul.f32.gmra.mxu0 %v5097
    %v7120 = vpop.f32.mrf.mxu0
    %v7121 = vadd.f32 %v6912, %v7120
    %7122 = vdwg.mxu0
    %v7123 = vadd.f32 %v6932, %v6935
    %v7124 = vadd.f32 %v7123, %v6938
    %v7125 = vadd.f32 %v7124, %v6941
    %v7126 = vadd.f32 %v7125, %v6944
    %v7127 = vadd.f32 %v7126, %v6947
    %v7128 = vadd.f32 %v7127, %v6950
    %v7129 = vadd.f32 %v7128, %v6953
    %v7130 = vadd.f32 %v7129, %v6956
    %v7131 = vadd.f32 %v7130, %v6959
    %v7132 = vadd.f32 %v7131, %v6962
    %v7133 = vadd.f32 %v7132, %v6965
    %v7134 = vadd.f32 %v7133, %v6968
    %v7135 = vadd.f32 %v7134, %v6971
    %v7136 = vadd.f32 %v7135, %v6974
    %v7137 = vadd.f32 %v7136, %v6977
    %v7138 = vadd.f32 %v7137, %v6980
    %v7139 = vadd.f32 %v7138, %v6983
    %v7140 = vadd.f32 %v7139, %v6986
    %v7141 = vadd.f32 %v7140, %v6989
    %v7142 = vadd.f32 %v7141, %v6992
    %v7143 = vadd.f32 %v7142, %v6995
    %v7144 = vadd.f32 %v7143, %v6998
    %v7145 = vadd.f32 %v7144, %v7001
    %v7146 = vadd.f32 %v7145, %v7004
    %v7147 = vadd.f32 %v7146, %v7007
    %v7148 = vadd.f32 %v7147, %v7010
    %v7149 = vadd.f32 %v7148, %v7013
    %v7150 = vadd.f32 %v7149, %v7016
    %v7151 = vadd.f32 %v7150, %v7019
    %v7152 = vadd.f32 %v7151, %v7022
    %v7153 = vadd.f32 %v7152, %v7025
    %v7154 = vadd.f32 %v7153, %v7028
    %v7155 = vadd.f32 %v7154, %v7031
    %v7156 = vadd.f32 %v7155, %v7034
    %v7157 = vadd.f32 %v7156, %v7037
    %v7158 = vadd.f32 %v7157, %v7040
    %v7159 = vadd.f32 %v7158, %v7043
    %v7160 = vadd.f32 %v7159, %v7046
    %v7161 = vadd.f32 %v7160, %v7049
    %v7162 = vadd.f32 %v7161, %v7052
    %v7163 = vadd.f32 %v7162, %v7055
    %v7164 = vadd.f32 %v7163, %v7058
    %v7165 = vadd.f32 %v7164, %v7061
    %v7166 = vadd.f32 %v7165, %v7064
    %v7167 = vadd.f32 %v7166, %v7067
    %v7168 = vadd.f32 %v7167, %v7070
    %v7169 = vadd.f32 %v7168, %v7073
    %v7170 = vadd.f32 %v7169, %v7076
    %v7171 = vadd.f32 %v7170, %v7079
    %v7172 = vadd.f32 %v7171, %v7082
    %v7173 = vadd.f32 %v7172, %v7085
    %v7174 = vadd.f32 %v7173, %v7088
    %v7175 = vadd.f32 %v7174, %v7091
    %v7176 = vadd.f32 %v7175, %v7094
    %v7177 = vadd.f32 %v7176, %v7097
    %v7178 = vadd.f32 %v7177, %v7100
    %v7179 = vadd.f32 %v7178, %v7103
    %v7180 = vadd.f32 %v7179, %v7106
    %v7181 = vadd.f32 %v7180, %v7109
    %v7182 = vadd.f32 %v7181, %v7112
    %v7183 = vadd.f32 %v7182, %v7115
    %v7184 = vadd.f32 %v7183, %v7118
    %v7185 = vadd.f32 %v7184, %v7121
    %v7186 = vrot.slane %v7185, 4
    %v7187 = vadd.f32 %v7185, %v7186
    %v7188 = vrot.slane %v7187, 2
    %v7189 = vadd.f32 %v7187, %v7188
    %v7190 = vrot.slane %v7189, 1
    %v7191 = vadd.f32 %v7189, %v7190
    %v7192 = vmul.f32 %v7191, %v3893
    %v7193 = vmul.f32 %v6932, %v6932
    %v7194 = vmul.f32 %v6935, %v6935
    %v7195 = vmul.f32 %v6938, %v6938
    %v7196 = vmul.f32 %v6941, %v6941
    %v7197 = vmul.f32 %v6944, %v6944
    %v7198 = vmul.f32 %v6947, %v6947
    %v7199 = vmul.f32 %v6950, %v6950
    %v7200 = vmul.f32 %v6953, %v6953
    %v7201 = vmul.f32 %v6956, %v6956
    %v7202 = vmul.f32 %v6959, %v6959
    %v7203 = vmul.f32 %v6962, %v6962
    %v7204 = vmul.f32 %v6965, %v6965
    %v7205 = vmul.f32 %v6968, %v6968
    %v7206 = vmul.f32 %v6971, %v6971
    %v7207 = vmul.f32 %v6974, %v6974
    %v7208 = vmul.f32 %v6977, %v6977
    %v7209 = vmul.f32 %v6980, %v6980
    %v7210 = vmul.f32 %v6983, %v6983
    %v7211 = vmul.f32 %v6986, %v6986
    %v7212 = vmul.f32 %v6989, %v6989
    %v7213 = vmul.f32 %v6992, %v6992
    %v7214 = vmul.f32 %v6995, %v6995
    %v7215 = vmul.f32 %v6998, %v6998
    %v7216 = vmul.f32 %v7001, %v7001
    %v7217 = vmul.f32 %v7004, %v7004
    %v7218 = vmul.f32 %v7007, %v7007
    %v7219 = vmul.f32 %v7010, %v7010
    %v7220 = vmul.f32 %v7013, %v7013
    %v7221 = vmul.f32 %v7016, %v7016
    %v7222 = vmul.f32 %v7019, %v7019
    %v7223 = vmul.f32 %v7022, %v7022
    %v7224 = vmul.f32 %v7025, %v7025
    %v7225 = vmul.f32 %v7028, %v7028
    %v7226 = vmul.f32 %v7031, %v7031
    %v7227 = vmul.f32 %v7034, %v7034
    %v7228 = vmul.f32 %v7037, %v7037
    %v7229 = vmul.f32 %v7040, %v7040
    %v7230 = vmul.f32 %v7043, %v7043
    %v7231 = vmul.f32 %v7046, %v7046
    %v7232 = vmul.f32 %v7049, %v7049
    %v7233 = vmul.f32 %v7052, %v7052
    %v7234 = vmul.f32 %v7055, %v7055
    %v7235 = vmul.f32 %v7058, %v7058
    %v7236 = vmul.f32 %v7061, %v7061
    %v7237 = vmul.f32 %v7064, %v7064
    %v7238 = vmul.f32 %v7067, %v7067
    %v7239 = vmul.f32 %v7070, %v7070
    %v7240 = vmul.f32 %v7073, %v7073
    %v7241 = vmul.f32 %v7076, %v7076
    %v7242 = vmul.f32 %v7079, %v7079
    %v7243 = vmul.f32 %v7082, %v7082
    %v7244 = vmul.f32 %v7085, %v7085
    %v7245 = vmul.f32 %v7088, %v7088
    %v7246 = vmul.f32 %v7091, %v7091
    %v7247 = vmul.f32 %v7094, %v7094
    %v7248 = vmul.f32 %v7097, %v7097
    %v7249 = vmul.f32 %v7100, %v7100
    %v7250 = vmul.f32 %v7103, %v7103
    %v7251 = vmul.f32 %v7106, %v7106
    %v7252 = vmul.f32 %v7109, %v7109
    %v7253 = vmul.f32 %v7112, %v7112
    %v7254 = vmul.f32 %v7115, %v7115
    %v7255 = vmul.f32 %v7118, %v7118
    %v7256 = vmul.f32 %v7121, %v7121
    %v7257 = vadd.f32 %v7193, %v7194
    %v7258 = vadd.f32 %v7257, %v7195
    %v7259 = vadd.f32 %v7258, %v7196
    %v7260 = vadd.f32 %v7259, %v7197
    %v7261 = vadd.f32 %v7260, %v7198
    %v7262 = vadd.f32 %v7261, %v7199
    %v7263 = vadd.f32 %v7262, %v7200
    %v7264 = vadd.f32 %v7263, %v7201
    %v7265 = vadd.f32 %v7264, %v7202
    %v7266 = vadd.f32 %v7265, %v7203
    %v7267 = vadd.f32 %v7266, %v7204
    %v7268 = vadd.f32 %v7267, %v7205
    %v7269 = vadd.f32 %v7268, %v7206
    %v7270 = vadd.f32 %v7269, %v7207
    %v7271 = vadd.f32 %v7270, %v7208
    %v7272 = vadd.f32 %v7271, %v7209
    %v7273 = vadd.f32 %v7272, %v7210
    %v7274 = vadd.f32 %v7273, %v7211
    %v7275 = vadd.f32 %v7274, %v7212
    %v7276 = vadd.f32 %v7275, %v7213
    %v7277 = vadd.f32 %v7276, %v7214
    %v7278 = vadd.f32 %v7277, %v7215
    %v7279 = vadd.f32 %v7278, %v7216
    %v7280 = vadd.f32 %v7279, %v7217
    %v7281 = vadd.f32 %v7280, %v7218
    %v7282 = vadd.f32 %v7281, %v7219
    %v7283 = vadd.f32 %v7282, %v7220
    %v7284 = vadd.f32 %v7283, %v7221
    %v7285 = vadd.f32 %v7284, %v7222
    %v7286 = vadd.f32 %v7285, %v7223
    %v7287 = vadd.f32 %v7286, %v7224
    %v7288 = vadd.f32 %v7287, %v7225
    %v7289 = vadd.f32 %v7288, %v7226
    %v7290 = vadd.f32 %v7289, %v7227
    %v7291 = vadd.f32 %v7290, %v7228
    %v7292 = vadd.f32 %v7291, %v7229
    %v7293 = vadd.f32 %v7292, %v7230
    %v7294 = vadd.f32 %v7293, %v7231
    %v7295 = vadd.f32 %v7294, %v7232
    %v7296 = vadd.f32 %v7295, %v7233
    %v7297 = vadd.f32 %v7296, %v7234
    %v7298 = vadd.f32 %v7297, %v7235
    %v7299 = vadd.f32 %v7298, %v7236
    %v7300 = vadd.f32 %v7299, %v7237
    %v7301 = vadd.f32 %v7300, %v7238
    %v7302 = vadd.f32 %v7301, %v7239
    %v7303 = vadd.f32 %v7302, %v7240
    %v7304 = vadd.f32 %v7303, %v7241
    %v7305 = vadd.f32 %v7304, %v7242
    %v7306 = vadd.f32 %v7305, %v7243
    %v7307 = vadd.f32 %v7306, %v7244
    %v7308 = vadd.f32 %v7307, %v7245
    %v7309 = vadd.f32 %v7308, %v7246
    %v7310 = vadd.f32 %v7309, %v7247
    %v7311 = vadd.f32 %v7310, %v7248
    %v7312 = vadd.f32 %v7311, %v7249
    %v7313 = vadd.f32 %v7312, %v7250
    %v7314 = vadd.f32 %v7313, %v7251
    %v7315 = vadd.f32 %v7314, %v7252
    %v7316 = vadd.f32 %v7315, %v7253
    %v7317 = vadd.f32 %v7316, %v7254
    %v7318 = vadd.f32 %v7317, %v7255
    %v7319 = vadd.f32 %v7318, %v7256
    %v7320 = vrot.slane %v7319, 4
    %v7321 = vadd.f32 %v7319, %v7320
    %v7322 = vrot.slane %v7321, 2
    %v7323 = vadd.f32 %v7321, %v7322
    %v7324 = vrot.slane %v7323, 1
    %v7325 = vadd.f32 %v7323, %v7324
    %v7326 = vmul.f32 %v7325, %v3893
    %v7327 = vmul.f32 %v7192, %v7192
    %v7328 = vsub.f32 %v7326, %v7327
    %v7329 = vmax.f32 %v7328, 0.0
    %v7330 = vsub.f32 %v6932, %v7192
    %v7331 = vsub.f32 %v6935, %v7192
    %v7332 = vsub.f32 %v6938, %v7192
    %v7333 = vsub.f32 %v6941, %v7192
    %v7334 = vsub.f32 %v6944, %v7192
    %v7335 = vsub.f32 %v6947, %v7192
    %v7336 = vsub.f32 %v6950, %v7192
    %v7337 = vsub.f32 %v6953, %v7192
    %v7338 = vsub.f32 %v6956, %v7192
    %v7339 = vsub.f32 %v6959, %v7192
    %v7340 = vsub.f32 %v6962, %v7192
    %v7341 = vsub.f32 %v6965, %v7192
    %v7342 = vsub.f32 %v6968, %v7192
    %v7343 = vsub.f32 %v6971, %v7192
    %v7344 = vsub.f32 %v6974, %v7192
    %v7345 = vsub.f32 %v6977, %v7192
    %v7346 = vsub.f32 %v6980, %v7192
    %v7347 = vsub.f32 %v6983, %v7192
    %v7348 = vsub.f32 %v6986, %v7192
    %v7349 = vsub.f32 %v6989, %v7192
    %v7350 = vsub.f32 %v6992, %v7192
    %v7351 = vsub.f32 %v6995, %v7192
    %v7352 = vsub.f32 %v6998, %v7192
    %v7353 = vsub.f32 %v7001, %v7192
    %v7354 = vsub.f32 %v7004, %v7192
    %v7355 = vsub.f32 %v7007, %v7192
    %v7356 = vsub.f32 %v7010, %v7192
    %v7357 = vsub.f32 %v7013, %v7192
    %v7358 = vsub.f32 %v7016, %v7192
    %v7359 = vsub.f32 %v7019, %v7192
    %v7360 = vsub.f32 %v7022, %v7192
    %v7361 = vsub.f32 %v7025, %v7192
    %v7362 = vsub.f32 %v7028, %v7192
    %v7363 = vsub.f32 %v7031, %v7192
    %v7364 = vsub.f32 %v7034, %v7192
    %v7365 = vsub.f32 %v7037, %v7192
    %v7366 = vsub.f32 %v7040, %v7192
    %v7367 = vsub.f32 %v7043, %v7192
    %v7368 = vsub.f32 %v7046, %v7192
    %v7369 = vsub.f32 %v7049, %v7192
    %v7370 = vsub.f32 %v7052, %v7192
    %v7371 = vsub.f32 %v7055, %v7192
    %v7372 = vsub.f32 %v7058, %v7192
    %v7373 = vsub.f32 %v7061, %v7192
    %v7374 = vsub.f32 %v7064, %v7192
    %v7375 = vsub.f32 %v7067, %v7192
    %v7376 = vsub.f32 %v7070, %v7192
    %v7377 = vsub.f32 %v7073, %v7192
    %v7378 = vsub.f32 %v7076, %v7192
    %v7379 = vsub.f32 %v7079, %v7192
    %v7380 = vsub.f32 %v7082, %v7192
    %v7381 = vsub.f32 %v7085, %v7192
    %v7382 = vsub.f32 %v7088, %v7192
    %v7383 = vsub.f32 %v7091, %v7192
    %v7384 = vsub.f32 %v7094, %v7192
    %v7385 = vsub.f32 %v7097, %v7192
    %v7386 = vsub.f32 %v7100, %v7192
    %v7387 = vsub.f32 %v7103, %v7192
    %v7388 = vsub.f32 %v7106, %v7192
    %v7389 = vsub.f32 %v7109, %v7192
    %v7390 = vsub.f32 %v7112, %v7192
    %v7391 = vsub.f32 %v7115, %v7192
    %v7392 = vsub.f32 %v7118, %v7192
    %v7393 = vsub.f32 %v7121, %v7192
    %v7394 = vadd.f32 %v7329, 1e-05
    %v7395 = vrsqrt.pop %v7394
    %v7396 = vmul.f32 %v7395, %v7394
    %v7397 = vmul.f32 %v7396, %v7395
    %v7398 = vmul.f32 0.5, %v7397
    %v7399 = vsub.f32 1.5, %v7398
    %v7400 = vmul.f32 %v7395, %v7399
    %vm7401 = vweird.f32 %v7394
    %vm7402 = vweird.f32 %v7395
    %vm7403 = vmor %vm7401, %vm7402
    %v7404 = vsel %vm7403, %v7395, %v7400
    %v7405 = vmul.f32 %v7330, %v7404
    %v7406 = vmul.f32 %v7331, %v7404
    %v7407 = vmul.f32 %v7332, %v7404
    %v7408 = vmul.f32 %v7333, %v7404
    %v7409 = vmul.f32 %v7334, %v7404
    %v7410 = vmul.f32 %v7335, %v7404
    %v7411 = vmul.f32 %v7336, %v7404
    %v7412 = vmul.f32 %v7337, %v7404
    %v7413 = vmul.f32 %v7338, %v7404
    %v7414 = vmul.f32 %v7339, %v7404
    %v7415 = vmul.f32 %v7340, %v7404
    %v7416 = vmul.f32 %v7341, %v7404
    %v7417 = vmul.f32 %v7342, %v7404
    %v7418 = vmul.f32 %v7343, %v7404
    %v7419 = vmul.f32 %v7344, %v7404
    %v7420 = vmul.f32 %v7345, %v7404
    %v7421 = vmul.f32 %v7346, %v7404
    %v7422 = vmul.f32 %v7347, %v7404
    %v7423 = vmul.f32 %v7348, %v7404
    %v7424 = vmul.f32 %v7349, %v7404
    %v7425 = vmul.f32 %v7350, %v7404
    %v7426 = vmul.f32 %v7351, %v7404
    %v7427 = vmul.f32 %v7352, %v7404
    %v7428 = vmul.f32 %v7353, %v7404
    %v7429 = vmul.f32 %v7354, %v7404
    %v7430 = vmul.f32 %v7355, %v7404
    %v7431 = vmul.f32 %v7356, %v7404
    %v7432 = vmul.f32 %v7357, %v7404
    %v7433 = vmul.f32 %v7358, %v7404
    %v7434 = vmul.f32 %v7359, %v7404
    %v7435 = vmul.f32 %v7360, %v7404
    %v7436 = vmul.f32 %v7361, %v7404
    %v7437 = vmul.f32 %v7362, %v7404
    %v7438 = vmul.f32 %v7363, %v7404
    %v7439 = vmul.f32 %v7364, %v7404
    %v7440 = vmul.f32 %v7365, %v7404
    %v7441 = vmul.f32 %v7366, %v7404
    %v7442 = vmul.f32 %v7367, %v7404
    %v7443 = vmul.f32 %v7368, %v7404
    %v7444 = vmul.f32 %v7369, %v7404
    %v7445 = vmul.f32 %v7370, %v7404
    %v7446 = vmul.f32 %v7371, %v7404
    %v7447 = vmul.f32 %v7372, %v7404
    %v7448 = vmul.f32 %v7373, %v7404
    %v7449 = vmul.f32 %v7374, %v7404
    %v7450 = vmul.f32 %v7375, %v7404
    %v7451 = vmul.f32 %v7376, %v7404
    %v7452 = vmul.f32 %v7377, %v7404
    %v7453 = vmul.f32 %v7378, %v7404
    %v7454 = vmul.f32 %v7379, %v7404
    %v7455 = vmul.f32 %v7380, %v7404
    %v7456 = vmul.f32 %v7381, %v7404
    %v7457 = vmul.f32 %v7382, %v7404
    %v7458 = vmul.f32 %v7383, %v7404
    %v7459 = vmul.f32 %v7384, %v7404
    %v7460 = vmul.f32 %v7385, %v7404
    %v7461 = vmul.f32 %v7386, %v7404
    %v7462 = vmul.f32 %v7387, %v7404
    %v7463 = vmul.f32 %v7388, %v7404
    %v7464 = vmul.f32 %v7389, %v7404
    %v7465 = vmul.f32 %v7390, %v7404
    %v7466 = vmul.f32 %v7391, %v7404
    %v7467 = vmul.f32 %v7392, %v7404
    %v7468 = vmul.f32 %v7393, %v7404
    %v7469 = vld [vmem:[%s5] sm:$0x1]
    %v7471 = vperm.slane %v7469, 0
    %v7473 = vmul.f32 %v7405, %v7471
    %v7474 = vmul.f32 %v7406, %v7471
    %v7475 = vmul.f32 %v7407, %v7471
    %v7476 = vmul.f32 %v7408, %v7471
    %v7477 = vmul.f32 %v7409, %v7471
    %v7478 = vmul.f32 %v7410, %v7471
    %v7479 = vmul.f32 %v7411, %v7471
    %v7480 = vmul.f32 %v7412, %v7471
    %v7481 = vmul.f32 %v7413, %v7471
    %v7482 = vmul.f32 %v7414, %v7471
    %v7483 = vmul.f32 %v7415, %v7471
    %v7484 = vmul.f32 %v7416, %v7471
    %v7485 = vmul.f32 %v7417, %v7471
    %v7486 = vmul.f32 %v7418, %v7471
    %v7487 = vmul.f32 %v7419, %v7471
    %v7488 = vmul.f32 %v7420, %v7471
    %v7489 = vmul.f32 %v7421, %v7471
    %v7490 = vmul.f32 %v7422, %v7471
    %v7491 = vmul.f32 %v7423, %v7471
    %v7492 = vmul.f32 %v7424, %v7471
    %v7493 = vmul.f32 %v7425, %v7471
    %v7494 = vmul.f32 %v7426, %v7471
    %v7495 = vmul.f32 %v7427, %v7471
    %v7496 = vmul.f32 %v7428, %v7471
    %v7497 = vmul.f32 %v7429, %v7471
    %v7498 = vmul.f32 %v7430, %v7471
    %v7499 = vmul.f32 %v7431, %v7471
    %v7500 = vmul.f32 %v7432, %v7471
    %v7501 = vmul.f32 %v7433, %v7471
    %v7502 = vmul.f32 %v7434, %v7471
    %v7503 = vmul.f32 %v7435, %v7471
    %v7504 = vmul.f32 %v7436, %v7471
    %v7505 = vmul.f32 %v7437, %v7471
    %v7506 = vmul.f32 %v7438, %v7471
    %v7507 = vmul.f32 %v7439, %v7471
    %v7508 = vmul.f32 %v7440, %v7471
    %v7509 = vmul.f32 %v7441, %v7471
    %v7510 = vmul.f32 %v7442, %v7471
    %v7511 = vmul.f32 %v7443, %v7471
    %v7512 = vmul.f32 %v7444, %v7471
    %v7513 = vmul.f32 %v7445, %v7471
    %v7514 = vmul.f32 %v7446, %v7471
    %v7515 = vmul.f32 %v7447, %v7471
    %v7516 = vmul.f32 %v7448, %v7471
    %v7517 = vmul.f32 %v7449, %v7471
    %v7518 = vmul.f32 %v7450, %v7471
    %v7519 = vmul.f32 %v7451, %v7471
    %v7520 = vmul.f32 %v7452, %v7471
    %v7521 = vmul.f32 %v7453, %v7471
    %v7522 = vmul.f32 %v7454, %v7471
    %v7523 = vmul.f32 %v7455, %v7471
    %v7524 = vmul.f32 %v7456, %v7471
    %v7525 = vmul.f32 %v7457, %v7471
    %v7526 = vmul.f32 %v7458, %v7471
    %v7527 = vmul.f32 %v7459, %v7471
    %v7528 = vmul.f32 %v7460, %v7471
    %v7529 = vmul.f32 %v7461, %v7471
    %v7530 = vmul.f32 %v7462, %v7471
    %v7531 = vmul.f32 %v7463, %v7471
    %v7532 = vmul.f32 %v7464, %v7471
    %v7533 = vmul.f32 %v7465, %v7471
    %v7534 = vmul.f32 %v7466, %v7471
    %v7535 = vmul.f32 %v7467, %v7471
    %v7536 = vmul.f32 %v7468, %v7471
    %v7537 = vld [vmem:[%s6] sm:$0x1]
    %v7539 = vperm.slane %v7537, 0
    %v7541 = vadd.f32 %v7473, %v7539
    %v7542 = vadd.f32 %v7474, %v7539
    %v7543 = vadd.f32 %v7475, %v7539
    %v7544 = vadd.f32 %v7476, %v7539
    %v7545 = vadd.f32 %v7477, %v7539
    %v7546 = vadd.f32 %v7478, %v7539
    %v7547 = vadd.f32 %v7479, %v7539
    %v7548 = vadd.f32 %v7480, %v7539
    %v7549 = vadd.f32 %v7481, %v7539
    %v7550 = vadd.f32 %v7482, %v7539
    %v7551 = vadd.f32 %v7483, %v7539
    %v7552 = vadd.f32 %v7484, %v7539
    %v7553 = vadd.f32 %v7485, %v7539
    %v7554 = vadd.f32 %v7486, %v7539
    %v7555 = vadd.f32 %v7487, %v7539
    %v7556 = vadd.f32 %v7488, %v7539
    %v7557 = vadd.f32 %v7489, %v7539
    %v7558 = vadd.f32 %v7490, %v7539
    %v7559 = vadd.f32 %v7491, %v7539
    %v7560 = vadd.f32 %v7492, %v7539
    %v7561 = vadd.f32 %v7493, %v7539
    %v7562 = vadd.f32 %v7494, %v7539
    %v7563 = vadd.f32 %v7495, %v7539
    %v7564 = vadd.f32 %v7496, %v7539
    %v7565 = vadd.f32 %v7497, %v7539
    %v7566 = vadd.f32 %v7498, %v7539
    %v7567 = vadd.f32 %v7499, %v7539
    %v7568 = vadd.f32 %v7500, %v7539
    %v7569 = vadd.f32 %v7501, %v7539
    %v7570 = vadd.f32 %v7502, %v7539
    %v7571 = vadd.f32 %v7503, %v7539
    %v7572 = vadd.f32 %v7504, %v7539
    %v7573 = vadd.f32 %v7505, %v7539
    %v7574 = vadd.f32 %v7506, %v7539
    %v7575 = vadd.f32 %v7507, %v7539
    %v7576 = vadd.f32 %v7508, %v7539
    %v7577 = vadd.f32 %v7509, %v7539
    %v7578 = vadd.f32 %v7510, %v7539
    %v7579 = vadd.f32 %v7511, %v7539
    %v7580 = vadd.f32 %v7512, %v7539
    %v7581 = vadd.f32 %v7513, %v7539
    %v7582 = vadd.f32 %v7514, %v7539
    %v7583 = vadd.f32 %v7515, %v7539
    %v7584 = vadd.f32 %v7516, %v7539
    %v7585 = vadd.f32 %v7517, %v7539
    %v7586 = vadd.f32 %v7518, %v7539
    %v7587 = vadd.f32 %v7519, %v7539
    %v7588 = vadd.f32 %v7520, %v7539
    %v7589 = vadd.f32 %v7521, %v7539
    %v7590 = vadd.f32 %v7522, %v7539
    %v7591 = vadd.f32 %v7523, %v7539
    %v7592 = vadd.f32 %v7524, %v7539
    %v7593 = vadd.f32 %v7525, %v7539
    %v7594 = vadd.f32 %v7526, %v7539
    %v7595 = vadd.f32 %v7527, %v7539
    %v7596 = vadd.f32 %v7528, %v7539
    %v7597 = vadd.f32 %v7529, %v7539
    %v7598 = vadd.f32 %v7530, %v7539
    %v7599 = vadd.f32 %v7531, %v7539
    %v7600 = vadd.f32 %v7532, %v7539
    %v7601 = vadd.f32 %v7533, %v7539
    %v7602 = vadd.f32 %v7534, %v7539
    %v7603 = vadd.f32 %v7535, %v7539
    %v7604 = vadd.f32 %v7536, %v7539
    %v7605 = vmax.f32 %v7541, 0.0
    %v7606 = vmax.f32 %v7542, 0.0
    %v7607 = vmax.f32 %v7543, 0.0
    %v7608 = vmax.f32 %v7544, 0.0
    %v7609 = vmax.f32 %v7545, 0.0
    %v7610 = vmax.f32 %v7546, 0.0
    %v7611 = vmax.f32 %v7547, 0.0
    %v7612 = vmax.f32 %v7548, 0.0
    %v7613 = vmax.f32 %v7549, 0.0
    %v7614 = vmax.f32 %v7550, 0.0
    %v7615 = vmax.f32 %v7551, 0.0
    %v7616 = vmax.f32 %v7552, 0.0
    %v7617 = vmax.f32 %v7553, 0.0
    %v7618 = vmax.f32 %v7554, 0.0
    %v7619 = vmax.f32 %v7555, 0.0
    %v7620 = vmax.f32 %v7556, 0.0
    %v7621 = vmax.f32 %v7557, 0.0
    %v7622 = vmax.f32 %v7558, 0.0
    %v7623 = vmax.f32 %v7559, 0.0
    %v7624 = vmax.f32 %v7560, 0.0
    %v7625 = vmax.f32 %v7561, 0.0
    %v7626 = vmax.f32 %v7562, 0.0
    %v7627 = vmax.f32 %v7563, 0.0
    %v7628 = vmax.f32 %v7564, 0.0
    %v7629 = vmax.f32 %v7565, 0.0
    %v7630 = vmax.f32 %v7566, 0.0
    %v7631 = vmax.f32 %v7567, 0.0
    %v7632 = vmax.f32 %v7568, 0.0
    %v7633 = vmax.f32 %v7569, 0.0
    %v7634 = vmax.f32 %v7570, 0.0
    %v7635 = vmax.f32 %v7571, 0.0
    %v7636 = vmax.f32 %v7572, 0.0
    %v7637 = vmax.f32 %v7573, 0.0
    %v7638 = vmax.f32 %v7574, 0.0
    %v7639 = vmax.f32 %v7575, 0.0
    %v7640 = vmax.f32 %v7576, 0.0
    %v7641 = vmax.f32 %v7577, 0.0
    %v7642 = vmax.f32 %v7578, 0.0
    %v7643 = vmax.f32 %v7579, 0.0
    %v7644 = vmax.f32 %v7580, 0.0
    %v7645 = vmax.f32 %v7581, 0.0
    %v7646 = vmax.f32 %v7582, 0.0
    %v7647 = vmax.f32 %v7583, 0.0
    %v7648 = vmax.f32 %v7584, 0.0
    %v7649 = vmax.f32 %v7585, 0.0
    %v7650 = vmax.f32 %v7586, 0.0
    %v7651 = vmax.f32 %v7587, 0.0
    %v7652 = vmax.f32 %v7588, 0.0
    %v7653 = vmax.f32 %v7589, 0.0
    %v7654 = vmax.f32 %v7590, 0.0
    %v7655 = vmax.f32 %v7591, 0.0
    %v7656 = vmax.f32 %v7592, 0.0
    %v7657 = vmax.f32 %v7593, 0.0
    %v7658 = vmax.f32 %v7594, 0.0
    %v7659 = vmax.f32 %v7595, 0.0
    %v7660 = vmax.f32 %v7596, 0.0
    %v7661 = vmax.f32 %v7597, 0.0
    %v7662 = vmax.f32 %v7598, 0.0
    %v7663 = vmax.f32 %v7599, 0.0
    %v7664 = vmax.f32 %v7600, 0.0
    %v7665 = vmax.f32 %v7601, 0.0
    %v7666 = vmax.f32 %v7602, 0.0
    %v7667 = vmax.f32 %v7603, 0.0
    %v7668 = vmax.f32 %v7604, 0.0
    %7669 = vst [vmem:[#allocation9] sm:$0xff] %v7605
    %7670 = vst [vmem:[#allocation9 + $0x8] sm:$0xff] %v7606
    %7671 = vst [vmem:[#allocation9 + $0x10] sm:$0xff] %v7607
    %7672 = vst [vmem:[#allocation9 + $0x18] sm:$0xff] %v7608
    %7673 = vst [vmem:[#allocation9 + $0x20] sm:$0xff] %v7609
    %7674 = vst [vmem:[#allocation9 + $0x28] sm:$0xff] %v7610
    %7675 = vst [vmem:[#allocation9 + $0x30] sm:$0xff] %v7611
    %7676 = vst [vmem:[#allocation9 + $0x38] sm:$0xff] %v7612
    %7677 = vst [vmem:[#allocation9 + $0x40] sm:$0xff] %v7613
    %7678 = vst [vmem:[#allocation9 + $0x48] sm:$0xff] %v7614
    %7679 = vst [vmem:[#allocation9 + $0x50] sm:$0xff] %v7615
    %7680 = vst [vmem:[#allocation9 + $0x58] sm:$0xff] %v7616
    %7681 = vst [vmem:[#allocation9 + $0x60] sm:$0xff] %v7617
    %7682 = vst [vmem:[#allocation9 + $0x68] sm:$0xff] %v7618
    %7683 = vst [vmem:[#allocation9 + $0x70] sm:$0xff] %v7619
    %7684 = vst [vmem:[#allocation9 + $0x78] sm:$0xff] %v7620
    %7685 = vst [vmem:[#allocation9 + $0x80] sm:$0xff] %v7621
    %7686 = vst [vmem:[#allocation9 + $0x88] sm:$0xff] %v7622
    %7687 = vst [vmem:[#allocation9 + $0x90] sm:$0xff] %v7623
    %7688 = vst [vmem:[#allocation9 + $0x98] sm:$0xff] %v7624
    %7689 = vst [vmem:[#allocation9 + $0xa0] sm:$0xff] %v7625
    %7690 = vst [vmem:[#allocation9 + $0xa8] sm:$0xff] %v7626
    %7691 = vst [vmem:[#allocation9 + $0xb0] sm:$0xff] %v7627
    %7692 = vst [vmem:[#allocation9 + $0xb8] sm:$0xff] %v7628
    %7693 = vst [vmem:[#allocation9 + $0xc0] sm:$0xff] %v7629
    %7694 = vst [vmem:[#allocation9 + $0xc8] sm:$0xff] %v7630
    %7695 = vst [vmem:[#allocation9 + $0xd0] sm:$0xff] %v7631
    %7696 = vst [vmem:[#allocation9 + $0xd8] sm:$0xff] %v7632
    %7697 = vst [vmem:[#allocation9 + $0xe0] sm:$0xff] %v7633
    %7698 = vst [vmem:[#allocation9 + $0xe8] sm:$0xff] %v7634
    %7699 = vst [vmem:[#allocation9 + $0xf0] sm:$0xff] %v7635
    %7700 = vst [vmem:[#allocation9 + $0xf8] sm:$0xff] %v7636
    %7701 = vst [vmem:[#allocation9 + $0x100] sm:$0xff] %v7637
    %7702 = vst [vmem:[#allocation9 + $0x108] sm:$0xff] %v7638
    %7703 = vst [vmem:[#allocation9 + $0x110] sm:$0xff] %v7639
    %7704 = vst [vmem:[#allocation9 + $0x118] sm:$0xff] %v7640
    %7705 = vst [vmem:[#allocation9 + $0x120] sm:$0xff] %v7641
    %7706 = vst [vmem:[#allocation9 + $0x128] sm:$0xff] %v7642
    %7707 = vst [vmem:[#allocation9 + $0x130] sm:$0xff] %v7643
    %7708 = vst [vmem:[#allocation9 + $0x138] sm:$0xff] %v7644
    %7709 = vst [vmem:[#allocation9 + $0x140] sm:$0xff] %v7645
    %7710 = vst [vmem:[#allocation9 + $0x148] sm:$0xff] %v7646
    %7711 = vst [vmem:[#allocation9 + $0x150] sm:$0xff] %v7647
    %7712 = vst [vmem:[#allocation9 + $0x158] sm:$0xff] %v7648
    %7713 = vst [vmem:[#allocation9 + $0x160] sm:$0xff] %v7649
    %7714 = vst [vmem:[#allocation9 + $0x168] sm:$0xff] %v7650
    %7715 = vst [vmem:[#allocation9 + $0x170] sm:$0xff] %v7651
    %7716 = vst [vmem:[#allocation9 + $0x178] sm:$0xff] %v7652
    %7717 = vst [vmem:[#allocation9 + $0x180] sm:$0xff] %v7653
    %7718 = vst [vmem:[#allocation9 + $0x188] sm:$0xff] %v7654
    %7719 = vst [vmem:[#allocation9 + $0x190] sm:$0xff] %v7655
    %7720 = vst [vmem:[#allocation9 + $0x198] sm:$0xff] %v7656
    %7721 = vst [vmem:[#allocation9 + $0x1a0] sm:$0xff] %v7657
    %7722 = vst [vmem:[#allocation9 + $0x1a8] sm:$0xff] %v7658
    %7723 = vst [vmem:[#allocation9 + $0x1b0] sm:$0xff] %v7659
    %7724 = vst [vmem:[#allocation9 + $0x1b8] sm:$0xff] %v7660
    %7725 = vst [vmem:[#allocation9 + $0x1c0] sm:$0xff] %v7661
    %7726 = vst [vmem:[#allocation9 + $0x1c8] sm:$0xff] %v7662
    %7727 = vst [vmem:[#allocation9 + $0x1d0] sm:$0xff] %v7663
    %7728 = vst [vmem:[#allocation9 + $0x1d8] sm:$0xff] %v7664
    %7729 = vst [vmem:[#allocation9 + $0x1e0] sm:$0xff] %v7665
    %7730 = vst [vmem:[#allocation9 + $0x1e8] sm:$0xff] %v7666
    %7731 = vst [vmem:[#allocation9 + $0x1f0] sm:$0xff] %v7667
    %7732 = vst [vmem:[#allocation9 + $0x1f8] sm:$0xff] %v7668
    %v7733 = vmax.f32 %v7605, %v7607
    %v7734 = vmax.f32 %v7606, %v7608
    %v7735 = vmax.f32 %v7609, %v7611
    %v7736 = vmax.f32 %v7610, %v7612
    %v7737 = vmax.f32 %v7613, %v7615
    %v7738 = vmax.f32 %v7614, %v7616
    %v7739 = vmax.f32 %v7617, %v7619
    %v7740 = vmax.f32 %v7618, %v7620
    %v7741 = vmax.f32 %v7621, %v7623
    %v7742 = vmax.f32 %v7622, %v7624
    %v7743 = vmax.f32 %v7625, %v7627
    %v7744 = vmax.f32 %v7626, %v7628
    %v7745 = vmax.f32 %v7629, %v7631
    %v7746 = vmax.f32 %v7630, %v7632
    %v7747 = vmax.f32 %v7633, %v7635
    %v7748 = vmax.f32 %v7634, %v7636
    %v7749 = vmax.f32 %v7637, %v7639
    %v7750 = vmax.f32 %v7638, %v7640
    %v7751 = vmax.f32 %v7641, %v7643
    %v7752 = vmax.f32 %v7642, %v7644
    %v7753 = vmax.f32 %v7645, %v7647
    %v7754 = vmax.f32 %v7646, %v7648
    %v7755 = vmax.f32 %v7649, %v7651
    %v7756 = vmax.f32 %v7650, %v7652
    %v7757 = vmax.f32 %v7653, %v7655
    %v7758 = vmax.f32 %v7654, %v7656
    %v7759 = vmax.f32 %v7657, %v7659
    %v7760 = vmax.f32 %v7658, %v7660
    %v7761 = vmax.f32 %v7661, %v7663
    %v7762 = vmax.f32 %v7662, %v7664
    %v7763 = vmax.f32 %v7665, %v7667
    %v7764 = vmax.f32 %v7666, %v7668
    %7765 = vst [vmem:[#allocation4] sm:$0xff] %v7733
    %7766 = vst [vmem:[#allocation4 + $0x8] sm:$0xff] %v7734
    %7767 = vst [vmem:[#allocation4 + $0x10] sm:$0xff] %v7735
    %7768 = vst [vmem:[#allocation4 + $0x18] sm:$0xff] %v7736
    %7769 = vst [vmem:[#allocation4 + $0x20] sm:$0xff] %v7737
    %7770 = vst [vmem:[#allocation4 + $0x28] sm:$0xff] %v7738
    %7771 = vst [vmem:[#allocation4 + $0x30] sm:$0xff] %v7739
    %7772 = vst [vmem:[#allocation4 + $0x38] sm:$0xff] %v7740
    %7773 = vst [vmem:[#allocation4 + $0x40] sm:$0xff] %v7741
    %7774 = vst [vmem:[#allocation4 + $0x48] sm:$0xff] %v7742
    %7775 = vst [vmem:[#allocation4 + $0x50] sm:$0xff] %v7743
    %7776 = vst [vmem:[#allocation4 + $0x58] sm:$0xff] %v7744
    %7777 = vst [vmem:[#allocation4 + $0x60] sm:$0xff] %v7745
    %7778 = vst [vmem:[#allocation4 + $0x68] sm:$0xff] %v7746
    %7779 = vst [vmem:[#allocation4 + $0x70] sm:$0xff] %v7747
    %7780 = vst [vmem:[#allocation4 + $0x78] sm:$0xff] %v7748
    %7781 = vst [vmem:[#allocation4 + $0x80] sm:$0xff] %v7749
    %7782 = vst [vmem:[#allocation4 + $0x88] sm:$0xff] %v7750
    %7783 = vst [vmem:[#allocation4 + $0x90] sm:$0xff] %v7751
    %7784 = vst [vmem:[#allocation4 + $0x98] sm:$0xff] %v7752
    %7785 = vst [vmem:[#allocation4 + $0xa0] sm:$0xff] %v7753
    %7786 = vst [vmem:[#allocation4 + $0xa8] sm:$0xff] %v7754
    %7787 = vst [vmem:[#allocation4 + $0xb0] sm:$0xff] %v7755
    %7788 = vst [vmem:[#allocation4 + $0xb8] sm:$0xff] %v7756
    %7789 = vst [vmem:[#allocation4 + $0xc0] sm:$0xff] %v7757
    %7790 = vst [vmem:[#allocation4 + $0xc8] sm:$0xff] %v7758
    %7791 = vst [vmem:[#allocation4 + $0xd0] sm:$0xff] %v7759
    %7792 = vst [vmem:[#allocation4 + $0xd8] sm:$0xff] %v7760
    %7793 = vst [vmem:[#allocation4 + $0xe0] sm:$0xff] %v7761
    %7794 = vst [vmem:[#allocation4 + $0xe8] sm:$0xff] %v7762
    %7795 = vst [vmem:[#allocation4 + $0xf0] sm:$0xff] %v7763
    %7796 = vst [vmem:[#allocation4 + $0xf8] sm:$0xff] %v7764
    %v7797 = vld [vmem:[#allocation4] ss:$2 sm:$0xff]
    %s7798 = scalar_lea.vmem [#allocation4], 16
    %v7799 = vld [vmem:[%s7798] ss:$2 sm:$0xff]
    %s7800 = scalar_lea.vmem [#allocation4], 32
    %v7801 = vld [vmem:[%s7800] ss:$2 sm:$0xff]
    %s7802 = scalar_lea.vmem [#allocation4], 48
    %v7803 = vld [vmem:[%s7802] ss:$2 sm:$0xff]
    %s7804 = scalar_lea.vmem [#allocation4], 64
    %v7805 = vld [vmem:[%s7804] ss:$2 sm:$0xff]
    %s7806 = scalar_lea.vmem [#allocation4], 80
    %v7807 = vld [vmem:[%s7806] ss:$2 sm:$0xff]
    %s7808 = scalar_lea.vmem [#allocation4], 96
    %v7809 = vld [vmem:[%s7808] ss:$2 sm:$0xff]
    %s7810 = scalar_lea.vmem [#allocation4], 112
    %v7811 = vld [vmem:[%s7810] ss:$2 sm:$0xff]
    %s7812 = scalar_lea.vmem [#allocation4], 128
    %v7813 = vld [vmem:[%s7812] ss:$2 sm:$0xff]
    %s7814 = scalar_lea.vmem [#allocation4], 144
    %v7815 = vld [vmem:[%s7814] ss:$2 sm:$0xff]
    %s7816 = scalar_lea.vmem [#allocation4], 160
    %v7817 = vld [vmem:[%s7816] ss:$2 sm:$0xff]
    %s7818 = scalar_lea.vmem [#allocation4], 176
    %v7819 = vld [vmem:[%s7818] ss:$2 sm:$0xff]
    %s7820 = scalar_lea.vmem [#allocation4], 192
    %v7821 = vld [vmem:[%s7820] ss:$2 sm:$0xff]
    %s7822 = scalar_lea.vmem [#allocation4], 208
    %v7823 = vld [vmem:[%s7822] ss:$2 sm:$0xff]
    %s7824 = scalar_lea.vmem [#allocation4], 224
    %v7825 = vld [vmem:[%s7824] ss:$2 sm:$0xff]
    %s7826 = scalar_lea.vmem [#allocation4], 240
    %v7827 = vld [vmem:[%s7826] ss:$2 sm:$0xff]
    %s7828 = scalar_lea.vmem [#allocation4], 1
    %v7829 = vld [vmem:[%s7828] ss:$2 sm:$0xff]
    %s7830 = scalar_lea.vmem [#allocation4], 17
    %v7831 = vld [vmem:[%s7830] ss:$2 sm:$0xff]
    %s7832 = scalar_lea.vmem [#allocation4], 33
    %v7833 = vld [vmem:[%s7832] ss:$2 sm:$0xff]
    %s7834 = scalar_lea.vmem [#allocation4], 49
    %v7835 = vld [vmem:[%s7834] ss:$2 sm:$0xff]
    %s7836 = scalar_lea.vmem [#allocation4], 65
    %v7837 = vld [vmem:[%s7836] ss:$2 sm:$0xff]
    %s7838 = scalar_lea.vmem [#allocation4], 81
    %v7839 = vld [vmem:[%s7838] ss:$2 sm:$0xff]
    %s7840 = scalar_lea.vmem [#allocation4], 97
    %v7841 = vld [vmem:[%s7840] ss:$2 sm:$0xff]
    %s7842 = scalar_lea.vmem [#allocation4], 113
    %v7843 = vld [vmem:[%s7842] ss:$2 sm:$0xff]
    %s7844 = scalar_lea.vmem [#allocation4], 129
    %v7845 = vld [vmem:[%s7844] ss:$2 sm:$0xff]
    %s7846 = scalar_lea.vmem [#allocation4], 145
    %v7847 = vld [vmem:[%s7846] ss:$2 sm:$0xff]
    %s7848 = scalar_lea.vmem [#allocation4], 161
    %v7849 = vld [vmem:[%s7848] ss:$2 sm:$0xff]
    %s7850 = scalar_lea.vmem [#allocation4], 177
    %v7851 = vld [vmem:[%s7850] ss:$2 sm:$0xff]
    %s7852 = scalar_lea.vmem [#allocation4], 193
    %v7853 = vld [vmem:[%s7852] ss:$2 sm:$0xff]
    %s7854 = scalar_lea.vmem [#allocation4], 209
    %v7855 = vld [vmem:[%s7854] ss:$2 sm:$0xff]
    %s7856 = scalar_lea.vmem [#allocation4], 225
    %v7857 = vld [vmem:[%s7856] ss:$2 sm:$0xff]
    %s7858 = scalar_lea.vmem [#allocation4], 241
    %v7859 = vld [vmem:[%s7858] ss:$2 sm:$0xff]
    %v7860 = vmax.f32 %v7797, %v7829
    %v7861 = vmax.f32 %v7799, %v7831
    %v7862 = vmax.f32 %v7801, %v7833
    %v7863 = vmax.f32 %v7803, %v7835
    %v7864 = vmax.f32 %v7805, %v7837
    %v7865 = vmax.f32 %v7807, %v7839
    %v7866 = vmax.f32 %v7809, %v7841
    %v7867 = vmax.f32 %v7811, %v7843
    %v7868 = vmax.f32 %v7813, %v7845
    %v7869 = vmax.f32 %v7815, %v7847
    %v7870 = vmax.f32 %v7817, %v7849
    %v7871 = vmax.f32 %v7819, %v7851
    %v7872 = vmax.f32 %v7821, %v7853
    %v7873 = vmax.f32 %v7823, %v7855
    %v7874 = vmax.f32 %v7825, %v7857
    %v7875 = vmax.f32 %v7827, %v7859
    %7876 = vst [vmem:[#allocation8] sm:$0xff] %v7860
    %7877 = vst [vmem:[#allocation8 + $0x8] sm:$0xff] %v7861
    %7878 = vst [vmem:[#allocation8 + $0x10] sm:$0xff] %v7862
    %7879 = vst [vmem:[#allocation8 + $0x18] sm:$0xff] %v7863
    %7880 = vst [vmem:[#allocation8 + $0x20] sm:$0xff] %v7864
    %7881 = vst [vmem:[#allocation8 + $0x28] sm:$0xff] %v7865
    %7882 = vst [vmem:[#allocation8 + $0x30] sm:$0xff] %v7866
    %7883 = vst [vmem:[#allocation8 + $0x38] sm:$0xff] %v7867
    %7884 = vst [vmem:[#allocation8 + $0x40] sm:$0xff] %v7868
    %7885 = vst [vmem:[#allocation8 + $0x48] sm:$0xff] %v7869
    %7886 = vst [vmem:[#allocation8 + $0x50] sm:$0xff] %v7870
    %7887 = vst [vmem:[#allocation8 + $0x58] sm:$0xff] %v7871
    %7888 = vst [vmem:[#allocation8 + $0x60] sm:$0xff] %v7872
    %7889 = vst [vmem:[#allocation8 + $0x68] sm:$0xff] %v7873
    %7890 = vst [vmem:[#allocation8 + $0x70] sm:$0xff] %v7874
    %7891 = vst [vmem:[#allocation8 + $0x78] sm:$0xff] %v7875
    // Predicated region
    $region34: #{tpu_custom_call.1} parent=1 // pred_check
      _
    $region35: #{tpu_custom_call.1} parent=1 // pred_check_branch
      %7893 = sbr.rel (0) target = $region37
    $region36: #{tpu_custom_call.1} parent=1 // pred_region
      %7895 = vsyncadd [#allocation7], 0
      %s7896 = sshll.u32 [#allocation8], 4
      %s7897 = int_to_ptr.vmem [resolvable:$true] %s7896
      %s7898 = sshll.u32 %s7, 4
      %s7899 = int_to_ptr.hbm [resolvable:$true] %s7898
      %7904 = dma.vmem_to_hbm [thread:$0]  %s7897, 2048, %s7899, [#allocation7], 128, 128, 8
    $region37: #{tpu_custom_call.1} parent=1 // pred_fallthru
      _
    // Predicated region
    $region38: #{tpu_custom_call.1} parent=1 // pred_check
      _
    $region39: #{tpu_custom_call.1} parent=1 // pred_check_branch
      %7906 = sbr.rel (0) target = $region41
    $region40: #{tpu_custom_call.1} parent=1 // pred_region
      %7908 = vsyncadd [#allocation10], 0
      %s7909 = sshll.u32 [#allocation9], 4
      %s7910 = int_to_ptr.vmem [resolvable:$true] %s7909
      %s7911 = sshll.u32 %s8, 4
      %s7912 = int_to_ptr.hbm [resolvable:$true] %s7911
      %7917 = dma.vmem_to_hbm [thread:$0]  %s7910, 8192, %s7912, [#allocation10], 128, 128, 8
    $region41: #{tpu_custom_call.1} parent=1 // pred_fallthru
      _
    // Predicated region
    $region42: #{tpu_custom_call.1} parent=1 // pred_check
      _
    $region43: #{tpu_custom_call.1} parent=1 // pred_check_branch
      %7919 = sbr.rel (0) target = $region45
    $region44: #{tpu_custom_call.1} parent=1 // pred_region
      %7921 = dma.done [#allocation7], 2048
    $region45: #{tpu_custom_call.1} parent=1 // pred_fallthru
      _
    // Predicated region
    $region46: #{tpu_custom_call.1} parent=1 // pred_check
      _
    $region47: #{tpu_custom_call.1} parent=1 // pred_check_branch
      %7923 = sbr.rel (0) target = $region49
    $region48: #{tpu_custom_call.1} parent=1 // pred_region
      %7925 = dma.done [#allocation10], 8192
    $region49: #{tpu_custom_call.1} parent=1 // pred_fallthru
      _
    %7926 = vsyncpa [#allocation6], 1
    %7927 = vsyncpa [#allocation7], 1
    %7928 = vsyncpa [#allocation10], 1

</llo_original>
